<compile_context>
chip_gen: v7x
topology: tpu7x:2x2x1
jax: 0.10.0
libtpu: 0.0.40
codegen_flags: <defaults>
</compile_context>

<pallas_src>
import functools

import jax
import jax.numpy as jnp
from jax.experimental import pallas as pl
from jax.experimental.pallas import tpu as pltpu

D_IN = 1024
D_HID = 1024
D_IDEN = 8
D_IDEN_PAD = 128                      # pad 8-wide iden output to a lane-dense 128
D_TOT = 2 * D_HID + D_IDEN_PAD        # 2176 = 17 * 128


def _round_up(n, m):
    return ((n + m - 1) // m) * m


def mlp_kernel(x_ref, w_ref, b_ref, lang_ref, mean_ref, iden_ref):
    # Cast the activation tile to the weight dtype (bf16 by default) -> one
    # wide bf16 x bf16 MXU pass with f32 accumulation.
    x = x_ref[...].astype(w_ref.dtype)
    acc = jnp.dot(x, w_ref[...], preferred_element_type=jnp.float32)
    acc = acc + b_ref[...]            # f32 bias add on the f32 accumulator

    # Column layout of the packed weight: [lang | mean | folded-iden(pad 128)]
    lang_ref[...] = acc[:, :D_HID].astype(lang_ref.dtype)
    mean_ref[...] = acc[:, D_HID:2 * D_HID].astype(mean_ref.dtype)
    iden_ref[...] = acc[:, 2 * D_HID:].astype(iden_ref.dtype)


def pack_params(w_lang, b_lang, w_mean, b_mean, w_iden, b_iden,
                *, weight_dtype=jnp.bfloat16):
    """One-time packing.

    Weights are expected pre-transposed to [in, out] (y = x @ W + b).
    Folds the iden layer:  lang_iden = x @ (W_lang @ W_iden) + (b_lang @ W_iden + b_iden)
    and concatenates everything into one [1024, 2176] weight (bf16) plus a
    [1, 2176] f32 bias.  The fold is done at HIGHEST precision so the
    reassociation itself adds no meaningful error.
    """
    hp = jax.lax.Precision.HIGHEST
    w_li = jnp.dot(w_lang, w_iden, precision=hp)                     # [1024, 8]
    b_li = jnp.dot(b_lang, w_iden, precision=hp) + b_iden            # [8]
    w_li_p = jnp.pad(w_li, ((0, 0), (0, D_IDEN_PAD - D_IDEN)))       # [1024, 128]
    b_li_p = jnp.pad(b_li, (0, D_IDEN_PAD - D_IDEN))                 # [128]

    w_all = jnp.concatenate([w_lang, w_mean, w_li_p], axis=1).astype(weight_dtype)
    b_all = jnp.concatenate([b_lang, b_mean, b_li_p]).reshape(1, D_TOT).astype(jnp.float32)
    return w_all, b_all


@functools.partial(jax.jit, static_argnames=("bm",))
def mlp_forward(x, w_all, b_all, *, bm=512):
    B, D = x.shape
    assert D == D_IN
    assert w_all.shape == (D_IN, D_TOT)

    # Batch tile selection:
    #   * never larger than requested bm (cap 512 recommended on v7x),
    #   * at least two grid steps when the batch allows it, so the "parallel"
    #     grid axis can shard across v7x's two TensorCores,
    #   * multiple of 8 (sublane granularity).
    B8 = _round_up(B, 8)
    half = _round_up((B8 + 1) // 2, 8)
    bm_eff = max(8, min(_round_up(bm, 8), half if B8 >= 16 else B8))
    B_pad = _round_up(B, bm_eff)
    if B_pad != B:
        # Only unaligned batches pay the pad/slice copies.
        x = jnp.pad(x, ((0, B_pad - B), (0, 0)))
    grid = (B_pad // bm_eff,)

    resident = pl.Buffered(1)   # constant-index operands: single VMEM buffer

    in_specs = [
        pl.BlockSpec((bm_eff, D_IN), lambda i: (i, 0)),                 # x tile
        pl.BlockSpec((D_IN, D_TOT), lambda i: (0, 0),
                     pipeline_mode=resident),                           # packed weight (bf16)
        pl.BlockSpec((1, D_TOT), lambda i: (0, 0),
                     pipeline_mode=resident),                           # packed bias (f32)
    ]
    out_specs = [
        pl.BlockSpec((bm_eff, D_HID), lambda i: (i, 0)),                # lang_emb
        pl.BlockSpec((bm_eff, D_HID), lambda i: (i, 0)),                # meaning_emb
        pl.BlockSpec((bm_eff, D_IDEN_PAD), lambda i: (i, 0)),           # lang_iden (padded)
    ]
    out_shape = [
        jax.ShapeDtypeStruct((B_pad, D_HID), x.dtype),
        jax.ShapeDtypeStruct((B_pad, D_HID), x.dtype),
        jax.ShapeDtypeStruct((B_pad, D_IDEN_PAD), x.dtype),
    ]

    w_bytes = jnp.dtype(w_all.dtype).itemsize
    flops = 2 * B_pad * D_IN * D_TOT
    bytes_accessed = (
        4 * B_pad * D_IN                               # x (f32)
        + w_bytes * D_IN * D_TOT + 4 * D_TOT           # packed weight + bias
        + 4 * B_pad * (2 * D_HID + D_IDEN_PAD)         # outputs (f32)
    )

    lang, mean, iden_p = pl.pallas_call(
        mlp_kernel,
        grid=grid,
        in_specs=in_specs,
        out_specs=out_specs,
        out_shape=out_shape,
        compiler_params=pltpu.CompilerParams(
            dimension_semantics=("parallel",),
            vmem_limit_bytes=48 * 1024 * 1024,   # fits bm=512 bf16 path on v5e/v6e/v7x
        ),
        cost_estimate=pl.CostEstimate(
            flops=flops, transcendentals=0, bytes_accessed=bytes_accessed),
    )(x, w_all, b_all)

    if B_pad != B:
        lang, mean, iden_p = lang[:B], mean[:B], iden_p[:B]
    return lang, mean, iden_p[:, :D_IDEN]


def init_params(key):
    """Deterministic init matching PyTorch nn.Linear's U(-1/sqrt(in), 1/sqrt(in)).
    Weights are stored pre-transposed as [in, out]."""
    ks = jax.random.split(key, 6)
    bound = 1.0 / jnp.sqrt(jnp.float32(D_IN))
    w_lang = jax.random.uniform(ks[0], (D_IN, D_HID), jnp.float32, -bound, bound)
    b_lang = jax.random.uniform(ks[1], (D_HID,), jnp.float32, -bound, bound)
    w_mean = jax.random.uniform(ks[2], (D_IN, D_HID), jnp.float32, -bound, bound)
    b_mean = jax.random.uniform(ks[3], (D_HID,), jnp.float32, -bound, bound)
    w_iden = jax.random.uniform(ks[4], (D_HID, D_IDEN), jnp.float32, -bound, bound)
    b_iden = jax.random.uniform(ks[5], (D_IDEN,), jnp.float32, -bound, bound)
    return w_lang, b_lang, w_mean, b_mean, w_iden, b_iden


def _check(x, params, w_all, b_all):
    w_lang, b_lang, w_mean, b_mean, w_iden, b_iden = params
    B = x.shape[0]

    lang, mean, iden = mlp_forward(x, w_all, b_all)
    jax.block_until_ready((lang, mean, iden))
    assert lang.shape == (B, D_HID)
    assert mean.shape == (B, D_HID)
    assert iden.shape == (B, D_IDEN)

    hp = jax.lax.Precision.HIGHEST

    # (1) Tight check: kernel vs the identical packed bf16-weight math in plain
    #     JAX (same quantized inputs, f32 accumulation) -> only reordering error.
    x_q = x.astype(w_all.dtype).astype(jnp.float32)
    w_q = w_all.astype(jnp.float32)
    packed = jnp.dot(x_q, w_q, precision=hp) + b_all
    assert jnp.allclose(lang, packed[:, :D_HID], atol=1e-4, rtol=1e-4)
    assert jnp.allclose(mean, packed[:, D_HID:2 * D_HID], atol=1e-4, rtol=1e-4)
    assert jnp.allclose(iden, packed[:, 2 * D_HID:2 * D_HID + D_IDEN],
                        atol=1e-4, rtol=1e-4)

    # (2) Loose end-to-end check vs exact-f32 torch-style math: bf16 MXU inputs
    #     give ~1e-3 absolute error on these unit-scale outputs.
    ref_lang = jnp.dot(x, w_lang, precision=hp) + b_lang
    ref_mean = jnp.dot(x, w_mean, precision=hp) + b_mean
    ref_iden = jnp.dot(ref_lang, w_iden, precision=hp) + b_iden
    assert jnp.allclose(lang, ref_lang, atol=2e-2, rtol=2e-2)
    assert jnp.allclose(mean, ref_mean, atol=2e-2, rtol=2e-2)
    assert jnp.allclose(iden, ref_iden, atol=2e-2, rtol=2e-2)


if __name__ == "__main__":
    key = jax.random.PRNGKey(0)
    k_x1, k_x2, k_p = jax.random.split(key, 3)

    params = init_params(k_p)
    w_all, b_all = pack_params(*params)

    # Small batch: single-tile path.
    x_small = jax.random.normal(k_x1, (8, D_IN), dtype=jnp.float32)
    _check(x_small, params, w_all, b_all)

    # Larger batch: exercises the production bm=512 tile and a >=2-step
    # "parallel" grid (v7x megacore sharding), with no batch padding.
    x_large = jax.random.normal(k_x2, (1024, D_IN), dtype=jnp.float32)
    _check(x_large, params, w_all, b_all)

    print("KERNEL_OK")
</pallas_src>

<mosaic_0001>
module attributes {stable_mosaic.version = 11 : i64} {
  func.func @mlp_kernel(%arg0: i32, %arg1: memref<8x1024xf32, #tpu.memory_space<vmem>>, %arg2: memref<1024x2176xbf16, #tpu.memory_space<vmem>>, %arg3: memref<1x2176xf32, #tpu.memory_space<vmem>>, %arg4: memref<8x1024xf32, #tpu.memory_space<vmem>>, %arg5: memref<8x1024xf32, #tpu.memory_space<vmem>>, %arg6: memref<8x128xf32, #tpu.memory_space<vmem>>) attributes {dimension_semantics = [#tpu.dimension_semantics<parallel>], iteration_bounds = array<i64: 1>, scalar_prefetch = 0 : i64, scratch_operands = 0 : i64, tpu.core_type = #tpu.core_type<tc>, window_params = [{transform_indices = @transform_0, window_bounds = array<i64: 8, 1024>}, {pipeline_mode = #tpu.pipeline_mode<synchronous>, transform_indices = @transform_1, window_bounds = array<i64: 1024, 2176>}, {pipeline_mode = #tpu.pipeline_mode<synchronous>, transform_indices = @transform_2, window_bounds = array<i64: 1, 2176>}, {transform_indices = @transform_3, window_bounds = array<i64: 8, 1024>}, {transform_indices = @transform_4, window_bounds = array<i64: 8, 1024>}, {transform_indices = @transform_5, window_bounds = array<i64: 8, 128>}]} {
    %c0 = arith.constant 0 : index
    %c0_0 = arith.constant 0 : index
    %0 = vector.load %arg1[%c0, %c0_0] : memref<8x1024xf32, #tpu.memory_space<vmem>>, vector<8x1024xf32>
    %1 = arith.truncf %0 : vector<8x1024xf32> to vector<8x1024xbf16>
    %c0_1 = arith.constant 0 : index
    %c0_2 = arith.constant 0 : index
    %2 = vector.load %arg2[%c0_1, %c0_2] : memref<1024x2176xbf16, #tpu.memory_space<vmem>>, vector<1024x2176xbf16>
    %cst = arith.constant dense<0.000000e+00> : vector<8x2176xf32>
    %3 = tpu.matmul %1, %2, %cst {dimension_numbers = #tpu.dot_dimension_numbers<[1], [0], [0], [1], [0, 0, 1, 1], [], []>} : vector<8x1024xbf16>, vector<1024x2176xbf16>, vector<8x2176xf32> -> vector<8x2176xf32>
    %c0_3 = arith.constant 0 : index
    %c0_4 = arith.constant 0 : index
    %4 = vector.load %arg3[%c0_3, %c0_4] : memref<1x2176xf32, #tpu.memory_space<vmem>>, vector<1x2176xf32>
    %5 = vector.broadcast %4 : vector<1x2176xf32> to vector<8x2176xf32>
    %6 = arith.addf %3, %5 : vector<8x2176xf32>
    %7 = vector.extract_strided_slice %6 {offsets = [0, 0], sizes = [8, 1024], strides = [1, 1]} : vector<8x2176xf32> to vector<8x1024xf32>
    %c0_5 = arith.constant 0 : index
    %c0_6 = arith.constant 0 : index
    %8 = vector.load %arg4[%c0_5, %c0_6] : memref<8x1024xf32, #tpu.memory_space<vmem>>, vector<8x1024xf32>
    tpu.vector_store %arg4[%c0_5, %c0_6], %7 {strides = array<i32>} : memref<8x1024xf32, #tpu.memory_space<vmem>>, vector<8x1024xf32>,
    %9 = vector.extract_strided_slice %6 {offsets = [0, 1024], sizes = [8, 1024], strides = [1, 1]} : vector<8x2176xf32> to vector<8x1024xf32>
    %c0_7 = arith.constant 0 : index
    %c0_8 = arith.constant 0 : index
    %10 = vector.load %arg5[%c0_7, %c0_8] : memref<8x1024xf32, #tpu.memory_space<vmem>>, vector<8x1024xf32>
    tpu.vector_store %arg5[%c0_7, %c0_8], %9 {strides = array<i32>} : memref<8x1024xf32, #tpu.memory_space<vmem>>, vector<8x1024xf32>,
    %11 = vector.extract_strided_slice %6 {offsets = [0, 2048], sizes = [8, 128], strides = [1, 1]} : vector<8x2176xf32> to vector<8x128xf32>
    %c0_9 = arith.constant 0 : index
    %c0_10 = arith.constant 0 : index
    %12 = vector.load %arg6[%c0_9, %c0_10] : memref<8x128xf32, #tpu.memory_space<vmem>>, vector<8x128xf32>
    tpu.vector_store %arg6[%c0_9, %c0_10], %11 {strides = array<i32>} : memref<8x128xf32, #tpu.memory_space<vmem>>, vector<8x128xf32>,
    return
  }
  func.func @transform_0(%arg0: i32) -> (i32, i32) {
    %c0_i32 = arith.constant 0 : i32
    %c0_i32_0 = arith.constant 0 : i32
    return %arg0, %c0_i32 : i32, i32
  }
  func.func @transform_1(%arg0: i32) -> (i32, i32) {
    %c0_i32 = arith.constant 0 : i32
    %c0_i32_0 = arith.constant 0 : i32
    %c0_i32_1 = arith.constant 0 : i32
    return %c0_i32, %c0_i32_0 : i32, i32
  }
  func.func @transform_2(%arg0: i32) -> (i32, i32) {
    %c0_i32 = arith.constant 0 : i32
    %c0_i32_0 = arith.constant 0 : i32
    %c0_i32_1 = arith.constant 0 : i32
    return %c0_i32, %c0_i32_0 : i32, i32
  }
  func.func @transform_3(%arg0: i32) -> (i32, i32) {
    %c0_i32 = arith.constant 0 : i32
    %c0_i32_0 = arith.constant 0 : i32
    return %arg0, %c0_i32 : i32, i32
  }
  func.func @transform_4(%arg0: i32) -> (i32, i32) {
    %c0_i32 = arith.constant 0 : i32
    %c0_i32_0 = arith.constant 0 : i32
    return %arg0, %c0_i32 : i32, i32
  }
  func.func @transform_5(%arg0: i32) -> (i32, i32) {
    %c0_i32 = arith.constant 0 : i32
    %c0_i32_0 = arith.constant 0 : i32
    return %arg0, %c0_i32 : i32, i32
  }
}

</mosaic_0001>

<llo_original>
// kernel: mlp_forward.1
$region0: #{mlp_forward.1}
  #allocation0 [shape = 'u32[]', space=smem, size = 0x4, offset = 0x4, fixed_abs, tag = 'smem constant byte address 0x4 - core index']
  #allocation1 [shape = 'u32[144,128]{1,0:T(1,128)}', space=vmem, size = 0x12000, scoped, tag = 'internal scratch']
  %s0 = inlined_call_operand.hbm [shape: f32[8,1024], index: 0, kind: input, shape index: {}]
  %s1 = inlined_call_operand.hbm [shape: bf16[1024,2176], index: 1, kind: input, shape index: {}]
  %s2 = inlined_call_operand.hbm [shape: f32[1,2176], index: 2, kind: input, shape index: {}]
  %s3 = inlined_call_operand.hbm [shape: f32[8,1024], index: 3, kind: output, shape index: {0}]
  %s4 = inlined_call_operand.hbm [shape: f32[8,1024], index: 4, kind: output, shape index: {1}]
  %s5 = inlined_call_operand.hbm [shape: f32[8,128], index: 5, kind: output, shape index: {2}]
  %6 = xla_tuple %s3, %s4, %s5
  %s7 = sld [smem:[#allocation0]]
  $region50: #{mlp_forward.1} parent=0
    _
  %s9 = ssub.s32 1, %s7
  %s10 = scalar_select 0, %s9, %s7
  $region1: #{mlp_forward.1} parent=0
    #allocation2 [shape = 'u8[32768]{0}', space=vmem, size = 0x8000, scoped, tag = 'input window, operand 0, single buffered']
    #allocation3 [shape = 's32[1]{0}', space=sflag, size = 0x4, scoped, tag = 'scoped memory for mlp_forward.1']
    #allocation4 [shape = 's32[1]{0}', space=sflag, size = 0x4, scoped, tag = 'scoped memory for mlp_forward.1']
    #allocation5 [shape = 'u8[4456448]{0}', space=vmem, size = 0x440000, scoped, tag = 'input window, operand 1, single buffered']
    #allocation6 [shape = 's32[1]{0}', space=sflag, size = 0x4, scoped, tag = 'scoped memory for mlp_forward.1']
    #allocation7 [shape = 'u8[8704]{0}', space=vmem, size = 0x2400, scoped, tag = 'input window, operand 2, single buffered']
    #allocation8 [shape = 'u8[32768]{0}', space=vmem, size = 0x8000, scoped, tag = 'output window, operand 0, single buffered']
    #allocation9 [shape = 'u8[32768]{0}', space=vmem, size = 0x8000, scoped, tag = 'output window, operand 1, single buffered']
    #allocation10 [shape = 's32[1]{0}', space=sflag, size = 0x4, scoped, tag = 'scoped memory for mlp_forward.1']
    #allocation11 [shape = 'u8[4096]{0}', space=vmem, size = 0x1000, scoped, tag = 'output window, operand 2, single buffered']
    %11 = vsyncpa [#allocation3], 0
    %12 = vsyncpa [#allocation6], 0
    %13 = vsyncpa [#allocation4], 0
    %14 = vsyncpa [#allocation10], 0
    // Predicated region
    $region2: #{mlp_forward.1} parent=1 // pred_check
      _
    $region3: #{mlp_forward.1} parent=1 // pred_check_branch
      %16 = sbr.rel (0) target = $region5
    $region4: #{mlp_forward.1} parent=1 // pred_region
      %s18 = ssub.s32 1024, 1024
      %19 = vsyncadd [#allocation3], %s18
      %s21 = sshll.u32 [#allocation2], 4
      %s22 = int_to_ptr.vmem [resolvable:$true] %s21
      %24 = dma.hbm_to_vmem [thread:$0]  %s0, 1024, %s22, [#allocation3]
    $region5: #{mlp_forward.1} parent=1 // pred_fallthru
      _
    // Predicated region
    $region6: #{mlp_forward.1} parent=1 // pred_check
      _
    $region7: #{mlp_forward.1} parent=1 // pred_check_branch
      %26 = sbr.rel (0) target = $region9
    $region8: #{mlp_forward.1} parent=1 // pred_region
      %s28 = ssub.s32 139264, 139264
      %29 = vsyncadd [#allocation6], %s28
      %s30 = sshll.u32 [#allocation5], 4
      %s31 = int_to_ptr.vmem [resolvable:$true] %s30
      %36 = dma.hbm_to_vmem [thread:$0]  %s1, 139264, %s31, [#allocation6], 1088, 1088, 68
    $region9: #{mlp_forward.1} parent=1 // pred_fallthru
      _
    // Predicated region
    $region10: #{mlp_forward.1} parent=1 // pred_check
      _
    $region11: #{mlp_forward.1} parent=1 // pred_check_branch
      %38 = sbr.rel (0) target = $region13
    $region12: #{mlp_forward.1} parent=1 // pred_region
      %s40 = ssub.s32 272, 272
      %41 = vsyncadd [#allocation6], %s40
      %s43 = sshll.u32 [#allocation7], 4
      %s44 = int_to_ptr.vmem [resolvable:$true] %s43
      %46 = dma.hbm_to_vmem [thread:$0]  %s2, 272, %s44, [#allocation6]
    $region13: #{mlp_forward.1} parent=1 // pred_fallthru
      _
    // Predicated region
    $region14: #{mlp_forward.1} parent=1 // pred_check
      _
    $region15: #{mlp_forward.1} parent=1 // pred_check_branch
      %48 = sbr.rel (0) target = $region17
    $region16: #{mlp_forward.1} parent=1 // pred_region
      %49 = dma.done [#allocation3], 1024
    $region17: #{mlp_forward.1} parent=1 // pred_fallthru
      _
    // Predicated region
    $region18: #{mlp_forward.1} parent=1 // pred_check
      _
    $region19: #{mlp_forward.1} parent=1 // pred_check_branch
      %51 = sbr.rel (0) target = $region21
    $region20: #{mlp_forward.1} parent=1 // pred_region
      %52 = dma.done [#allocation6], 139264
    $region21: #{mlp_forward.1} parent=1 // pred_fallthru
      _
    // Predicated region
    $region22: #{mlp_forward.1} parent=1 // pred_check
      _
    $region23: #{mlp_forward.1} parent=1 // pred_check_branch
      %54 = sbr.rel (0) target = $region25
    $region24: #{mlp_forward.1} parent=1 // pred_region
      %55 = dma.done [#allocation6], 272
    $region25: #{mlp_forward.1} parent=1 // pred_fallthru
      _
    %v57 = vld [vmem:[#allocation2] sm:$0xff]
    %v58 = vld [vmem:[#allocation2 + $0x8] sm:$0xff]
    %v59 = vld [vmem:[#allocation2 + $0x10] sm:$0xff]
    %v60 = vld [vmem:[#allocation2 + $0x18] sm:$0xff]
    %v61 = vld [vmem:[#allocation2 + $0x20] sm:$0xff]
    %v62 = vld [vmem:[#allocation2 + $0x28] sm:$0xff]
    %v63 = vld [vmem:[#allocation2 + $0x30] sm:$0xff]
    %v64 = vld [vmem:[#allocation2 + $0x38] sm:$0xff]
    %v65 = vpack.c.bf16 %v57, %v57
    %v66 = vpack.c.bf16 %v58, %v58
    %v67 = vpack.c.bf16 %v59, %v59
    %v68 = vpack.c.bf16 %v60, %v60
    %v69 = vpack.c.bf16 %v61, %v61
    %v70 = vpack.c.bf16 %v62, %v62
    %v71 = vpack.c.bf16 %v63, %v63
    %v72 = vpack.c.bf16 %v64, %v64
    %v73 = vld [vmem:[#allocation5] sm:$0xff]
    %v74 = vld [vmem:[#allocation5 + $0x8] sm:$0xff]
    %v75 = vld [vmem:[#allocation5 + $0x10] sm:$0xff]
    %v76 = vld [vmem:[#allocation5 + $0x18] sm:$0xff]
    %v77 = vld [vmem:[#allocation5 + $0x20] sm:$0xff]
    %v78 = vld [vmem:[#allocation5 + $0x28] sm:$0xff]
    %v79 = vld [vmem:[#allocation5 + $0x30] sm:$0xff]
    %v80 = vld [vmem:[#allocation5 + $0x38] sm:$0xff]
    %v81 = vld [vmem:[#allocation5 + $0x40] sm:$0xf]
    %v82 = vld [vmem:[#allocation5 + $0x44] sm:$0xff]
    %v83 = vld [vmem:[#allocation5 + $0x4c] sm:$0xff]
    %v84 = vld [vmem:[#allocation5 + $0x54] sm:$0xff]
    %v85 = vld [vmem:[#allocation5 + $0x5c] sm:$0xff]
    %v86 = vld [vmem:[#allocation5 + $0x64] sm:$0xff]
    %v87 = vld [vmem:[#allocation5 + $0x6c] sm:$0xff]
    %v88 = vld [vmem:[#allocation5 + $0x74] sm:$0xff]
    %v89 = vld [vmem:[#allocation5 + $0x7c] sm:$0xff]
    %v90 = vld [vmem:[#allocation5 + $0x84] sm:$0xf]
    %v91 = vld [vmem:[#allocation5 + $0x88] sm:$0xff]
    %v92 = vld [vmem:[#allocation5 + $0x90] sm:$0xff]
    %v93 = vld [vmem:[#allocation5 + $0x98] sm:$0xff]
    %v94 = vld [vmem:[#allocation5 + $0xa0] sm:$0xff]
    %v95 = vld [vmem:[#allocation5 + $0xa8] sm:$0xff]
    %v96 = vld [vmem:[#allocation5 + $0xb0] sm:$0xff]
    %v97 = vld [vmem:[#allocation5 + $0xb8] sm:$0xff]
    %v98 = vld [vmem:[#allocation5 + $0xc0] sm:$0xff]
    %v99 = vld [vmem:[#allocation5 + $0xc8] sm:$0xf]
    %v100 = vld [vmem:[#allocation5 + $0xcc] sm:$0xff]
    %v101 = vld [vmem:[#allocation5 + $0xd4] sm:$0xff]
    %v102 = vld [vmem:[#allocation5 + $0xdc] sm:$0xff]
    %v103 = vld [vmem:[#allocation5 + $0xe4] sm:$0xff]
    %v104 = vld [vmem:[#allocation5 + $0xec] sm:$0xff]
    %v105 = vld [vmem:[#allocation5 + $0xf4] sm:$0xff]
    %v106 = vld [vmem:[#allocation5 + $0xfc] sm:$0xff]
    %v107 = vld [vmem:[#allocation5 + $0x104] sm:$0xff]
    %v108 = vld [vmem:[#allocation5 + $0x10c] sm:$0xf]
    %v109 = vld [vmem:[#allocation5 + $0x110] sm:$0xff]
    %v110 = vld [vmem:[#allocation5 + $0x118] sm:$0xff]
    %v111 = vld [vmem:[#allocation5 + $0x120] sm:$0xff]
    %v112 = vld [vmem:[#allocation5 + $0x128] sm:$0xff]
    %v113 = vld [vmem:[#allocation5 + $0x130] sm:$0xff]
    %v114 = vld [vmem:[#allocation5 + $0x138] sm:$0xff]
    %v115 = vld [vmem:[#allocation5 + $0x140] sm:$0xff]
    %v116 = vld [vmem:[#allocation5 + $0x148] sm:$0xff]
    %v117 = vld [vmem:[#allocation5 + $0x150] sm:$0xf]
    %v118 = vld [vmem:[#allocation5 + $0x154] sm:$0xff]
    %v119 = vld [vmem:[#allocation5 + $0x15c] sm:$0xff]
    %v120 = vld [vmem:[#allocation5 + $0x164] sm:$0xff]
    %v121 = vld [vmem:[#allocation5 + $0x16c] sm:$0xff]
    %v122 = vld [vmem:[#allocation5 + $0x174] sm:$0xff]
    %v123 = vld [vmem:[#allocation5 + $0x17c] sm:$0xff]
    %v124 = vld [vmem:[#allocation5 + $0x184] sm:$0xff]
    %v125 = vld [vmem:[#allocation5 + $0x18c] sm:$0xff]
    %v126 = vld [vmem:[#allocation5 + $0x194] sm:$0xf]
    %v127 = vld [vmem:[#allocation5 + $0x198] sm:$0xff]
    %v128 = vld [vmem:[#allocation5 + $0x1a0] sm:$0xff]
    %v129 = vld [vmem:[#allocation5 + $0x1a8] sm:$0xff]
    %v130 = vld [vmem:[#allocation5 + $0x1b0] sm:$0xff]
    %v131 = vld [vmem:[#allocation5 + $0x1b8] sm:$0xff]
    %v132 = vld [vmem:[#allocation5 + $0x1c0] sm:$0xff]
    %v133 = vld [vmem:[#allocation5 + $0x1c8] sm:$0xff]
    %v134 = vld [vmem:[#allocation5 + $0x1d0] sm:$0xff]
    %v135 = vld [vmem:[#allocation5 + $0x1d8] sm:$0xf]
    %v136 = vld [vmem:[#allocation5 + $0x1dc] sm:$0xff]
    %v137 = vld [vmem:[#allocation5 + $0x1e4] sm:$0xff]
    %v138 = vld [vmem:[#allocation5 + $0x1ec] sm:$0xff]
    %v139 = vld [vmem:[#allocation5 + $0x1f4] sm:$0xff]
    %v140 = vld [vmem:[#allocation5 + $0x1fc] sm:$0xff]
    %v141 = vld [vmem:[#allocation5 + $0x204] sm:$0xff]
    %v142 = vld [vmem:[#allocation5 + $0x20c] sm:$0xff]
    %v143 = vld [vmem:[#allocation5 + $0x214] sm:$0xff]
    %v144 = vld [vmem:[#allocation5 + $0x21c] sm:$0xf]
    %v145 = vld [vmem:[#allocation5 + $0x220] sm:$0xff]
    %v146 = vld [vmem:[#allocation5 + $0x228] sm:$0xff]
    %v147 = vld [vmem:[#allocation5 + $0x230] sm:$0xff]
    %v148 = vld [vmem:[#allocation5 + $0x238] sm:$0xff]
    %v149 = vld [vmem:[#allocation5 + $0x240] sm:$0xff]
    %v150 = vld [vmem:[#allocation5 + $0x248] sm:$0xff]
    %v151 = vld [vmem:[#allocation5 + $0x250] sm:$0xff]
    %v152 = vld [vmem:[#allocation5 + $0x258] sm:$0xff]
    %v153 = vld [vmem:[#allocation5 + $0x260] sm:$0xf]
    %v154 = vld [vmem:[#allocation5 + $0x264] sm:$0xff]
    %v155 = vld [vmem:[#allocation5 + $0x26c] sm:$0xff]
    %v156 = vld [vmem:[#allocation5 + $0x274] sm:$0xff]
    %v157 = vld [vmem:[#allocation5 + $0x27c] sm:$0xff]
    %v158 = vld [vmem:[#allocation5 + $0x284] sm:$0xff]
    %v159 = vld [vmem:[#allocation5 + $0x28c] sm:$0xff]
    %v160 = vld [vmem:[#allocation5 + $0x294] sm:$0xff]
    %v161 = vld [vmem:[#allocation5 + $0x29c] sm:$0xff]
    %v162 = vld [vmem:[#allocation5 + $0x2a4] sm:$0xf]
    %v163 = vld [vmem:[#allocation5 + $0x2a8] sm:$0xff]
    %v164 = vld [vmem:[#allocation5 + $0x2b0] sm:$0xff]
    %v165 = vld [vmem:[#allocation5 + $0x2b8] sm:$0xff]
    %v166 = vld [vmem:[#allocation5 + $0x2c0] sm:$0xff]
    %v167 = vld [vmem:[#allocation5 + $0x2c8] sm:$0xff]
    %v168 = vld [vmem:[#allocation5 + $0x2d0] sm:$0xff]
    %v169 = vld [vmem:[#allocation5 + $0x2d8] sm:$0xff]
    %v170 = vld [vmem:[#allocation5 + $0x2e0] sm:$0xff]
    %v171 = vld [vmem:[#allocation5 + $0x2e8] sm:$0xf]
    %v172 = vld [vmem:[#allocation5 + $0x2ec] sm:$0xff]
    %v173 = vld [vmem:[#allocation5 + $0x2f4] sm:$0xff]
    %v174 = vld [vmem:[#allocation5 + $0x2fc] sm:$0xff]
    %v175 = vld [vmem:[#allocation5 + $0x304] sm:$0xff]
    %v176 = vld [vmem:[#allocation5 + $0x30c] sm:$0xff]
    %v177 = vld [vmem:[#allocation5 + $0x314] sm:$0xff]
    %v178 = vld [vmem:[#allocation5 + $0x31c] sm:$0xff]
    %v179 = vld [vmem:[#allocation5 + $0x324] sm:$0xff]
    %v180 = vld [vmem:[#allocation5 + $0x32c] sm:$0xf]
    %v181 = vld [vmem:[#allocation5 + $0x330] sm:$0xff]
    %v182 = vld [vmem:[#allocation5 + $0x338] sm:$0xff]
    %v183 = vld [vmem:[#allocation5 + $0x340] sm:$0xff]
    %v184 = vld [vmem:[#allocation5 + $0x348] sm:$0xff]
    %v185 = vld [vmem:[#allocation5 + $0x350] sm:$0xff]
    %v186 = vld [vmem:[#allocation5 + $0x358] sm:$0xff]
    %v187 = vld [vmem:[#allocation5 + $0x360] sm:$0xff]
    %v188 = vld [vmem:[#allocation5 + $0x368] sm:$0xff]
    %v189 = vld [vmem:[#allocation5 + $0x370] sm:$0xf]
    %v190 = vld [vmem:[#allocation5 + $0x374] sm:$0xff]
    %v191 = vld [vmem:[#allocation5 + $0x37c] sm:$0xff]
    %v192 = vld [vmem:[#allocation5 + $0x384] sm:$0xff]
    %v193 = vld [vmem:[#allocation5 + $0x38c] sm:$0xff]
    %v194 = vld [vmem:[#allocation5 + $0x394] sm:$0xff]
    %v195 = vld [vmem:[#allocation5 + $0x39c] sm:$0xff]
    %v196 = vld [vmem:[#allocation5 + $0x3a4] sm:$0xff]
    %v197 = vld [vmem:[#allocation5 + $0x3ac] sm:$0xff]
    %v198 = vld [vmem:[#allocation5 + $0x3b4] sm:$0xf]
    %v199 = vld [vmem:[#allocation5 + $0x3b8] sm:$0xff]
    %v200 = vld [vmem:[#allocation5 + $0x3c0] sm:$0xff]
    %v201 = vld [vmem:[#allocation5 + $0x3c8] sm:$0xff]
    %v202 = vld [vmem:[#allocation5 + $0x3d0] sm:$0xff]
    %v203 = vld [vmem:[#allocation5 + $0x3d8] sm:$0xff]
    %v204 = vld [vmem:[#allocation5 + $0x3e0] sm:$0xff]
    %v205 = vld [vmem:[#allocation5 + $0x3e8] sm:$0xff]
    %v206 = vld [vmem:[#allocation5 + $0x3f0] sm:$0xff]
    %v207 = vld [vmem:[#allocation5 + $0x3f8] sm:$0xf]
    %v208 = vld [vmem:[#allocation5 + $0x3fc] sm:$0xff]
    %v209 = vld [vmem:[#allocation5 + $0x404] sm:$0xff]
    %v210 = vld [vmem:[#allocation5 + $0x40c] sm:$0xff]
    %v211 = vld [vmem:[#allocation5 + $0x414] sm:$0xff]
    %v212 = vld [vmem:[#allocation5 + $0x41c] sm:$0xff]
    %v213 = vld [vmem:[#allocation5 + $0x424] sm:$0xff]
    %v214 = vld [vmem:[#allocation5 + $0x42c] sm:$0xff]
    %v215 = vld [vmem:[#allocation5 + $0x434] sm:$0xff]
    %v216 = vld [vmem:[#allocation5 + $0x43c] sm:$0xf]
    %v217 = vld [vmem:[#allocation5 + $0x440] sm:$0xff]
    %v218 = vld [vmem:[#allocation5 + $0x448] sm:$0xff]
    %v219 = vld [vmem:[#allocation5 + $0x450] sm:$0xff]
    %v220 = vld [vmem:[#allocation5 + $0x458] sm:$0xff]
    %v221 = vld [vmem:[#allocation5 + $0x460] sm:$0xff]
    %v222 = vld [vmem:[#allocation5 + $0x468] sm:$0xff]
    %v223 = vld [vmem:[#allocation5 + $0x470] sm:$0xff]
    %v224 = vld [vmem:[#allocation5 + $0x478] sm:$0xff]
    %v225 = vld [vmem:[#allocation5 + $0x480] sm:$0xf]
    %v226 = vld [vmem:[#allocation5 + $0x484] sm:$0xff]
    %v227 = vld [vmem:[#allocation5 + $0x48c] sm:$0xff]
    %v228 = vld [vmem:[#allocation5 + $0x494] sm:$0xff]
    %v229 = vld [vmem:[#allocation5 + $0x49c] sm:$0xff]
    %v230 = vld [vmem:[#allocation5 + $0x4a4] sm:$0xff]
    %v231 = vld [vmem:[#allocation5 + $0x4ac] sm:$0xff]
    %v232 = vld [vmem:[#allocation5 + $0x4b4] sm:$0xff]
    %v233 = vld [vmem:[#allocation5 + $0x4bc] sm:$0xff]
    %v234 = vld [vmem:[#allocation5 + $0x4c4] sm:$0xf]
    %v235 = vld [vmem:[#allocation5 + $0x4c8] sm:$0xff]
    %v236 = vld [vmem:[#allocation5 + $0x4d0] sm:$0xff]
    %v237 = vld [vmem:[#allocation5 + $0x4d8] sm:$0xff]
    %v238 = vld [vmem:[#allocation5 + $0x4e0] sm:$0xff]
    %v239 = vld [vmem:[#allocation5 + $0x4e8] sm:$0xff]
    %v240 = vld [vmem:[#allocation5 + $0x4f0] sm:$0xff]
    %v241 = vld [vmem:[#allocation5 + $0x4f8] sm:$0xff]
    %v242 = vld [vmem:[#allocation5 + $0x500] sm:$0xff]
    %v243 = vld [vmem:[#allocation5 + $0x508] sm:$0xf]
    %v244 = vld [vmem:[#allocation5 + $0x50c] sm:$0xff]
    %v245 = vld [vmem:[#allocation5 + $0x514] sm:$0xff]
    %v246 = vld [vmem:[#allocation5 + $0x51c] sm:$0xff]
    %v247 = vld [vmem:[#allocation5 + $0x524] sm:$0xff]
    %v248 = vld [vmem:[#allocation5 + $0x52c] sm:$0xff]
    %v249 = vld [vmem:[#allocation5 + $0x534] sm:$0xff]
    %v250 = vld [vmem:[#allocation5 + $0x53c] sm:$0xff]
    %v251 = vld [vmem:[#allocation5 + $0x544] sm:$0xff]
    %v252 = vld [vmem:[#allocation5 + $0x54c] sm:$0xf]
    %v253 = vld [vmem:[#allocation5 + $0x550] sm:$0xff]
    %v254 = vld [vmem:[#allocation5 + $0x558] sm:$0xff]
    %v255 = vld [vmem:[#allocation5 + $0x560] sm:$0xff]
    %v256 = vld [vmem:[#allocation5 + $0x568] sm:$0xff]
    %v257 = vld [vmem:[#allocation5 + $0x570] sm:$0xff]
    %v258 = vld [vmem:[#allocation5 + $0x578] sm:$0xff]
    %v259 = vld [vmem:[#allocation5 + $0x580] sm:$0xff]
    %v260 = vld [vmem:[#allocation5 + $0x588] sm:$0xff]
    %v261 = vld [vmem:[#allocation5 + $0x590] sm:$0xf]
    %v262 = vld [vmem:[#allocation5 + $0x594] sm:$0xff]
    %v263 = vld [vmem:[#allocation5 + $0x59c] sm:$0xff]
    %v264 = vld [vmem:[#allocation5 + $0x5a4] sm:$0xff]
    %v265 = vld [vmem:[#allocation5 + $0x5ac] sm:$0xff]
    %v266 = vld [vmem:[#allocation5 + $0x5b4] sm:$0xff]
    %v267 = vld [vmem:[#allocation5 + $0x5bc] sm:$0xff]
    %v268 = vld [vmem:[#allocation5 + $0x5c4] sm:$0xff]
    %v269 = vld [vmem:[#allocation5 + $0x5cc] sm:$0xff]
    %v270 = vld [vmem:[#allocation5 + $0x5d4] sm:$0xf]
    %v271 = vld [vmem:[#allocation5 + $0x5d8] sm:$0xff]
    %v272 = vld [vmem:[#allocation5 + $0x5e0] sm:$0xff]
    %v273 = vld [vmem:[#allocation5 + $0x5e8] sm:$0xff]
    %v274 = vld [vmem:[#allocation5 + $0x5f0] sm:$0xff]
    %v275 = vld [vmem:[#allocation5 + $0x5f8] sm:$0xff]
    %v276 = vld [vmem:[#allocation5 + $0x600] sm:$0xff]
    %v277 = vld [vmem:[#allocation5 + $0x608] sm:$0xff]
    %v278 = vld [vmem:[#allocation5 + $0x610] sm:$0xff]
    %v279 = vld [vmem:[#allocation5 + $0x618] sm:$0xf]
    %v280 = vld [vmem:[#allocation5 + $0x61c] sm:$0xff]
    %v281 = vld [vmem:[#allocation5 + $0x624] sm:$0xff]
    %v282 = vld [vmem:[#allocation5 + $0x62c] sm:$0xff]
    %v283 = vld [vmem:[#allocation5 + $0x634] sm:$0xff]
    %v284 = vld [vmem:[#allocation5 + $0x63c] sm:$0xff]
    %v285 = vld [vmem:[#allocation5 + $0x644] sm:$0xff]
    %v286 = vld [vmem:[#allocation5 + $0x64c] sm:$0xff]
    %v287 = vld [vmem:[#allocation5 + $0x654] sm:$0xff]
    %v288 = vld [vmem:[#allocation5 + $0x65c] sm:$0xf]
    %v289 = vld [vmem:[#allocation5 + $0x660] sm:$0xff]
    %v290 = vld [vmem:[#allocation5 + $0x668] sm:$0xff]
    %v291 = vld [vmem:[#allocation5 + $0x670] sm:$0xff]
    %v292 = vld [vmem:[#allocation5 + $0x678] sm:$0xff]
    %v293 = vld [vmem:[#allocation5 + $0x680] sm:$0xff]
    %v294 = vld [vmem:[#allocation5 + $0x688] sm:$0xff]
    %v295 = vld [vmem:[#allocation5 + $0x690] sm:$0xff]
    %v296 = vld [vmem:[#allocation5 + $0x698] sm:$0xff]
    %v297 = vld [vmem:[#allocation5 + $0x6a0] sm:$0xf]
    %v298 = vld [vmem:[#allocation5 + $0x6a4] sm:$0xff]
    %v299 = vld [vmem:[#allocation5 + $0x6ac] sm:$0xff]
    %v300 = vld [vmem:[#allocation5 + $0x6b4] sm:$0xff]
    %v301 = vld [vmem:[#allocation5 + $0x6bc] sm:$0xff]
    %v302 = vld [vmem:[#allocation5 + $0x6c4] sm:$0xff]
    %v303 = vld [vmem:[#allocation5 + $0x6cc] sm:$0xff]
    %v304 = vld [vmem:[#allocation5 + $0x6d4] sm:$0xff]
    %v305 = vld [vmem:[#allocation5 + $0x6dc] sm:$0xff]
    %v306 = vld [vmem:[#allocation5 + $0x6e4] sm:$0xf]
    %v307 = vld [vmem:[#allocation5 + $0x6e8] sm:$0xff]
    %v308 = vld [vmem:[#allocation5 + $0x6f0] sm:$0xff]
    %v309 = vld [vmem:[#allocation5 + $0x6f8] sm:$0xff]
    %v310 = vld [vmem:[#allocation5 + $0x700] sm:$0xff]
    %v311 = vld [vmem:[#allocation5 + $0x708] sm:$0xff]
    %v312 = vld [vmem:[#allocation5 + $0x710] sm:$0xff]
    %v313 = vld [vmem:[#allocation5 + $0x718] sm:$0xff]
    %v314 = vld [vmem:[#allocation5 + $0x720] sm:$0xff]
    %v315 = vld [vmem:[#allocation5 + $0x728] sm:$0xf]
    %v316 = vld [vmem:[#allocation5 + $0x72c] sm:$0xff]
    %v317 = vld [vmem:[#allocation5 + $0x734] sm:$0xff]
    %v318 = vld [vmem:[#allocation5 + $0x73c] sm:$0xff]
    %v319 = vld [vmem:[#allocation5 + $0x744] sm:$0xff]
    %v320 = vld [vmem:[#allocation5 + $0x74c] sm:$0xff]
    %v321 = vld [vmem:[#allocation5 + $0x754] sm:$0xff]
    %v322 = vld [vmem:[#allocation5 + $0x75c] sm:$0xff]
    %v323 = vld [vmem:[#allocation5 + $0x764] sm:$0xff]
    %v324 = vld [vmem:[#allocation5 + $0x76c] sm:$0xf]
    %v325 = vld [vmem:[#allocation5 + $0x770] sm:$0xff]
    %v326 = vld [vmem:[#allocation5 + $0x778] sm:$0xff]
    %v327 = vld [vmem:[#allocation5 + $0x780] sm:$0xff]
    %v328 = vld [vmem:[#allocation5 + $0x788] sm:$0xff]
    %v329 = vld [vmem:[#allocation5 + $0x790] sm:$0xff]
    %v330 = vld [vmem:[#allocation5 + $0x798] sm:$0xff]
    %v331 = vld [vmem:[#allocation5 + $0x7a0] sm:$0xff]
    %v332 = vld [vmem:[#allocation5 + $0x7a8] sm:$0xff]
    %v333 = vld [vmem:[#allocation5 + $0x7b0] sm:$0xf]
    %v334 = vld [vmem:[#allocation5 + $0x7b4] sm:$0xff]
    %v335 = vld [vmem:[#allocation5 + $0x7bc] sm:$0xff]
    %v336 = vld [vmem:[#allocation5 + $0x7c4] sm:$0xff]
    %v337 = vld [vmem:[#allocation5 + $0x7cc] sm:$0xff]
    %v338 = vld [vmem:[#allocation5 + $0x7d4] sm:$0xff]
    %v339 = vld [vmem:[#allocation5 + $0x7dc] sm:$0xff]
    %v340 = vld [vmem:[#allocation5 + $0x7e4] sm:$0xff]
    %v341 = vld [vmem:[#allocation5 + $0x7ec] sm:$0xff]
    %v342 = vld [vmem:[#allocation5 + $0x7f4] sm:$0xf]
    %v343 = vld [vmem:[#allocation5 + $0x7f8] sm:$0xff]
    %v344 = vld [vmem:[#allocation5 + $0x800] sm:$0xff]
    %v345 = vld [vmem:[#allocation5 + $0x808] sm:$0xff]
    %v346 = vld [vmem:[#allocation5 + $0x810] sm:$0xff]
    %v347 = vld [vmem:[#allocation5 + $0x818] sm:$0xff]
    %v348 = vld [vmem:[#allocation5 + $0x820] sm:$0xff]
    %v349 = vld [vmem:[#allocation5 + $0x828] sm:$0xff]
    %v350 = vld [vmem:[#allocation5 + $0x830] sm:$0xff]
    %v351 = vld [vmem:[#allocation5 + $0x838] sm:$0xf]
    %v352 = vld [vmem:[#allocation5 + $0x83c] sm:$0xff]
    %v353 = vld [vmem:[#allocation5 + $0x844] sm:$0xff]
    %v354 = vld [vmem:[#allocation5 + $0x84c] sm:$0xff]
    %v355 = vld [vmem:[#allocation5 + $0x854] sm:$0xff]
    %v356 = vld [vmem:[#allocation5 + $0x85c] sm:$0xff]
    %v357 = vld [vmem:[#allocation5 + $0x864] sm:$0xff]
    %v358 = vld [vmem:[#allocation5 + $0x86c] sm:$0xff]
    %v359 = vld [vmem:[#allocation5 + $0x874] sm:$0xff]
    %v360 = vld [vmem:[#allocation5 + $0x87c] sm:$0xf]
    %v361 = vld [vmem:[#allocation5 + $0x880] sm:$0xff]
    %v362 = vld [vmem:[#allocation5 + $0x888] sm:$0xff]
    %v363 = vld [vmem:[#allocation5 + $0x890] sm:$0xff]
    %v364 = vld [vmem:[#allocation5 + $0x898] sm:$0xff]
    %v365 = vld [vmem:[#allocation5 + $0x8a0] sm:$0xff]
    %v366 = vld [vmem:[#allocation5 + $0x8a8] sm:$0xff]
    %v367 = vld [vmem:[#allocation5 + $0x8b0] sm:$0xff]
    %v368 = vld [vmem:[#allocation5 + $0x8b8] sm:$0xff]
    %v369 = vld [vmem:[#allocation5 + $0x8c0] sm:$0xf]
    %v370 = vld [vmem:[#allocation5 + $0x8c4] sm:$0xff]
    %v371 = vld [vmem:[#allocation5 + $0x8cc] sm:$0xff]
    %v372 = vld [vmem:[#allocation5 + $0x8d4] sm:$0xff]
    %v373 = vld [vmem:[#allocation5 + $0x8dc] sm:$0xff]
    %v374 = vld [vmem:[#allocation5 + $0x8e4] sm:$0xff]
    %v375 = vld [vmem:[#allocation5 + $0x8ec] sm:$0xff]
    %v376 = vld [vmem:[#allocation5 + $0x8f4] sm:$0xff]
    %v377 = vld [vmem:[#allocation5 + $0x8fc] sm:$0xff]
    %v378 = vld [vmem:[#allocation5 + $0x904] sm:$0xf]
    %v379 = vld [vmem:[#allocation5 + $0x908] sm:$0xff]
    %v380 = vld [vmem:[#allocation5 + $0x910] sm:$0xff]
    %v381 = vld [vmem:[#allocation5 + $0x918] sm:$0xff]
    %v382 = vld [vmem:[#allocation5 + $0x920] sm:$0xff]
    %v383 = vld [vmem:[#allocation5 + $0x928] sm:$0xff]
    %v384 = vld [vmem:[#allocation5 + $0x930] sm:$0xff]
    %v385 = vld [vmem:[#allocation5 + $0x938] sm:$0xff]
    %v386 = vld [vmem:[#allocation5 + $0x940] sm:$0xff]
    %v387 = vld [vmem:[#allocation5 + $0x948] sm:$0xf]
    %v388 = vld [vmem:[#allocation5 + $0x94c] sm:$0xff]
    %v389 = vld [vmem:[#allocation5 + $0x954] sm:$0xff]
    %v390 = vld [vmem:[#allocation5 + $0x95c] sm:$0xff]
    %v391 = vld [vmem:[#allocation5 + $0x964] sm:$0xff]
    %v392 = vld [vmem:[#allocation5 + $0x96c] sm:$0xff]
    %v393 = vld [vmem:[#allocation5 + $0x974] sm:$0xff]
    %v394 = vld [vmem:[#allocation5 + $0x97c] sm:$0xff]
    %v395 = vld [vmem:[#allocation5 + $0x984] sm:$0xff]
    %v396 = vld [vmem:[#allocation5 + $0x98c] sm:$0xf]
    %v397 = vld [vmem:[#allocation5 + $0x990] sm:$0xff]
    %v398 = vld [vmem:[#allocation5 + $0x998] sm:$0xff]
    %v399 = vld [vmem:[#allocation5 + $0x9a0] sm:$0xff]
    %v400 = vld [vmem:[#allocation5 + $0x9a8] sm:$0xff]
    %v401 = vld [vmem:[#allocation5 + $0x9b0] sm:$0xff]
    %v402 = vld [vmem:[#allocation5 + $0x9b8] sm:$0xff]
    %v403 = vld [vmem:[#allocation5 + $0x9c0] sm:$0xff]
    %v404 = vld [vmem:[#allocation5 + $0x9c8] sm:$0xff]
    %v405 = vld [vmem:[#allocation5 + $0x9d0] sm:$0xf]
    %v406 = vld [vmem:[#allocation5 + $0x9d4] sm:$0xff]
    %v407 = vld [vmem:[#allocation5 + $0x9dc] sm:$0xff]
    %v408 = vld [vmem:[#allocation5 + $0x9e4] sm:$0xff]
    %v409 = vld [vmem:[#allocation5 + $0x9ec] sm:$0xff]
    %v410 = vld [vmem:[#allocation5 + $0x9f4] sm:$0xff]
    %v411 = vld [vmem:[#allocation5 + $0x9fc] sm:$0xff]
    %v412 = vld [vmem:[#allocation5 + $0xa04] sm:$0xff]
    %v413 = vld [vmem:[#allocation5 + $0xa0c] sm:$0xff]
    %v414 = vld [vmem:[#allocation5 + $0xa14] sm:$0xf]
    %v415 = vld [vmem:[#allocation5 + $0xa18] sm:$0xff]
    %v416 = vld [vmem:[#allocation5 + $0xa20] sm:$0xff]
    %v417 = vld [vmem:[#allocation5 + $0xa28] sm:$0xff]
    %v418 = vld [vmem:[#allocation5 + $0xa30] sm:$0xff]
    %v419 = vld [vmem:[#allocation5 + $0xa38] sm:$0xff]
    %v420 = vld [vmem:[#allocation5 + $0xa40] sm:$0xff]
    %v421 = vld [vmem:[#allocation5 + $0xa48] sm:$0xff]
    %v422 = vld [vmem:[#allocation5 + $0xa50] sm:$0xff]
    %v423 = vld [vmem:[#allocation5 + $0xa58] sm:$0xf]
    %v424 = vld [vmem:[#allocation5 + $0xa5c] sm:$0xff]
    %v425 = vld [vmem:[#allocation5 + $0xa64] sm:$0xff]
    %v426 = vld [vmem:[#allocation5 + $0xa6c] sm:$0xff]
    %v427 = vld [vmem:[#allocation5 + $0xa74] sm:$0xff]
    %v428 = vld [vmem:[#allocation5 + $0xa7c] sm:$0xff]
    %v429 = vld [vmem:[#allocation5 + $0xa84] sm:$0xff]
    %v430 = vld [vmem:[#allocation5 + $0xa8c] sm:$0xff]
    %v431 = vld [vmem:[#allocation5 + $0xa94] sm:$0xff]
    %v432 = vld [vmem:[#allocation5 + $0xa9c] sm:$0xf]
    %v433 = vld [vmem:[#allocation5 + $0xaa0] sm:$0xff]
    %v434 = vld [vmem:[#allocation5 + $0xaa8] sm:$0xff]
    %v435 = vld [vmem:[#allocation5 + $0xab0] sm:$0xff]
    %v436 = vld [vmem:[#allocation5 + $0xab8] sm:$0xff]
    %v437 = vld [vmem:[#allocation5 + $0xac0] sm:$0xff]
    %v438 = vld [vmem:[#allocation5 + $0xac8] sm:$0xff]
    %v439 = vld [vmem:[#allocation5 + $0xad0] sm:$0xff]
    %v440 = vld [vmem:[#allocation5 + $0xad8] sm:$0xff]
    %v441 = vld [vmem:[#allocation5 + $0xae0] sm:$0xf]
    %v442 = vld [vmem:[#allocation5 + $0xae4] sm:$0xff]
    %v443 = vld [vmem:[#allocation5 + $0xaec] sm:$0xff]
    %v444 = vld [vmem:[#allocation5 + $0xaf4] sm:$0xff]
    %v445 = vld [vmem:[#allocation5 + $0xafc] sm:$0xff]
    %v446 = vld [vmem:[#allocation5 + $0xb04] sm:$0xff]
    %v447 = vld [vmem:[#allocation5 + $0xb0c] sm:$0xff]
    %v448 = vld [vmem:[#allocation5 + $0xb14] sm:$0xff]
    %v449 = vld [vmem:[#allocation5 + $0xb1c] sm:$0xff]
    %v450 = vld [vmem:[#allocation5 + $0xb24] sm:$0xf]
    %v451 = vld [vmem:[#allocation5 + $0xb28] sm:$0xff]
    %v452 = vld [vmem:[#allocation5 + $0xb30] sm:$0xff]
    %v453 = vld [vmem:[#allocation5 + $0xb38] sm:$0xff]
    %v454 = vld [vmem:[#allocation5 + $0xb40] sm:$0xff]
    %v455 = vld [vmem:[#allocation5 + $0xb48] sm:$0xff]
    %v456 = vld [vmem:[#allocation5 + $0xb50] sm:$0xff]
    %v457 = vld [vmem:[#allocation5 + $0xb58] sm:$0xff]
    %v458 = vld [vmem:[#allocation5 + $0xb60] sm:$0xff]
    %v459 = vld [vmem:[#allocation5 + $0xb68] sm:$0xf]
    %v460 = vld [vmem:[#allocation5 + $0xb6c] sm:$0xff]
    %v461 = vld [vmem:[#allocation5 + $0xb74] sm:$0xff]
    %v462 = vld [vmem:[#allocation5 + $0xb7c] sm:$0xff]
    %v463 = vld [vmem:[#allocation5 + $0xb84] sm:$0xff]
    %v464 = vld [vmem:[#allocation5 + $0xb8c] sm:$0xff]
    %v465 = vld [vmem:[#allocation5 + $0xb94] sm:$0xff]
    %v466 = vld [vmem:[#allocation5 + $0xb9c] sm:$0xff]
    %v467 = vld [vmem:[#allocation5 + $0xba4] sm:$0xff]
    %v468 = vld [vmem:[#allocation5 + $0xbac] sm:$0xf]
    %v469 = vld [vmem:[#allocation5 + $0xbb0] sm:$0xff]
    %v470 = vld [vmem:[#allocation5 + $0xbb8] sm:$0xff]
    %v471 = vld [vmem:[#allocation5 + $0xbc0] sm:$0xff]
    %v472 = vld [vmem:[#allocation5 + $0xbc8] sm:$0xff]
    %v473 = vld [vmem:[#allocation5 + $0xbd0] sm:$0xff]
    %v474 = vld [vmem:[#allocation5 + $0xbd8] sm:$0xff]
    %v475 = vld [vmem:[#allocation5 + $0xbe0] sm:$0xff]
    %v476 = vld [vmem:[#allocation5 + $0xbe8] sm:$0xff]
    %v477 = vld [vmem:[#allocation5 + $0xbf0] sm:$0xf]
    %v478 = vld [vmem:[#allocation5 + $0xbf4] sm:$0xff]
    %v479 = vld [vmem:[#allocation5 + $0xbfc] sm:$0xff]
    %v480 = vld [vmem:[#allocation5 + $0xc04] sm:$0xff]
    %v481 = vld [vmem:[#allocation5 + $0xc0c] sm:$0xff]
    %v482 = vld [vmem:[#allocation5 + $0xc14] sm:$0xff]
    %v483 = vld [vmem:[#allocation5 + $0xc1c] sm:$0xff]
    %v484 = vld [vmem:[#allocation5 + $0xc24] sm:$0xff]
    %v485 = vld [vmem:[#allocation5 + $0xc2c] sm:$0xff]
    %v486 = vld [vmem:[#allocation5 + $0xc34] sm:$0xf]
    %v487 = vld [vmem:[#allocation5 + $0xc38] sm:$0xff]
    %v488 = vld [vmem:[#allocation5 + $0xc40] sm:$0xff]
    %v489 = vld [vmem:[#allocation5 + $0xc48] sm:$0xff]
    %v490 = vld [vmem:[#allocation5 + $0xc50] sm:$0xff]
    %v491 = vld [vmem:[#allocation5 + $0xc58] sm:$0xff]
    %v492 = vld [vmem:[#allocation5 + $0xc60] sm:$0xff]
    %v493 = vld [vmem:[#allocation5 + $0xc68] sm:$0xff]
    %v494 = vld [vmem:[#allocation5 + $0xc70] sm:$0xff]
    %v495 = vld [vmem:[#allocation5 + $0xc78] sm:$0xf]
    %v496 = vld [vmem:[#allocation5 + $0xc7c] sm:$0xff]
    %v497 = vld [vmem:[#allocation5 + $0xc84] sm:$0xff]
    %v498 = vld [vmem:[#allocation5 + $0xc8c] sm:$0xff]
    %v499 = vld [vmem:[#allocation5 + $0xc94] sm:$0xff]
    %v500 = vld [vmem:[#allocation5 + $0xc9c] sm:$0xff]
    %v501 = vld [vmem:[#allocation5 + $0xca4] sm:$0xff]
    %v502 = vld [vmem:[#allocation5 + $0xcac] sm:$0xff]
    %v503 = vld [vmem:[#allocation5 + $0xcb4] sm:$0xff]
    %v504 = vld [vmem:[#allocation5 + $0xcbc] sm:$0xf]
    %v505 = vld [vmem:[#allocation5 + $0xcc0] sm:$0xff]
    %v506 = vld [vmem:[#allocation5 + $0xcc8] sm:$0xff]
    %v507 = vld [vmem:[#allocation5 + $0xcd0] sm:$0xff]
    %v508 = vld [vmem:[#allocation5 + $0xcd8] sm:$0xff]
    %v509 = vld [vmem:[#allocation5 + $0xce0] sm:$0xff]
    %v510 = vld [vmem:[#allocation5 + $0xce8] sm:$0xff]
    %v511 = vld [vmem:[#allocation5 + $0xcf0] sm:$0xff]
    %v512 = vld [vmem:[#allocation5 + $0xcf8] sm:$0xff]
    %v513 = vld [vmem:[#allocation5 + $0xd00] sm:$0xf]
    %v514 = vld [vmem:[#allocation5 + $0xd04] sm:$0xff]
    %v515 = vld [vmem:[#allocation5 + $0xd0c] sm:$0xff]
    %v516 = vld [vmem:[#allocation5 + $0xd14] sm:$0xff]
    %v517 = vld [vmem:[#allocation5 + $0xd1c] sm:$0xff]
    %v518 = vld [vmem:[#allocation5 + $0xd24] sm:$0xff]
    %v519 = vld [vmem:[#allocation5 + $0xd2c] sm:$0xff]
    %v520 = vld [vmem:[#allocation5 + $0xd34] sm:$0xff]
    %v521 = vld [vmem:[#allocation5 + $0xd3c] sm:$0xff]
    %v522 = vld [vmem:[#allocation5 + $0xd44] sm:$0xf]
    %v523 = vld [vmem:[#allocation5 + $0xd48] sm:$0xff]
    %v524 = vld [vmem:[#allocation5 + $0xd50] sm:$0xff]
    %v525 = vld [vmem:[#allocation5 + $0xd58] sm:$0xff]
    %v526 = vld [vmem:[#allocation5 + $0xd60] sm:$0xff]
    %v527 = vld [vmem:[#allocation5 + $0xd68] sm:$0xff]
    %v528 = vld [vmem:[#allocation5 + $0xd70] sm:$0xff]
    %v529 = vld [vmem:[#allocation5 + $0xd78] sm:$0xff]
    %v530 = vld [vmem:[#allocation5 + $0xd80] sm:$0xff]
    %v531 = vld [vmem:[#allocation5 + $0xd88] sm:$0xf]
    %v532 = vld [vmem:[#allocation5 + $0xd8c] sm:$0xff]
    %v533 = vld [vmem:[#allocation5 + $0xd94] sm:$0xff]
    %v534 = vld [vmem:[#allocation5 + $0xd9c] sm:$0xff]
    %v535 = vld [vmem:[#allocation5 + $0xda4] sm:$0xff]
    %v536 = vld [vmem:[#allocation5 + $0xdac] sm:$0xff]
    %v537 = vld [vmem:[#allocation5 + $0xdb4] sm:$0xff]
    %v538 = vld [vmem:[#allocation5 + $0xdbc] sm:$0xff]
    %v539 = vld [vmem:[#allocation5 + $0xdc4] sm:$0xff]
    %v540 = vld [vmem:[#allocation5 + $0xdcc] sm:$0xf]
    %v541 = vld [vmem:[#allocation5 + $0xdd0] sm:$0xff]
    %v542 = vld [vmem:[#allocation5 + $0xdd8] sm:$0xff]
    %v543 = vld [vmem:[#allocation5 + $0xde0] sm:$0xff]
    %v544 = vld [vmem:[#allocation5 + $0xde8] sm:$0xff]
    %v545 = vld [vmem:[#allocation5 + $0xdf0] sm:$0xff]
    %v546 = vld [vmem:[#allocation5 + $0xdf8] sm:$0xff]
    %v547 = vld [vmem:[#allocation5 + $0xe00] sm:$0xff]
    %v548 = vld [vmem:[#allocation5 + $0xe08] sm:$0xff]
    %v549 = vld [vmem:[#allocation5 + $0xe10] sm:$0xf]
    %v550 = vld [vmem:[#allocation5 + $0xe14] sm:$0xff]
    %v551 = vld [vmem:[#allocation5 + $0xe1c] sm:$0xff]
    %v552 = vld [vmem:[#allocation5 + $0xe24] sm:$0xff]
    %v553 = vld [vmem:[#allocation5 + $0xe2c] sm:$0xff]
    %v554 = vld [vmem:[#allocation5 + $0xe34] sm:$0xff]
    %v555 = vld [vmem:[#allocation5 + $0xe3c] sm:$0xff]
    %v556 = vld [vmem:[#allocation5 + $0xe44] sm:$0xff]
    %v557 = vld [vmem:[#allocation5 + $0xe4c] sm:$0xff]
    %v558 = vld [vmem:[#allocation5 + $0xe54] sm:$0xf]
    %v559 = vld [vmem:[#allocation5 + $0xe58] sm:$0xff]
    %v560 = vld [vmem:[#allocation5 + $0xe60] sm:$0xff]
    %v561 = vld [vmem:[#allocation5 + $0xe68] sm:$0xff]
    %v562 = vld [vmem:[#allocation5 + $0xe70] sm:$0xff]
    %v563 = vld [vmem:[#allocation5 + $0xe78] sm:$0xff]
    %v564 = vld [vmem:[#allocation5 + $0xe80] sm:$0xff]
    %v565 = vld [vmem:[#allocation5 + $0xe88] sm:$0xff]
    %v566 = vld [vmem:[#allocation5 + $0xe90] sm:$0xff]
    %v567 = vld [vmem:[#allocation5 + $0xe98] sm:$0xf]
    %v568 = vld [vmem:[#allocation5 + $0xe9c] sm:$0xff]
    %v569 = vld [vmem:[#allocation5 + $0xea4] sm:$0xff]
    %v570 = vld [vmem:[#allocation5 + $0xeac] sm:$0xff]
    %v571 = vld [vmem:[#allocation5 + $0xeb4] sm:$0xff]
    %v572 = vld [vmem:[#allocation5 + $0xebc] sm:$0xff]
    %v573 = vld [vmem:[#allocation5 + $0xec4] sm:$0xff]
    %v574 = vld [vmem:[#allocation5 + $0xecc] sm:$0xff]
    %v575 = vld [vmem:[#allocation5 + $0xed4] sm:$0xff]
    %v576 = vld [vmem:[#allocation5 + $0xedc] sm:$0xf]
    %v577 = vld [vmem:[#allocation5 + $0xee0] sm:$0xff]
    %v578 = vld [vmem:[#allocation5 + $0xee8] sm:$0xff]
    %v579 = vld [vmem:[#allocation5 + $0xef0] sm:$0xff]
    %v580 = vld [vmem:[#allocation5 + $0xef8] sm:$0xff]
    %v581 = vld [vmem:[#allocation5 + $0xf00] sm:$0xff]
    %v582 = vld [vmem:[#allocation5 + $0xf08] sm:$0xff]
    %v583 = vld [vmem:[#allocation5 + $0xf10] sm:$0xff]
    %v584 = vld [vmem:[#allocation5 + $0xf18] sm:$0xff]
    %v585 = vld [vmem:[#allocation5 + $0xf20] sm:$0xf]
    %v586 = vld [vmem:[#allocation5 + $0xf24] sm:$0xff]
    %v587 = vld [vmem:[#allocation5 + $0xf2c] sm:$0xff]
    %v588 = vld [vmem:[#allocation5 + $0xf34] sm:$0xff]
    %v589 = vld [vmem:[#allocation5 + $0xf3c] sm:$0xff]
    %v590 = vld [vmem:[#allocation5 + $0xf44] sm:$0xff]
    %v591 = vld [vmem:[#allocation5 + $0xf4c] sm:$0xff]
    %v592 = vld [vmem:[#allocation5 + $0xf54] sm:$0xff]
    %v593 = vld [vmem:[#allocation5 + $0xf5c] sm:$0xff]
    %v594 = vld [vmem:[#allocation5 + $0xf64] sm:$0xf]
    %v595 = vld [vmem:[#allocation5 + $0xf68] sm:$0xff]
    %v596 = vld [vmem:[#allocation5 + $0xf70] sm:$0xff]
    %v597 = vld [vmem:[#allocation5 + $0xf78] sm:$0xff]
    %v598 = vld [vmem:[#allocation5 + $0xf80] sm:$0xff]
    %v599 = vld [vmem:[#allocation5 + $0xf88] sm:$0xff]
    %v600 = vld [vmem:[#allocation5 + $0xf90] sm:$0xff]
    %v601 = vld [vmem:[#allocation5 + $0xf98] sm:$0xff]
    %v602 = vld [vmem:[#allocation5 + $0xfa0] sm:$0xff]
    %v603 = vld [vmem:[#allocation5 + $0xfa8] sm:$0xf]
    %v604 = vld [vmem:[#allocation5 + $0xfac] sm:$0xff]
    %v605 = vld [vmem:[#allocation5 + $0xfb4] sm:$0xff]
    %v606 = vld [vmem:[#allocation5 + $0xfbc] sm:$0xff]
    %v607 = vld [vmem:[#allocation5 + $0xfc4] sm:$0xff]
    %v608 = vld [vmem:[#allocation5 + $0xfcc] sm:$0xff]
    %v609 = vld [vmem:[#allocation5 + $0xfd4] sm:$0xff]
    %v610 = vld [vmem:[#allocation5 + $0xfdc] sm:$0xff]
    %v611 = vld [vmem:[#allocation5 + $0xfe4] sm:$0xff]
    %v612 = vld [vmem:[#allocation5 + $0xfec] sm:$0xf]
    %v613 = vld [vmem:[#allocation5 + $0xff0] sm:$0xff]
    %v614 = vld [vmem:[#allocation5 + $0xff8] sm:$0xff]
    %v615 = vld [vmem:[#allocation5 + $0x1000] sm:$0xff]
    %v616 = vld [vmem:[#allocation5 + $0x1008] sm:$0xff]
    %v617 = vld [vmem:[#allocation5 + $0x1010] sm:$0xff]
    %v618 = vld [vmem:[#allocation5 + $0x1018] sm:$0xff]
    %v619 = vld [vmem:[#allocation5 + $0x1020] sm:$0xff]
    %v620 = vld [vmem:[#allocation5 + $0x1028] sm:$0xff]
    %v621 = vld [vmem:[#allocation5 + $0x1030] sm:$0xf]
    %v622 = vld [vmem:[#allocation5 + $0x1034] sm:$0xff]
    %v623 = vld [vmem:[#allocation5 + $0x103c] sm:$0xff]
    %v624 = vld [vmem:[#allocation5 + $0x1044] sm:$0xff]
    %v625 = vld [vmem:[#allocation5 + $0x104c] sm:$0xff]
    %v626 = vld [vmem:[#allocation5 + $0x1054] sm:$0xff]
    %v627 = vld [vmem:[#allocation5 + $0x105c] sm:$0xff]
    %v628 = vld [vmem:[#allocation5 + $0x1064] sm:$0xff]
    %v629 = vld [vmem:[#allocation5 + $0x106c] sm:$0xff]
    %v630 = vld [vmem:[#allocation5 + $0x1074] sm:$0xf]
    %v631 = vld [vmem:[#allocation5 + $0x1078] sm:$0xff]
    %v632 = vld [vmem:[#allocation5 + $0x1080] sm:$0xff]
    %v633 = vld [vmem:[#allocation5 + $0x1088] sm:$0xff]
    %v634 = vld [vmem:[#allocation5 + $0x1090] sm:$0xff]
    %v635 = vld [vmem:[#allocation5 + $0x1098] sm:$0xff]
    %v636 = vld [vmem:[#allocation5 + $0x10a0] sm:$0xff]
    %v637 = vld [vmem:[#allocation5 + $0x10a8] sm:$0xff]
    %v638 = vld [vmem:[#allocation5 + $0x10b0] sm:$0xff]
    %v639 = vld [vmem:[#allocation5 + $0x10b8] sm:$0xf]
    %v640 = vld [vmem:[#allocation5 + $0x10bc] sm:$0xff]
    %v641 = vld [vmem:[#allocation5 + $0x10c4] sm:$0xff]
    %v642 = vld [vmem:[#allocation5 + $0x10cc] sm:$0xff]
    %v643 = vld [vmem:[#allocation5 + $0x10d4] sm:$0xff]
    %v644 = vld [vmem:[#allocation5 + $0x10dc] sm:$0xff]
    %v645 = vld [vmem:[#allocation5 + $0x10e4] sm:$0xff]
    %v646 = vld [vmem:[#allocation5 + $0x10ec] sm:$0xff]
    %v647 = vld [vmem:[#allocation5 + $0x10f4] sm:$0xff]
    %v648 = vld [vmem:[#allocation5 + $0x10fc] sm:$0xf]
    %v649 = vld [vmem:[#allocation5 + $0x1100] sm:$0xff]
    %v650 = vld [vmem:[#allocation5 + $0x1108] sm:$0xff]
    %v651 = vld [vmem:[#allocation5 + $0x1110] sm:$0xff]
    %v652 = vld [vmem:[#allocation5 + $0x1118] sm:$0xff]
    %v653 = vld [vmem:[#allocation5 + $0x1120] sm:$0xff]
    %v654 = vld [vmem:[#allocation5 + $0x1128] sm:$0xff]
    %v655 = vld [vmem:[#allocation5 + $0x1130] sm:$0xff]
    %v656 = vld [vmem:[#allocation5 + $0x1138] sm:$0xff]
    %v657 = vld [vmem:[#allocation5 + $0x1140] sm:$0xf]
    %v658 = vld [vmem:[#allocation5 + $0x1144] sm:$0xff]
    %v659 = vld [vmem:[#allocation5 + $0x114c] sm:$0xff]
    %v660 = vld [vmem:[#allocation5 + $0x1154] sm:$0xff]
    %v661 = vld [vmem:[#allocation5 + $0x115c] sm:$0xff]
    %v662 = vld [vmem:[#allocation5 + $0x1164] sm:$0xff]
    %v663 = vld [vmem:[#allocation5 + $0x116c] sm:$0xff]
    %v664 = vld [vmem:[#allocation5 + $0x1174] sm:$0xff]
    %v665 = vld [vmem:[#allocation5 + $0x117c] sm:$0xff]
    %v666 = vld [vmem:[#allocation5 + $0x1184] sm:$0xf]
    %v667 = vld [vmem:[#allocation5 + $0x1188] sm:$0xff]
    %v668 = vld [vmem:[#allocation5 + $0x1190] sm:$0xff]
    %v669 = vld [vmem:[#allocation5 + $0x1198] sm:$0xff]
    %v670 = vld [vmem:[#allocation5 + $0x11a0] sm:$0xff]
    %v671 = vld [vmem:[#allocation5 + $0x11a8] sm:$0xff]
    %v672 = vld [vmem:[#allocation5 + $0x11b0] sm:$0xff]
    %v673 = vld [vmem:[#allocation5 + $0x11b8] sm:$0xff]
    %v674 = vld [vmem:[#allocation5 + $0x11c0] sm:$0xff]
    %v675 = vld [vmem:[#allocation5 + $0x11c8] sm:$0xf]
    %v676 = vld [vmem:[#allocation5 + $0x11cc] sm:$0xff]
    %v677 = vld [vmem:[#allocation5 + $0x11d4] sm:$0xff]
    %v678 = vld [vmem:[#allocation5 + $0x11dc] sm:$0xff]
    %v679 = vld [vmem:[#allocation5 + $0x11e4] sm:$0xff]
    %v680 = vld [vmem:[#allocation5 + $0x11ec] sm:$0xff]
    %v681 = vld [vmem:[#allocation5 + $0x11f4] sm:$0xff]
    %v682 = vld [vmem:[#allocation5 + $0x11fc] sm:$0xff]
    %v683 = vld [vmem:[#allocation5 + $0x1204] sm:$0xff]
    %v684 = vld [vmem:[#allocation5 + $0x120c] sm:$0xf]
    %v685 = vld [vmem:[#allocation5 + $0x1210] sm:$0xff]
    %v686 = vld [vmem:[#allocation5 + $0x1218] sm:$0xff]
    %v687 = vld [vmem:[#allocation5 + $0x1220] sm:$0xff]
    %v688 = vld [vmem:[#allocation5 + $0x1228] sm:$0xff]
    %v689 = vld [vmem:[#allocation5 + $0x1230] sm:$0xff]
    %v690 = vld [vmem:[#allocation5 + $0x1238] sm:$0xff]
    %v691 = vld [vmem:[#allocation5 + $0x1240] sm:$0xff]
    %v692 = vld [vmem:[#allocation5 + $0x1248] sm:$0xff]
    %v693 = vld [vmem:[#allocation5 + $0x1250] sm:$0xf]
    %v694 = vld [vmem:[#allocation5 + $0x1254] sm:$0xff]
    %v695 = vld [vmem:[#allocation5 + $0x125c] sm:$0xff]
    %v696 = vld [vmem:[#allocation5 + $0x1264] sm:$0xff]
    %v697 = vld [vmem:[#allocation5 + $0x126c] sm:$0xff]
    %v698 = vld [vmem:[#allocation5 + $0x1274] sm:$0xff]
    %v699 = vld [vmem:[#allocation5 + $0x127c] sm:$0xff]
    %v700 = vld [vmem:[#allocation5 + $0x1284] sm:$0xff]
    %v701 = vld [vmem:[#allocation5 + $0x128c] sm:$0xff]
    %v702 = vld [vmem:[#allocation5 + $0x1294] sm:$0xf]
    %v703 = vld [vmem:[#allocation5 + $0x1298] sm:$0xff]
    %v704 = vld [vmem:[#allocation5 + $0x12a0] sm:$0xff]
    %v705 = vld [vmem:[#allocation5 + $0x12a8] sm:$0xff]
    %v706 = vld [vmem:[#allocation5 + $0x12b0] sm:$0xff]
    %v707 = vld [vmem:[#allocation5 + $0x12b8] sm:$0xff]
    %v708 = vld [vmem:[#allocation5 + $0x12c0] sm:$0xff]
    %v709 = vld [vmem:[#allocation5 + $0x12c8] sm:$0xff]
    %v710 = vld [vmem:[#allocation5 + $0x12d0] sm:$0xff]
    %v711 = vld [vmem:[#allocation5 + $0x12d8] sm:$0xf]
    %v712 = vld [vmem:[#allocation5 + $0x12dc] sm:$0xff]
    %v713 = vld [vmem:[#allocation5 + $0x12e4] sm:$0xff]
    %v714 = vld [vmem:[#allocation5 + $0x12ec] sm:$0xff]
    %v715 = vld [vmem:[#allocation5 + $0x12f4] sm:$0xff]
    %v716 = vld [vmem:[#allocation5 + $0x12fc] sm:$0xff]
    %v717 = vld [vmem:[#allocation5 + $0x1304] sm:$0xff]
    %v718 = vld [vmem:[#allocation5 + $0x130c] sm:$0xff]
    %v719 = vld [vmem:[#allocation5 + $0x1314] sm:$0xff]
    %v720 = vld [vmem:[#allocation5 + $0x131c] sm:$0xf]
    %v721 = vld [vmem:[#allocation5 + $0x1320] sm:$0xff]
    %v722 = vld [vmem:[#allocation5 + $0x1328] sm:$0xff]
    %v723 = vld [vmem:[#allocation5 + $0x1330] sm:$0xff]
    %v724 = vld [vmem:[#allocation5 + $0x1338] sm:$0xff]
    %v725 = vld [vmem:[#allocation5 + $0x1340] sm:$0xff]
    %v726 = vld [vmem:[#allocation5 + $0x1348] sm:$0xff]
    %v727 = vld [vmem:[#allocation5 + $0x1350] sm:$0xff]
    %v728 = vld [vmem:[#allocation5 + $0x1358] sm:$0xff]
    %v729 = vld [vmem:[#allocation5 + $0x1360] sm:$0xf]
    %v730 = vld [vmem:[#allocation5 + $0x1364] sm:$0xff]
    %v731 = vld [vmem:[#allocation5 + $0x136c] sm:$0xff]
    %v732 = vld [vmem:[#allocation5 + $0x1374] sm:$0xff]
    %v733 = vld [vmem:[#allocation5 + $0x137c] sm:$0xff]
    %v734 = vld [vmem:[#allocation5 + $0x1384] sm:$0xff]
    %v735 = vld [vmem:[#allocation5 + $0x138c] sm:$0xff]
    %v736 = vld [vmem:[#allocation5 + $0x1394] sm:$0xff]
    %v737 = vld [vmem:[#allocation5 + $0x139c] sm:$0xff]
    %v738 = vld [vmem:[#allocation5 + $0x13a4] sm:$0xf]
    %v739 = vld [vmem:[#allocation5 + $0x13a8] sm:$0xff]
    %v740 = vld [vmem:[#allocation5 + $0x13b0] sm:$0xff]
    %v741 = vld [vmem:[#allocation5 + $0x13b8] sm:$0xff]
    %v742 = vld [vmem:[#allocation5 + $0x13c0] sm:$0xff]
    %v743 = vld [vmem:[#allocation5 + $0x13c8] sm:$0xff]
    %v744 = vld [vmem:[#allocation5 + $0x13d0] sm:$0xff]
    %v745 = vld [vmem:[#allocation5 + $0x13d8] sm:$0xff]
    %v746 = vld [vmem:[#allocation5 + $0x13e0] sm:$0xff]
    %v747 = vld [vmem:[#allocation5 + $0x13e8] sm:$0xf]
    %v748 = vld [vmem:[#allocation5 + $0x13ec] sm:$0xff]
    %v749 = vld [vmem:[#allocation5 + $0x13f4] sm:$0xff]
    %v750 = vld [vmem:[#allocation5 + $0x13fc] sm:$0xff]
    %v751 = vld [vmem:[#allocation5 + $0x1404] sm:$0xff]
    %v752 = vld [vmem:[#allocation5 + $0x140c] sm:$0xff]
    %v753 = vld [vmem:[#allocation5 + $0x1414] sm:$0xff]
    %v754 = vld [vmem:[#allocation5 + $0x141c] sm:$0xff]
    %v755 = vld [vmem:[#allocation5 + $0x1424] sm:$0xff]
    %v756 = vld [vmem:[#allocation5 + $0x142c] sm:$0xf]
    %v757 = vld [vmem:[#allocation5 + $0x1430] sm:$0xff]
    %v758 = vld [vmem:[#allocation5 + $0x1438] sm:$0xff]
    %v759 = vld [vmem:[#allocation5 + $0x1440] sm:$0xff]
    %v760 = vld [vmem:[#allocation5 + $0x1448] sm:$0xff]
    %v761 = vld [vmem:[#allocation5 + $0x1450] sm:$0xff]
    %v762 = vld [vmem:[#allocation5 + $0x1458] sm:$0xff]
    %v763 = vld [vmem:[#allocation5 + $0x1460] sm:$0xff]
    %v764 = vld [vmem:[#allocation5 + $0x1468] sm:$0xff]
    %v765 = vld [vmem:[#allocation5 + $0x1470] sm:$0xf]
    %v766 = vld [vmem:[#allocation5 + $0x1474] sm:$0xff]
    %v767 = vld [vmem:[#allocation5 + $0x147c] sm:$0xff]
    %v768 = vld [vmem:[#allocation5 + $0x1484] sm:$0xff]
    %v769 = vld [vmem:[#allocation5 + $0x148c] sm:$0xff]
    %v770 = vld [vmem:[#allocation5 + $0x1494] sm:$0xff]
    %v771 = vld [vmem:[#allocation5 + $0x149c] sm:$0xff]
    %v772 = vld [vmem:[#allocation5 + $0x14a4] sm:$0xff]
    %v773 = vld [vmem:[#allocation5 + $0x14ac] sm:$0xff]
    %v774 = vld [vmem:[#allocation5 + $0x14b4] sm:$0xf]
    %v775 = vld [vmem:[#allocation5 + $0x14b8] sm:$0xff]
    %v776 = vld [vmem:[#allocation5 + $0x14c0] sm:$0xff]
    %v777 = vld [vmem:[#allocation5 + $0x14c8] sm:$0xff]
    %v778 = vld [vmem:[#allocation5 + $0x14d0] sm:$0xff]
    %v779 = vld [vmem:[#allocation5 + $0x14d8] sm:$0xff]
    %v780 = vld [vmem:[#allocation5 + $0x14e0] sm:$0xff]
    %v781 = vld [vmem:[#allocation5 + $0x14e8] sm:$0xff]
    %v782 = vld [vmem:[#allocation5 + $0x14f0] sm:$0xff]
    %v783 = vld [vmem:[#allocation5 + $0x14f8] sm:$0xf]
    %v784 = vld [vmem:[#allocation5 + $0x14fc] sm:$0xff]
    %v785 = vld [vmem:[#allocation5 + $0x1504] sm:$0xff]
    %v786 = vld [vmem:[#allocation5 + $0x150c] sm:$0xff]
    %v787 = vld [vmem:[#allocation5 + $0x1514] sm:$0xff]
    %v788 = vld [vmem:[#allocation5 + $0x151c] sm:$0xff]
    %v789 = vld [vmem:[#allocation5 + $0x1524] sm:$0xff]
    %v790 = vld [vmem:[#allocation5 + $0x152c] sm:$0xff]
    %v791 = vld [vmem:[#allocation5 + $0x1534] sm:$0xff]
    %v792 = vld [vmem:[#allocation5 + $0x153c] sm:$0xf]
    %v793 = vld [vmem:[#allocation5 + $0x1540] sm:$0xff]
    %v794 = vld [vmem:[#allocation5 + $0x1548] sm:$0xff]
    %v795 = vld [vmem:[#allocation5 + $0x1550] sm:$0xff]
    %v796 = vld [vmem:[#allocation5 + $0x1558] sm:$0xff]
    %v797 = vld [vmem:[#allocation5 + $0x1560] sm:$0xff]
    %v798 = vld [vmem:[#allocation5 + $0x1568] sm:$0xff]
    %v799 = vld [vmem:[#allocation5 + $0x1570] sm:$0xff]
    %v800 = vld [vmem:[#allocation5 + $0x1578] sm:$0xff]
    %v801 = vld [vmem:[#allocation5 + $0x1580] sm:$0xf]
    %v802 = vld [vmem:[#allocation5 + $0x1584] sm:$0xff]
    %v803 = vld [vmem:[#allocation5 + $0x158c] sm:$0xff]
    %v804 = vld [vmem:[#allocation5 + $0x1594] sm:$0xff]
    %v805 = vld [vmem:[#allocation5 + $0x159c] sm:$0xff]
    %v806 = vld [vmem:[#allocation5 + $0x15a4] sm:$0xff]
    %v807 = vld [vmem:[#allocation5 + $0x15ac] sm:$0xff]
    %v808 = vld [vmem:[#allocation5 + $0x15b4] sm:$0xff]
    %v809 = vld [vmem:[#allocation5 + $0x15bc] sm:$0xff]
    %v810 = vld [vmem:[#allocation5 + $0x15c4] sm:$0xf]
    %v811 = vld [vmem:[#allocation5 + $0x15c8] sm:$0xff]
    %v812 = vld [vmem:[#allocation5 + $0x15d0] sm:$0xff]
    %v813 = vld [vmem:[#allocation5 + $0x15d8] sm:$0xff]
    %v814 = vld [vmem:[#allocation5 + $0x15e0] sm:$0xff]
    %v815 = vld [vmem:[#allocation5 + $0x15e8] sm:$0xff]
    %v816 = vld [vmem:[#allocation5 + $0x15f0] sm:$0xff]
    %v817 = vld [vmem:[#allocation5 + $0x15f8] sm:$0xff]
    %v818 = vld [vmem:[#allocation5 + $0x1600] sm:$0xff]
    %v819 = vld [vmem:[#allocation5 + $0x1608] sm:$0xf]
    %v820 = vld [vmem:[#allocation5 + $0x160c] sm:$0xff]
    %v821 = vld [vmem:[#allocation5 + $0x1614] sm:$0xff]
    %v822 = vld [vmem:[#allocation5 + $0x161c] sm:$0xff]
    %v823 = vld [vmem:[#allocation5 + $0x1624] sm:$0xff]
    %v824 = vld [vmem:[#allocation5 + $0x162c] sm:$0xff]
    %v825 = vld [vmem:[#allocation5 + $0x1634] sm:$0xff]
    %v826 = vld [vmem:[#allocation5 + $0x163c] sm:$0xff]
    %v827 = vld [vmem:[#allocation5 + $0x1644] sm:$0xff]
    %v828 = vld [vmem:[#allocation5 + $0x164c] sm:$0xf]
    %v829 = vld [vmem:[#allocation5 + $0x1650] sm:$0xff]
    %v830 = vld [vmem:[#allocation5 + $0x1658] sm:$0xff]
    %v831 = vld [vmem:[#allocation5 + $0x1660] sm:$0xff]
    %v832 = vld [vmem:[#allocation5 + $0x1668] sm:$0xff]
    %v833 = vld [vmem:[#allocation5 + $0x1670] sm:$0xff]
    %v834 = vld [vmem:[#allocation5 + $0x1678] sm:$0xff]
    %v835 = vld [vmem:[#allocation5 + $0x1680] sm:$0xff]
    %v836 = vld [vmem:[#allocation5 + $0x1688] sm:$0xff]
    %v837 = vld [vmem:[#allocation5 + $0x1690] sm:$0xf]
    %v838 = vld [vmem:[#allocation5 + $0x1694] sm:$0xff]
    %v839 = vld [vmem:[#allocation5 + $0x169c] sm:$0xff]
    %v840 = vld [vmem:[#allocation5 + $0x16a4] sm:$0xff]
    %v841 = vld [vmem:[#allocation5 + $0x16ac] sm:$0xff]
    %v842 = vld [vmem:[#allocation5 + $0x16b4] sm:$0xff]
    %v843 = vld [vmem:[#allocation5 + $0x16bc] sm:$0xff]
    %v844 = vld [vmem:[#allocation5 + $0x16c4] sm:$0xff]
    %v845 = vld [vmem:[#allocation5 + $0x16cc] sm:$0xff]
    %v846 = vld [vmem:[#allocation5 + $0x16d4] sm:$0xf]
    %v847 = vld [vmem:[#allocation5 + $0x16d8] sm:$0xff]
    %v848 = vld [vmem:[#allocation5 + $0x16e0] sm:$0xff]
    %v849 = vld [vmem:[#allocation5 + $0x16e8] sm:$0xff]
    %v850 = vld [vmem:[#allocation5 + $0x16f0] sm:$0xff]
    %v851 = vld [vmem:[#allocation5 + $0x16f8] sm:$0xff]
    %v852 = vld [vmem:[#allocation5 + $0x1700] sm:$0xff]
    %v853 = vld [vmem:[#allocation5 + $0x1708] sm:$0xff]
    %v854 = vld [vmem:[#allocation5 + $0x1710] sm:$0xff]
    %v855 = vld [vmem:[#allocation5 + $0x1718] sm:$0xf]
    %v856 = vld [vmem:[#allocation5 + $0x171c] sm:$0xff]
    %v857 = vld [vmem:[#allocation5 + $0x1724] sm:$0xff]
    %v858 = vld [vmem:[#allocation5 + $0x172c] sm:$0xff]
    %v859 = vld [vmem:[#allocation5 + $0x1734] sm:$0xff]
    %v860 = vld [vmem:[#allocation5 + $0x173c] sm:$0xff]
    %v861 = vld [vmem:[#allocation5 + $0x1744] sm:$0xff]
    %v862 = vld [vmem:[#allocation5 + $0x174c] sm:$0xff]
    %v863 = vld [vmem:[#allocation5 + $0x1754] sm:$0xff]
    %v864 = vld [vmem:[#allocation5 + $0x175c] sm:$0xf]
    %v865 = vld [vmem:[#allocation5 + $0x1760] sm:$0xff]
    %v866 = vld [vmem:[#allocation5 + $0x1768] sm:$0xff]
    %v867 = vld [vmem:[#allocation5 + $0x1770] sm:$0xff]
    %v868 = vld [vmem:[#allocation5 + $0x1778] sm:$0xff]
    %v869 = vld [vmem:[#allocation5 + $0x1780] sm:$0xff]
    %v870 = vld [vmem:[#allocation5 + $0x1788] sm:$0xff]
    %v871 = vld [vmem:[#allocation5 + $0x1790] sm:$0xff]
    %v872 = vld [vmem:[#allocation5 + $0x1798] sm:$0xff]
    %v873 = vld [vmem:[#allocation5 + $0x17a0] sm:$0xf]
    %v874 = vld [vmem:[#allocation5 + $0x17a4] sm:$0xff]
    %v875 = vld [vmem:[#allocation5 + $0x17ac] sm:$0xff]
    %v876 = vld [vmem:[#allocation5 + $0x17b4] sm:$0xff]
    %v877 = vld [vmem:[#allocation5 + $0x17bc] sm:$0xff]
    %v878 = vld [vmem:[#allocation5 + $0x17c4] sm:$0xff]
    %v879 = vld [vmem:[#allocation5 + $0x17cc] sm:$0xff]
    %v880 = vld [vmem:[#allocation5 + $0x17d4] sm:$0xff]
    %v881 = vld [vmem:[#allocation5 + $0x17dc] sm:$0xff]
    %v882 = vld [vmem:[#allocation5 + $0x17e4] sm:$0xf]
    %v883 = vld [vmem:[#allocation5 + $0x17e8] sm:$0xff]
    %v884 = vld [vmem:[#allocation5 + $0x17f0] sm:$0xff]
    %v885 = vld [vmem:[#allocation5 + $0x17f8] sm:$0xff]
    %v886 = vld [vmem:[#allocation5 + $0x1800] sm:$0xff]
    %v887 = vld [vmem:[#allocation5 + $0x1808] sm:$0xff]
    %v888 = vld [vmem:[#allocation5 + $0x1810] sm:$0xff]
    %v889 = vld [vmem:[#allocation5 + $0x1818] sm:$0xff]
    %v890 = vld [vmem:[#allocation5 + $0x1820] sm:$0xff]
    %v891 = vld [vmem:[#allocation5 + $0x1828] sm:$0xf]
    %v892 = vld [vmem:[#allocation5 + $0x182c] sm:$0xff]
    %v893 = vld [vmem:[#allocation5 + $0x1834] sm:$0xff]
    %v894 = vld [vmem:[#allocation5 + $0x183c] sm:$0xff]
    %v895 = vld [vmem:[#allocation5 + $0x1844] sm:$0xff]
    %v896 = vld [vmem:[#allocation5 + $0x184c] sm:$0xff]
    %v897 = vld [vmem:[#allocation5 + $0x1854] sm:$0xff]
    %v898 = vld [vmem:[#allocation5 + $0x185c] sm:$0xff]
    %v899 = vld [vmem:[#allocation5 + $0x1864] sm:$0xff]
    %v900 = vld [vmem:[#allocation5 + $0x186c] sm:$0xf]
    %v901 = vld [vmem:[#allocation5 + $0x1870] sm:$0xff]
    %v902 = vld [vmem:[#allocation5 + $0x1878] sm:$0xff]
    %v903 = vld [vmem:[#allocation5 + $0x1880] sm:$0xff]
    %v904 = vld [vmem:[#allocation5 + $0x1888] sm:$0xff]
    %v905 = vld [vmem:[#allocation5 + $0x1890] sm:$0xff]
    %v906 = vld [vmem:[#allocation5 + $0x1898] sm:$0xff]
    %v907 = vld [vmem:[#allocation5 + $0x18a0] sm:$0xff]
    %v908 = vld [vmem:[#allocation5 + $0x18a8] sm:$0xff]
    %v909 = vld [vmem:[#allocation5 + $0x18b0] sm:$0xf]
    %v910 = vld [vmem:[#allocation5 + $0x18b4] sm:$0xff]
    %v911 = vld [vmem:[#allocation5 + $0x18bc] sm:$0xff]
    %v912 = vld [vmem:[#allocation5 + $0x18c4] sm:$0xff]
    %v913 = vld [vmem:[#allocation5 + $0x18cc] sm:$0xff]
    %v914 = vld [vmem:[#allocation5 + $0x18d4] sm:$0xff]
    %v915 = vld [vmem:[#allocation5 + $0x18dc] sm:$0xff]
    %v916 = vld [vmem:[#allocation5 + $0x18e4] sm:$0xff]
    %v917 = vld [vmem:[#allocation5 + $0x18ec] sm:$0xff]
    %v918 = vld [vmem:[#allocation5 + $0x18f4] sm:$0xf]
    %v919 = vld [vmem:[#allocation5 + $0x18f8] sm:$0xff]
    %v920 = vld [vmem:[#allocation5 + $0x1900] sm:$0xff]
    %v921 = vld [vmem:[#allocation5 + $0x1908] sm:$0xff]
    %v922 = vld [vmem:[#allocation5 + $0x1910] sm:$0xff]
    %v923 = vld [vmem:[#allocation5 + $0x1918] sm:$0xff]
    %v924 = vld [vmem:[#allocation5 + $0x1920] sm:$0xff]
    %v925 = vld [vmem:[#allocation5 + $0x1928] sm:$0xff]
    %v926 = vld [vmem:[#allocation5 + $0x1930] sm:$0xff]
    %v927 = vld [vmem:[#allocation5 + $0x1938] sm:$0xf]
    %v928 = vld [vmem:[#allocation5 + $0x193c] sm:$0xff]
    %v929 = vld [vmem:[#allocation5 + $0x1944] sm:$0xff]
    %v930 = vld [vmem:[#allocation5 + $0x194c] sm:$0xff]
    %v931 = vld [vmem:[#allocation5 + $0x1954] sm:$0xff]
    %v932 = vld [vmem:[#allocation5 + $0x195c] sm:$0xff]
    %v933 = vld [vmem:[#allocation5 + $0x1964] sm:$0xff]
    %v934 = vld [vmem:[#allocation5 + $0x196c] sm:$0xff]
    %v935 = vld [vmem:[#allocation5 + $0x1974] sm:$0xff]
    %v936 = vld [vmem:[#allocation5 + $0x197c] sm:$0xf]
    %v937 = vld [vmem:[#allocation5 + $0x1980] sm:$0xff]
    %v938 = vld [vmem:[#allocation5 + $0x1988] sm:$0xff]
    %v939 = vld [vmem:[#allocation5 + $0x1990] sm:$0xff]
    %v940 = vld [vmem:[#allocation5 + $0x1998] sm:$0xff]
    %v941 = vld [vmem:[#allocation5 + $0x19a0] sm:$0xff]
    %v942 = vld [vmem:[#allocation5 + $0x19a8] sm:$0xff]
    %v943 = vld [vmem:[#allocation5 + $0x19b0] sm:$0xff]
    %v944 = vld [vmem:[#allocation5 + $0x19b8] sm:$0xff]
    %v945 = vld [vmem:[#allocation5 + $0x19c0] sm:$0xf]
    %v946 = vld [vmem:[#allocation5 + $0x19c4] sm:$0xff]
    %v947 = vld [vmem:[#allocation5 + $0x19cc] sm:$0xff]
    %v948 = vld [vmem:[#allocation5 + $0x19d4] sm:$0xff]
    %v949 = vld [vmem:[#allocation5 + $0x19dc] sm:$0xff]
    %v950 = vld [vmem:[#allocation5 + $0x19e4] sm:$0xff]
    %v951 = vld [vmem:[#allocation5 + $0x19ec] sm:$0xff]
    %v952 = vld [vmem:[#allocation5 + $0x19f4] sm:$0xff]
    %v953 = vld [vmem:[#allocation5 + $0x19fc] sm:$0xff]
    %v954 = vld [vmem:[#allocation5 + $0x1a04] sm:$0xf]
    %v955 = vld [vmem:[#allocation5 + $0x1a08] sm:$0xff]
    %v956 = vld [vmem:[#allocation5 + $0x1a10] sm:$0xff]
    %v957 = vld [vmem:[#allocation5 + $0x1a18] sm:$0xff]
    %v958 = vld [vmem:[#allocation5 + $0x1a20] sm:$0xff]
    %v959 = vld [vmem:[#allocation5 + $0x1a28] sm:$0xff]
    %v960 = vld [vmem:[#allocation5 + $0x1a30] sm:$0xff]
    %v961 = vld [vmem:[#allocation5 + $0x1a38] sm:$0xff]
    %v962 = vld [vmem:[#allocation5 + $0x1a40] sm:$0xff]
    %v963 = vld [vmem:[#allocation5 + $0x1a48] sm:$0xf]
    %v964 = vld [vmem:[#allocation5 + $0x1a4c] sm:$0xff]
    %v965 = vld [vmem:[#allocation5 + $0x1a54] sm:$0xff]
    %v966 = vld [vmem:[#allocation5 + $0x1a5c] sm:$0xff]
    %v967 = vld [vmem:[#allocation5 + $0x1a64] sm:$0xff]
    %v968 = vld [vmem:[#allocation5 + $0x1a6c] sm:$0xff]
    %v969 = vld [vmem:[#allocation5 + $0x1a74] sm:$0xff]
    %v970 = vld [vmem:[#allocation5 + $0x1a7c] sm:$0xff]
    %v971 = vld [vmem:[#allocation5 + $0x1a84] sm:$0xff]
    %v972 = vld [vmem:[#allocation5 + $0x1a8c] sm:$0xf]
    %v973 = vld [vmem:[#allocation5 + $0x1a90] sm:$0xff]
    %v974 = vld [vmem:[#allocation5 + $0x1a98] sm:$0xff]
    %v975 = vld [vmem:[#allocation5 + $0x1aa0] sm:$0xff]
    %v976 = vld [vmem:[#allocation5 + $0x1aa8] sm:$0xff]
    %v977 = vld [vmem:[#allocation5 + $0x1ab0] sm:$0xff]
    %v978 = vld [vmem:[#allocation5 + $0x1ab8] sm:$0xff]
    %v979 = vld [vmem:[#allocation5 + $0x1ac0] sm:$0xff]
    %v980 = vld [vmem:[#allocation5 + $0x1ac8] sm:$0xff]
    %v981 = vld [vmem:[#allocation5 + $0x1ad0] sm:$0xf]
    %v982 = vld [vmem:[#allocation5 + $0x1ad4] sm:$0xff]
    %v983 = vld [vmem:[#allocation5 + $0x1adc] sm:$0xff]
    %v984 = vld [vmem:[#allocation5 + $0x1ae4] sm:$0xff]
    %v985 = vld [vmem:[#allocation5 + $0x1aec] sm:$0xff]
    %v986 = vld [vmem:[#allocation5 + $0x1af4] sm:$0xff]
    %v987 = vld [vmem:[#allocation5 + $0x1afc] sm:$0xff]
    %v988 = vld [vmem:[#allocation5 + $0x1b04] sm:$0xff]
    %v989 = vld [vmem:[#allocation5 + $0x1b0c] sm:$0xff]
    %v990 = vld [vmem:[#allocation5 + $0x1b14] sm:$0xf]
    %v991 = vld [vmem:[#allocation5 + $0x1b18] sm:$0xff]
    %v992 = vld [vmem:[#allocation5 + $0x1b20] sm:$0xff]
    %v993 = vld [vmem:[#allocation5 + $0x1b28] sm:$0xff]
    %v994 = vld [vmem:[#allocation5 + $0x1b30] sm:$0xff]
    %v995 = vld [vmem:[#allocation5 + $0x1b38] sm:$0xff]
    %v996 = vld [vmem:[#allocation5 + $0x1b40] sm:$0xff]
    %v997 = vld [vmem:[#allocation5 + $0x1b48] sm:$0xff]
    %v998 = vld [vmem:[#allocation5 + $0x1b50] sm:$0xff]
    %v999 = vld [vmem:[#allocation5 + $0x1b58] sm:$0xf]
    %v1000 = vld [vmem:[#allocation5 + $0x1b5c] sm:$0xff]
    %v1001 = vld [vmem:[#allocation5 + $0x1b64] sm:$0xff]
    %v1002 = vld [vmem:[#allocation5 + $0x1b6c] sm:$0xff]
    %v1003 = vld [vmem:[#allocation5 + $0x1b74] sm:$0xff]
    %v1004 = vld [vmem:[#allocation5 + $0x1b7c] sm:$0xff]
    %v1005 = vld [vmem:[#allocation5 + $0x1b84] sm:$0xff]
    %v1006 = vld [vmem:[#allocation5 + $0x1b8c] sm:$0xff]
    %v1007 = vld [vmem:[#allocation5 + $0x1b94] sm:$0xff]
    %v1008 = vld [vmem:[#allocation5 + $0x1b9c] sm:$0xf]
    %v1009 = vld [vmem:[#allocation5 + $0x1ba0] sm:$0xff]
    %v1010 = vld [vmem:[#allocation5 + $0x1ba8] sm:$0xff]
    %v1011 = vld [vmem:[#allocation5 + $0x1bb0] sm:$0xff]
    %v1012 = vld [vmem:[#allocation5 + $0x1bb8] sm:$0xff]
    %v1013 = vld [vmem:[#allocation5 + $0x1bc0] sm:$0xff]
    %v1014 = vld [vmem:[#allocation5 + $0x1bc8] sm:$0xff]
    %v1015 = vld [vmem:[#allocation5 + $0x1bd0] sm:$0xff]
    %v1016 = vld [vmem:[#allocation5 + $0x1bd8] sm:$0xff]
    %v1017 = vld [vmem:[#allocation5 + $0x1be0] sm:$0xf]
    %v1018 = vld [vmem:[#allocation5 + $0x1be4] sm:$0xff]
    %v1019 = vld [vmem:[#allocation5 + $0x1bec] sm:$0xff]
    %v1020 = vld [vmem:[#allocation5 + $0x1bf4] sm:$0xff]
    %v1021 = vld [vmem:[#allocation5 + $0x1bfc] sm:$0xff]
    %v1022 = vld [vmem:[#allocation5 + $0x1c04] sm:$0xff]
    %v1023 = vld [vmem:[#allocation5 + $0x1c0c] sm:$0xff]
    %v1024 = vld [vmem:[#allocation5 + $0x1c14] sm:$0xff]
    %v1025 = vld [vmem:[#allocation5 + $0x1c1c] sm:$0xff]
    %v1026 = vld [vmem:[#allocation5 + $0x1c24] sm:$0xf]
    %v1027 = vld [vmem:[#allocation5 + $0x1c28] sm:$0xff]
    %v1028 = vld [vmem:[#allocation5 + $0x1c30] sm:$0xff]
    %v1029 = vld [vmem:[#allocation5 + $0x1c38] sm:$0xff]
    %v1030 = vld [vmem:[#allocation5 + $0x1c40] sm:$0xff]
    %v1031 = vld [vmem:[#allocation5 + $0x1c48] sm:$0xff]
    %v1032 = vld [vmem:[#allocation5 + $0x1c50] sm:$0xff]
    %v1033 = vld [vmem:[#allocation5 + $0x1c58] sm:$0xff]
    %v1034 = vld [vmem:[#allocation5 + $0x1c60] sm:$0xff]
    %v1035 = vld [vmem:[#allocation5 + $0x1c68] sm:$0xf]
    %v1036 = vld [vmem:[#allocation5 + $0x1c6c] sm:$0xff]
    %v1037 = vld [vmem:[#allocation5 + $0x1c74] sm:$0xff]
    %v1038 = vld [vmem:[#allocation5 + $0x1c7c] sm:$0xff]
    %v1039 = vld [vmem:[#allocation5 + $0x1c84] sm:$0xff]
    %v1040 = vld [vmem:[#allocation5 + $0x1c8c] sm:$0xff]
    %v1041 = vld [vmem:[#allocation5 + $0x1c94] sm:$0xff]
    %v1042 = vld [vmem:[#allocation5 + $0x1c9c] sm:$0xff]
    %v1043 = vld [vmem:[#allocation5 + $0x1ca4] sm:$0xff]
    %v1044 = vld [vmem:[#allocation5 + $0x1cac] sm:$0xf]
    %v1045 = vld [vmem:[#allocation5 + $0x1cb0] sm:$0xff]
    %v1046 = vld [vmem:[#allocation5 + $0x1cb8] sm:$0xff]
    %v1047 = vld [vmem:[#allocation5 + $0x1cc0] sm:$0xff]
    %v1048 = vld [vmem:[#allocation5 + $0x1cc8] sm:$0xff]
    %v1049 = vld [vmem:[#allocation5 + $0x1cd0] sm:$0xff]
    %v1050 = vld [vmem:[#allocation5 + $0x1cd8] sm:$0xff]
    %v1051 = vld [vmem:[#allocation5 + $0x1ce0] sm:$0xff]
    %v1052 = vld [vmem:[#allocation5 + $0x1ce8] sm:$0xff]
    %v1053 = vld [vmem:[#allocation5 + $0x1cf0] sm:$0xf]
    %v1054 = vld [vmem:[#allocation5 + $0x1cf4] sm:$0xff]
    %v1055 = vld [vmem:[#allocation5 + $0x1cfc] sm:$0xff]
    %v1056 = vld [vmem:[#allocation5 + $0x1d04] sm:$0xff]
    %v1057 = vld [vmem:[#allocation5 + $0x1d0c] sm:$0xff]
    %v1058 = vld [vmem:[#allocation5 + $0x1d14] sm:$0xff]
    %v1059 = vld [vmem:[#allocation5 + $0x1d1c] sm:$0xff]
    %v1060 = vld [vmem:[#allocation5 + $0x1d24] sm:$0xff]
    %v1061 = vld [vmem:[#allocation5 + $0x1d2c] sm:$0xff]
    %v1062 = vld [vmem:[#allocation5 + $0x1d34] sm:$0xf]
    %v1063 = vld [vmem:[#allocation5 + $0x1d38] sm:$0xff]
    %v1064 = vld [vmem:[#allocation5 + $0x1d40] sm:$0xff]
    %v1065 = vld [vmem:[#allocation5 + $0x1d48] sm:$0xff]
    %v1066 = vld [vmem:[#allocation5 + $0x1d50] sm:$0xff]
    %v1067 = vld [vmem:[#allocation5 + $0x1d58] sm:$0xff]
    %v1068 = vld [vmem:[#allocation5 + $0x1d60] sm:$0xff]
    %v1069 = vld [vmem:[#allocation5 + $0x1d68] sm:$0xff]
    %v1070 = vld [vmem:[#allocation5 + $0x1d70] sm:$0xff]
    %v1071 = vld [vmem:[#allocation5 + $0x1d78] sm:$0xf]
    %v1072 = vld [vmem:[#allocation5 + $0x1d7c] sm:$0xff]
    %v1073 = vld [vmem:[#allocation5 + $0x1d84] sm:$0xff]
    %v1074 = vld [vmem:[#allocation5 + $0x1d8c] sm:$0xff]
    %v1075 = vld [vmem:[#allocation5 + $0x1d94] sm:$0xff]
    %v1076 = vld [vmem:[#allocation5 + $0x1d9c] sm:$0xff]
    %v1077 = vld [vmem:[#allocation5 + $0x1da4] sm:$0xff]
    %v1078 = vld [vmem:[#allocation5 + $0x1dac] sm:$0xff]
    %v1079 = vld [vmem:[#allocation5 + $0x1db4] sm:$0xff]
    %v1080 = vld [vmem:[#allocation5 + $0x1dbc] sm:$0xf]
    %v1081 = vld [vmem:[#allocation5 + $0x1dc0] sm:$0xff]
    %v1082 = vld [vmem:[#allocation5 + $0x1dc8] sm:$0xff]
    %v1083 = vld [vmem:[#allocation5 + $0x1dd0] sm:$0xff]
    %v1084 = vld [vmem:[#allocation5 + $0x1dd8] sm:$0xff]
    %v1085 = vld [vmem:[#allocation5 + $0x1de0] sm:$0xff]
    %v1086 = vld [vmem:[#allocation5 + $0x1de8] sm:$0xff]
    %v1087 = vld [vmem:[#allocation5 + $0x1df0] sm:$0xff]
    %v1088 = vld [vmem:[#allocation5 + $0x1df8] sm:$0xff]
    %v1089 = vld [vmem:[#allocation5 + $0x1e00] sm:$0xf]
    %v1090 = vld [vmem:[#allocation5 + $0x1e04] sm:$0xff]
    %v1091 = vld [vmem:[#allocation5 + $0x1e0c] sm:$0xff]
    %v1092 = vld [vmem:[#allocation5 + $0x1e14] sm:$0xff]
    %v1093 = vld [vmem:[#allocation5 + $0x1e1c] sm:$0xff]
    %v1094 = vld [vmem:[#allocation5 + $0x1e24] sm:$0xff]
    %v1095 = vld [vmem:[#allocation5 + $0x1e2c] sm:$0xff]
    %v1096 = vld [vmem:[#allocation5 + $0x1e34] sm:$0xff]
    %v1097 = vld [vmem:[#allocation5 + $0x1e3c] sm:$0xff]
    %v1098 = vld [vmem:[#allocation5 + $0x1e44] sm:$0xf]
    %v1099 = vld [vmem:[#allocation5 + $0x1e48] sm:$0xff]
    %v1100 = vld [vmem:[#allocation5 + $0x1e50] sm:$0xff]
    %v1101 = vld [vmem:[#allocation5 + $0x1e58] sm:$0xff]
    %v1102 = vld [vmem:[#allocation5 + $0x1e60] sm:$0xff]
    %v1103 = vld [vmem:[#allocation5 + $0x1e68] sm:$0xff]
    %v1104 = vld [vmem:[#allocation5 + $0x1e70] sm:$0xff]
    %v1105 = vld [vmem:[#allocation5 + $0x1e78] sm:$0xff]
    %v1106 = vld [vmem:[#allocation5 + $0x1e80] sm:$0xff]
    %v1107 = vld [vmem:[#allocation5 + $0x1e88] sm:$0xf]
    %v1108 = vld [vmem:[#allocation5 + $0x1e8c] sm:$0xff]
    %v1109 = vld [vmem:[#allocation5 + $0x1e94] sm:$0xff]
    %v1110 = vld [vmem:[#allocation5 + $0x1e9c] sm:$0xff]
    %v1111 = vld [vmem:[#allocation5 + $0x1ea4] sm:$0xff]
    %v1112 = vld [vmem:[#allocation5 + $0x1eac] sm:$0xff]
    %v1113 = vld [vmem:[#allocation5 + $0x1eb4] sm:$0xff]
    %v1114 = vld [vmem:[#allocation5 + $0x1ebc] sm:$0xff]
    %v1115 = vld [vmem:[#allocation5 + $0x1ec4] sm:$0xff]
    %v1116 = vld [vmem:[#allocation5 + $0x1ecc] sm:$0xf]
    %v1117 = vld [vmem:[#allocation5 + $0x1ed0] sm:$0xff]
    %v1118 = vld [vmem:[#allocation5 + $0x1ed8] sm:$0xff]
    %v1119 = vld [vmem:[#allocation5 + $0x1ee0] sm:$0xff]
    %v1120 = vld [vmem:[#allocation5 + $0x1ee8] sm:$0xff]
    %v1121 = vld [vmem:[#allocation5 + $0x1ef0] sm:$0xff]
    %v1122 = vld [vmem:[#allocation5 + $0x1ef8] sm:$0xff]
    %v1123 = vld [vmem:[#allocation5 + $0x1f00] sm:$0xff]
    %v1124 = vld [vmem:[#allocation5 + $0x1f08] sm:$0xff]
    %v1125 = vld [vmem:[#allocation5 + $0x1f10] sm:$0xf]
    %v1126 = vld [vmem:[#allocation5 + $0x1f14] sm:$0xff]
    %v1127 = vld [vmem:[#allocation5 + $0x1f1c] sm:$0xff]
    %v1128 = vld [vmem:[#allocation5 + $0x1f24] sm:$0xff]
    %v1129 = vld [vmem:[#allocation5 + $0x1f2c] sm:$0xff]
    %v1130 = vld [vmem:[#allocation5 + $0x1f34] sm:$0xff]
    %v1131 = vld [vmem:[#allocation5 + $0x1f3c] sm:$0xff]
    %v1132 = vld [vmem:[#allocation5 + $0x1f44] sm:$0xff]
    %v1133 = vld [vmem:[#allocation5 + $0x1f4c] sm:$0xff]
    %v1134 = vld [vmem:[#allocation5 + $0x1f54] sm:$0xf]
    %v1135 = vld [vmem:[#allocation5 + $0x1f58] sm:$0xff]
    %v1136 = vld [vmem:[#allocation5 + $0x1f60] sm:$0xff]
    %v1137 = vld [vmem:[#allocation5 + $0x1f68] sm:$0xff]
    %v1138 = vld [vmem:[#allocation5 + $0x1f70] sm:$0xff]
    %v1139 = vld [vmem:[#allocation5 + $0x1f78] sm:$0xff]
    %v1140 = vld [vmem:[#allocation5 + $0x1f80] sm:$0xff]
    %v1141 = vld [vmem:[#allocation5 + $0x1f88] sm:$0xff]
    %v1142 = vld [vmem:[#allocation5 + $0x1f90] sm:$0xff]
    %v1143 = vld [vmem:[#allocation5 + $0x1f98] sm:$0xf]
    %v1144 = vld [vmem:[#allocation5 + $0x1f9c] sm:$0xff]
    %v1145 = vld [vmem:[#allocation5 + $0x1fa4] sm:$0xff]
    %v1146 = vld [vmem:[#allocation5 + $0x1fac] sm:$0xff]
    %v1147 = vld [vmem:[#allocation5 + $0x1fb4] sm:$0xff]
    %v1148 = vld [vmem:[#allocation5 + $0x1fbc] sm:$0xff]
    %v1149 = vld [vmem:[#allocation5 + $0x1fc4] sm:$0xff]
    %v1150 = vld [vmem:[#allocation5 + $0x1fcc] sm:$0xff]
    %v1151 = vld [vmem:[#allocation5 + $0x1fd4] sm:$0xff]
    %v1152 = vld [vmem:[#allocation5 + $0x1fdc] sm:$0xf]
    %v1153 = vld [vmem:[#allocation5 + $0x1fe0] sm:$0xff]
    %v1154 = vld [vmem:[#allocation5 + $0x1fe8] sm:$0xff]
    %v1155 = vld [vmem:[#allocation5 + $0x1ff0] sm:$0xff]
    %v1156 = vld [vmem:[#allocation5 + $0x1ff8] sm:$0xff]
    %v1157 = vld [vmem:[#allocation5 + $0x2000] sm:$0xff]
    %v1158 = vld [vmem:[#allocation5 + $0x2008] sm:$0xff]
    %v1159 = vld [vmem:[#allocation5 + $0x2010] sm:$0xff]
    %v1160 = vld [vmem:[#allocation5 + $0x2018] sm:$0xff]
    %v1161 = vld [vmem:[#allocation5 + $0x2020] sm:$0xf]
    %v1162 = vld [vmem:[#allocation5 + $0x2024] sm:$0xff]
    %v1163 = vld [vmem:[#allocation5 + $0x202c] sm:$0xff]
    %v1164 = vld [vmem:[#allocation5 + $0x2034] sm:$0xff]
    %v1165 = vld [vmem:[#allocation5 + $0x203c] sm:$0xff]
    %v1166 = vld [vmem:[#allocation5 + $0x2044] sm:$0xff]
    %v1167 = vld [vmem:[#allocation5 + $0x204c] sm:$0xff]
    %v1168 = vld [vmem:[#allocation5 + $0x2054] sm:$0xff]
    %v1169 = vld [vmem:[#allocation5 + $0x205c] sm:$0xff]
    %v1170 = vld [vmem:[#allocation5 + $0x2064] sm:$0xf]
    %v1171 = vld [vmem:[#allocation5 + $0x2068] sm:$0xff]
    %v1172 = vld [vmem:[#allocation5 + $0x2070] sm:$0xff]
    %v1173 = vld [vmem:[#allocation5 + $0x2078] sm:$0xff]
    %v1174 = vld [vmem:[#allocation5 + $0x2080] sm:$0xff]
    %v1175 = vld [vmem:[#allocation5 + $0x2088] sm:$0xff]
    %v1176 = vld [vmem:[#allocation5 + $0x2090] sm:$0xff]
    %v1177 = vld [vmem:[#allocation5 + $0x2098] sm:$0xff]
    %v1178 = vld [vmem:[#allocation5 + $0x20a0] sm:$0xff]
    %v1179 = vld [vmem:[#allocation5 + $0x20a8] sm:$0xf]
    %v1180 = vld [vmem:[#allocation5 + $0x20ac] sm:$0xff]
    %v1181 = vld [vmem:[#allocation5 + $0x20b4] sm:$0xff]
    %v1182 = vld [vmem:[#allocation5 + $0x20bc] sm:$0xff]
    %v1183 = vld [vmem:[#allocation5 + $0x20c4] sm:$0xff]
    %v1184 = vld [vmem:[#allocation5 + $0x20cc] sm:$0xff]
    %v1185 = vld [vmem:[#allocation5 + $0x20d4] sm:$0xff]
    %v1186 = vld [vmem:[#allocation5 + $0x20dc] sm:$0xff]
    %v1187 = vld [vmem:[#allocation5 + $0x20e4] sm:$0xff]
    %v1188 = vld [vmem:[#allocation5 + $0x20ec] sm:$0xf]
    %v1189 = vld [vmem:[#allocation5 + $0x20f0] sm:$0xff]
    %v1190 = vld [vmem:[#allocation5 + $0x20f8] sm:$0xff]
    %v1191 = vld [vmem:[#allocation5 + $0x2100] sm:$0xff]
    %v1192 = vld [vmem:[#allocation5 + $0x2108] sm:$0xff]
    %v1193 = vld [vmem:[#allocation5 + $0x2110] sm:$0xff]
    %v1194 = vld [vmem:[#allocation5 + $0x2118] sm:$0xff]
    %v1195 = vld [vmem:[#allocation5 + $0x2120] sm:$0xff]
    %v1196 = vld [vmem:[#allocation5 + $0x2128] sm:$0xff]
    %v1197 = vld [vmem:[#allocation5 + $0x2130] sm:$0xf]
    %v1198 = vld [vmem:[#allocation5 + $0x2134] sm:$0xff]
    %v1199 = vld [vmem:[#allocation5 + $0x213c] sm:$0xff]
    %v1200 = vld [vmem:[#allocation5 + $0x2144] sm:$0xff]
    %v1201 = vld [vmem:[#allocation5 + $0x214c] sm:$0xff]
    %v1202 = vld [vmem:[#allocation5 + $0x2154] sm:$0xff]
    %v1203 = vld [vmem:[#allocation5 + $0x215c] sm:$0xff]
    %v1204 = vld [vmem:[#allocation5 + $0x2164] sm:$0xff]
    %v1205 = vld [vmem:[#allocation5 + $0x216c] sm:$0xff]
    %v1206 = vld [vmem:[#allocation5 + $0x2174] sm:$0xf]
    %v1207 = vld [vmem:[#allocation5 + $0x2178] sm:$0xff]
    %v1208 = vld [vmem:[#allocation5 + $0x2180] sm:$0xff]
    %v1209 = vld [vmem:[#allocation5 + $0x2188] sm:$0xff]
    %v1210 = vld [vmem:[#allocation5 + $0x2190] sm:$0xff]
    %v1211 = vld [vmem:[#allocation5 + $0x2198] sm:$0xff]
    %v1212 = vld [vmem:[#allocation5 + $0x21a0] sm:$0xff]
    %v1213 = vld [vmem:[#allocation5 + $0x21a8] sm:$0xff]
    %v1214 = vld [vmem:[#allocation5 + $0x21b0] sm:$0xff]
    %v1215 = vld [vmem:[#allocation5 + $0x21b8] sm:$0xf]
    %v1216 = vld [vmem:[#allocation5 + $0x21bc] sm:$0xff]
    %v1217 = vld [vmem:[#allocation5 + $0x21c4] sm:$0xff]
    %v1218 = vld [vmem:[#allocation5 + $0x21cc] sm:$0xff]
    %v1219 = vld [vmem:[#allocation5 + $0x21d4] sm:$0xff]
    %v1220 = vld [vmem:[#allocation5 + $0x21dc] sm:$0xff]
    %v1221 = vld [vmem:[#allocation5 + $0x21e4] sm:$0xff]
    %v1222 = vld [vmem:[#allocation5 + $0x21ec] sm:$0xff]
    %v1223 = vld [vmem:[#allocation5 + $0x21f4] sm:$0xff]
    %v1224 = vld [vmem:[#allocation5 + $0x21fc] sm:$0xf]
    %v1225 = vld [vmem:[#allocation7] sm:$0xff]
    %v1226 = vld [vmem:[#allocation7 + $0x8] sm:$0xff]
    %v1227 = vld [vmem:[#allocation7 + $0x10] sm:$0x1]
    %v1231 = vlaneseq
    %v1232 = vshrl.u32 %v1231, 7
    %v1233 = vsub.s32 0, %v1232
    %v1234 = vrot.slane %v1225, %v1233
    %v1235 = vlaneseq
    %v1236 = vshrl.u32 %v1235, 7
    %v1237 = vsub.s32 1, %v1236
    %v1238 = vrot.slane %v1225, %v1237
    %v1239 = vlaneseq
    %v1240 = vshrl.u32 %v1239, 7
    %v1241 = vsub.s32 2, %v1240
    %v1242 = vrot.slane %v1225, %v1241
    %v1243 = vlaneseq
    %v1244 = vshrl.u32 %v1243, 7
    %v1245 = vsub.s32 3, %v1244
    %v1246 = vrot.slane %v1225, %v1245
    %v1247 = vlaneseq
    %v1248 = vshrl.u32 %v1247, 7
    %v1249 = vsub.s32 4, %v1248
    %v1250 = vrot.slane %v1225, %v1249
    %v1251 = vlaneseq
    %v1252 = vshrl.u32 %v1251, 7
    %v1253 = vsub.s32 5, %v1252
    %v1254 = vrot.slane %v1225, %v1253
    %v1255 = vlaneseq
    %v1256 = vshrl.u32 %v1255, 7
    %v1257 = vsub.s32 6, %v1256
    %v1258 = vrot.slane %v1225, %v1257
    %v1259 = vlaneseq
    %v1260 = vshrl.u32 %v1259, 7
    %v1261 = vsub.s32 7, %v1260
    %v1262 = vrot.slane %v1225, %v1261
    %v1263 = vlaneseq
    %v1264 = vshrl.u32 %v1263, 7
    %v1265 = vsub.s32 0, %v1264
    %v1266 = vrot.slane %v1226, %v1265
    %v1267 = vlaneseq
    %v1268 = vshrl.u32 %v1267, 7
    %v1269 = vsub.s32 1, %v1268
    %v1270 = vrot.slane %v1226, %v1269
    %v1271 = vlaneseq
    %v1272 = vshrl.u32 %v1271, 7
    %v1273 = vsub.s32 2, %v1272
    %v1274 = vrot.slane %v1226, %v1273
    %v1275 = vlaneseq
    %v1276 = vshrl.u32 %v1275, 7
    %v1277 = vsub.s32 3, %v1276
    %v1278 = vrot.slane %v1226, %v1277
    %v1279 = vlaneseq
    %v1280 = vshrl.u32 %v1279, 7
    %v1281 = vsub.s32 4, %v1280
    %v1282 = vrot.slane %v1226, %v1281
    %v1283 = vlaneseq
    %v1284 = vshrl.u32 %v1283, 7
    %v1285 = vsub.s32 5, %v1284
    %v1286 = vrot.slane %v1226, %v1285
    %v1287 = vlaneseq
    %v1288 = vshrl.u32 %v1287, 7
    %v1289 = vsub.s32 6, %v1288
    %v1290 = vrot.slane %v1226, %v1289
    %v1291 = vlaneseq
    %v1292 = vshrl.u32 %v1291, 7
    %v1293 = vsub.s32 7, %v1292
    %v1294 = vrot.slane %v1226, %v1293
    %v1295 = vlaneseq
    %v1296 = vshrl.u32 %v1295, 7
    %v1297 = vsub.s32 0, %v1296
    %v1298 = vrot.slane %v1227, %v1297
    %v2468 = vunpack.c.l.b16 %v73
    %v2469 = vunpack.c.h.b16 %v73
    %v2470 = vunpack.c.l.b16 %v74
    %v2471 = vunpack.c.h.b16 %v74
    %v2472 = vunpack.c.l.b16 %v75
    %v2473 = vunpack.c.h.b16 %v75
    %v2474 = vunpack.c.l.b16 %v76
    %v2475 = vunpack.c.h.b16 %v76
    %v2476 = vunpack.c.l.b16 %v77
    %v2477 = vunpack.c.h.b16 %v77
    %v2478 = vunpack.c.l.b16 %v78
    %v2479 = vunpack.c.h.b16 %v78
    %v2480 = vunpack.c.l.b16 %v79
    %v2481 = vunpack.c.h.b16 %v79
    %v2482 = vunpack.c.l.b16 %v80
    %v2483 = vunpack.c.h.b16 %v80
    %v2484 = vunpack.c.l.b16 %v81
    %v2485 = vunpack.c.l.b16 %v82
    %v2486 = vunpack.c.h.b16 %v82
    %v2487 = vunpack.c.l.b16 %v83
    %v2488 = vunpack.c.h.b16 %v83
    %v2489 = vunpack.c.l.b16 %v84
    %v2490 = vunpack.c.h.b16 %v84
    %v2491 = vunpack.c.l.b16 %v85
    %v2492 = vunpack.c.h.b16 %v85
    %v2493 = vunpack.c.l.b16 %v86
    %v2494 = vunpack.c.h.b16 %v86
    %v2495 = vunpack.c.l.b16 %v87
    %v2496 = vunpack.c.h.b16 %v87
    %v2497 = vunpack.c.l.b16 %v88
    %v2498 = vunpack.c.h.b16 %v88
    %v2499 = vunpack.c.l.b16 %v89
    %v2500 = vunpack.c.h.b16 %v89
    %v2501 = vunpack.c.l.b16 %v90
    %v2502 = vunpack.c.l.b16 %v91
    %v2503 = vunpack.c.h.b16 %v91
    %v2504 = vunpack.c.l.b16 %v92
    %v2505 = vunpack.c.h.b16 %v92
    %v2506 = vunpack.c.l.b16 %v93
    %v2507 = vunpack.c.h.b16 %v93
    %v2508 = vunpack.c.l.b16 %v94
    %v2509 = vunpack.c.h.b16 %v94
    %v2510 = vunpack.c.l.b16 %v95
    %v2511 = vunpack.c.h.b16 %v95
    %v2512 = vunpack.c.l.b16 %v96
    %v2513 = vunpack.c.h.b16 %v96
    %v2514 = vunpack.c.l.b16 %v97
    %v2515 = vunpack.c.h.b16 %v97
    %v2516 = vunpack.c.l.b16 %v98
    %v2517 = vunpack.c.h.b16 %v98
    %v2518 = vunpack.c.l.b16 %v99
    %v2519 = vunpack.c.l.b16 %v100
    %v2520 = vunpack.c.h.b16 %v100
    %v2521 = vunpack.c.l.b16 %v101
    %v2522 = vunpack.c.h.b16 %v101
    %v2523 = vunpack.c.l.b16 %v102
    %v2524 = vunpack.c.h.b16 %v102
    %v2525 = vunpack.c.l.b16 %v103
    %v2526 = vunpack.c.h.b16 %v103
    %v2527 = vunpack.c.l.b16 %v104
    %v2528 = vunpack.c.h.b16 %v104
    %v2529 = vunpack.c.l.b16 %v105
    %v2530 = vunpack.c.h.b16 %v105
    %v2531 = vunpack.c.l.b16 %v106
    %v2532 = vunpack.c.h.b16 %v106
    %v2533 = vunpack.c.l.b16 %v107
    %v2534 = vunpack.c.h.b16 %v107
    %v2535 = vunpack.c.l.b16 %v108
    %v2536 = vunpack.c.l.b16 %v109
    %v2537 = vunpack.c.h.b16 %v109
    %v2538 = vunpack.c.l.b16 %v110
    %v2539 = vunpack.c.h.b16 %v110
    %v2540 = vunpack.c.l.b16 %v111
    %v2541 = vunpack.c.h.b16 %v111
    %v2542 = vunpack.c.l.b16 %v112
    %v2543 = vunpack.c.h.b16 %v112
    %v2544 = vunpack.c.l.b16 %v113
    %v2545 = vunpack.c.h.b16 %v113
    %v2546 = vunpack.c.l.b16 %v114
    %v2547 = vunpack.c.h.b16 %v114
    %v2548 = vunpack.c.l.b16 %v115
    %v2549 = vunpack.c.h.b16 %v115
    %v2550 = vunpack.c.l.b16 %v116
    %v2551 = vunpack.c.h.b16 %v116
    %v2552 = vunpack.c.l.b16 %v117
    %v2553 = vunpack.c.l.b16 %v118
    %v2554 = vunpack.c.h.b16 %v118
    %v2555 = vunpack.c.l.b16 %v119
    %v2556 = vunpack.c.h.b16 %v119
    %v2557 = vunpack.c.l.b16 %v120
    %v2558 = vunpack.c.h.b16 %v120
    %v2559 = vunpack.c.l.b16 %v121
    %v2560 = vunpack.c.h.b16 %v121
    %v2561 = vunpack.c.l.b16 %v122
    %v2562 = vunpack.c.h.b16 %v122
    %v2563 = vunpack.c.l.b16 %v123
    %v2564 = vunpack.c.h.b16 %v123
    %v2565 = vunpack.c.l.b16 %v124
    %v2566 = vunpack.c.h.b16 %v124
    %v2567 = vunpack.c.l.b16 %v125
    %v2568 = vunpack.c.h.b16 %v125
    %v2569 = vunpack.c.l.b16 %v126
    %v2570 = vunpack.c.l.b16 %v127
    %v2571 = vunpack.c.h.b16 %v127
    %v2572 = vunpack.c.l.b16 %v128
    %v2573 = vunpack.c.h.b16 %v128
    %v2574 = vunpack.c.l.b16 %v129
    %v2575 = vunpack.c.h.b16 %v129
    %v2576 = vunpack.c.l.b16 %v130
    %v2577 = vunpack.c.h.b16 %v130
    %v2578 = vunpack.c.l.b16 %v131
    %v2579 = vunpack.c.h.b16 %v131
    %v2580 = vunpack.c.l.b16 %v132
    %v2581 = vunpack.c.h.b16 %v132
    %v2582 = vunpack.c.l.b16 %v133
    %v2583 = vunpack.c.h.b16 %v133
    %v2584 = vunpack.c.l.b16 %v134
    %v2585 = vunpack.c.h.b16 %v134
    %v2586 = vunpack.c.l.b16 %v135
    %v2587 = vunpack.c.l.b16 %v136
    %v2588 = vunpack.c.h.b16 %v136
    %v2589 = vunpack.c.l.b16 %v137
    %v2590 = vunpack.c.h.b16 %v137
    %v2591 = vunpack.c.l.b16 %v138
    %v2592 = vunpack.c.h.b16 %v138
    %v2593 = vunpack.c.l.b16 %v139
    %v2594 = vunpack.c.h.b16 %v139
    %v2595 = vunpack.c.l.b16 %v140
    %v2596 = vunpack.c.h.b16 %v140
    %v2597 = vunpack.c.l.b16 %v141
    %v2598 = vunpack.c.h.b16 %v141
    %v2599 = vunpack.c.l.b16 %v142
    %v2600 = vunpack.c.h.b16 %v142
    %v2601 = vunpack.c.l.b16 %v143
    %v2602 = vunpack.c.h.b16 %v143
    %v2603 = vunpack.c.l.b16 %v144
    %v2604 = vunpack.c.l.b16 %v145
    %v2605 = vunpack.c.h.b16 %v145
    %v2606 = vunpack.c.l.b16 %v146
    %v2607 = vunpack.c.h.b16 %v146
    %v2608 = vunpack.c.l.b16 %v147
    %v2609 = vunpack.c.h.b16 %v147
    %v2610 = vunpack.c.l.b16 %v148
    %v2611 = vunpack.c.h.b16 %v148
    %v2612 = vunpack.c.l.b16 %v149
    %v2613 = vunpack.c.h.b16 %v149
    %v2614 = vunpack.c.l.b16 %v150
    %v2615 = vunpack.c.h.b16 %v150
    %v2616 = vunpack.c.l.b16 %v151
    %v2617 = vunpack.c.h.b16 %v151
    %v2618 = vunpack.c.l.b16 %v152
    %v2619 = vunpack.c.h.b16 %v152
    %v2620 = vunpack.c.l.b16 %v153
    %v2621 = vunpack.c.l.b16 %v154
    %v2622 = vunpack.c.h.b16 %v154
    %v2623 = vunpack.c.l.b16 %v155
    %v2624 = vunpack.c.h.b16 %v155
    %v2625 = vunpack.c.l.b16 %v156
    %v2626 = vunpack.c.h.b16 %v156
    %v2627 = vunpack.c.l.b16 %v157
    %v2628 = vunpack.c.h.b16 %v157
    %v2629 = vunpack.c.l.b16 %v158
    %v2630 = vunpack.c.h.b16 %v158
    %v2631 = vunpack.c.l.b16 %v159
    %v2632 = vunpack.c.h.b16 %v159
    %v2633 = vunpack.c.l.b16 %v160
    %v2634 = vunpack.c.h.b16 %v160
    %v2635 = vunpack.c.l.b16 %v161
    %v2636 = vunpack.c.h.b16 %v161
    %v2637 = vunpack.c.l.b16 %v162
    %v2638 = vunpack.c.l.b16 %v163
    %v2639 = vunpack.c.h.b16 %v163
    %v2640 = vunpack.c.l.b16 %v164
    %v2641 = vunpack.c.h.b16 %v164
    %v2642 = vunpack.c.l.b16 %v165
    %v2643 = vunpack.c.h.b16 %v165
    %v2644 = vunpack.c.l.b16 %v166
    %v2645 = vunpack.c.h.b16 %v166
    %v2646 = vunpack.c.l.b16 %v167
    %v2647 = vunpack.c.h.b16 %v167
    %v2648 = vunpack.c.l.b16 %v168
    %v2649 = vunpack.c.h.b16 %v168
    %v2650 = vunpack.c.l.b16 %v169
    %v2651 = vunpack.c.h.b16 %v169
    %v2652 = vunpack.c.l.b16 %v170
    %v2653 = vunpack.c.h.b16 %v170
    %v2654 = vunpack.c.l.b16 %v171
    %v2655 = vunpack.c.l.b16 %v172
    %v2656 = vunpack.c.h.b16 %v172
    %v2657 = vunpack.c.l.b16 %v173
    %v2658 = vunpack.c.h.b16 %v173
    %v2659 = vunpack.c.l.b16 %v174
    %v2660 = vunpack.c.h.b16 %v174
    %v2661 = vunpack.c.l.b16 %v175
    %v2662 = vunpack.c.h.b16 %v175
    %v2663 = vunpack.c.l.b16 %v176
    %v2664 = vunpack.c.h.b16 %v176
    %v2665 = vunpack.c.l.b16 %v177
    %v2666 = vunpack.c.h.b16 %v177
    %v2667 = vunpack.c.l.b16 %v178
    %v2668 = vunpack.c.h.b16 %v178
    %v2669 = vunpack.c.l.b16 %v179
    %v2670 = vunpack.c.h.b16 %v179
    %v2671 = vunpack.c.l.b16 %v180
    %v2672 = vunpack.c.l.b16 %v181
    %v2673 = vunpack.c.h.b16 %v181
    %v2674 = vunpack.c.l.b16 %v182
    %v2675 = vunpack.c.h.b16 %v182
    %v2676 = vunpack.c.l.b16 %v183
    %v2677 = vunpack.c.h.b16 %v183
    %v2678 = vunpack.c.l.b16 %v184
    %v2679 = vunpack.c.h.b16 %v184
    %v2680 = vunpack.c.l.b16 %v185
    %v2681 = vunpack.c.h.b16 %v185
    %v2682 = vunpack.c.l.b16 %v186
    %v2683 = vunpack.c.h.b16 %v186
    %v2684 = vunpack.c.l.b16 %v187
    %v2685 = vunpack.c.h.b16 %v187
    %v2686 = vunpack.c.l.b16 %v188
    %v2687 = vunpack.c.h.b16 %v188
    %v2688 = vunpack.c.l.b16 %v189
    %v2689 = vunpack.c.l.b16 %v190
    %v2690 = vunpack.c.h.b16 %v190
    %v2691 = vunpack.c.l.b16 %v191
    %v2692 = vunpack.c.h.b16 %v191
    %v2693 = vunpack.c.l.b16 %v192
    %v2694 = vunpack.c.h.b16 %v192
    %v2695 = vunpack.c.l.b16 %v193
    %v2696 = vunpack.c.h.b16 %v193
    %v2697 = vunpack.c.l.b16 %v194
    %v2698 = vunpack.c.h.b16 %v194
    %v2699 = vunpack.c.l.b16 %v195
    %v2700 = vunpack.c.h.b16 %v195
    %v2701 = vunpack.c.l.b16 %v196
    %v2702 = vunpack.c.h.b16 %v196
    %v2703 = vunpack.c.l.b16 %v197
    %v2704 = vunpack.c.h.b16 %v197
    %v2705 = vunpack.c.l.b16 %v198
    %v2706 = vunpack.c.l.b16 %v199
    %v2707 = vunpack.c.h.b16 %v199
    %v2708 = vunpack.c.l.b16 %v200
    %v2709 = vunpack.c.h.b16 %v200
    %v2710 = vunpack.c.l.b16 %v201
    %v2711 = vunpack.c.h.b16 %v201
    %v2712 = vunpack.c.l.b16 %v202
    %v2713 = vunpack.c.h.b16 %v202
    %v2714 = vunpack.c.l.b16 %v203
    %v2715 = vunpack.c.h.b16 %v203
    %v2716 = vunpack.c.l.b16 %v204
    %v2717 = vunpack.c.h.b16 %v204
    %v2718 = vunpack.c.l.b16 %v205
    %v2719 = vunpack.c.h.b16 %v205
    %v2720 = vunpack.c.l.b16 %v206
    %v2721 = vunpack.c.h.b16 %v206
    %v2722 = vunpack.c.l.b16 %v207
    %v2723 = vunpack.c.l.b16 %v208
    %v2724 = vunpack.c.h.b16 %v208
    %v2725 = vunpack.c.l.b16 %v209
    %v2726 = vunpack.c.h.b16 %v209
    %v2727 = vunpack.c.l.b16 %v210
    %v2728 = vunpack.c.h.b16 %v210
    %v2729 = vunpack.c.l.b16 %v211
    %v2730 = vunpack.c.h.b16 %v211
    %v2731 = vunpack.c.l.b16 %v212
    %v2732 = vunpack.c.h.b16 %v212
    %v2733 = vunpack.c.l.b16 %v213
    %v2734 = vunpack.c.h.b16 %v213
    %v2735 = vunpack.c.l.b16 %v214
    %v2736 = vunpack.c.h.b16 %v214
    %v2737 = vunpack.c.l.b16 %v215
    %v2738 = vunpack.c.h.b16 %v215
    %v2739 = vunpack.c.l.b16 %v216
    %v2740 = vunpack.c.l.b16 %v217
    %v2741 = vunpack.c.h.b16 %v217
    %v2742 = vunpack.c.l.b16 %v218
    %v2743 = vunpack.c.h.b16 %v218
    %v2744 = vunpack.c.l.b16 %v219
    %v2745 = vunpack.c.h.b16 %v219
    %v2746 = vunpack.c.l.b16 %v220
    %v2747 = vunpack.c.h.b16 %v220
    %v2748 = vunpack.c.l.b16 %v221
    %v2749 = vunpack.c.h.b16 %v221
    %v2750 = vunpack.c.l.b16 %v222
    %v2751 = vunpack.c.h.b16 %v222
    %v2752 = vunpack.c.l.b16 %v223
    %v2753 = vunpack.c.h.b16 %v223
    %v2754 = vunpack.c.l.b16 %v224
    %v2755 = vunpack.c.h.b16 %v224
    %v2756 = vunpack.c.l.b16 %v225
    %v2757 = vunpack.c.l.b16 %v226
    %v2758 = vunpack.c.h.b16 %v226
    %v2759 = vunpack.c.l.b16 %v227
    %v2760 = vunpack.c.h.b16 %v227
    %v2761 = vunpack.c.l.b16 %v228
    %v2762 = vunpack.c.h.b16 %v228
    %v2763 = vunpack.c.l.b16 %v229
    %v2764 = vunpack.c.h.b16 %v229
    %v2765 = vunpack.c.l.b16 %v230
    %v2766 = vunpack.c.h.b16 %v230
    %v2767 = vunpack.c.l.b16 %v231
    %v2768 = vunpack.c.h.b16 %v231
    %v2769 = vunpack.c.l.b16 %v232
    %v2770 = vunpack.c.h.b16 %v232
    %v2771 = vunpack.c.l.b16 %v233
    %v2772 = vunpack.c.h.b16 %v233
    %v2773 = vunpack.c.l.b16 %v234
    %v2774 = vunpack.c.l.b16 %v235
    %v2775 = vunpack.c.h.b16 %v235
    %v2776 = vunpack.c.l.b16 %v236
    %v2777 = vunpack.c.h.b16 %v236
    %v2778 = vunpack.c.l.b16 %v237
    %v2779 = vunpack.c.h.b16 %v237
    %v2780 = vunpack.c.l.b16 %v238
    %v2781 = vunpack.c.h.b16 %v238
    %v2782 = vunpack.c.l.b16 %v239
    %v2783 = vunpack.c.h.b16 %v239
    %v2784 = vunpack.c.l.b16 %v240
    %v2785 = vunpack.c.h.b16 %v240
    %v2786 = vunpack.c.l.b16 %v241
    %v2787 = vunpack.c.h.b16 %v241
    %v2788 = vunpack.c.l.b16 %v242
    %v2789 = vunpack.c.h.b16 %v242
    %v2790 = vunpack.c.l.b16 %v243
    %v2791 = vunpack.c.l.b16 %v244
    %v2792 = vunpack.c.h.b16 %v244
    %v2793 = vunpack.c.l.b16 %v245
    %v2794 = vunpack.c.h.b16 %v245
    %v2795 = vunpack.c.l.b16 %v246
    %v2796 = vunpack.c.h.b16 %v246
    %v2797 = vunpack.c.l.b16 %v247
    %v2798 = vunpack.c.h.b16 %v247
    %v2799 = vunpack.c.l.b16 %v248
    %v2800 = vunpack.c.h.b16 %v248
    %v2801 = vunpack.c.l.b16 %v249
    %v2802 = vunpack.c.h.b16 %v249
    %v2803 = vunpack.c.l.b16 %v250
    %v2804 = vunpack.c.h.b16 %v250
    %v2805 = vunpack.c.l.b16 %v251
    %v2806 = vunpack.c.h.b16 %v251
    %v2807 = vunpack.c.l.b16 %v252
    %v2808 = vunpack.c.l.b16 %v253
    %v2809 = vunpack.c.h.b16 %v253
    %v2810 = vunpack.c.l.b16 %v254
    %v2811 = vunpack.c.h.b16 %v254
    %v2812 = vunpack.c.l.b16 %v255
    %v2813 = vunpack.c.h.b16 %v255
    %v2814 = vunpack.c.l.b16 %v256
    %v2815 = vunpack.c.h.b16 %v256
    %v2816 = vunpack.c.l.b16 %v257
    %v2817 = vunpack.c.h.b16 %v257
    %v2818 = vunpack.c.l.b16 %v258
    %v2819 = vunpack.c.h.b16 %v258
    %v2820 = vunpack.c.l.b16 %v259
    %v2821 = vunpack.c.h.b16 %v259
    %v2822 = vunpack.c.l.b16 %v260
    %v2823 = vunpack.c.h.b16 %v260
    %v2824 = vunpack.c.l.b16 %v261
    %v2825 = vunpack.c.l.b16 %v262
    %v2826 = vunpack.c.h.b16 %v262
    %v2827 = vunpack.c.l.b16 %v263
    %v2828 = vunpack.c.h.b16 %v263
    %v2829 = vunpack.c.l.b16 %v264
    %v2830 = vunpack.c.h.b16 %v264
    %v2831 = vunpack.c.l.b16 %v265
    %v2832 = vunpack.c.h.b16 %v265
    %v2833 = vunpack.c.l.b16 %v266
    %v2834 = vunpack.c.h.b16 %v266
    %v2835 = vunpack.c.l.b16 %v267
    %v2836 = vunpack.c.h.b16 %v267
    %v2837 = vunpack.c.l.b16 %v268
    %v2838 = vunpack.c.h.b16 %v268
    %v2839 = vunpack.c.l.b16 %v269
    %v2840 = vunpack.c.h.b16 %v269
    %v2841 = vunpack.c.l.b16 %v270
    %v2842 = vunpack.c.l.b16 %v271
    %v2843 = vunpack.c.h.b16 %v271
    %v2844 = vunpack.c.l.b16 %v272
    %v2845 = vunpack.c.h.b16 %v272
    %v2846 = vunpack.c.l.b16 %v273
    %v2847 = vunpack.c.h.b16 %v273
    %v2848 = vunpack.c.l.b16 %v274
    %v2849 = vunpack.c.h.b16 %v274
    %v2850 = vunpack.c.l.b16 %v275
    %v2851 = vunpack.c.h.b16 %v275
    %v2852 = vunpack.c.l.b16 %v276
    %v2853 = vunpack.c.h.b16 %v276
    %v2854 = vunpack.c.l.b16 %v277
    %v2855 = vunpack.c.h.b16 %v277
    %v2856 = vunpack.c.l.b16 %v278
    %v2857 = vunpack.c.h.b16 %v278
    %v2858 = vunpack.c.l.b16 %v279
    %v2859 = vunpack.c.l.b16 %v280
    %v2860 = vunpack.c.h.b16 %v280
    %v2861 = vunpack.c.l.b16 %v281
    %v2862 = vunpack.c.h.b16 %v281
    %v2863 = vunpack.c.l.b16 %v282
    %v2864 = vunpack.c.h.b16 %v282
    %v2865 = vunpack.c.l.b16 %v283
    %v2866 = vunpack.c.h.b16 %v283
    %v2867 = vunpack.c.l.b16 %v284
    %v2868 = vunpack.c.h.b16 %v284
    %v2869 = vunpack.c.l.b16 %v285
    %v2870 = vunpack.c.h.b16 %v285
    %v2871 = vunpack.c.l.b16 %v286
    %v2872 = vunpack.c.h.b16 %v286
    %v2873 = vunpack.c.l.b16 %v287
    %v2874 = vunpack.c.h.b16 %v287
    %v2875 = vunpack.c.l.b16 %v288
    %v2876 = vunpack.c.l.b16 %v289
    %v2877 = vunpack.c.h.b16 %v289
    %v2878 = vunpack.c.l.b16 %v290
    %v2879 = vunpack.c.h.b16 %v290
    %v2880 = vunpack.c.l.b16 %v291
    %v2881 = vunpack.c.h.b16 %v291
    %v2882 = vunpack.c.l.b16 %v292
    %v2883 = vunpack.c.h.b16 %v292
    %v2884 = vunpack.c.l.b16 %v293
    %v2885 = vunpack.c.h.b16 %v293
    %v2886 = vunpack.c.l.b16 %v294
    %v2887 = vunpack.c.h.b16 %v294
    %v2888 = vunpack.c.l.b16 %v295
    %v2889 = vunpack.c.h.b16 %v295
    %v2890 = vunpack.c.l.b16 %v296
    %v2891 = vunpack.c.h.b16 %v296
    %v2892 = vunpack.c.l.b16 %v297
    %v2893 = vunpack.c.l.b16 %v298
    %v2894 = vunpack.c.h.b16 %v298
    %v2895 = vunpack.c.l.b16 %v299
    %v2896 = vunpack.c.h.b16 %v299
    %v2897 = vunpack.c.l.b16 %v300
    %v2898 = vunpack.c.h.b16 %v300
    %v2899 = vunpack.c.l.b16 %v301
    %v2900 = vunpack.c.h.b16 %v301
    %v2901 = vunpack.c.l.b16 %v302
    %v2902 = vunpack.c.h.b16 %v302
    %v2903 = vunpack.c.l.b16 %v303
    %v2904 = vunpack.c.h.b16 %v303
    %v2905 = vunpack.c.l.b16 %v304
    %v2906 = vunpack.c.h.b16 %v304
    %v2907 = vunpack.c.l.b16 %v305
    %v2908 = vunpack.c.h.b16 %v305
    %v2909 = vunpack.c.l.b16 %v306
    %v2910 = vunpack.c.l.b16 %v307
    %v2911 = vunpack.c.h.b16 %v307
    %v2912 = vunpack.c.l.b16 %v308
    %v2913 = vunpack.c.h.b16 %v308
    %v2914 = vunpack.c.l.b16 %v309
    %v2915 = vunpack.c.h.b16 %v309
    %v2916 = vunpack.c.l.b16 %v310
    %v2917 = vunpack.c.h.b16 %v310
    %v2918 = vunpack.c.l.b16 %v311
    %v2919 = vunpack.c.h.b16 %v311
    %v2920 = vunpack.c.l.b16 %v312
    %v2921 = vunpack.c.h.b16 %v312
    %v2922 = vunpack.c.l.b16 %v313
    %v2923 = vunpack.c.h.b16 %v313
    %v2924 = vunpack.c.l.b16 %v314
    %v2925 = vunpack.c.h.b16 %v314
    %v2926 = vunpack.c.l.b16 %v315
    %v2927 = vunpack.c.l.b16 %v316
    %v2928 = vunpack.c.h.b16 %v316
    %v2929 = vunpack.c.l.b16 %v317
    %v2930 = vunpack.c.h.b16 %v317
    %v2931 = vunpack.c.l.b16 %v318
    %v2932 = vunpack.c.h.b16 %v318
    %v2933 = vunpack.c.l.b16 %v319
    %v2934 = vunpack.c.h.b16 %v319
    %v2935 = vunpack.c.l.b16 %v320
    %v2936 = vunpack.c.h.b16 %v320
    %v2937 = vunpack.c.l.b16 %v321
    %v2938 = vunpack.c.h.b16 %v321
    %v2939 = vunpack.c.l.b16 %v322
    %v2940 = vunpack.c.h.b16 %v322
    %v2941 = vunpack.c.l.b16 %v323
    %v2942 = vunpack.c.h.b16 %v323
    %v2943 = vunpack.c.l.b16 %v324
    %v2944 = vunpack.c.l.b16 %v325
    %v2945 = vunpack.c.h.b16 %v325
    %v2946 = vunpack.c.l.b16 %v326
    %v2947 = vunpack.c.h.b16 %v326
    %v2948 = vunpack.c.l.b16 %v327
    %v2949 = vunpack.c.h.b16 %v327
    %v2950 = vunpack.c.l.b16 %v328
    %v2951 = vunpack.c.h.b16 %v328
    %v2952 = vunpack.c.l.b16 %v329
    %v2953 = vunpack.c.h.b16 %v329
    %v2954 = vunpack.c.l.b16 %v330
    %v2955 = vunpack.c.h.b16 %v330
    %v2956 = vunpack.c.l.b16 %v331
    %v2957 = vunpack.c.h.b16 %v331
    %v2958 = vunpack.c.l.b16 %v332
    %v2959 = vunpack.c.h.b16 %v332
    %v2960 = vunpack.c.l.b16 %v333
    %v2961 = vunpack.c.l.b16 %v334
    %v2962 = vunpack.c.h.b16 %v334
    %v2963 = vunpack.c.l.b16 %v335
    %v2964 = vunpack.c.h.b16 %v335
    %v2965 = vunpack.c.l.b16 %v336
    %v2966 = vunpack.c.h.b16 %v336
    %v2967 = vunpack.c.l.b16 %v337
    %v2968 = vunpack.c.h.b16 %v337
    %v2969 = vunpack.c.l.b16 %v338
    %v2970 = vunpack.c.h.b16 %v338
    %v2971 = vunpack.c.l.b16 %v339
    %v2972 = vunpack.c.h.b16 %v339
    %v2973 = vunpack.c.l.b16 %v340
    %v2974 = vunpack.c.h.b16 %v340
    %v2975 = vunpack.c.l.b16 %v341
    %v2976 = vunpack.c.h.b16 %v341
    %v2977 = vunpack.c.l.b16 %v342
    %v2978 = vunpack.c.l.b16 %v343
    %v2979 = vunpack.c.h.b16 %v343
    %v2980 = vunpack.c.l.b16 %v344
    %v2981 = vunpack.c.h.b16 %v344
    %v2982 = vunpack.c.l.b16 %v345
    %v2983 = vunpack.c.h.b16 %v345
    %v2984 = vunpack.c.l.b16 %v346
    %v2985 = vunpack.c.h.b16 %v346
    %v2986 = vunpack.c.l.b16 %v347
    %v2987 = vunpack.c.h.b16 %v347
    %v2988 = vunpack.c.l.b16 %v348
    %v2989 = vunpack.c.h.b16 %v348
    %v2990 = vunpack.c.l.b16 %v349
    %v2991 = vunpack.c.h.b16 %v349
    %v2992 = vunpack.c.l.b16 %v350
    %v2993 = vunpack.c.h.b16 %v350
    %v2994 = vunpack.c.l.b16 %v351
    %v2995 = vunpack.c.l.b16 %v352
    %v2996 = vunpack.c.h.b16 %v352
    %v2997 = vunpack.c.l.b16 %v353
    %v2998 = vunpack.c.h.b16 %v353
    %v2999 = vunpack.c.l.b16 %v354
    %v3000 = vunpack.c.h.b16 %v354
    %v3001 = vunpack.c.l.b16 %v355
    %v3002 = vunpack.c.h.b16 %v355
    %v3003 = vunpack.c.l.b16 %v356
    %v3004 = vunpack.c.h.b16 %v356
    %v3005 = vunpack.c.l.b16 %v357
    %v3006 = vunpack.c.h.b16 %v357
    %v3007 = vunpack.c.l.b16 %v358
    %v3008 = vunpack.c.h.b16 %v358
    %v3009 = vunpack.c.l.b16 %v359
    %v3010 = vunpack.c.h.b16 %v359
    %v3011 = vunpack.c.l.b16 %v360
    %v3012 = vunpack.c.l.b16 %v361
    %v3013 = vunpack.c.h.b16 %v361
    %v3014 = vunpack.c.l.b16 %v362
    %v3015 = vunpack.c.h.b16 %v362
    %v3016 = vunpack.c.l.b16 %v363
    %v3017 = vunpack.c.h.b16 %v363
    %v3018 = vunpack.c.l.b16 %v364
    %v3019 = vunpack.c.h.b16 %v364
    %v3020 = vunpack.c.l.b16 %v365
    %v3021 = vunpack.c.h.b16 %v365
    %v3022 = vunpack.c.l.b16 %v366
    %v3023 = vunpack.c.h.b16 %v366
    %v3024 = vunpack.c.l.b16 %v367
    %v3025 = vunpack.c.h.b16 %v367
    %v3026 = vunpack.c.l.b16 %v368
    %v3027 = vunpack.c.h.b16 %v368
    %v3028 = vunpack.c.l.b16 %v369
    %v3029 = vunpack.c.l.b16 %v370
    %v3030 = vunpack.c.h.b16 %v370
    %v3031 = vunpack.c.l.b16 %v371
    %v3032 = vunpack.c.h.b16 %v371
    %v3033 = vunpack.c.l.b16 %v372
    %v3034 = vunpack.c.h.b16 %v372
    %v3035 = vunpack.c.l.b16 %v373
    %v3036 = vunpack.c.h.b16 %v373
    %v3037 = vunpack.c.l.b16 %v374
    %v3038 = vunpack.c.h.b16 %v374
    %v3039 = vunpack.c.l.b16 %v375
    %v3040 = vunpack.c.h.b16 %v375
    %v3041 = vunpack.c.l.b16 %v376
    %v3042 = vunpack.c.h.b16 %v376
    %v3043 = vunpack.c.l.b16 %v377
    %v3044 = vunpack.c.h.b16 %v377
    %v3045 = vunpack.c.l.b16 %v378
    %v3046 = vunpack.c.l.b16 %v379
    %v3047 = vunpack.c.h.b16 %v379
    %v3048 = vunpack.c.l.b16 %v380
    %v3049 = vunpack.c.h.b16 %v380
    %v3050 = vunpack.c.l.b16 %v381
    %v3051 = vunpack.c.h.b16 %v381
    %v3052 = vunpack.c.l.b16 %v382
    %v3053 = vunpack.c.h.b16 %v382
    %v3054 = vunpack.c.l.b16 %v383
    %v3055 = vunpack.c.h.b16 %v383
    %v3056 = vunpack.c.l.b16 %v384
    %v3057 = vunpack.c.h.b16 %v384
    %v3058 = vunpack.c.l.b16 %v385
    %v3059 = vunpack.c.h.b16 %v385
    %v3060 = vunpack.c.l.b16 %v386
    %v3061 = vunpack.c.h.b16 %v386
    %v3062 = vunpack.c.l.b16 %v387
    %v3063 = vunpack.c.l.b16 %v388
    %v3064 = vunpack.c.h.b16 %v388
    %v3065 = vunpack.c.l.b16 %v389
    %v3066 = vunpack.c.h.b16 %v389
    %v3067 = vunpack.c.l.b16 %v390
    %v3068 = vunpack.c.h.b16 %v390
    %v3069 = vunpack.c.l.b16 %v391
    %v3070 = vunpack.c.h.b16 %v391
    %v3071 = vunpack.c.l.b16 %v392
    %v3072 = vunpack.c.h.b16 %v392
    %v3073 = vunpack.c.l.b16 %v393
    %v3074 = vunpack.c.h.b16 %v393
    %v3075 = vunpack.c.l.b16 %v394
    %v3076 = vunpack.c.h.b16 %v394
    %v3077 = vunpack.c.l.b16 %v395
    %v3078 = vunpack.c.h.b16 %v395
    %v3079 = vunpack.c.l.b16 %v396
    %v3080 = vunpack.c.l.b16 %v397
    %v3081 = vunpack.c.h.b16 %v397
    %v3082 = vunpack.c.l.b16 %v398
    %v3083 = vunpack.c.h.b16 %v398
    %v3084 = vunpack.c.l.b16 %v399
    %v3085 = vunpack.c.h.b16 %v399
    %v3086 = vunpack.c.l.b16 %v400
    %v3087 = vunpack.c.h.b16 %v400
    %v3088 = vunpack.c.l.b16 %v401
    %v3089 = vunpack.c.h.b16 %v401
    %v3090 = vunpack.c.l.b16 %v402
    %v3091 = vunpack.c.h.b16 %v402
    %v3092 = vunpack.c.l.b16 %v403
    %v3093 = vunpack.c.h.b16 %v403
    %v3094 = vunpack.c.l.b16 %v404
    %v3095 = vunpack.c.h.b16 %v404
    %v3096 = vunpack.c.l.b16 %v405
    %v3097 = vunpack.c.l.b16 %v406
    %v3098 = vunpack.c.h.b16 %v406
    %v3099 = vunpack.c.l.b16 %v407
    %v3100 = vunpack.c.h.b16 %v407
    %v3101 = vunpack.c.l.b16 %v408
    %v3102 = vunpack.c.h.b16 %v408
    %v3103 = vunpack.c.l.b16 %v409
    %v3104 = vunpack.c.h.b16 %v409
    %v3105 = vunpack.c.l.b16 %v410
    %v3106 = vunpack.c.h.b16 %v410
    %v3107 = vunpack.c.l.b16 %v411
    %v3108 = vunpack.c.h.b16 %v411
    %v3109 = vunpack.c.l.b16 %v412
    %v3110 = vunpack.c.h.b16 %v412
    %v3111 = vunpack.c.l.b16 %v413
    %v3112 = vunpack.c.h.b16 %v413
    %v3113 = vunpack.c.l.b16 %v414
    %v3114 = vunpack.c.l.b16 %v415
    %v3115 = vunpack.c.h.b16 %v415
    %v3116 = vunpack.c.l.b16 %v416
    %v3117 = vunpack.c.h.b16 %v416
    %v3118 = vunpack.c.l.b16 %v417
    %v3119 = vunpack.c.h.b16 %v417
    %v3120 = vunpack.c.l.b16 %v418
    %v3121 = vunpack.c.h.b16 %v418
    %v3122 = vunpack.c.l.b16 %v419
    %v3123 = vunpack.c.h.b16 %v419
    %v3124 = vunpack.c.l.b16 %v420
    %v3125 = vunpack.c.h.b16 %v420
    %v3126 = vunpack.c.l.b16 %v421
    %v3127 = vunpack.c.h.b16 %v421
    %v3128 = vunpack.c.l.b16 %v422
    %v3129 = vunpack.c.h.b16 %v422
    %v3130 = vunpack.c.l.b16 %v423
    %v3131 = vunpack.c.l.b16 %v424
    %v3132 = vunpack.c.h.b16 %v424
    %v3133 = vunpack.c.l.b16 %v425
    %v3134 = vunpack.c.h.b16 %v425
    %v3135 = vunpack.c.l.b16 %v426
    %v3136 = vunpack.c.h.b16 %v426
    %v3137 = vunpack.c.l.b16 %v427
    %v3138 = vunpack.c.h.b16 %v427
    %v3139 = vunpack.c.l.b16 %v428
    %v3140 = vunpack.c.h.b16 %v428
    %v3141 = vunpack.c.l.b16 %v429
    %v3142 = vunpack.c.h.b16 %v429
    %v3143 = vunpack.c.l.b16 %v430
    %v3144 = vunpack.c.h.b16 %v430
    %v3145 = vunpack.c.l.b16 %v431
    %v3146 = vunpack.c.h.b16 %v431
    %v3147 = vunpack.c.l.b16 %v432
    %v3148 = vunpack.c.l.b16 %v433
    %v3149 = vunpack.c.h.b16 %v433
    %v3150 = vunpack.c.l.b16 %v434
    %v3151 = vunpack.c.h.b16 %v434
    %v3152 = vunpack.c.l.b16 %v435
    %v3153 = vunpack.c.h.b16 %v435
    %v3154 = vunpack.c.l.b16 %v436
    %v3155 = vunpack.c.h.b16 %v436
    %v3156 = vunpack.c.l.b16 %v437
    %v3157 = vunpack.c.h.b16 %v437
    %v3158 = vunpack.c.l.b16 %v438
    %v3159 = vunpack.c.h.b16 %v438
    %v3160 = vunpack.c.l.b16 %v439
    %v3161 = vunpack.c.h.b16 %v439
    %v3162 = vunpack.c.l.b16 %v440
    %v3163 = vunpack.c.h.b16 %v440
    %v3164 = vunpack.c.l.b16 %v441
    %v3165 = vunpack.c.l.b16 %v442
    %v3166 = vunpack.c.h.b16 %v442
    %v3167 = vunpack.c.l.b16 %v443
    %v3168 = vunpack.c.h.b16 %v443
    %v3169 = vunpack.c.l.b16 %v444
    %v3170 = vunpack.c.h.b16 %v444
    %v3171 = vunpack.c.l.b16 %v445
    %v3172 = vunpack.c.h.b16 %v445
    %v3173 = vunpack.c.l.b16 %v446
    %v3174 = vunpack.c.h.b16 %v446
    %v3175 = vunpack.c.l.b16 %v447
    %v3176 = vunpack.c.h.b16 %v447
    %v3177 = vunpack.c.l.b16 %v448
    %v3178 = vunpack.c.h.b16 %v448
    %v3179 = vunpack.c.l.b16 %v449
    %v3180 = vunpack.c.h.b16 %v449
    %v3181 = vunpack.c.l.b16 %v450
    %v3182 = vunpack.c.l.b16 %v451
    %v3183 = vunpack.c.h.b16 %v451
    %v3184 = vunpack.c.l.b16 %v452
    %v3185 = vunpack.c.h.b16 %v452
    %v3186 = vunpack.c.l.b16 %v453
    %v3187 = vunpack.c.h.b16 %v453
    %v3188 = vunpack.c.l.b16 %v454
    %v3189 = vunpack.c.h.b16 %v454
    %v3190 = vunpack.c.l.b16 %v455
    %v3191 = vunpack.c.h.b16 %v455
    %v3192 = vunpack.c.l.b16 %v456
    %v3193 = vunpack.c.h.b16 %v456
    %v3194 = vunpack.c.l.b16 %v457
    %v3195 = vunpack.c.h.b16 %v457
    %v3196 = vunpack.c.l.b16 %v458
    %v3197 = vunpack.c.h.b16 %v458
    %v3198 = vunpack.c.l.b16 %v459
    %v3199 = vunpack.c.l.b16 %v460
    %v3200 = vunpack.c.h.b16 %v460
    %v3201 = vunpack.c.l.b16 %v461
    %v3202 = vunpack.c.h.b16 %v461
    %v3203 = vunpack.c.l.b16 %v462
    %v3204 = vunpack.c.h.b16 %v462
    %v3205 = vunpack.c.l.b16 %v463
    %v3206 = vunpack.c.h.b16 %v463
    %v3207 = vunpack.c.l.b16 %v464
    %v3208 = vunpack.c.h.b16 %v464
    %v3209 = vunpack.c.l.b16 %v465
    %v3210 = vunpack.c.h.b16 %v465
    %v3211 = vunpack.c.l.b16 %v466
    %v3212 = vunpack.c.h.b16 %v466
    %v3213 = vunpack.c.l.b16 %v467
    %v3214 = vunpack.c.h.b16 %v467
    %v3215 = vunpack.c.l.b16 %v468
    %v3216 = vunpack.c.l.b16 %v469
    %v3217 = vunpack.c.h.b16 %v469
    %v3218 = vunpack.c.l.b16 %v470
    %v3219 = vunpack.c.h.b16 %v470
    %v3220 = vunpack.c.l.b16 %v471
    %v3221 = vunpack.c.h.b16 %v471
    %v3222 = vunpack.c.l.b16 %v472
    %v3223 = vunpack.c.h.b16 %v472
    %v3224 = vunpack.c.l.b16 %v473
    %v3225 = vunpack.c.h.b16 %v473
    %v3226 = vunpack.c.l.b16 %v474
    %v3227 = vunpack.c.h.b16 %v474
    %v3228 = vunpack.c.l.b16 %v475
    %v3229 = vunpack.c.h.b16 %v475
    %v3230 = vunpack.c.l.b16 %v476
    %v3231 = vunpack.c.h.b16 %v476
    %v3232 = vunpack.c.l.b16 %v477
    %v3233 = vunpack.c.l.b16 %v478
    %v3234 = vunpack.c.h.b16 %v478
    %v3235 = vunpack.c.l.b16 %v479
    %v3236 = vunpack.c.h.b16 %v479
    %v3237 = vunpack.c.l.b16 %v480
    %v3238 = vunpack.c.h.b16 %v480
    %v3239 = vunpack.c.l.b16 %v481
    %v3240 = vunpack.c.h.b16 %v481
    %v3241 = vunpack.c.l.b16 %v482
    %v3242 = vunpack.c.h.b16 %v482
    %v3243 = vunpack.c.l.b16 %v483
    %v3244 = vunpack.c.h.b16 %v483
    %v3245 = vunpack.c.l.b16 %v484
    %v3246 = vunpack.c.h.b16 %v484
    %v3247 = vunpack.c.l.b16 %v485
    %v3248 = vunpack.c.h.b16 %v485
    %v3249 = vunpack.c.l.b16 %v486
    %v3250 = vunpack.c.l.b16 %v487
    %v3251 = vunpack.c.h.b16 %v487
    %v3252 = vunpack.c.l.b16 %v488
    %v3253 = vunpack.c.h.b16 %v488
    %v3254 = vunpack.c.l.b16 %v489
    %v3255 = vunpack.c.h.b16 %v489
    %v3256 = vunpack.c.l.b16 %v490
    %v3257 = vunpack.c.h.b16 %v490
    %v3258 = vunpack.c.l.b16 %v491
    %v3259 = vunpack.c.h.b16 %v491
    %v3260 = vunpack.c.l.b16 %v492
    %v3261 = vunpack.c.h.b16 %v492
    %v3262 = vunpack.c.l.b16 %v493
    %v3263 = vunpack.c.h.b16 %v493
    %v3264 = vunpack.c.l.b16 %v494
    %v3265 = vunpack.c.h.b16 %v494
    %v3266 = vunpack.c.l.b16 %v495
    %v3267 = vunpack.c.l.b16 %v496
    %v3268 = vunpack.c.h.b16 %v496
    %v3269 = vunpack.c.l.b16 %v497
    %v3270 = vunpack.c.h.b16 %v497
    %v3271 = vunpack.c.l.b16 %v498
    %v3272 = vunpack.c.h.b16 %v498
    %v3273 = vunpack.c.l.b16 %v499
    %v3274 = vunpack.c.h.b16 %v499
    %v3275 = vunpack.c.l.b16 %v500
    %v3276 = vunpack.c.h.b16 %v500
    %v3277 = vunpack.c.l.b16 %v501
    %v3278 = vunpack.c.h.b16 %v501
    %v3279 = vunpack.c.l.b16 %v502
    %v3280 = vunpack.c.h.b16 %v502
    %v3281 = vunpack.c.l.b16 %v503
    %v3282 = vunpack.c.h.b16 %v503
    %v3283 = vunpack.c.l.b16 %v504
    %v3284 = vunpack.c.l.b16 %v505
    %v3285 = vunpack.c.h.b16 %v505
    %v3286 = vunpack.c.l.b16 %v506
    %v3287 = vunpack.c.h.b16 %v506
    %v3288 = vunpack.c.l.b16 %v507
    %v3289 = vunpack.c.h.b16 %v507
    %v3290 = vunpack.c.l.b16 %v508
    %v3291 = vunpack.c.h.b16 %v508
    %v3292 = vunpack.c.l.b16 %v509
    %v3293 = vunpack.c.h.b16 %v509
    %v3294 = vunpack.c.l.b16 %v510
    %v3295 = vunpack.c.h.b16 %v510
    %v3296 = vunpack.c.l.b16 %v511
    %v3297 = vunpack.c.h.b16 %v511
    %v3298 = vunpack.c.l.b16 %v512
    %v3299 = vunpack.c.h.b16 %v512
    %v3300 = vunpack.c.l.b16 %v513
    %v3301 = vunpack.c.l.b16 %v514
    %v3302 = vunpack.c.h.b16 %v514
    %v3303 = vunpack.c.l.b16 %v515
    %v3304 = vunpack.c.h.b16 %v515
    %v3305 = vunpack.c.l.b16 %v516
    %v3306 = vunpack.c.h.b16 %v516
    %v3307 = vunpack.c.l.b16 %v517
    %v3308 = vunpack.c.h.b16 %v517
    %v3309 = vunpack.c.l.b16 %v518
    %v3310 = vunpack.c.h.b16 %v518
    %v3311 = vunpack.c.l.b16 %v519
    %v3312 = vunpack.c.h.b16 %v519
    %v3313 = vunpack.c.l.b16 %v520
    %v3314 = vunpack.c.h.b16 %v520
    %v3315 = vunpack.c.l.b16 %v521
    %v3316 = vunpack.c.h.b16 %v521
    %v3317 = vunpack.c.l.b16 %v522
    %v3318 = vunpack.c.l.b16 %v523
    %v3319 = vunpack.c.h.b16 %v523
    %v3320 = vunpack.c.l.b16 %v524
    %v3321 = vunpack.c.h.b16 %v524
    %v3322 = vunpack.c.l.b16 %v525
    %v3323 = vunpack.c.h.b16 %v525
    %v3324 = vunpack.c.l.b16 %v526
    %v3325 = vunpack.c.h.b16 %v526
    %v3326 = vunpack.c.l.b16 %v527
    %v3327 = vunpack.c.h.b16 %v527
    %v3328 = vunpack.c.l.b16 %v528
    %v3329 = vunpack.c.h.b16 %v528
    %v3330 = vunpack.c.l.b16 %v529
    %v3331 = vunpack.c.h.b16 %v529
    %v3332 = vunpack.c.l.b16 %v530
    %v3333 = vunpack.c.h.b16 %v530
    %v3334 = vunpack.c.l.b16 %v531
    %v3335 = vunpack.c.l.b16 %v532
    %v3336 = vunpack.c.h.b16 %v532
    %v3337 = vunpack.c.l.b16 %v533
    %v3338 = vunpack.c.h.b16 %v533
    %v3339 = vunpack.c.l.b16 %v534
    %v3340 = vunpack.c.h.b16 %v534
    %v3341 = vunpack.c.l.b16 %v535
    %v3342 = vunpack.c.h.b16 %v535
    %v3343 = vunpack.c.l.b16 %v536
    %v3344 = vunpack.c.h.b16 %v536
    %v3345 = vunpack.c.l.b16 %v537
    %v3346 = vunpack.c.h.b16 %v537
    %v3347 = vunpack.c.l.b16 %v538
    %v3348 = vunpack.c.h.b16 %v538
    %v3349 = vunpack.c.l.b16 %v539
    %v3350 = vunpack.c.h.b16 %v539
    %v3351 = vunpack.c.l.b16 %v540
    %v3352 = vunpack.c.l.b16 %v541
    %v3353 = vunpack.c.h.b16 %v541
    %v3354 = vunpack.c.l.b16 %v542
    %v3355 = vunpack.c.h.b16 %v542
    %v3356 = vunpack.c.l.b16 %v543
    %v3357 = vunpack.c.h.b16 %v543
    %v3358 = vunpack.c.l.b16 %v544
    %v3359 = vunpack.c.h.b16 %v544
    %v3360 = vunpack.c.l.b16 %v545
    %v3361 = vunpack.c.h.b16 %v545
    %v3362 = vunpack.c.l.b16 %v546
    %v3363 = vunpack.c.h.b16 %v546
    %v3364 = vunpack.c.l.b16 %v547
    %v3365 = vunpack.c.h.b16 %v547
    %v3366 = vunpack.c.l.b16 %v548
    %v3367 = vunpack.c.h.b16 %v548
    %v3368 = vunpack.c.l.b16 %v549
    %v3369 = vunpack.c.l.b16 %v550
    %v3370 = vunpack.c.h.b16 %v550
    %v3371 = vunpack.c.l.b16 %v551
    %v3372 = vunpack.c.h.b16 %v551
    %v3373 = vunpack.c.l.b16 %v552
    %v3374 = vunpack.c.h.b16 %v552
    %v3375 = vunpack.c.l.b16 %v553
    %v3376 = vunpack.c.h.b16 %v553
    %v3377 = vunpack.c.l.b16 %v554
    %v3378 = vunpack.c.h.b16 %v554
    %v3379 = vunpack.c.l.b16 %v555
    %v3380 = vunpack.c.h.b16 %v555
    %v3381 = vunpack.c.l.b16 %v556
    %v3382 = vunpack.c.h.b16 %v556
    %v3383 = vunpack.c.l.b16 %v557
    %v3384 = vunpack.c.h.b16 %v557
    %v3385 = vunpack.c.l.b16 %v558
    %v3386 = vunpack.c.l.b16 %v559
    %v3387 = vunpack.c.h.b16 %v559
    %v3388 = vunpack.c.l.b16 %v560
    %v3389 = vunpack.c.h.b16 %v560
    %v3390 = vunpack.c.l.b16 %v561
    %v3391 = vunpack.c.h.b16 %v561
    %v3392 = vunpack.c.l.b16 %v562
    %v3393 = vunpack.c.h.b16 %v562
    %v3394 = vunpack.c.l.b16 %v563
    %v3395 = vunpack.c.h.b16 %v563
    %v3396 = vunpack.c.l.b16 %v564
    %v3397 = vunpack.c.h.b16 %v564
    %v3398 = vunpack.c.l.b16 %v565
    %v3399 = vunpack.c.h.b16 %v565
    %v3400 = vunpack.c.l.b16 %v566
    %v3401 = vunpack.c.h.b16 %v566
    %v3402 = vunpack.c.l.b16 %v567
    %v3403 = vunpack.c.l.b16 %v568
    %v3404 = vunpack.c.h.b16 %v568
    %v3405 = vunpack.c.l.b16 %v569
    %v3406 = vunpack.c.h.b16 %v569
    %v3407 = vunpack.c.l.b16 %v570
    %v3408 = vunpack.c.h.b16 %v570
    %v3409 = vunpack.c.l.b16 %v571
    %v3410 = vunpack.c.h.b16 %v571
    %v3411 = vunpack.c.l.b16 %v572
    %v3412 = vunpack.c.h.b16 %v572
    %v3413 = vunpack.c.l.b16 %v573
    %v3414 = vunpack.c.h.b16 %v573
    %v3415 = vunpack.c.l.b16 %v574
    %v3416 = vunpack.c.h.b16 %v574
    %v3417 = vunpack.c.l.b16 %v575
    %v3418 = vunpack.c.h.b16 %v575
    %v3419 = vunpack.c.l.b16 %v576
    %v3420 = vunpack.c.l.b16 %v577
    %v3421 = vunpack.c.h.b16 %v577
    %v3422 = vunpack.c.l.b16 %v578
    %v3423 = vunpack.c.h.b16 %v578
    %v3424 = vunpack.c.l.b16 %v579
    %v3425 = vunpack.c.h.b16 %v579
    %v3426 = vunpack.c.l.b16 %v580
    %v3427 = vunpack.c.h.b16 %v580
    %v3428 = vunpack.c.l.b16 %v581
    %v3429 = vunpack.c.h.b16 %v581
    %v3430 = vunpack.c.l.b16 %v582
    %v3431 = vunpack.c.h.b16 %v582
    %v3432 = vunpack.c.l.b16 %v583
    %v3433 = vunpack.c.h.b16 %v583
    %v3434 = vunpack.c.l.b16 %v584
    %v3435 = vunpack.c.h.b16 %v584
    %v3436 = vunpack.c.l.b16 %v585
    %v3437 = vunpack.c.l.b16 %v586
    %v3438 = vunpack.c.h.b16 %v586
    %v3439 = vunpack.c.l.b16 %v587
    %v3440 = vunpack.c.h.b16 %v587
    %v3441 = vunpack.c.l.b16 %v588
    %v3442 = vunpack.c.h.b16 %v588
    %v3443 = vunpack.c.l.b16 %v589
    %v3444 = vunpack.c.h.b16 %v589
    %v3445 = vunpack.c.l.b16 %v590
    %v3446 = vunpack.c.h.b16 %v590
    %v3447 = vunpack.c.l.b16 %v591
    %v3448 = vunpack.c.h.b16 %v591
    %v3449 = vunpack.c.l.b16 %v592
    %v3450 = vunpack.c.h.b16 %v592
    %v3451 = vunpack.c.l.b16 %v593
    %v3452 = vunpack.c.h.b16 %v593
    %v3453 = vunpack.c.l.b16 %v594
    %v3454 = vunpack.c.l.b16 %v595
    %v3455 = vunpack.c.h.b16 %v595
    %v3456 = vunpack.c.l.b16 %v596
    %v3457 = vunpack.c.h.b16 %v596
    %v3458 = vunpack.c.l.b16 %v597
    %v3459 = vunpack.c.h.b16 %v597
    %v3460 = vunpack.c.l.b16 %v598
    %v3461 = vunpack.c.h.b16 %v598
    %v3462 = vunpack.c.l.b16 %v599
    %v3463 = vunpack.c.h.b16 %v599
    %v3464 = vunpack.c.l.b16 %v600
    %v3465 = vunpack.c.h.b16 %v600
    %v3466 = vunpack.c.l.b16 %v601
    %v3467 = vunpack.c.h.b16 %v601
    %v3468 = vunpack.c.l.b16 %v602
    %v3469 = vunpack.c.h.b16 %v602
    %v3470 = vunpack.c.l.b16 %v603
    %v3471 = vunpack.c.l.b16 %v604
    %v3472 = vunpack.c.h.b16 %v604
    %v3473 = vunpack.c.l.b16 %v605
    %v3474 = vunpack.c.h.b16 %v605
    %v3475 = vunpack.c.l.b16 %v606
    %v3476 = vunpack.c.h.b16 %v606
    %v3477 = vunpack.c.l.b16 %v607
    %v3478 = vunpack.c.h.b16 %v607
    %v3479 = vunpack.c.l.b16 %v608
    %v3480 = vunpack.c.h.b16 %v608
    %v3481 = vunpack.c.l.b16 %v609
    %v3482 = vunpack.c.h.b16 %v609
    %v3483 = vunpack.c.l.b16 %v610
    %v3484 = vunpack.c.h.b16 %v610
    %v3485 = vunpack.c.l.b16 %v611
    %v3486 = vunpack.c.h.b16 %v611
    %v3487 = vunpack.c.l.b16 %v612
    %v3488 = vunpack.c.l.b16 %v613
    %v3489 = vunpack.c.h.b16 %v613
    %v3490 = vunpack.c.l.b16 %v614
    %v3491 = vunpack.c.h.b16 %v614
    %v3492 = vunpack.c.l.b16 %v615
    %v3493 = vunpack.c.h.b16 %v615
    %v3494 = vunpack.c.l.b16 %v616
    %v3495 = vunpack.c.h.b16 %v616
    %v3496 = vunpack.c.l.b16 %v617
    %v3497 = vunpack.c.h.b16 %v617
    %v3498 = vunpack.c.l.b16 %v618
    %v3499 = vunpack.c.h.b16 %v618
    %v3500 = vunpack.c.l.b16 %v619
    %v3501 = vunpack.c.h.b16 %v619
    %v3502 = vunpack.c.l.b16 %v620
    %v3503 = vunpack.c.h.b16 %v620
    %v3504 = vunpack.c.l.b16 %v621
    %v3505 = vunpack.c.l.b16 %v622
    %v3506 = vunpack.c.h.b16 %v622
    %v3507 = vunpack.c.l.b16 %v623
    %v3508 = vunpack.c.h.b16 %v623
    %v3509 = vunpack.c.l.b16 %v624
    %v3510 = vunpack.c.h.b16 %v624
    %v3511 = vunpack.c.l.b16 %v625
    %v3512 = vunpack.c.h.b16 %v625
    %v3513 = vunpack.c.l.b16 %v626
    %v3514 = vunpack.c.h.b16 %v626
    %v3515 = vunpack.c.l.b16 %v627
    %v3516 = vunpack.c.h.b16 %v627
    %v3517 = vunpack.c.l.b16 %v628
    %v3518 = vunpack.c.h.b16 %v628
    %v3519 = vunpack.c.l.b16 %v629
    %v3520 = vunpack.c.h.b16 %v629
    %v3521 = vunpack.c.l.b16 %v630
    %v3522 = vunpack.c.l.b16 %v631
    %v3523 = vunpack.c.h.b16 %v631
    %v3524 = vunpack.c.l.b16 %v632
    %v3525 = vunpack.c.h.b16 %v632
    %v3526 = vunpack.c.l.b16 %v633
    %v3527 = vunpack.c.h.b16 %v633
    %v3528 = vunpack.c.l.b16 %v634
    %v3529 = vunpack.c.h.b16 %v634
    %v3530 = vunpack.c.l.b16 %v635
    %v3531 = vunpack.c.h.b16 %v635
    %v3532 = vunpack.c.l.b16 %v636
    %v3533 = vunpack.c.h.b16 %v636
    %v3534 = vunpack.c.l.b16 %v637
    %v3535 = vunpack.c.h.b16 %v637
    %v3536 = vunpack.c.l.b16 %v638
    %v3537 = vunpack.c.h.b16 %v638
    %v3538 = vunpack.c.l.b16 %v639
    %v3539 = vunpack.c.l.b16 %v640
    %v3540 = vunpack.c.h.b16 %v640
    %v3541 = vunpack.c.l.b16 %v641
    %v3542 = vunpack.c.h.b16 %v641
    %v3543 = vunpack.c.l.b16 %v642
    %v3544 = vunpack.c.h.b16 %v642
    %v3545 = vunpack.c.l.b16 %v643
    %v3546 = vunpack.c.h.b16 %v643
    %v3547 = vunpack.c.l.b16 %v644
    %v3548 = vunpack.c.h.b16 %v644
    %v3549 = vunpack.c.l.b16 %v645
    %v3550 = vunpack.c.h.b16 %v645
    %v3551 = vunpack.c.l.b16 %v646
    %v3552 = vunpack.c.h.b16 %v646
    %v3553 = vunpack.c.l.b16 %v647
    %v3554 = vunpack.c.h.b16 %v647
    %v3555 = vunpack.c.l.b16 %v648
    %v3556 = vunpack.c.l.b16 %v649
    %v3557 = vunpack.c.h.b16 %v649
    %v3558 = vunpack.c.l.b16 %v650
    %v3559 = vunpack.c.h.b16 %v650
    %v3560 = vunpack.c.l.b16 %v651
    %v3561 = vunpack.c.h.b16 %v651
    %v3562 = vunpack.c.l.b16 %v652
    %v3563 = vunpack.c.h.b16 %v652
    %v3564 = vunpack.c.l.b16 %v653
    %v3565 = vunpack.c.h.b16 %v653
    %v3566 = vunpack.c.l.b16 %v654
    %v3567 = vunpack.c.h.b16 %v654
    %v3568 = vunpack.c.l.b16 %v655
    %v3569 = vunpack.c.h.b16 %v655
    %v3570 = vunpack.c.l.b16 %v656
    %v3571 = vunpack.c.h.b16 %v656
    %v3572 = vunpack.c.l.b16 %v657
    %v3573 = vunpack.c.l.b16 %v658
    %v3574 = vunpack.c.h.b16 %v658
    %v3575 = vunpack.c.l.b16 %v659
    %v3576 = vunpack.c.h.b16 %v659
    %v3577 = vunpack.c.l.b16 %v660
    %v3578 = vunpack.c.h.b16 %v660
    %v3579 = vunpack.c.l.b16 %v661
    %v3580 = vunpack.c.h.b16 %v661
    %v3581 = vunpack.c.l.b16 %v662
    %v3582 = vunpack.c.h.b16 %v662
    %v3583 = vunpack.c.l.b16 %v663
    %v3584 = vunpack.c.h.b16 %v663
    %v3585 = vunpack.c.l.b16 %v664
    %v3586 = vunpack.c.h.b16 %v664
    %v3587 = vunpack.c.l.b16 %v665
    %v3588 = vunpack.c.h.b16 %v665
    %v3589 = vunpack.c.l.b16 %v666
    %v3590 = vunpack.c.l.b16 %v667
    %v3591 = vunpack.c.h.b16 %v667
    %v3592 = vunpack.c.l.b16 %v668
    %v3593 = vunpack.c.h.b16 %v668
    %v3594 = vunpack.c.l.b16 %v669
    %v3595 = vunpack.c.h.b16 %v669
    %v3596 = vunpack.c.l.b16 %v670
    %v3597 = vunpack.c.h.b16 %v670
    %v3598 = vunpack.c.l.b16 %v671
    %v3599 = vunpack.c.h.b16 %v671
    %v3600 = vunpack.c.l.b16 %v672
    %v3601 = vunpack.c.h.b16 %v672
    %v3602 = vunpack.c.l.b16 %v673
    %v3603 = vunpack.c.h.b16 %v673
    %v3604 = vunpack.c.l.b16 %v674
    %v3605 = vunpack.c.h.b16 %v674
    %v3606 = vunpack.c.l.b16 %v675
    %v3607 = vunpack.c.l.b16 %v676
    %v3608 = vunpack.c.h.b16 %v676
    %v3609 = vunpack.c.l.b16 %v677
    %v3610 = vunpack.c.h.b16 %v677
    %v3611 = vunpack.c.l.b16 %v678
    %v3612 = vunpack.c.h.b16 %v678
    %v3613 = vunpack.c.l.b16 %v679
    %v3614 = vunpack.c.h.b16 %v679
    %v3615 = vunpack.c.l.b16 %v680
    %v3616 = vunpack.c.h.b16 %v680
    %v3617 = vunpack.c.l.b16 %v681
    %v3618 = vunpack.c.h.b16 %v681
    %v3619 = vunpack.c.l.b16 %v682
    %v3620 = vunpack.c.h.b16 %v682
    %v3621 = vunpack.c.l.b16 %v683
    %v3622 = vunpack.c.h.b16 %v683
    %v3623 = vunpack.c.l.b16 %v684
    %v3624 = vunpack.c.l.b16 %v685
    %v3625 = vunpack.c.h.b16 %v685
    %v3626 = vunpack.c.l.b16 %v686
    %v3627 = vunpack.c.h.b16 %v686
    %v3628 = vunpack.c.l.b16 %v687
    %v3629 = vunpack.c.h.b16 %v687
    %v3630 = vunpack.c.l.b16 %v688
    %v3631 = vunpack.c.h.b16 %v688
    %v3632 = vunpack.c.l.b16 %v689
    %v3633 = vunpack.c.h.b16 %v689
    %v3634 = vunpack.c.l.b16 %v690
    %v3635 = vunpack.c.h.b16 %v690
    %v3636 = vunpack.c.l.b16 %v691
    %v3637 = vunpack.c.h.b16 %v691
    %v3638 = vunpack.c.l.b16 %v692
    %v3639 = vunpack.c.h.b16 %v692
    %v3640 = vunpack.c.l.b16 %v693
    %v3641 = vunpack.c.l.b16 %v694
    %v3642 = vunpack.c.h.b16 %v694
    %v3643 = vunpack.c.l.b16 %v695
    %v3644 = vunpack.c.h.b16 %v695
    %v3645 = vunpack.c.l.b16 %v696
    %v3646 = vunpack.c.h.b16 %v696
    %v3647 = vunpack.c.l.b16 %v697
    %v3648 = vunpack.c.h.b16 %v697
    %v3649 = vunpack.c.l.b16 %v698
    %v3650 = vunpack.c.h.b16 %v698
    %v3651 = vunpack.c.l.b16 %v699
    %v3652 = vunpack.c.h.b16 %v699
    %v3653 = vunpack.c.l.b16 %v700
    %v3654 = vunpack.c.h.b16 %v700
    %v3655 = vunpack.c.l.b16 %v701
    %v3656 = vunpack.c.h.b16 %v701
    %v3657 = vunpack.c.l.b16 %v702
    %v3658 = vunpack.c.l.b16 %v703
    %v3659 = vunpack.c.h.b16 %v703
    %v3660 = vunpack.c.l.b16 %v704
    %v3661 = vunpack.c.h.b16 %v704
    %v3662 = vunpack.c.l.b16 %v705
    %v3663 = vunpack.c.h.b16 %v705
    %v3664 = vunpack.c.l.b16 %v706
    %v3665 = vunpack.c.h.b16 %v706
    %v3666 = vunpack.c.l.b16 %v707
    %v3667 = vunpack.c.h.b16 %v707
    %v3668 = vunpack.c.l.b16 %v708
    %v3669 = vunpack.c.h.b16 %v708
    %v3670 = vunpack.c.l.b16 %v709
    %v3671 = vunpack.c.h.b16 %v709
    %v3672 = vunpack.c.l.b16 %v710
    %v3673 = vunpack.c.h.b16 %v710
    %v3674 = vunpack.c.l.b16 %v711
    %v3675 = vunpack.c.l.b16 %v712
    %v3676 = vunpack.c.h.b16 %v712
    %v3677 = vunpack.c.l.b16 %v713
    %v3678 = vunpack.c.h.b16 %v713
    %v3679 = vunpack.c.l.b16 %v714
    %v3680 = vunpack.c.h.b16 %v714
    %v3681 = vunpack.c.l.b16 %v715
    %v3682 = vunpack.c.h.b16 %v715
    %v3683 = vunpack.c.l.b16 %v716
    %v3684 = vunpack.c.h.b16 %v716
    %v3685 = vunpack.c.l.b16 %v717
    %v3686 = vunpack.c.h.b16 %v717
    %v3687 = vunpack.c.l.b16 %v718
    %v3688 = vunpack.c.h.b16 %v718
    %v3689 = vunpack.c.l.b16 %v719
    %v3690 = vunpack.c.h.b16 %v719
    %v3691 = vunpack.c.l.b16 %v720
    %v3692 = vunpack.c.l.b16 %v721
    %v3693 = vunpack.c.h.b16 %v721
    %v3694 = vunpack.c.l.b16 %v722
    %v3695 = vunpack.c.h.b16 %v722
    %v3696 = vunpack.c.l.b16 %v723
    %v3697 = vunpack.c.h.b16 %v723
    %v3698 = vunpack.c.l.b16 %v724
    %v3699 = vunpack.c.h.b16 %v724
    %v3700 = vunpack.c.l.b16 %v725
    %v3701 = vunpack.c.h.b16 %v725
    %v3702 = vunpack.c.l.b16 %v726
    %v3703 = vunpack.c.h.b16 %v726
    %v3704 = vunpack.c.l.b16 %v727
    %v3705 = vunpack.c.h.b16 %v727
    %v3706 = vunpack.c.l.b16 %v728
    %v3707 = vunpack.c.h.b16 %v728
    %v3708 = vunpack.c.l.b16 %v729
    %v3709 = vunpack.c.l.b16 %v730
    %v3710 = vunpack.c.h.b16 %v730
    %v3711 = vunpack.c.l.b16 %v731
    %v3712 = vunpack.c.h.b16 %v731
    %v3713 = vunpack.c.l.b16 %v732
    %v3714 = vunpack.c.h.b16 %v732
    %v3715 = vunpack.c.l.b16 %v733
    %v3716 = vunpack.c.h.b16 %v733
    %v3717 = vunpack.c.l.b16 %v734
    %v3718 = vunpack.c.h.b16 %v734
    %v3719 = vunpack.c.l.b16 %v735
    %v3720 = vunpack.c.h.b16 %v735
    %v3721 = vunpack.c.l.b16 %v736
    %v3722 = vunpack.c.h.b16 %v736
    %v3723 = vunpack.c.l.b16 %v737
    %v3724 = vunpack.c.h.b16 %v737
    %v3725 = vunpack.c.l.b16 %v738
    %v3726 = vunpack.c.l.b16 %v739
    %v3727 = vunpack.c.h.b16 %v739
    %v3728 = vunpack.c.l.b16 %v740
    %v3729 = vunpack.c.h.b16 %v740
    %v3730 = vunpack.c.l.b16 %v741
    %v3731 = vunpack.c.h.b16 %v741
    %v3732 = vunpack.c.l.b16 %v742
    %v3733 = vunpack.c.h.b16 %v742
    %v3734 = vunpack.c.l.b16 %v743
    %v3735 = vunpack.c.h.b16 %v743
    %v3736 = vunpack.c.l.b16 %v744
    %v3737 = vunpack.c.h.b16 %v744
    %v3738 = vunpack.c.l.b16 %v745
    %v3739 = vunpack.c.h.b16 %v745
    %v3740 = vunpack.c.l.b16 %v746
    %v3741 = vunpack.c.h.b16 %v746
    %v3742 = vunpack.c.l.b16 %v747
    %v3743 = vunpack.c.l.b16 %v748
    %v3744 = vunpack.c.h.b16 %v748
    %v3745 = vunpack.c.l.b16 %v749
    %v3746 = vunpack.c.h.b16 %v749
    %v3747 = vunpack.c.l.b16 %v750
    %v3748 = vunpack.c.h.b16 %v750
    %v3749 = vunpack.c.l.b16 %v751
    %v3750 = vunpack.c.h.b16 %v751
    %v3751 = vunpack.c.l.b16 %v752
    %v3752 = vunpack.c.h.b16 %v752
    %v3753 = vunpack.c.l.b16 %v753
    %v3754 = vunpack.c.h.b16 %v753
    %v3755 = vunpack.c.l.b16 %v754
    %v3756 = vunpack.c.h.b16 %v754
    %v3757 = vunpack.c.l.b16 %v755
    %v3758 = vunpack.c.h.b16 %v755
    %v3759 = vunpack.c.l.b16 %v756
    %v3760 = vunpack.c.l.b16 %v757
    %v3761 = vunpack.c.h.b16 %v757
    %v3762 = vunpack.c.l.b16 %v758
    %v3763 = vunpack.c.h.b16 %v758
    %v3764 = vunpack.c.l.b16 %v759
    %v3765 = vunpack.c.h.b16 %v759
    %v3766 = vunpack.c.l.b16 %v760
    %v3767 = vunpack.c.h.b16 %v760
    %v3768 = vunpack.c.l.b16 %v761
    %v3769 = vunpack.c.h.b16 %v761
    %v3770 = vunpack.c.l.b16 %v762
    %v3771 = vunpack.c.h.b16 %v762
    %v3772 = vunpack.c.l.b16 %v763
    %v3773 = vunpack.c.h.b16 %v763
    %v3774 = vunpack.c.l.b16 %v764
    %v3775 = vunpack.c.h.b16 %v764
    %v3776 = vunpack.c.l.b16 %v765
    %v3777 = vunpack.c.l.b16 %v766
    %v3778 = vunpack.c.h.b16 %v766
    %v3779 = vunpack.c.l.b16 %v767
    %v3780 = vunpack.c.h.b16 %v767
    %v3781 = vunpack.c.l.b16 %v768
    %v3782 = vunpack.c.h.b16 %v768
    %v3783 = vunpack.c.l.b16 %v769
    %v3784 = vunpack.c.h.b16 %v769
    %v3785 = vunpack.c.l.b16 %v770
    %v3786 = vunpack.c.h.b16 %v770
    %v3787 = vunpack.c.l.b16 %v771
    %v3788 = vunpack.c.h.b16 %v771
    %v3789 = vunpack.c.l.b16 %v772
    %v3790 = vunpack.c.h.b16 %v772
    %v3791 = vunpack.c.l.b16 %v773
    %v3792 = vunpack.c.h.b16 %v773
    %v3793 = vunpack.c.l.b16 %v774
    %v3794 = vunpack.c.l.b16 %v775
    %v3795 = vunpack.c.h.b16 %v775
    %v3796 = vunpack.c.l.b16 %v776
    %v3797 = vunpack.c.h.b16 %v776
    %v3798 = vunpack.c.l.b16 %v777
    %v3799 = vunpack.c.h.b16 %v777
    %v3800 = vunpack.c.l.b16 %v778
    %v3801 = vunpack.c.h.b16 %v778
    %v3802 = vunpack.c.l.b16 %v779
    %v3803 = vunpack.c.h.b16 %v779
    %v3804 = vunpack.c.l.b16 %v780
    %v3805 = vunpack.c.h.b16 %v780
    %v3806 = vunpack.c.l.b16 %v781
    %v3807 = vunpack.c.h.b16 %v781
    %v3808 = vunpack.c.l.b16 %v782
    %v3809 = vunpack.c.h.b16 %v782
    %v3810 = vunpack.c.l.b16 %v783
    %v3811 = vunpack.c.l.b16 %v784
    %v3812 = vunpack.c.h.b16 %v784
    %v3813 = vunpack.c.l.b16 %v785
    %v3814 = vunpack.c.h.b16 %v785
    %v3815 = vunpack.c.l.b16 %v786
    %v3816 = vunpack.c.h.b16 %v786
    %v3817 = vunpack.c.l.b16 %v787
    %v3818 = vunpack.c.h.b16 %v787
    %v3819 = vunpack.c.l.b16 %v788
    %v3820 = vunpack.c.h.b16 %v788
    %v3821 = vunpack.c.l.b16 %v789
    %v3822 = vunpack.c.h.b16 %v789
    %v3823 = vunpack.c.l.b16 %v790
    %v3824 = vunpack.c.h.b16 %v790
    %v3825 = vunpack.c.l.b16 %v791
    %v3826 = vunpack.c.h.b16 %v791
    %v3827 = vunpack.c.l.b16 %v792
    %v3828 = vunpack.c.l.b16 %v793
    %v3829 = vunpack.c.h.b16 %v793
    %v3830 = vunpack.c.l.b16 %v794
    %v3831 = vunpack.c.h.b16 %v794
    %v3832 = vunpack.c.l.b16 %v795
    %v3833 = vunpack.c.h.b16 %v795
    %v3834 = vunpack.c.l.b16 %v796
    %v3835 = vunpack.c.h.b16 %v796
    %v3836 = vunpack.c.l.b16 %v797
    %v3837 = vunpack.c.h.b16 %v797
    %v3838 = vunpack.c.l.b16 %v798
    %v3839 = vunpack.c.h.b16 %v798
    %v3840 = vunpack.c.l.b16 %v799
    %v3841 = vunpack.c.h.b16 %v799
    %v3842 = vunpack.c.l.b16 %v800
    %v3843 = vunpack.c.h.b16 %v800
    %v3844 = vunpack.c.l.b16 %v801
    %v3845 = vunpack.c.l.b16 %v802
    %v3846 = vunpack.c.h.b16 %v802
    %v3847 = vunpack.c.l.b16 %v803
    %v3848 = vunpack.c.h.b16 %v803
    %v3849 = vunpack.c.l.b16 %v804
    %v3850 = vunpack.c.h.b16 %v804
    %v3851 = vunpack.c.l.b16 %v805
    %v3852 = vunpack.c.h.b16 %v805
    %v3853 = vunpack.c.l.b16 %v806
    %v3854 = vunpack.c.h.b16 %v806
    %v3855 = vunpack.c.l.b16 %v807
    %v3856 = vunpack.c.h.b16 %v807
    %v3857 = vunpack.c.l.b16 %v808
    %v3858 = vunpack.c.h.b16 %v808
    %v3859 = vunpack.c.l.b16 %v809
    %v3860 = vunpack.c.h.b16 %v809
    %v3861 = vunpack.c.l.b16 %v810
    %v3862 = vunpack.c.l.b16 %v811
    %v3863 = vunpack.c.h.b16 %v811
    %v3864 = vunpack.c.l.b16 %v812
    %v3865 = vunpack.c.h.b16 %v812
    %v3866 = vunpack.c.l.b16 %v813
    %v3867 = vunpack.c.h.b16 %v813
    %v3868 = vunpack.c.l.b16 %v814
    %v3869 = vunpack.c.h.b16 %v814
    %v3870 = vunpack.c.l.b16 %v815
    %v3871 = vunpack.c.h.b16 %v815
    %v3872 = vunpack.c.l.b16 %v816
    %v3873 = vunpack.c.h.b16 %v816
    %v3874 = vunpack.c.l.b16 %v817
    %v3875 = vunpack.c.h.b16 %v817
    %v3876 = vunpack.c.l.b16 %v818
    %v3877 = vunpack.c.h.b16 %v818
    %v3878 = vunpack.c.l.b16 %v819
    %v3879 = vunpack.c.l.b16 %v820
    %v3880 = vunpack.c.h.b16 %v820
    %v3881 = vunpack.c.l.b16 %v821
    %v3882 = vunpack.c.h.b16 %v821
    %v3883 = vunpack.c.l.b16 %v822
    %v3884 = vunpack.c.h.b16 %v822
    %v3885 = vunpack.c.l.b16 %v823
    %v3886 = vunpack.c.h.b16 %v823
    %v3887 = vunpack.c.l.b16 %v824
    %v3888 = vunpack.c.h.b16 %v824
    %v3889 = vunpack.c.l.b16 %v825
    %v3890 = vunpack.c.h.b16 %v825
    %v3891 = vunpack.c.l.b16 %v826
    %v3892 = vunpack.c.h.b16 %v826
    %v3893 = vunpack.c.l.b16 %v827
    %v3894 = vunpack.c.h.b16 %v827
    %v3895 = vunpack.c.l.b16 %v828
    %v3896 = vunpack.c.l.b16 %v829
    %v3897 = vunpack.c.h.b16 %v829
    %v3898 = vunpack.c.l.b16 %v830
    %v3899 = vunpack.c.h.b16 %v830
    %v3900 = vunpack.c.l.b16 %v831
    %v3901 = vunpack.c.h.b16 %v831
    %v3902 = vunpack.c.l.b16 %v832
    %v3903 = vunpack.c.h.b16 %v832
    %v3904 = vunpack.c.l.b16 %v833
    %v3905 = vunpack.c.h.b16 %v833
    %v3906 = vunpack.c.l.b16 %v834
    %v3907 = vunpack.c.h.b16 %v834
    %v3908 = vunpack.c.l.b16 %v835
    %v3909 = vunpack.c.h.b16 %v835
    %v3910 = vunpack.c.l.b16 %v836
    %v3911 = vunpack.c.h.b16 %v836
    %v3912 = vunpack.c.l.b16 %v837
    %v3913 = vunpack.c.l.b16 %v838
    %v3914 = vunpack.c.h.b16 %v838
    %v3915 = vunpack.c.l.b16 %v839
    %v3916 = vunpack.c.h.b16 %v839
    %v3917 = vunpack.c.l.b16 %v840
    %v3918 = vunpack.c.h.b16 %v840
    %v3919 = vunpack.c.l.b16 %v841
    %v3920 = vunpack.c.h.b16 %v841
    %v3921 = vunpack.c.l.b16 %v842
    %v3922 = vunpack.c.h.b16 %v842
    %v3923 = vunpack.c.l.b16 %v843
    %v3924 = vunpack.c.h.b16 %v843
    %v3925 = vunpack.c.l.b16 %v844
    %v3926 = vunpack.c.h.b16 %v844
    %v3927 = vunpack.c.l.b16 %v845
    %v3928 = vunpack.c.h.b16 %v845
    %v3929 = vunpack.c.l.b16 %v846
    %v3930 = vunpack.c.l.b16 %v847
    %v3931 = vunpack.c.h.b16 %v847
    %v3932 = vunpack.c.l.b16 %v848
    %v3933 = vunpack.c.h.b16 %v848
    %v3934 = vunpack.c.l.b16 %v849
    %v3935 = vunpack.c.h.b16 %v849
    %v3936 = vunpack.c.l.b16 %v850
    %v3937 = vunpack.c.h.b16 %v850
    %v3938 = vunpack.c.l.b16 %v851
    %v3939 = vunpack.c.h.b16 %v851
    %v3940 = vunpack.c.l.b16 %v852
    %v3941 = vunpack.c.h.b16 %v852
    %v3942 = vunpack.c.l.b16 %v853
    %v3943 = vunpack.c.h.b16 %v853
    %v3944 = vunpack.c.l.b16 %v854
    %v3945 = vunpack.c.h.b16 %v854
    %v3946 = vunpack.c.l.b16 %v855
    %v3947 = vunpack.c.l.b16 %v856
    %v3948 = vunpack.c.h.b16 %v856
    %v3949 = vunpack.c.l.b16 %v857
    %v3950 = vunpack.c.h.b16 %v857
    %v3951 = vunpack.c.l.b16 %v858
    %v3952 = vunpack.c.h.b16 %v858
    %v3953 = vunpack.c.l.b16 %v859
    %v3954 = vunpack.c.h.b16 %v859
    %v3955 = vunpack.c.l.b16 %v860
    %v3956 = vunpack.c.h.b16 %v860
    %v3957 = vunpack.c.l.b16 %v861
    %v3958 = vunpack.c.h.b16 %v861
    %v3959 = vunpack.c.l.b16 %v862
    %v3960 = vunpack.c.h.b16 %v862
    %v3961 = vunpack.c.l.b16 %v863
    %v3962 = vunpack.c.h.b16 %v863
    %v3963 = vunpack.c.l.b16 %v864
    %v3964 = vunpack.c.l.b16 %v865
    %v3965 = vunpack.c.h.b16 %v865
    %v3966 = vunpack.c.l.b16 %v866
    %v3967 = vunpack.c.h.b16 %v866
    %v3968 = vunpack.c.l.b16 %v867
    %v3969 = vunpack.c.h.b16 %v867
    %v3970 = vunpack.c.l.b16 %v868
    %v3971 = vunpack.c.h.b16 %v868
    %v3972 = vunpack.c.l.b16 %v869
    %v3973 = vunpack.c.h.b16 %v869
    %v3974 = vunpack.c.l.b16 %v870
    %v3975 = vunpack.c.h.b16 %v870
    %v3976 = vunpack.c.l.b16 %v871
    %v3977 = vunpack.c.h.b16 %v871
    %v3978 = vunpack.c.l.b16 %v872
    %v3979 = vunpack.c.h.b16 %v872
    %v3980 = vunpack.c.l.b16 %v873
    %v3981 = vunpack.c.l.b16 %v874
    %v3982 = vunpack.c.h.b16 %v874
    %v3983 = vunpack.c.l.b16 %v875
    %v3984 = vunpack.c.h.b16 %v875
    %v3985 = vunpack.c.l.b16 %v876
    %v3986 = vunpack.c.h.b16 %v876
    %v3987 = vunpack.c.l.b16 %v877
    %v3988 = vunpack.c.h.b16 %v877
    %v3989 = vunpack.c.l.b16 %v878
    %v3990 = vunpack.c.h.b16 %v878
    %v3991 = vunpack.c.l.b16 %v879
    %v3992 = vunpack.c.h.b16 %v879
    %v3993 = vunpack.c.l.b16 %v880
    %v3994 = vunpack.c.h.b16 %v880
    %v3995 = vunpack.c.l.b16 %v881
    %v3996 = vunpack.c.h.b16 %v881
    %v3997 = vunpack.c.l.b16 %v882
    %v3998 = vunpack.c.l.b16 %v883
    %v3999 = vunpack.c.h.b16 %v883
    %v4000 = vunpack.c.l.b16 %v884
    %v4001 = vunpack.c.h.b16 %v884
    %v4002 = vunpack.c.l.b16 %v885
    %v4003 = vunpack.c.h.b16 %v885
    %v4004 = vunpack.c.l.b16 %v886
    %v4005 = vunpack.c.h.b16 %v886
    %v4006 = vunpack.c.l.b16 %v887
    %v4007 = vunpack.c.h.b16 %v887
    %v4008 = vunpack.c.l.b16 %v888
    %v4009 = vunpack.c.h.b16 %v888
    %v4010 = vunpack.c.l.b16 %v889
    %v4011 = vunpack.c.h.b16 %v889
    %v4012 = vunpack.c.l.b16 %v890
    %v4013 = vunpack.c.h.b16 %v890
    %v4014 = vunpack.c.l.b16 %v891
    %v4015 = vunpack.c.l.b16 %v892
    %v4016 = vunpack.c.h.b16 %v892
    %v4017 = vunpack.c.l.b16 %v893
    %v4018 = vunpack.c.h.b16 %v893
    %v4019 = vunpack.c.l.b16 %v894
    %v4020 = vunpack.c.h.b16 %v894
    %v4021 = vunpack.c.l.b16 %v895
    %v4022 = vunpack.c.h.b16 %v895
    %v4023 = vunpack.c.l.b16 %v896
    %v4024 = vunpack.c.h.b16 %v896
    %v4025 = vunpack.c.l.b16 %v897
    %v4026 = vunpack.c.h.b16 %v897
    %v4027 = vunpack.c.l.b16 %v898
    %v4028 = vunpack.c.h.b16 %v898
    %v4029 = vunpack.c.l.b16 %v899
    %v4030 = vunpack.c.h.b16 %v899
    %v4031 = vunpack.c.l.b16 %v900
    %v4032 = vunpack.c.l.b16 %v901
    %v4033 = vunpack.c.h.b16 %v901
    %v4034 = vunpack.c.l.b16 %v902
    %v4035 = vunpack.c.h.b16 %v902
    %v4036 = vunpack.c.l.b16 %v903
    %v4037 = vunpack.c.h.b16 %v903
    %v4038 = vunpack.c.l.b16 %v904
    %v4039 = vunpack.c.h.b16 %v904
    %v4040 = vunpack.c.l.b16 %v905
    %v4041 = vunpack.c.h.b16 %v905
    %v4042 = vunpack.c.l.b16 %v906
    %v4043 = vunpack.c.h.b16 %v906
    %v4044 = vunpack.c.l.b16 %v907
    %v4045 = vunpack.c.h.b16 %v907
    %v4046 = vunpack.c.l.b16 %v908
    %v4047 = vunpack.c.h.b16 %v908
    %v4048 = vunpack.c.l.b16 %v909
    %v4049 = vunpack.c.l.b16 %v910
    %v4050 = vunpack.c.h.b16 %v910
    %v4051 = vunpack.c.l.b16 %v911
    %v4052 = vunpack.c.h.b16 %v911
    %v4053 = vunpack.c.l.b16 %v912
    %v4054 = vunpack.c.h.b16 %v912
    %v4055 = vunpack.c.l.b16 %v913
    %v4056 = vunpack.c.h.b16 %v913
    %v4057 = vunpack.c.l.b16 %v914
    %v4058 = vunpack.c.h.b16 %v914
    %v4059 = vunpack.c.l.b16 %v915
    %v4060 = vunpack.c.h.b16 %v915
    %v4061 = vunpack.c.l.b16 %v916
    %v4062 = vunpack.c.h.b16 %v916
    %v4063 = vunpack.c.l.b16 %v917
    %v4064 = vunpack.c.h.b16 %v917
    %v4065 = vunpack.c.l.b16 %v918
    %v4066 = vunpack.c.l.b16 %v919
    %v4067 = vunpack.c.h.b16 %v919
    %v4068 = vunpack.c.l.b16 %v920
    %v4069 = vunpack.c.h.b16 %v920
    %v4070 = vunpack.c.l.b16 %v921
    %v4071 = vunpack.c.h.b16 %v921
    %v4072 = vunpack.c.l.b16 %v922
    %v4073 = vunpack.c.h.b16 %v922
    %v4074 = vunpack.c.l.b16 %v923
    %v4075 = vunpack.c.h.b16 %v923
    %v4076 = vunpack.c.l.b16 %v924
    %v4077 = vunpack.c.h.b16 %v924
    %v4078 = vunpack.c.l.b16 %v925
    %v4079 = vunpack.c.h.b16 %v925
    %v4080 = vunpack.c.l.b16 %v926
    %v4081 = vunpack.c.h.b16 %v926
    %v4082 = vunpack.c.l.b16 %v927
    %v4083 = vunpack.c.l.b16 %v928
    %v4084 = vunpack.c.h.b16 %v928
    %v4085 = vunpack.c.l.b16 %v929
    %v4086 = vunpack.c.h.b16 %v929
    %v4087 = vunpack.c.l.b16 %v930
    %v4088 = vunpack.c.h.b16 %v930
    %v4089 = vunpack.c.l.b16 %v931
    %v4090 = vunpack.c.h.b16 %v931
    %v4091 = vunpack.c.l.b16 %v932
    %v4092 = vunpack.c.h.b16 %v932
    %v4093 = vunpack.c.l.b16 %v933
    %v4094 = vunpack.c.h.b16 %v933
    %v4095 = vunpack.c.l.b16 %v934
    %v4096 = vunpack.c.h.b16 %v934
    %v4097 = vunpack.c.l.b16 %v935
    %v4098 = vunpack.c.h.b16 %v935
    %v4099 = vunpack.c.l.b16 %v936
    %v4100 = vunpack.c.l.b16 %v937
    %v4101 = vunpack.c.h.b16 %v937
    %v4102 = vunpack.c.l.b16 %v938
    %v4103 = vunpack.c.h.b16 %v938
    %v4104 = vunpack.c.l.b16 %v939
    %v4105 = vunpack.c.h.b16 %v939
    %v4106 = vunpack.c.l.b16 %v940
    %v4107 = vunpack.c.h.b16 %v940
    %v4108 = vunpack.c.l.b16 %v941
    %v4109 = vunpack.c.h.b16 %v941
    %v4110 = vunpack.c.l.b16 %v942
    %v4111 = vunpack.c.h.b16 %v942
    %v4112 = vunpack.c.l.b16 %v943
    %v4113 = vunpack.c.h.b16 %v943
    %v4114 = vunpack.c.l.b16 %v944
    %v4115 = vunpack.c.h.b16 %v944
    %v4116 = vunpack.c.l.b16 %v945
    %v4117 = vunpack.c.l.b16 %v946
    %v4118 = vunpack.c.h.b16 %v946
    %v4119 = vunpack.c.l.b16 %v947
    %v4120 = vunpack.c.h.b16 %v947
    %v4121 = vunpack.c.l.b16 %v948
    %v4122 = vunpack.c.h.b16 %v948
    %v4123 = vunpack.c.l.b16 %v949
    %v4124 = vunpack.c.h.b16 %v949
    %v4125 = vunpack.c.l.b16 %v950
    %v4126 = vunpack.c.h.b16 %v950
    %v4127 = vunpack.c.l.b16 %v951
    %v4128 = vunpack.c.h.b16 %v951
    %v4129 = vunpack.c.l.b16 %v952
    %v4130 = vunpack.c.h.b16 %v952
    %v4131 = vunpack.c.l.b16 %v953
    %v4132 = vunpack.c.h.b16 %v953
    %v4133 = vunpack.c.l.b16 %v954
    %v4134 = vunpack.c.l.b16 %v955
    %v4135 = vunpack.c.h.b16 %v955
    %v4136 = vunpack.c.l.b16 %v956
    %v4137 = vunpack.c.h.b16 %v956
    %v4138 = vunpack.c.l.b16 %v957
    %v4139 = vunpack.c.h.b16 %v957
    %v4140 = vunpack.c.l.b16 %v958
    %v4141 = vunpack.c.h.b16 %v958
    %v4142 = vunpack.c.l.b16 %v959
    %v4143 = vunpack.c.h.b16 %v959
    %v4144 = vunpack.c.l.b16 %v960
    %v4145 = vunpack.c.h.b16 %v960
    %v4146 = vunpack.c.l.b16 %v961
    %v4147 = vunpack.c.h.b16 %v961
    %v4148 = vunpack.c.l.b16 %v962
    %v4149 = vunpack.c.h.b16 %v962
    %v4150 = vunpack.c.l.b16 %v963
    %v4151 = vunpack.c.l.b16 %v964
    %v4152 = vunpack.c.h.b16 %v964
    %v4153 = vunpack.c.l.b16 %v965
    %v4154 = vunpack.c.h.b16 %v965
    %v4155 = vunpack.c.l.b16 %v966
    %v4156 = vunpack.c.h.b16 %v966
    %v4157 = vunpack.c.l.b16 %v967
    %v4158 = vunpack.c.h.b16 %v967
    %v4159 = vunpack.c.l.b16 %v968
    %v4160 = vunpack.c.h.b16 %v968
    %v4161 = vunpack.c.l.b16 %v969
    %v4162 = vunpack.c.h.b16 %v969
    %v4163 = vunpack.c.l.b16 %v970
    %v4164 = vunpack.c.h.b16 %v970
    %v4165 = vunpack.c.l.b16 %v971
    %v4166 = vunpack.c.h.b16 %v971
    %v4167 = vunpack.c.l.b16 %v972
    %v4168 = vunpack.c.l.b16 %v973
    %v4169 = vunpack.c.h.b16 %v973
    %v4170 = vunpack.c.l.b16 %v974
    %v4171 = vunpack.c.h.b16 %v974
    %v4172 = vunpack.c.l.b16 %v975
    %v4173 = vunpack.c.h.b16 %v975
    %v4174 = vunpack.c.l.b16 %v976
    %v4175 = vunpack.c.h.b16 %v976
    %v4176 = vunpack.c.l.b16 %v977
    %v4177 = vunpack.c.h.b16 %v977
    %v4178 = vunpack.c.l.b16 %v978
    %v4179 = vunpack.c.h.b16 %v978
    %v4180 = vunpack.c.l.b16 %v979
    %v4181 = vunpack.c.h.b16 %v979
    %v4182 = vunpack.c.l.b16 %v980
    %v4183 = vunpack.c.h.b16 %v980
    %v4184 = vunpack.c.l.b16 %v981
    %v4185 = vunpack.c.l.b16 %v982
    %v4186 = vunpack.c.h.b16 %v982
    %v4187 = vunpack.c.l.b16 %v983
    %v4188 = vunpack.c.h.b16 %v983
    %v4189 = vunpack.c.l.b16 %v984
    %v4190 = vunpack.c.h.b16 %v984
    %v4191 = vunpack.c.l.b16 %v985
    %v4192 = vunpack.c.h.b16 %v985
    %v4193 = vunpack.c.l.b16 %v986
    %v4194 = vunpack.c.h.b16 %v986
    %v4195 = vunpack.c.l.b16 %v987
    %v4196 = vunpack.c.h.b16 %v987
    %v4197 = vunpack.c.l.b16 %v988
    %v4198 = vunpack.c.h.b16 %v988
    %v4199 = vunpack.c.l.b16 %v989
    %v4200 = vunpack.c.h.b16 %v989
    %v4201 = vunpack.c.l.b16 %v990
    %v4202 = vunpack.c.l.b16 %v991
    %v4203 = vunpack.c.h.b16 %v991
    %v4204 = vunpack.c.l.b16 %v992
    %v4205 = vunpack.c.h.b16 %v992
    %v4206 = vunpack.c.l.b16 %v993
    %v4207 = vunpack.c.h.b16 %v993
    %v4208 = vunpack.c.l.b16 %v994
    %v4209 = vunpack.c.h.b16 %v994
    %v4210 = vunpack.c.l.b16 %v995
    %v4211 = vunpack.c.h.b16 %v995
    %v4212 = vunpack.c.l.b16 %v996
    %v4213 = vunpack.c.h.b16 %v996
    %v4214 = vunpack.c.l.b16 %v997
    %v4215 = vunpack.c.h.b16 %v997
    %v4216 = vunpack.c.l.b16 %v998
    %v4217 = vunpack.c.h.b16 %v998
    %v4218 = vunpack.c.l.b16 %v999
    %v4219 = vunpack.c.l.b16 %v1000
    %v4220 = vunpack.c.h.b16 %v1000
    %v4221 = vunpack.c.l.b16 %v1001
    %v4222 = vunpack.c.h.b16 %v1001
    %v4223 = vunpack.c.l.b16 %v1002
    %v4224 = vunpack.c.h.b16 %v1002
    %v4225 = vunpack.c.l.b16 %v1003
    %v4226 = vunpack.c.h.b16 %v1003
    %v4227 = vunpack.c.l.b16 %v1004
    %v4228 = vunpack.c.h.b16 %v1004
    %v4229 = vunpack.c.l.b16 %v1005
    %v4230 = vunpack.c.h.b16 %v1005
    %v4231 = vunpack.c.l.b16 %v1006
    %v4232 = vunpack.c.h.b16 %v1006
    %v4233 = vunpack.c.l.b16 %v1007
    %v4234 = vunpack.c.h.b16 %v1007
    %v4235 = vunpack.c.l.b16 %v1008
    %v4236 = vunpack.c.l.b16 %v1009
    %v4237 = vunpack.c.h.b16 %v1009
    %v4238 = vunpack.c.l.b16 %v1010
    %v4239 = vunpack.c.h.b16 %v1010
    %v4240 = vunpack.c.l.b16 %v1011
    %v4241 = vunpack.c.h.b16 %v1011
    %v4242 = vunpack.c.l.b16 %v1012
    %v4243 = vunpack.c.h.b16 %v1012
    %v4244 = vunpack.c.l.b16 %v1013
    %v4245 = vunpack.c.h.b16 %v1013
    %v4246 = vunpack.c.l.b16 %v1014
    %v4247 = vunpack.c.h.b16 %v1014
    %v4248 = vunpack.c.l.b16 %v1015
    %v4249 = vunpack.c.h.b16 %v1015
    %v4250 = vunpack.c.l.b16 %v1016
    %v4251 = vunpack.c.h.b16 %v1016
    %v4252 = vunpack.c.l.b16 %v1017
    %v4253 = vunpack.c.l.b16 %v1018
    %v4254 = vunpack.c.h.b16 %v1018
    %v4255 = vunpack.c.l.b16 %v1019
    %v4256 = vunpack.c.h.b16 %v1019
    %v4257 = vunpack.c.l.b16 %v1020
    %v4258 = vunpack.c.h.b16 %v1020
    %v4259 = vunpack.c.l.b16 %v1021
    %v4260 = vunpack.c.h.b16 %v1021
    %v4261 = vunpack.c.l.b16 %v1022
    %v4262 = vunpack.c.h.b16 %v1022
    %v4263 = vunpack.c.l.b16 %v1023
    %v4264 = vunpack.c.h.b16 %v1023
    %v4265 = vunpack.c.l.b16 %v1024
    %v4266 = vunpack.c.h.b16 %v1024
    %v4267 = vunpack.c.l.b16 %v1025
    %v4268 = vunpack.c.h.b16 %v1025
    %v4269 = vunpack.c.l.b16 %v1026
    %v4270 = vunpack.c.l.b16 %v1027
    %v4271 = vunpack.c.h.b16 %v1027
    %v4272 = vunpack.c.l.b16 %v1028
    %v4273 = vunpack.c.h.b16 %v1028
    %v4274 = vunpack.c.l.b16 %v1029
    %v4275 = vunpack.c.h.b16 %v1029
    %v4276 = vunpack.c.l.b16 %v1030
    %v4277 = vunpack.c.h.b16 %v1030
    %v4278 = vunpack.c.l.b16 %v1031
    %v4279 = vunpack.c.h.b16 %v1031
    %v4280 = vunpack.c.l.b16 %v1032
    %v4281 = vunpack.c.h.b16 %v1032
    %v4282 = vunpack.c.l.b16 %v1033
    %v4283 = vunpack.c.h.b16 %v1033
    %v4284 = vunpack.c.l.b16 %v1034
    %v4285 = vunpack.c.h.b16 %v1034
    %v4286 = vunpack.c.l.b16 %v1035
    %v4287 = vunpack.c.l.b16 %v1036
    %v4288 = vunpack.c.h.b16 %v1036
    %v4289 = vunpack.c.l.b16 %v1037
    %v4290 = vunpack.c.h.b16 %v1037
    %v4291 = vunpack.c.l.b16 %v1038
    %v4292 = vunpack.c.h.b16 %v1038
    %v4293 = vunpack.c.l.b16 %v1039
    %v4294 = vunpack.c.h.b16 %v1039
    %v4295 = vunpack.c.l.b16 %v1040
    %v4296 = vunpack.c.h.b16 %v1040
    %v4297 = vunpack.c.l.b16 %v1041
    %v4298 = vunpack.c.h.b16 %v1041
    %v4299 = vunpack.c.l.b16 %v1042
    %v4300 = vunpack.c.h.b16 %v1042
    %v4301 = vunpack.c.l.b16 %v1043
    %v4302 = vunpack.c.h.b16 %v1043
    %v4303 = vunpack.c.l.b16 %v1044
    %v4304 = vunpack.c.l.b16 %v1045
    %v4305 = vunpack.c.h.b16 %v1045
    %v4306 = vunpack.c.l.b16 %v1046
    %v4307 = vunpack.c.h.b16 %v1046
    %v4308 = vunpack.c.l.b16 %v1047
    %v4309 = vunpack.c.h.b16 %v1047
    %v4310 = vunpack.c.l.b16 %v1048
    %v4311 = vunpack.c.h.b16 %v1048
    %v4312 = vunpack.c.l.b16 %v1049
    %v4313 = vunpack.c.h.b16 %v1049
    %v4314 = vunpack.c.l.b16 %v1050
    %v4315 = vunpack.c.h.b16 %v1050
    %v4316 = vunpack.c.l.b16 %v1051
    %v4317 = vunpack.c.h.b16 %v1051
    %v4318 = vunpack.c.l.b16 %v1052
    %v4319 = vunpack.c.h.b16 %v1052
    %v4320 = vunpack.c.l.b16 %v1053
    %v4321 = vunpack.c.l.b16 %v1054
    %v4322 = vunpack.c.h.b16 %v1054
    %v4323 = vunpack.c.l.b16 %v1055
    %v4324 = vunpack.c.h.b16 %v1055
    %v4325 = vunpack.c.l.b16 %v1056
    %v4326 = vunpack.c.h.b16 %v1056
    %v4327 = vunpack.c.l.b16 %v1057
    %v4328 = vunpack.c.h.b16 %v1057
    %v4329 = vunpack.c.l.b16 %v1058
    %v4330 = vunpack.c.h.b16 %v1058
    %v4331 = vunpack.c.l.b16 %v1059
    %v4332 = vunpack.c.h.b16 %v1059
    %v4333 = vunpack.c.l.b16 %v1060
    %v4334 = vunpack.c.h.b16 %v1060
    %v4335 = vunpack.c.l.b16 %v1061
    %v4336 = vunpack.c.h.b16 %v1061
    %v4337 = vunpack.c.l.b16 %v1062
    %v4338 = vunpack.c.l.b16 %v1063
    %v4339 = vunpack.c.h.b16 %v1063
    %v4340 = vunpack.c.l.b16 %v1064
    %v4341 = vunpack.c.h.b16 %v1064
    %v4342 = vunpack.c.l.b16 %v1065
    %v4343 = vunpack.c.h.b16 %v1065
    %v4344 = vunpack.c.l.b16 %v1066
    %v4345 = vunpack.c.h.b16 %v1066
    %v4346 = vunpack.c.l.b16 %v1067
    %v4347 = vunpack.c.h.b16 %v1067
    %v4348 = vunpack.c.l.b16 %v1068
    %v4349 = vunpack.c.h.b16 %v1068
    %v4350 = vunpack.c.l.b16 %v1069
    %v4351 = vunpack.c.h.b16 %v1069
    %v4352 = vunpack.c.l.b16 %v1070
    %v4353 = vunpack.c.h.b16 %v1070
    %v4354 = vunpack.c.l.b16 %v1071
    %v4355 = vunpack.c.l.b16 %v1072
    %v4356 = vunpack.c.h.b16 %v1072
    %v4357 = vunpack.c.l.b16 %v1073
    %v4358 = vunpack.c.h.b16 %v1073
    %v4359 = vunpack.c.l.b16 %v1074
    %v4360 = vunpack.c.h.b16 %v1074
    %v4361 = vunpack.c.l.b16 %v1075
    %v4362 = vunpack.c.h.b16 %v1075
    %v4363 = vunpack.c.l.b16 %v1076
    %v4364 = vunpack.c.h.b16 %v1076
    %v4365 = vunpack.c.l.b16 %v1077
    %v4366 = vunpack.c.h.b16 %v1077
    %v4367 = vunpack.c.l.b16 %v1078
    %v4368 = vunpack.c.h.b16 %v1078
    %v4369 = vunpack.c.l.b16 %v1079
    %v4370 = vunpack.c.h.b16 %v1079
    %v4371 = vunpack.c.l.b16 %v1080
    %v4372 = vunpack.c.l.b16 %v1081
    %v4373 = vunpack.c.h.b16 %v1081
    %v4374 = vunpack.c.l.b16 %v1082
    %v4375 = vunpack.c.h.b16 %v1082
    %v4376 = vunpack.c.l.b16 %v1083
    %v4377 = vunpack.c.h.b16 %v1083
    %v4378 = vunpack.c.l.b16 %v1084
    %v4379 = vunpack.c.h.b16 %v1084
    %v4380 = vunpack.c.l.b16 %v1085
    %v4381 = vunpack.c.h.b16 %v1085
    %v4382 = vunpack.c.l.b16 %v1086
    %v4383 = vunpack.c.h.b16 %v1086
    %v4384 = vunpack.c.l.b16 %v1087
    %v4385 = vunpack.c.h.b16 %v1087
    %v4386 = vunpack.c.l.b16 %v1088
    %v4387 = vunpack.c.h.b16 %v1088
    %v4388 = vunpack.c.l.b16 %v1089
    %v4389 = vunpack.c.l.b16 %v1090
    %v4390 = vunpack.c.h.b16 %v1090
    %v4391 = vunpack.c.l.b16 %v1091
    %v4392 = vunpack.c.h.b16 %v1091
    %v4393 = vunpack.c.l.b16 %v1092
    %v4394 = vunpack.c.h.b16 %v1092
    %v4395 = vunpack.c.l.b16 %v1093
    %v4396 = vunpack.c.h.b16 %v1093
    %v4397 = vunpack.c.l.b16 %v1094
    %v4398 = vunpack.c.h.b16 %v1094
    %v4399 = vunpack.c.l.b16 %v1095
    %v4400 = vunpack.c.h.b16 %v1095
    %v4401 = vunpack.c.l.b16 %v1096
    %v4402 = vunpack.c.h.b16 %v1096
    %v4403 = vunpack.c.l.b16 %v1097
    %v4404 = vunpack.c.h.b16 %v1097
    %v4405 = vunpack.c.l.b16 %v1098
    %v4406 = vunpack.c.l.b16 %v1099
    %v4407 = vunpack.c.h.b16 %v1099
    %v4408 = vunpack.c.l.b16 %v1100
    %v4409 = vunpack.c.h.b16 %v1100
    %v4410 = vunpack.c.l.b16 %v1101
    %v4411 = vunpack.c.h.b16 %v1101
    %v4412 = vunpack.c.l.b16 %v1102
    %v4413 = vunpack.c.h.b16 %v1102
    %v4414 = vunpack.c.l.b16 %v1103
    %v4415 = vunpack.c.h.b16 %v1103
    %v4416 = vunpack.c.l.b16 %v1104
    %v4417 = vunpack.c.h.b16 %v1104
    %v4418 = vunpack.c.l.b16 %v1105
    %v4419 = vunpack.c.h.b16 %v1105
    %v4420 = vunpack.c.l.b16 %v1106
    %v4421 = vunpack.c.h.b16 %v1106
    %v4422 = vunpack.c.l.b16 %v1107
    %v4423 = vunpack.c.l.b16 %v1108
    %v4424 = vunpack.c.h.b16 %v1108
    %v4425 = vunpack.c.l.b16 %v1109
    %v4426 = vunpack.c.h.b16 %v1109
    %v4427 = vunpack.c.l.b16 %v1110
    %v4428 = vunpack.c.h.b16 %v1110
    %v4429 = vunpack.c.l.b16 %v1111
    %v4430 = vunpack.c.h.b16 %v1111
    %v4431 = vunpack.c.l.b16 %v1112
    %v4432 = vunpack.c.h.b16 %v1112
    %v4433 = vunpack.c.l.b16 %v1113
    %v4434 = vunpack.c.h.b16 %v1113
    %v4435 = vunpack.c.l.b16 %v1114
    %v4436 = vunpack.c.h.b16 %v1114
    %v4437 = vunpack.c.l.b16 %v1115
    %v4438 = vunpack.c.h.b16 %v1115
    %v4439 = vunpack.c.l.b16 %v1116
    %v4440 = vunpack.c.l.b16 %v1117
    %v4441 = vunpack.c.h.b16 %v1117
    %v4442 = vunpack.c.l.b16 %v1118
    %v4443 = vunpack.c.h.b16 %v1118
    %v4444 = vunpack.c.l.b16 %v1119
    %v4445 = vunpack.c.h.b16 %v1119
    %v4446 = vunpack.c.l.b16 %v1120
    %v4447 = vunpack.c.h.b16 %v1120
    %v4448 = vunpack.c.l.b16 %v1121
    %v4449 = vunpack.c.h.b16 %v1121
    %v4450 = vunpack.c.l.b16 %v1122
    %v4451 = vunpack.c.h.b16 %v1122
    %v4452 = vunpack.c.l.b16 %v1123
    %v4453 = vunpack.c.h.b16 %v1123
    %v4454 = vunpack.c.l.b16 %v1124
    %v4455 = vunpack.c.h.b16 %v1124
    %v4456 = vunpack.c.l.b16 %v1125
    %v4457 = vunpack.c.l.b16 %v1126
    %v4458 = vunpack.c.h.b16 %v1126
    %v4459 = vunpack.c.l.b16 %v1127
    %v4460 = vunpack.c.h.b16 %v1127
    %v4461 = vunpack.c.l.b16 %v1128
    %v4462 = vunpack.c.h.b16 %v1128
    %v4463 = vunpack.c.l.b16 %v1129
    %v4464 = vunpack.c.h.b16 %v1129
    %v4465 = vunpack.c.l.b16 %v1130
    %v4466 = vunpack.c.h.b16 %v1130
    %v4467 = vunpack.c.l.b16 %v1131
    %v4468 = vunpack.c.h.b16 %v1131
    %v4469 = vunpack.c.l.b16 %v1132
    %v4470 = vunpack.c.h.b16 %v1132
    %v4471 = vunpack.c.l.b16 %v1133
    %v4472 = vunpack.c.h.b16 %v1133
    %v4473 = vunpack.c.l.b16 %v1134
    %v4474 = vunpack.c.l.b16 %v1135
    %v4475 = vunpack.c.h.b16 %v1135
    %v4476 = vunpack.c.l.b16 %v1136
    %v4477 = vunpack.c.h.b16 %v1136
    %v4478 = vunpack.c.l.b16 %v1137
    %v4479 = vunpack.c.h.b16 %v1137
    %v4480 = vunpack.c.l.b16 %v1138
    %v4481 = vunpack.c.h.b16 %v1138
    %v4482 = vunpack.c.l.b16 %v1139
    %v4483 = vunpack.c.h.b16 %v1139
    %v4484 = vunpack.c.l.b16 %v1140
    %v4485 = vunpack.c.h.b16 %v1140
    %v4486 = vunpack.c.l.b16 %v1141
    %v4487 = vunpack.c.h.b16 %v1141
    %v4488 = vunpack.c.l.b16 %v1142
    %v4489 = vunpack.c.h.b16 %v1142
    %v4490 = vunpack.c.l.b16 %v1143
    %v4491 = vunpack.c.l.b16 %v1144
    %v4492 = vunpack.c.h.b16 %v1144
    %v4493 = vunpack.c.l.b16 %v1145
    %v4494 = vunpack.c.h.b16 %v1145
    %v4495 = vunpack.c.l.b16 %v1146
    %v4496 = vunpack.c.h.b16 %v1146
    %v4497 = vunpack.c.l.b16 %v1147
    %v4498 = vunpack.c.h.b16 %v1147
    %v4499 = vunpack.c.l.b16 %v1148
    %v4500 = vunpack.c.h.b16 %v1148
    %v4501 = vunpack.c.l.b16 %v1149
    %v4502 = vunpack.c.h.b16 %v1149
    %v4503 = vunpack.c.l.b16 %v1150
    %v4504 = vunpack.c.h.b16 %v1150
    %v4505 = vunpack.c.l.b16 %v1151
    %v4506 = vunpack.c.h.b16 %v1151
    %v4507 = vunpack.c.l.b16 %v1152
    %v4508 = vunpack.c.l.b16 %v1153
    %v4509 = vunpack.c.h.b16 %v1153
    %v4510 = vunpack.c.l.b16 %v1154
    %v4511 = vunpack.c.h.b16 %v1154
    %v4512 = vunpack.c.l.b16 %v1155
    %v4513 = vunpack.c.h.b16 %v1155
    %v4514 = vunpack.c.l.b16 %v1156
    %v4515 = vunpack.c.h.b16 %v1156
    %v4516 = vunpack.c.l.b16 %v1157
    %v4517 = vunpack.c.h.b16 %v1157
    %v4518 = vunpack.c.l.b16 %v1158
    %v4519 = vunpack.c.h.b16 %v1158
    %v4520 = vunpack.c.l.b16 %v1159
    %v4521 = vunpack.c.h.b16 %v1159
    %v4522 = vunpack.c.l.b16 %v1160
    %v4523 = vunpack.c.h.b16 %v1160
    %v4524 = vunpack.c.l.b16 %v1161
    %v4525 = vunpack.c.l.b16 %v1162
    %v4526 = vunpack.c.h.b16 %v1162
    %v4527 = vunpack.c.l.b16 %v1163
    %v4528 = vunpack.c.h.b16 %v1163
    %v4529 = vunpack.c.l.b16 %v1164
    %v4530 = vunpack.c.h.b16 %v1164
    %v4531 = vunpack.c.l.b16 %v1165
    %v4532 = vunpack.c.h.b16 %v1165
    %v4533 = vunpack.c.l.b16 %v1166
    %v4534 = vunpack.c.h.b16 %v1166
    %v4535 = vunpack.c.l.b16 %v1167
    %v4536 = vunpack.c.h.b16 %v1167
    %v4537 = vunpack.c.l.b16 %v1168
    %v4538 = vunpack.c.h.b16 %v1168
    %v4539 = vunpack.c.l.b16 %v1169
    %v4540 = vunpack.c.h.b16 %v1169
    %v4541 = vunpack.c.l.b16 %v1170
    %v4542 = vunpack.c.l.b16 %v1171
    %v4543 = vunpack.c.h.b16 %v1171
    %v4544 = vunpack.c.l.b16 %v1172
    %v4545 = vunpack.c.h.b16 %v1172
    %v4546 = vunpack.c.l.b16 %v1173
    %v4547 = vunpack.c.h.b16 %v1173
    %v4548 = vunpack.c.l.b16 %v1174
    %v4549 = vunpack.c.h.b16 %v1174
    %v4550 = vunpack.c.l.b16 %v1175
    %v4551 = vunpack.c.h.b16 %v1175
    %v4552 = vunpack.c.l.b16 %v1176
    %v4553 = vunpack.c.h.b16 %v1176
    %v4554 = vunpack.c.l.b16 %v1177
    %v4555 = vunpack.c.h.b16 %v1177
    %v4556 = vunpack.c.l.b16 %v1178
    %v4557 = vunpack.c.h.b16 %v1178
    %v4558 = vunpack.c.l.b16 %v1179
    %v4559 = vunpack.c.l.b16 %v1180
    %v4560 = vunpack.c.h.b16 %v1180
    %v4561 = vunpack.c.l.b16 %v1181
    %v4562 = vunpack.c.h.b16 %v1181
    %v4563 = vunpack.c.l.b16 %v1182
    %v4564 = vunpack.c.h.b16 %v1182
    %v4565 = vunpack.c.l.b16 %v1183
    %v4566 = vunpack.c.h.b16 %v1183
    %v4567 = vunpack.c.l.b16 %v1184
    %v4568 = vunpack.c.h.b16 %v1184
    %v4569 = vunpack.c.l.b16 %v1185
    %v4570 = vunpack.c.h.b16 %v1185
    %v4571 = vunpack.c.l.b16 %v1186
    %v4572 = vunpack.c.h.b16 %v1186
    %v4573 = vunpack.c.l.b16 %v1187
    %v4574 = vunpack.c.h.b16 %v1187
    %v4575 = vunpack.c.l.b16 %v1188
    %v4576 = vunpack.c.l.b16 %v1189
    %v4577 = vunpack.c.h.b16 %v1189
    %v4578 = vunpack.c.l.b16 %v1190
    %v4579 = vunpack.c.h.b16 %v1190
    %v4580 = vunpack.c.l.b16 %v1191
    %v4581 = vunpack.c.h.b16 %v1191
    %v4582 = vunpack.c.l.b16 %v1192
    %v4583 = vunpack.c.h.b16 %v1192
    %v4584 = vunpack.c.l.b16 %v1193
    %v4585 = vunpack.c.h.b16 %v1193
    %v4586 = vunpack.c.l.b16 %v1194
    %v4587 = vunpack.c.h.b16 %v1194
    %v4588 = vunpack.c.l.b16 %v1195
    %v4589 = vunpack.c.h.b16 %v1195
    %v4590 = vunpack.c.l.b16 %v1196
    %v4591 = vunpack.c.h.b16 %v1196
    %v4592 = vunpack.c.l.b16 %v1197
    %v4593 = vunpack.c.l.b16 %v1198
    %v4594 = vunpack.c.h.b16 %v1198
    %v4595 = vunpack.c.l.b16 %v1199
    %v4596 = vunpack.c.h.b16 %v1199
    %v4597 = vunpack.c.l.b16 %v1200
    %v4598 = vunpack.c.h.b16 %v1200
    %v4599 = vunpack.c.l.b16 %v1201
    %v4600 = vunpack.c.h.b16 %v1201
    %v4601 = vunpack.c.l.b16 %v1202
    %v4602 = vunpack.c.h.b16 %v1202
    %v4603 = vunpack.c.l.b16 %v1203
    %v4604 = vunpack.c.h.b16 %v1203
    %v4605 = vunpack.c.l.b16 %v1204
    %v4606 = vunpack.c.h.b16 %v1204
    %v4607 = vunpack.c.l.b16 %v1205
    %v4608 = vunpack.c.h.b16 %v1205
    %v4609 = vunpack.c.l.b16 %v1206
    %v4610 = vunpack.c.l.b16 %v1207
    %v4611 = vunpack.c.h.b16 %v1207
    %v4612 = vunpack.c.l.b16 %v1208
    %v4613 = vunpack.c.h.b16 %v1208
    %v4614 = vunpack.c.l.b16 %v1209
    %v4615 = vunpack.c.h.b16 %v1209
    %v4616 = vunpack.c.l.b16 %v1210
    %v4617 = vunpack.c.h.b16 %v1210
    %v4618 = vunpack.c.l.b16 %v1211
    %v4619 = vunpack.c.h.b16 %v1211
    %v4620 = vunpack.c.l.b16 %v1212
    %v4621 = vunpack.c.h.b16 %v1212
    %v4622 = vunpack.c.l.b16 %v1213
    %v4623 = vunpack.c.h.b16 %v1213
    %v4624 = vunpack.c.l.b16 %v1214
    %v4625 = vunpack.c.h.b16 %v1214
    %v4626 = vunpack.c.l.b16 %v1215
    %v4627 = vunpack.c.l.b16 %v1216
    %v4628 = vunpack.c.h.b16 %v1216
    %v4629 = vunpack.c.l.b16 %v1217
    %v4630 = vunpack.c.h.b16 %v1217
    %v4631 = vunpack.c.l.b16 %v1218
    %v4632 = vunpack.c.h.b16 %v1218
    %v4633 = vunpack.c.l.b16 %v1219
    %v4634 = vunpack.c.h.b16 %v1219
    %v4635 = vunpack.c.l.b16 %v1220
    %v4636 = vunpack.c.h.b16 %v1220
    %v4637 = vunpack.c.l.b16 %v1221
    %v4638 = vunpack.c.h.b16 %v1221
    %v4639 = vunpack.c.l.b16 %v1222
    %v4640 = vunpack.c.h.b16 %v1222
    %v4641 = vunpack.c.l.b16 %v1223
    %v4642 = vunpack.c.h.b16 %v1223
    %v4643 = vunpack.c.l.b16 %v1224
    %v4644 = vpack.c.b16 %v2485, %v2468
    %v4645 = vpack.c.b16 %v2486, %v2469
    %v4646 = vpack.c.b16 %v2487, %v2470
    %v4647 = vpack.c.b16 %v2488, %v2471
    %v4648 = vpack.c.b16 %v2489, %v2472
    %v4649 = vpack.c.b16 %v2490, %v2473
    %v4650 = vpack.c.b16 %v2491, %v2474
    %v4651 = vpack.c.b16 %v2492, %v2475
    %v4652 = vpack.c.b16 %v2493, %v2476
    %v4653 = vpack.c.b16 %v2494, %v2477
    %v4654 = vpack.c.b16 %v2495, %v2478
    %v4655 = vpack.c.b16 %v2496, %v2479
    %v4656 = vpack.c.b16 %v2497, %v2480
    %v4657 = vpack.c.b16 %v2498, %v2481
    %v4658 = vpack.c.b16 %v2499, %v2482
    %v4659 = vpack.c.b16 %v2500, %v2483
    %v4660 = vpack.c.b16 %v2501, %v2484
    %v4661 = vpack.c.b16 %v2519, %v2502
    %v4662 = vpack.c.b16 %v2520, %v2503
    %v4663 = vpack.c.b16 %v2521, %v2504
    %v4664 = vpack.c.b16 %v2522, %v2505
    %v4665 = vpack.c.b16 %v2523, %v2506
    %v4666 = vpack.c.b16 %v2524, %v2507
    %v4667 = vpack.c.b16 %v2525, %v2508
    %v4668 = vpack.c.b16 %v2526, %v2509
    %v4669 = vpack.c.b16 %v2527, %v2510
    %v4670 = vpack.c.b16 %v2528, %v2511
    %v4671 = vpack.c.b16 %v2529, %v2512
    %v4672 = vpack.c.b16 %v2530, %v2513
    %v4673 = vpack.c.b16 %v2531, %v2514
    %v4674 = vpack.c.b16 %v2532, %v2515
    %v4675 = vpack.c.b16 %v2533, %v2516
    %v4676 = vpack.c.b16 %v2534, %v2517
    %v4677 = vpack.c.b16 %v2535, %v2518
    %v4678 = vpack.c.b16 %v2553, %v2536
    %v4679 = vpack.c.b16 %v2554, %v2537
    %v4680 = vpack.c.b16 %v2555, %v2538
    %v4681 = vpack.c.b16 %v2556, %v2539
    %v4682 = vpack.c.b16 %v2557, %v2540
    %v4683 = vpack.c.b16 %v2558, %v2541
    %v4684 = vpack.c.b16 %v2559, %v2542
    %v4685 = vpack.c.b16 %v2560, %v2543
    %v4686 = vpack.c.b16 %v2561, %v2544
    %v4687 = vpack.c.b16 %v2562, %v2545
    %v4688 = vpack.c.b16 %v2563, %v2546
    %v4689 = vpack.c.b16 %v2564, %v2547
    %v4690 = vpack.c.b16 %v2565, %v2548
    %v4691 = vpack.c.b16 %v2566, %v2549
    %v4692 = vpack.c.b16 %v2567, %v2550
    %v4693 = vpack.c.b16 %v2568, %v2551
    %v4694 = vpack.c.b16 %v2569, %v2552
    %v4695 = vpack.c.b16 %v2587, %v2570
    %v4696 = vpack.c.b16 %v2588, %v2571
    %v4697 = vpack.c.b16 %v2589, %v2572
    %v4698 = vpack.c.b16 %v2590, %v2573
    %v4699 = vpack.c.b16 %v2591, %v2574
    %v4700 = vpack.c.b16 %v2592, %v2575
    %v4701 = vpack.c.b16 %v2593, %v2576
    %v4702 = vpack.c.b16 %v2594, %v2577
    %v4703 = vpack.c.b16 %v2595, %v2578
    %v4704 = vpack.c.b16 %v2596, %v2579
    %v4705 = vpack.c.b16 %v2597, %v2580
    %v4706 = vpack.c.b16 %v2598, %v2581
    %v4707 = vpack.c.b16 %v2599, %v2582
    %v4708 = vpack.c.b16 %v2600, %v2583
    %v4709 = vpack.c.b16 %v2601, %v2584
    %v4710 = vpack.c.b16 %v2602, %v2585
    %v4711 = vpack.c.b16 %v2603, %v2586
    %v4712 = vpack.c.b16 %v2621, %v2604
    %v4713 = vpack.c.b16 %v2622, %v2605
    %v4714 = vpack.c.b16 %v2623, %v2606
    %v4715 = vpack.c.b16 %v2624, %v2607
    %v4716 = vpack.c.b16 %v2625, %v2608
    %v4717 = vpack.c.b16 %v2626, %v2609
    %v4718 = vpack.c.b16 %v2627, %v2610
    %v4719 = vpack.c.b16 %v2628, %v2611
    %v4720 = vpack.c.b16 %v2629, %v2612
    %v4721 = vpack.c.b16 %v2630, %v2613
    %v4722 = vpack.c.b16 %v2631, %v2614
    %v4723 = vpack.c.b16 %v2632, %v2615
    %v4724 = vpack.c.b16 %v2633, %v2616
    %v4725 = vpack.c.b16 %v2634, %v2617
    %v4726 = vpack.c.b16 %v2635, %v2618
    %v4727 = vpack.c.b16 %v2636, %v2619
    %v4728 = vpack.c.b16 %v2637, %v2620
    %v4729 = vpack.c.b16 %v2655, %v2638
    %v4730 = vpack.c.b16 %v2656, %v2639
    %v4731 = vpack.c.b16 %v2657, %v2640
    %v4732 = vpack.c.b16 %v2658, %v2641
    %v4733 = vpack.c.b16 %v2659, %v2642
    %v4734 = vpack.c.b16 %v2660, %v2643
    %v4735 = vpack.c.b16 %v2661, %v2644
    %v4736 = vpack.c.b16 %v2662, %v2645
    %v4737 = vpack.c.b16 %v2663, %v2646
    %v4738 = vpack.c.b16 %v2664, %v2647
    %v4739 = vpack.c.b16 %v2665, %v2648
    %v4740 = vpack.c.b16 %v2666, %v2649
    %v4741 = vpack.c.b16 %v2667, %v2650
    %v4742 = vpack.c.b16 %v2668, %v2651
    %v4743 = vpack.c.b16 %v2669, %v2652
    %v4744 = vpack.c.b16 %v2670, %v2653
    %v4745 = vpack.c.b16 %v2671, %v2654
    %v4746 = vpack.c.b16 %v2689, %v2672
    %v4747 = vpack.c.b16 %v2690, %v2673
    %v4748 = vpack.c.b16 %v2691, %v2674
    %v4749 = vpack.c.b16 %v2692, %v2675
    %v4750 = vpack.c.b16 %v2693, %v2676
    %v4751 = vpack.c.b16 %v2694, %v2677
    %v4752 = vpack.c.b16 %v2695, %v2678
    %v4753 = vpack.c.b16 %v2696, %v2679
    %v4754 = vpack.c.b16 %v2697, %v2680
    %v4755 = vpack.c.b16 %v2698, %v2681
    %v4756 = vpack.c.b16 %v2699, %v2682
    %v4757 = vpack.c.b16 %v2700, %v2683
    %v4758 = vpack.c.b16 %v2701, %v2684
    %v4759 = vpack.c.b16 %v2702, %v2685
    %v4760 = vpack.c.b16 %v2703, %v2686
    %v4761 = vpack.c.b16 %v2704, %v2687
    %v4762 = vpack.c.b16 %v2705, %v2688
    %v4763 = vpack.c.b16 %v2723, %v2706
    %v4764 = vpack.c.b16 %v2724, %v2707
    %v4765 = vpack.c.b16 %v2725, %v2708
    %v4766 = vpack.c.b16 %v2726, %v2709
    %v4767 = vpack.c.b16 %v2727, %v2710
    %v4768 = vpack.c.b16 %v2728, %v2711
    %v4769 = vpack.c.b16 %v2729, %v2712
    %v4770 = vpack.c.b16 %v2730, %v2713
    %v4771 = vpack.c.b16 %v2731, %v2714
    %v4772 = vpack.c.b16 %v2732, %v2715
    %v4773 = vpack.c.b16 %v2733, %v2716
    %v4774 = vpack.c.b16 %v2734, %v2717
    %v4775 = vpack.c.b16 %v2735, %v2718
    %v4776 = vpack.c.b16 %v2736, %v2719
    %v4777 = vpack.c.b16 %v2737, %v2720
    %v4778 = vpack.c.b16 %v2738, %v2721
    %v4779 = vpack.c.b16 %v2739, %v2722
    %v4780 = vpack.c.b16 %v2757, %v2740
    %v4781 = vpack.c.b16 %v2758, %v2741
    %v4782 = vpack.c.b16 %v2759, %v2742
    %v4783 = vpack.c.b16 %v2760, %v2743
    %v4784 = vpack.c.b16 %v2761, %v2744
    %v4785 = vpack.c.b16 %v2762, %v2745
    %v4786 = vpack.c.b16 %v2763, %v2746
    %v4787 = vpack.c.b16 %v2764, %v2747
    %v4788 = vpack.c.b16 %v2765, %v2748
    %v4789 = vpack.c.b16 %v2766, %v2749
    %v4790 = vpack.c.b16 %v2767, %v2750
    %v4791 = vpack.c.b16 %v2768, %v2751
    %v4792 = vpack.c.b16 %v2769, %v2752
    %v4793 = vpack.c.b16 %v2770, %v2753
    %v4794 = vpack.c.b16 %v2771, %v2754
    %v4795 = vpack.c.b16 %v2772, %v2755
    %v4796 = vpack.c.b16 %v2773, %v2756
    %v4797 = vpack.c.b16 %v2791, %v2774
    %v4798 = vpack.c.b16 %v2792, %v2775
    %v4799 = vpack.c.b16 %v2793, %v2776
    %v4800 = vpack.c.b16 %v2794, %v2777
    %v4801 = vpack.c.b16 %v2795, %v2778
    %v4802 = vpack.c.b16 %v2796, %v2779
    %v4803 = vpack.c.b16 %v2797, %v2780
    %v4804 = vpack.c.b16 %v2798, %v2781
    %v4805 = vpack.c.b16 %v2799, %v2782
    %v4806 = vpack.c.b16 %v2800, %v2783
    %v4807 = vpack.c.b16 %v2801, %v2784
    %v4808 = vpack.c.b16 %v2802, %v2785
    %v4809 = vpack.c.b16 %v2803, %v2786
    %v4810 = vpack.c.b16 %v2804, %v2787
    %v4811 = vpack.c.b16 %v2805, %v2788
    %v4812 = vpack.c.b16 %v2806, %v2789
    %v4813 = vpack.c.b16 %v2807, %v2790
    %v4814 = vpack.c.b16 %v2825, %v2808
    %v4815 = vpack.c.b16 %v2826, %v2809
    %v4816 = vpack.c.b16 %v2827, %v2810
    %v4817 = vpack.c.b16 %v2828, %v2811
    %v4818 = vpack.c.b16 %v2829, %v2812
    %v4819 = vpack.c.b16 %v2830, %v2813
    %v4820 = vpack.c.b16 %v2831, %v2814
    %v4821 = vpack.c.b16 %v2832, %v2815
    %v4822 = vpack.c.b16 %v2833, %v2816
    %v4823 = vpack.c.b16 %v2834, %v2817
    %v4824 = vpack.c.b16 %v2835, %v2818
    %v4825 = vpack.c.b16 %v2836, %v2819
    %v4826 = vpack.c.b16 %v2837, %v2820
    %v4827 = vpack.c.b16 %v2838, %v2821
    %v4828 = vpack.c.b16 %v2839, %v2822
    %v4829 = vpack.c.b16 %v2840, %v2823
    %v4830 = vpack.c.b16 %v2841, %v2824
    %v4831 = vpack.c.b16 %v2859, %v2842
    %v4832 = vpack.c.b16 %v2860, %v2843
    %v4833 = vpack.c.b16 %v2861, %v2844
    %v4834 = vpack.c.b16 %v2862, %v2845
    %v4835 = vpack.c.b16 %v2863, %v2846
    %v4836 = vpack.c.b16 %v2864, %v2847
    %v4837 = vpack.c.b16 %v2865, %v2848
    %v4838 = vpack.c.b16 %v2866, %v2849
    %v4839 = vpack.c.b16 %v2867, %v2850
    %v4840 = vpack.c.b16 %v2868, %v2851
    %v4841 = vpack.c.b16 %v2869, %v2852
    %v4842 = vpack.c.b16 %v2870, %v2853
    %v4843 = vpack.c.b16 %v2871, %v2854
    %v4844 = vpack.c.b16 %v2872, %v2855
    %v4845 = vpack.c.b16 %v2873, %v2856
    %v4846 = vpack.c.b16 %v2874, %v2857
    %v4847 = vpack.c.b16 %v2875, %v2858
    %v4848 = vpack.c.b16 %v2893, %v2876
    %v4849 = vpack.c.b16 %v2894, %v2877
    %v4850 = vpack.c.b16 %v2895, %v2878
    %v4851 = vpack.c.b16 %v2896, %v2879
    %v4852 = vpack.c.b16 %v2897, %v2880
    %v4853 = vpack.c.b16 %v2898, %v2881
    %v4854 = vpack.c.b16 %v2899, %v2882
    %v4855 = vpack.c.b16 %v2900, %v2883
    %v4856 = vpack.c.b16 %v2901, %v2884
    %v4857 = vpack.c.b16 %v2902, %v2885
    %v4858 = vpack.c.b16 %v2903, %v2886
    %v4859 = vpack.c.b16 %v2904, %v2887
    %v4860 = vpack.c.b16 %v2905, %v2888
    %v4861 = vpack.c.b16 %v2906, %v2889
    %v4862 = vpack.c.b16 %v2907, %v2890
    %v4863 = vpack.c.b16 %v2908, %v2891
    %v4864 = vpack.c.b16 %v2909, %v2892
    %v4865 = vpack.c.b16 %v2927, %v2910
    %v4866 = vpack.c.b16 %v2928, %v2911
    %v4867 = vpack.c.b16 %v2929, %v2912
    %v4868 = vpack.c.b16 %v2930, %v2913
    %v4869 = vpack.c.b16 %v2931, %v2914
    %v4870 = vpack.c.b16 %v2932, %v2915
    %v4871 = vpack.c.b16 %v2933, %v2916
    %v4872 = vpack.c.b16 %v2934, %v2917
    %v4873 = vpack.c.b16 %v2935, %v2918
    %v4874 = vpack.c.b16 %v2936, %v2919
    %v4875 = vpack.c.b16 %v2937, %v2920
    %v4876 = vpack.c.b16 %v2938, %v2921
    %v4877 = vpack.c.b16 %v2939, %v2922
    %v4878 = vpack.c.b16 %v2940, %v2923
    %v4879 = vpack.c.b16 %v2941, %v2924
    %v4880 = vpack.c.b16 %v2942, %v2925
    %v4881 = vpack.c.b16 %v2943, %v2926
    %v4882 = vpack.c.b16 %v2961, %v2944
    %v4883 = vpack.c.b16 %v2962, %v2945
    %v4884 = vpack.c.b16 %v2963, %v2946
    %v4885 = vpack.c.b16 %v2964, %v2947
    %v4886 = vpack.c.b16 %v2965, %v2948
    %v4887 = vpack.c.b16 %v2966, %v2949
    %v4888 = vpack.c.b16 %v2967, %v2950
    %v4889 = vpack.c.b16 %v2968, %v2951
    %v4890 = vpack.c.b16 %v2969, %v2952
    %v4891 = vpack.c.b16 %v2970, %v2953
    %v4892 = vpack.c.b16 %v2971, %v2954
    %v4893 = vpack.c.b16 %v2972, %v2955
    %v4894 = vpack.c.b16 %v2973, %v2956
    %v4895 = vpack.c.b16 %v2974, %v2957
    %v4896 = vpack.c.b16 %v2975, %v2958
    %v4897 = vpack.c.b16 %v2976, %v2959
    %v4898 = vpack.c.b16 %v2977, %v2960
    %v4899 = vpack.c.b16 %v2995, %v2978
    %v4900 = vpack.c.b16 %v2996, %v2979
    %v4901 = vpack.c.b16 %v2997, %v2980
    %v4902 = vpack.c.b16 %v2998, %v2981
    %v4903 = vpack.c.b16 %v2999, %v2982
    %v4904 = vpack.c.b16 %v3000, %v2983
    %v4905 = vpack.c.b16 %v3001, %v2984
    %v4906 = vpack.c.b16 %v3002, %v2985
    %v4907 = vpack.c.b16 %v3003, %v2986
    %v4908 = vpack.c.b16 %v3004, %v2987
    %v4909 = vpack.c.b16 %v3005, %v2988
    %v4910 = vpack.c.b16 %v3006, %v2989
    %v4911 = vpack.c.b16 %v3007, %v2990
    %v4912 = vpack.c.b16 %v3008, %v2991
    %v4913 = vpack.c.b16 %v3009, %v2992
    %v4914 = vpack.c.b16 %v3010, %v2993
    %v4915 = vpack.c.b16 %v3011, %v2994
    %v4916 = vpack.c.b16 %v3029, %v3012
    %v4917 = vpack.c.b16 %v3030, %v3013
    %v4918 = vpack.c.b16 %v3031, %v3014
    %v4919 = vpack.c.b16 %v3032, %v3015
    %v4920 = vpack.c.b16 %v3033, %v3016
    %v4921 = vpack.c.b16 %v3034, %v3017
    %v4922 = vpack.c.b16 %v3035, %v3018
    %v4923 = vpack.c.b16 %v3036, %v3019
    %v4924 = vpack.c.b16 %v3037, %v3020
    %v4925 = vpack.c.b16 %v3038, %v3021
    %v4926 = vpack.c.b16 %v3039, %v3022
    %v4927 = vpack.c.b16 %v3040, %v3023
    %v4928 = vpack.c.b16 %v3041, %v3024
    %v4929 = vpack.c.b16 %v3042, %v3025
    %v4930 = vpack.c.b16 %v3043, %v3026
    %v4931 = vpack.c.b16 %v3044, %v3027
    %v4932 = vpack.c.b16 %v3045, %v3028
    %v4933 = vpack.c.b16 %v3063, %v3046
    %v4934 = vpack.c.b16 %v3064, %v3047
    %v4935 = vpack.c.b16 %v3065, %v3048
    %v4936 = vpack.c.b16 %v3066, %v3049
    %v4937 = vpack.c.b16 %v3067, %v3050
    %v4938 = vpack.c.b16 %v3068, %v3051
    %v4939 = vpack.c.b16 %v3069, %v3052
    %v4940 = vpack.c.b16 %v3070, %v3053
    %v4941 = vpack.c.b16 %v3071, %v3054
    %v4942 = vpack.c.b16 %v3072, %v3055
    %v4943 = vpack.c.b16 %v3073, %v3056
    %v4944 = vpack.c.b16 %v3074, %v3057
    %v4945 = vpack.c.b16 %v3075, %v3058
    %v4946 = vpack.c.b16 %v3076, %v3059
    %v4947 = vpack.c.b16 %v3077, %v3060
    %v4948 = vpack.c.b16 %v3078, %v3061
    %v4949 = vpack.c.b16 %v3079, %v3062
    %v4950 = vpack.c.b16 %v3097, %v3080
    %v4951 = vpack.c.b16 %v3098, %v3081
    %v4952 = vpack.c.b16 %v3099, %v3082
    %v4953 = vpack.c.b16 %v3100, %v3083
    %v4954 = vpack.c.b16 %v3101, %v3084
    %v4955 = vpack.c.b16 %v3102, %v3085
    %v4956 = vpack.c.b16 %v3103, %v3086
    %v4957 = vpack.c.b16 %v3104, %v3087
    %v4958 = vpack.c.b16 %v3105, %v3088
    %v4959 = vpack.c.b16 %v3106, %v3089
    %v4960 = vpack.c.b16 %v3107, %v3090
    %v4961 = vpack.c.b16 %v3108, %v3091
    %v4962 = vpack.c.b16 %v3109, %v3092
    %v4963 = vpack.c.b16 %v3110, %v3093
    %v4964 = vpack.c.b16 %v3111, %v3094
    %v4965 = vpack.c.b16 %v3112, %v3095
    %v4966 = vpack.c.b16 %v3113, %v3096
    %v4967 = vpack.c.b16 %v3131, %v3114
    %v4968 = vpack.c.b16 %v3132, %v3115
    %v4969 = vpack.c.b16 %v3133, %v3116
    %v4970 = vpack.c.b16 %v3134, %v3117
    %v4971 = vpack.c.b16 %v3135, %v3118
    %v4972 = vpack.c.b16 %v3136, %v3119
    %v4973 = vpack.c.b16 %v3137, %v3120
    %v4974 = vpack.c.b16 %v3138, %v3121
    %v4975 = vpack.c.b16 %v3139, %v3122
    %v4976 = vpack.c.b16 %v3140, %v3123
    %v4977 = vpack.c.b16 %v3141, %v3124
    %v4978 = vpack.c.b16 %v3142, %v3125
    %v4979 = vpack.c.b16 %v3143, %v3126
    %v4980 = vpack.c.b16 %v3144, %v3127
    %v4981 = vpack.c.b16 %v3145, %v3128
    %v4982 = vpack.c.b16 %v3146, %v3129
    %v4983 = vpack.c.b16 %v3147, %v3130
    %v4984 = vpack.c.b16 %v3165, %v3148
    %v4985 = vpack.c.b16 %v3166, %v3149
    %v4986 = vpack.c.b16 %v3167, %v3150
    %v4987 = vpack.c.b16 %v3168, %v3151
    %v4988 = vpack.c.b16 %v3169, %v3152
    %v4989 = vpack.c.b16 %v3170, %v3153
    %v4990 = vpack.c.b16 %v3171, %v3154
    %v4991 = vpack.c.b16 %v3172, %v3155
    %v4992 = vpack.c.b16 %v3173, %v3156
    %v4993 = vpack.c.b16 %v3174, %v3157
    %v4994 = vpack.c.b16 %v3175, %v3158
    %v4995 = vpack.c.b16 %v3176, %v3159
    %v4996 = vpack.c.b16 %v3177, %v3160
    %v4997 = vpack.c.b16 %v3178, %v3161
    %v4998 = vpack.c.b16 %v3179, %v3162
    %v4999 = vpack.c.b16 %v3180, %v3163
    %v5000 = vpack.c.b16 %v3181, %v3164
    %v5001 = vpack.c.b16 %v3199, %v3182
    %v5002 = vpack.c.b16 %v3200, %v3183
    %v5003 = vpack.c.b16 %v3201, %v3184
    %v5004 = vpack.c.b16 %v3202, %v3185
    %v5005 = vpack.c.b16 %v3203, %v3186
    %v5006 = vpack.c.b16 %v3204, %v3187
    %v5007 = vpack.c.b16 %v3205, %v3188
    %v5008 = vpack.c.b16 %v3206, %v3189
    %v5009 = vpack.c.b16 %v3207, %v3190
    %v5010 = vpack.c.b16 %v3208, %v3191
    %v5011 = vpack.c.b16 %v3209, %v3192
    %v5012 = vpack.c.b16 %v3210, %v3193
    %v5013 = vpack.c.b16 %v3211, %v3194
    %v5014 = vpack.c.b16 %v3212, %v3195
    %v5015 = vpack.c.b16 %v3213, %v3196
    %v5016 = vpack.c.b16 %v3214, %v3197
    %v5017 = vpack.c.b16 %v3215, %v3198
    %v5018 = vpack.c.b16 %v3233, %v3216
    %v5019 = vpack.c.b16 %v3234, %v3217
    %v5020 = vpack.c.b16 %v3235, %v3218
    %v5021 = vpack.c.b16 %v3236, %v3219
    %v5022 = vpack.c.b16 %v3237, %v3220
    %v5023 = vpack.c.b16 %v3238, %v3221
    %v5024 = vpack.c.b16 %v3239, %v3222
    %v5025 = vpack.c.b16 %v3240, %v3223
    %v5026 = vpack.c.b16 %v3241, %v3224
    %v5027 = vpack.c.b16 %v3242, %v3225
    %v5028 = vpack.c.b16 %v3243, %v3226
    %v5029 = vpack.c.b16 %v3244, %v3227
    %v5030 = vpack.c.b16 %v3245, %v3228
    %v5031 = vpack.c.b16 %v3246, %v3229
    %v5032 = vpack.c.b16 %v3247, %v3230
    %v5033 = vpack.c.b16 %v3248, %v3231
    %v5034 = vpack.c.b16 %v3249, %v3232
    %v5035 = vpack.c.b16 %v3267, %v3250
    %v5036 = vpack.c.b16 %v3268, %v3251
    %v5037 = vpack.c.b16 %v3269, %v3252
    %v5038 = vpack.c.b16 %v3270, %v3253
    %v5039 = vpack.c.b16 %v3271, %v3254
    %v5040 = vpack.c.b16 %v3272, %v3255
    %v5041 = vpack.c.b16 %v3273, %v3256
    %v5042 = vpack.c.b16 %v3274, %v3257
    %v5043 = vpack.c.b16 %v3275, %v3258
    %v5044 = vpack.c.b16 %v3276, %v3259
    %v5045 = vpack.c.b16 %v3277, %v3260
    %v5046 = vpack.c.b16 %v3278, %v3261
    %v5047 = vpack.c.b16 %v3279, %v3262
    %v5048 = vpack.c.b16 %v3280, %v3263
    %v5049 = vpack.c.b16 %v3281, %v3264
    %v5050 = vpack.c.b16 %v3282, %v3265
    %v5051 = vpack.c.b16 %v3283, %v3266
    %v5052 = vpack.c.b16 %v3301, %v3284
    %v5053 = vpack.c.b16 %v3302, %v3285
    %v5054 = vpack.c.b16 %v3303, %v3286
    %v5055 = vpack.c.b16 %v3304, %v3287
    %v5056 = vpack.c.b16 %v3305, %v3288
    %v5057 = vpack.c.b16 %v3306, %v3289
    %v5058 = vpack.c.b16 %v3307, %v3290
    %v5059 = vpack.c.b16 %v3308, %v3291
    %v5060 = vpack.c.b16 %v3309, %v3292
    %v5061 = vpack.c.b16 %v3310, %v3293
    %v5062 = vpack.c.b16 %v3311, %v3294
    %v5063 = vpack.c.b16 %v3312, %v3295
    %v5064 = vpack.c.b16 %v3313, %v3296
    %v5065 = vpack.c.b16 %v3314, %v3297
    %v5066 = vpack.c.b16 %v3315, %v3298
    %v5067 = vpack.c.b16 %v3316, %v3299
    %v5068 = vpack.c.b16 %v3317, %v3300
    %v5069 = vpack.c.b16 %v3335, %v3318
    %v5070 = vpack.c.b16 %v3336, %v3319
    %v5071 = vpack.c.b16 %v3337, %v3320
    %v5072 = vpack.c.b16 %v3338, %v3321
    %v5073 = vpack.c.b16 %v3339, %v3322
    %v5074 = vpack.c.b16 %v3340, %v3323
    %v5075 = vpack.c.b16 %v3341, %v3324
    %v5076 = vpack.c.b16 %v3342, %v3325
    %v5077 = vpack.c.b16 %v3343, %v3326
    %v5078 = vpack.c.b16 %v3344, %v3327
    %v5079 = vpack.c.b16 %v3345, %v3328
    %v5080 = vpack.c.b16 %v3346, %v3329
    %v5081 = vpack.c.b16 %v3347, %v3330
    %v5082 = vpack.c.b16 %v3348, %v3331
    %v5083 = vpack.c.b16 %v3349, %v3332
    %v5084 = vpack.c.b16 %v3350, %v3333
    %v5085 = vpack.c.b16 %v3351, %v3334
    %v5086 = vpack.c.b16 %v3369, %v3352
    %v5087 = vpack.c.b16 %v3370, %v3353
    %v5088 = vpack.c.b16 %v3371, %v3354
    %v5089 = vpack.c.b16 %v3372, %v3355
    %v5090 = vpack.c.b16 %v3373, %v3356
    %v5091 = vpack.c.b16 %v3374, %v3357
    %v5092 = vpack.c.b16 %v3375, %v3358
    %v5093 = vpack.c.b16 %v3376, %v3359
    %v5094 = vpack.c.b16 %v3377, %v3360
    %v5095 = vpack.c.b16 %v3378, %v3361
    %v5096 = vpack.c.b16 %v3379, %v3362
    %v5097 = vpack.c.b16 %v3380, %v3363
    %v5098 = vpack.c.b16 %v3381, %v3364
    %v5099 = vpack.c.b16 %v3382, %v3365
    %v5100 = vpack.c.b16 %v3383, %v3366
    %v5101 = vpack.c.b16 %v3384, %v3367
    %v5102 = vpack.c.b16 %v3385, %v3368
    %v5103 = vpack.c.b16 %v3403, %v3386
    %v5104 = vpack.c.b16 %v3404, %v3387
    %v5105 = vpack.c.b16 %v3405, %v3388
    %v5106 = vpack.c.b16 %v3406, %v3389
    %v5107 = vpack.c.b16 %v3407, %v3390
    %v5108 = vpack.c.b16 %v3408, %v3391
    %v5109 = vpack.c.b16 %v3409, %v3392
    %v5110 = vpack.c.b16 %v3410, %v3393
    %v5111 = vpack.c.b16 %v3411, %v3394
    %v5112 = vpack.c.b16 %v3412, %v3395
    %v5113 = vpack.c.b16 %v3413, %v3396
    %v5114 = vpack.c.b16 %v3414, %v3397
    %v5115 = vpack.c.b16 %v3415, %v3398
    %v5116 = vpack.c.b16 %v3416, %v3399
    %v5117 = vpack.c.b16 %v3417, %v3400
    %v5118 = vpack.c.b16 %v3418, %v3401
    %v5119 = vpack.c.b16 %v3419, %v3402
    %v5120 = vpack.c.b16 %v3437, %v3420
    %v5121 = vpack.c.b16 %v3438, %v3421
    %v5122 = vpack.c.b16 %v3439, %v3422
    %v5123 = vpack.c.b16 %v3440, %v3423
    %v5124 = vpack.c.b16 %v3441, %v3424
    %v5125 = vpack.c.b16 %v3442, %v3425
    %v5126 = vpack.c.b16 %v3443, %v3426
    %v5127 = vpack.c.b16 %v3444, %v3427
    %v5128 = vpack.c.b16 %v3445, %v3428
    %v5129 = vpack.c.b16 %v3446, %v3429
    %v5130 = vpack.c.b16 %v3447, %v3430
    %v5131 = vpack.c.b16 %v3448, %v3431
    %v5132 = vpack.c.b16 %v3449, %v3432
    %v5133 = vpack.c.b16 %v3450, %v3433
    %v5134 = vpack.c.b16 %v3451, %v3434
    %v5135 = vpack.c.b16 %v3452, %v3435
    %v5136 = vpack.c.b16 %v3453, %v3436
    %v5137 = vpack.c.b16 %v3471, %v3454
    %v5138 = vpack.c.b16 %v3472, %v3455
    %v5139 = vpack.c.b16 %v3473, %v3456
    %v5140 = vpack.c.b16 %v3474, %v3457
    %v5141 = vpack.c.b16 %v3475, %v3458
    %v5142 = vpack.c.b16 %v3476, %v3459
    %v5143 = vpack.c.b16 %v3477, %v3460
    %v5144 = vpack.c.b16 %v3478, %v3461
    %v5145 = vpack.c.b16 %v3479, %v3462
    %v5146 = vpack.c.b16 %v3480, %v3463
    %v5147 = vpack.c.b16 %v3481, %v3464
    %v5148 = vpack.c.b16 %v3482, %v3465
    %v5149 = vpack.c.b16 %v3483, %v3466
    %v5150 = vpack.c.b16 %v3484, %v3467
    %v5151 = vpack.c.b16 %v3485, %v3468
    %v5152 = vpack.c.b16 %v3486, %v3469
    %v5153 = vpack.c.b16 %v3487, %v3470
    %v5154 = vpack.c.b16 %v3505, %v3488
    %v5155 = vpack.c.b16 %v3506, %v3489
    %v5156 = vpack.c.b16 %v3507, %v3490
    %v5157 = vpack.c.b16 %v3508, %v3491
    %v5158 = vpack.c.b16 %v3509, %v3492
    %v5159 = vpack.c.b16 %v3510, %v3493
    %v5160 = vpack.c.b16 %v3511, %v3494
    %v5161 = vpack.c.b16 %v3512, %v3495
    %v5162 = vpack.c.b16 %v3513, %v3496
    %v5163 = vpack.c.b16 %v3514, %v3497
    %v5164 = vpack.c.b16 %v3515, %v3498
    %v5165 = vpack.c.b16 %v3516, %v3499
    %v5166 = vpack.c.b16 %v3517, %v3500
    %v5167 = vpack.c.b16 %v3518, %v3501
    %v5168 = vpack.c.b16 %v3519, %v3502
    %v5169 = vpack.c.b16 %v3520, %v3503
    %v5170 = vpack.c.b16 %v3521, %v3504
    %v5171 = vpack.c.b16 %v3539, %v3522
    %v5172 = vpack.c.b16 %v3540, %v3523
    %v5173 = vpack.c.b16 %v3541, %v3524
    %v5174 = vpack.c.b16 %v3542, %v3525
    %v5175 = vpack.c.b16 %v3543, %v3526
    %v5176 = vpack.c.b16 %v3544, %v3527
    %v5177 = vpack.c.b16 %v3545, %v3528
    %v5178 = vpack.c.b16 %v3546, %v3529
    %v5179 = vpack.c.b16 %v3547, %v3530
    %v5180 = vpack.c.b16 %v3548, %v3531
    %v5181 = vpack.c.b16 %v3549, %v3532
    %v5182 = vpack.c.b16 %v3550, %v3533
    %v5183 = vpack.c.b16 %v3551, %v3534
    %v5184 = vpack.c.b16 %v3552, %v3535
    %v5185 = vpack.c.b16 %v3553, %v3536
    %v5186 = vpack.c.b16 %v3554, %v3537
    %v5187 = vpack.c.b16 %v3555, %v3538
    %v5188 = vpack.c.b16 %v3573, %v3556
    %v5189 = vpack.c.b16 %v3574, %v3557
    %v5190 = vpack.c.b16 %v3575, %v3558
    %v5191 = vpack.c.b16 %v3576, %v3559
    %v5192 = vpack.c.b16 %v3577, %v3560
    %v5193 = vpack.c.b16 %v3578, %v3561
    %v5194 = vpack.c.b16 %v3579, %v3562
    %v5195 = vpack.c.b16 %v3580, %v3563
    %v5196 = vpack.c.b16 %v3581, %v3564
    %v5197 = vpack.c.b16 %v3582, %v3565
    %v5198 = vpack.c.b16 %v3583, %v3566
    %v5199 = vpack.c.b16 %v3584, %v3567
    %v5200 = vpack.c.b16 %v3585, %v3568
    %v5201 = vpack.c.b16 %v3586, %v3569
    %v5202 = vpack.c.b16 %v3587, %v3570
    %v5203 = vpack.c.b16 %v3588, %v3571
    %v5204 = vpack.c.b16 %v3589, %v3572
    %v5205 = vpack.c.b16 %v3607, %v3590
    %v5206 = vpack.c.b16 %v3608, %v3591
    %v5207 = vpack.c.b16 %v3609, %v3592
    %v5208 = vpack.c.b16 %v3610, %v3593
    %v5209 = vpack.c.b16 %v3611, %v3594
    %v5210 = vpack.c.b16 %v3612, %v3595
    %v5211 = vpack.c.b16 %v3613, %v3596
    %v5212 = vpack.c.b16 %v3614, %v3597
    %v5213 = vpack.c.b16 %v3615, %v3598
    %v5214 = vpack.c.b16 %v3616, %v3599
    %v5215 = vpack.c.b16 %v3617, %v3600
    %v5216 = vpack.c.b16 %v3618, %v3601
    %v5217 = vpack.c.b16 %v3619, %v3602
    %v5218 = vpack.c.b16 %v3620, %v3603
    %v5219 = vpack.c.b16 %v3621, %v3604
    %v5220 = vpack.c.b16 %v3622, %v3605
    %v5221 = vpack.c.b16 %v3623, %v3606
    %v5222 = vpack.c.b16 %v3641, %v3624
    %v5223 = vpack.c.b16 %v3642, %v3625
    %v5224 = vpack.c.b16 %v3643, %v3626
    %v5225 = vpack.c.b16 %v3644, %v3627
    %v5226 = vpack.c.b16 %v3645, %v3628
    %v5227 = vpack.c.b16 %v3646, %v3629
    %v5228 = vpack.c.b16 %v3647, %v3630
    %v5229 = vpack.c.b16 %v3648, %v3631
    %v5230 = vpack.c.b16 %v3649, %v3632
    %v5231 = vpack.c.b16 %v3650, %v3633
    %v5232 = vpack.c.b16 %v3651, %v3634
    %v5233 = vpack.c.b16 %v3652, %v3635
    %v5234 = vpack.c.b16 %v3653, %v3636
    %v5235 = vpack.c.b16 %v3654, %v3637
    %v5236 = vpack.c.b16 %v3655, %v3638
    %v5237 = vpack.c.b16 %v3656, %v3639
    %v5238 = vpack.c.b16 %v3657, %v3640
    %v5239 = vpack.c.b16 %v3675, %v3658
    %v5240 = vpack.c.b16 %v3676, %v3659
    %v5241 = vpack.c.b16 %v3677, %v3660
    %v5242 = vpack.c.b16 %v3678, %v3661
    %v5243 = vpack.c.b16 %v3679, %v3662
    %v5244 = vpack.c.b16 %v3680, %v3663
    %v5245 = vpack.c.b16 %v3681, %v3664
    %v5246 = vpack.c.b16 %v3682, %v3665
    %v5247 = vpack.c.b16 %v3683, %v3666
    %v5248 = vpack.c.b16 %v3684, %v3667
    %v5249 = vpack.c.b16 %v3685, %v3668
    %v5250 = vpack.c.b16 %v3686, %v3669
    %v5251 = vpack.c.b16 %v3687, %v3670
    %v5252 = vpack.c.b16 %v3688, %v3671
    %v5253 = vpack.c.b16 %v3689, %v3672
    %v5254 = vpack.c.b16 %v3690, %v3673
    %v5255 = vpack.c.b16 %v3691, %v3674
    %v5256 = vpack.c.b16 %v3709, %v3692
    %v5257 = vpack.c.b16 %v3710, %v3693
    %v5258 = vpack.c.b16 %v3711, %v3694
    %v5259 = vpack.c.b16 %v3712, %v3695
    %v5260 = vpack.c.b16 %v3713, %v3696
    %v5261 = vpack.c.b16 %v3714, %v3697
    %v5262 = vpack.c.b16 %v3715, %v3698
    %v5263 = vpack.c.b16 %v3716, %v3699
    %v5264 = vpack.c.b16 %v3717, %v3700
    %v5265 = vpack.c.b16 %v3718, %v3701
    %v5266 = vpack.c.b16 %v3719, %v3702
    %v5267 = vpack.c.b16 %v3720, %v3703
    %v5268 = vpack.c.b16 %v3721, %v3704
    %v5269 = vpack.c.b16 %v3722, %v3705
    %v5270 = vpack.c.b16 %v3723, %v3706
    %v5271 = vpack.c.b16 %v3724, %v3707
    %v5272 = vpack.c.b16 %v3725, %v3708
    %v5273 = vpack.c.b16 %v3743, %v3726
    %v5274 = vpack.c.b16 %v3744, %v3727
    %v5275 = vpack.c.b16 %v3745, %v3728
    %v5276 = vpack.c.b16 %v3746, %v3729
    %v5277 = vpack.c.b16 %v3747, %v3730
    %v5278 = vpack.c.b16 %v3748, %v3731
    %v5279 = vpack.c.b16 %v3749, %v3732
    %v5280 = vpack.c.b16 %v3750, %v3733
    %v5281 = vpack.c.b16 %v3751, %v3734
    %v5282 = vpack.c.b16 %v3752, %v3735
    %v5283 = vpack.c.b16 %v3753, %v3736
    %v5284 = vpack.c.b16 %v3754, %v3737
    %v5285 = vpack.c.b16 %v3755, %v3738
    %v5286 = vpack.c.b16 %v3756, %v3739
    %v5287 = vpack.c.b16 %v3757, %v3740
    %v5288 = vpack.c.b16 %v3758, %v3741
    %v5289 = vpack.c.b16 %v3759, %v3742
    %v5290 = vpack.c.b16 %v3777, %v3760
    %v5291 = vpack.c.b16 %v3778, %v3761
    %v5292 = vpack.c.b16 %v3779, %v3762
    %v5293 = vpack.c.b16 %v3780, %v3763
    %v5294 = vpack.c.b16 %v3781, %v3764
    %v5295 = vpack.c.b16 %v3782, %v3765
    %v5296 = vpack.c.b16 %v3783, %v3766
    %v5297 = vpack.c.b16 %v3784, %v3767
    %v5298 = vpack.c.b16 %v3785, %v3768
    %v5299 = vpack.c.b16 %v3786, %v3769
    %v5300 = vpack.c.b16 %v3787, %v3770
    %v5301 = vpack.c.b16 %v3788, %v3771
    %v5302 = vpack.c.b16 %v3789, %v3772
    %v5303 = vpack.c.b16 %v3790, %v3773
    %v5304 = vpack.c.b16 %v3791, %v3774
    %v5305 = vpack.c.b16 %v3792, %v3775
    %v5306 = vpack.c.b16 %v3793, %v3776
    %v5307 = vpack.c.b16 %v3811, %v3794
    %v5308 = vpack.c.b16 %v3812, %v3795
    %v5309 = vpack.c.b16 %v3813, %v3796
    %v5310 = vpack.c.b16 %v3814, %v3797
    %v5311 = vpack.c.b16 %v3815, %v3798
    %v5312 = vpack.c.b16 %v3816, %v3799
    %v5313 = vpack.c.b16 %v3817, %v3800
    %v5314 = vpack.c.b16 %v3818, %v3801
    %v5315 = vpack.c.b16 %v3819, %v3802
    %v5316 = vpack.c.b16 %v3820, %v3803
    %v5317 = vpack.c.b16 %v3821, %v3804
    %v5318 = vpack.c.b16 %v3822, %v3805
    %v5319 = vpack.c.b16 %v3823, %v3806
    %v5320 = vpack.c.b16 %v3824, %v3807
    %v5321 = vpack.c.b16 %v3825, %v3808
    %v5322 = vpack.c.b16 %v3826, %v3809
    %v5323 = vpack.c.b16 %v3827, %v3810
    %v5324 = vpack.c.b16 %v3845, %v3828
    %v5325 = vpack.c.b16 %v3846, %v3829
    %v5326 = vpack.c.b16 %v3847, %v3830
    %v5327 = vpack.c.b16 %v3848, %v3831
    %v5328 = vpack.c.b16 %v3849, %v3832
    %v5329 = vpack.c.b16 %v3850, %v3833
    %v5330 = vpack.c.b16 %v3851, %v3834
    %v5331 = vpack.c.b16 %v3852, %v3835
    %v5332 = vpack.c.b16 %v3853, %v3836
    %v5333 = vpack.c.b16 %v3854, %v3837
    %v5334 = vpack.c.b16 %v3855, %v3838
    %v5335 = vpack.c.b16 %v3856, %v3839
    %v5336 = vpack.c.b16 %v3857, %v3840
    %v5337 = vpack.c.b16 %v3858, %v3841
    %v5338 = vpack.c.b16 %v3859, %v3842
    %v5339 = vpack.c.b16 %v3860, %v3843
    %v5340 = vpack.c.b16 %v3861, %v3844
    %v5341 = vpack.c.b16 %v3879, %v3862
    %v5342 = vpack.c.b16 %v3880, %v3863
    %v5343 = vpack.c.b16 %v3881, %v3864
    %v5344 = vpack.c.b16 %v3882, %v3865
    %v5345 = vpack.c.b16 %v3883, %v3866
    %v5346 = vpack.c.b16 %v3884, %v3867
    %v5347 = vpack.c.b16 %v3885, %v3868
    %v5348 = vpack.c.b16 %v3886, %v3869
    %v5349 = vpack.c.b16 %v3887, %v3870
    %v5350 = vpack.c.b16 %v3888, %v3871
    %v5351 = vpack.c.b16 %v3889, %v3872
    %v5352 = vpack.c.b16 %v3890, %v3873
    %v5353 = vpack.c.b16 %v3891, %v3874
    %v5354 = vpack.c.b16 %v3892, %v3875
    %v5355 = vpack.c.b16 %v3893, %v3876
    %v5356 = vpack.c.b16 %v3894, %v3877
    %v5357 = vpack.c.b16 %v3895, %v3878
    %v5358 = vpack.c.b16 %v3913, %v3896
    %v5359 = vpack.c.b16 %v3914, %v3897
    %v5360 = vpack.c.b16 %v3915, %v3898
    %v5361 = vpack.c.b16 %v3916, %v3899
    %v5362 = vpack.c.b16 %v3917, %v3900
    %v5363 = vpack.c.b16 %v3918, %v3901
    %v5364 = vpack.c.b16 %v3919, %v3902
    %v5365 = vpack.c.b16 %v3920, %v3903
    %v5366 = vpack.c.b16 %v3921, %v3904
    %v5367 = vpack.c.b16 %v3922, %v3905
    %v5368 = vpack.c.b16 %v3923, %v3906
    %v5369 = vpack.c.b16 %v3924, %v3907
    %v5370 = vpack.c.b16 %v3925, %v3908
    %v5371 = vpack.c.b16 %v3926, %v3909
    %v5372 = vpack.c.b16 %v3927, %v3910
    %v5373 = vpack.c.b16 %v3928, %v3911
    %v5374 = vpack.c.b16 %v3929, %v3912
    %v5375 = vpack.c.b16 %v3947, %v3930
    %v5376 = vpack.c.b16 %v3948, %v3931
    %v5377 = vpack.c.b16 %v3949, %v3932
    %v5378 = vpack.c.b16 %v3950, %v3933
    %v5379 = vpack.c.b16 %v3951, %v3934
    %v5380 = vpack.c.b16 %v3952, %v3935
    %v5381 = vpack.c.b16 %v3953, %v3936
    %v5382 = vpack.c.b16 %v3954, %v3937
    %v5383 = vpack.c.b16 %v3955, %v3938
    %v5384 = vpack.c.b16 %v3956, %v3939
    %v5385 = vpack.c.b16 %v3957, %v3940
    %v5386 = vpack.c.b16 %v3958, %v3941
    %v5387 = vpack.c.b16 %v3959, %v3942
    %v5388 = vpack.c.b16 %v3960, %v3943
    %v5389 = vpack.c.b16 %v3961, %v3944
    %v5390 = vpack.c.b16 %v3962, %v3945
    %v5391 = vpack.c.b16 %v3963, %v3946
    %v5392 = vpack.c.b16 %v3981, %v3964
    %v5393 = vpack.c.b16 %v3982, %v3965
    %v5394 = vpack.c.b16 %v3983, %v3966
    %v5395 = vpack.c.b16 %v3984, %v3967
    %v5396 = vpack.c.b16 %v3985, %v3968
    %v5397 = vpack.c.b16 %v3986, %v3969
    %v5398 = vpack.c.b16 %v3987, %v3970
    %v5399 = vpack.c.b16 %v3988, %v3971
    %v5400 = vpack.c.b16 %v3989, %v3972
    %v5401 = vpack.c.b16 %v3990, %v3973
    %v5402 = vpack.c.b16 %v3991, %v3974
    %v5403 = vpack.c.b16 %v3992, %v3975
    %v5404 = vpack.c.b16 %v3993, %v3976
    %v5405 = vpack.c.b16 %v3994, %v3977
    %v5406 = vpack.c.b16 %v3995, %v3978
    %v5407 = vpack.c.b16 %v3996, %v3979
    %v5408 = vpack.c.b16 %v3997, %v3980
    %v5409 = vpack.c.b16 %v4015, %v3998
    %v5410 = vpack.c.b16 %v4016, %v3999
    %v5411 = vpack.c.b16 %v4017, %v4000
    %v5412 = vpack.c.b16 %v4018, %v4001
    %v5413 = vpack.c.b16 %v4019, %v4002
    %v5414 = vpack.c.b16 %v4020, %v4003
    %v5415 = vpack.c.b16 %v4021, %v4004
    %v5416 = vpack.c.b16 %v4022, %v4005
    %v5417 = vpack.c.b16 %v4023, %v4006
    %v5418 = vpack.c.b16 %v4024, %v4007
    %v5419 = vpack.c.b16 %v4025, %v4008
    %v5420 = vpack.c.b16 %v4026, %v4009
    %v5421 = vpack.c.b16 %v4027, %v4010
    %v5422 = vpack.c.b16 %v4028, %v4011
    %v5423 = vpack.c.b16 %v4029, %v4012
    %v5424 = vpack.c.b16 %v4030, %v4013
    %v5425 = vpack.c.b16 %v4031, %v4014
    %v5426 = vpack.c.b16 %v4049, %v4032
    %v5427 = vpack.c.b16 %v4050, %v4033
    %v5428 = vpack.c.b16 %v4051, %v4034
    %v5429 = vpack.c.b16 %v4052, %v4035
    %v5430 = vpack.c.b16 %v4053, %v4036
    %v5431 = vpack.c.b16 %v4054, %v4037
    %v5432 = vpack.c.b16 %v4055, %v4038
    %v5433 = vpack.c.b16 %v4056, %v4039
    %v5434 = vpack.c.b16 %v4057, %v4040
    %v5435 = vpack.c.b16 %v4058, %v4041
    %v5436 = vpack.c.b16 %v4059, %v4042
    %v5437 = vpack.c.b16 %v4060, %v4043
    %v5438 = vpack.c.b16 %v4061, %v4044
    %v5439 = vpack.c.b16 %v4062, %v4045
    %v5440 = vpack.c.b16 %v4063, %v4046
    %v5441 = vpack.c.b16 %v4064, %v4047
    %v5442 = vpack.c.b16 %v4065, %v4048
    %v5443 = vpack.c.b16 %v4083, %v4066
    %v5444 = vpack.c.b16 %v4084, %v4067
    %v5445 = vpack.c.b16 %v4085, %v4068
    %v5446 = vpack.c.b16 %v4086, %v4069
    %v5447 = vpack.c.b16 %v4087, %v4070
    %v5448 = vpack.c.b16 %v4088, %v4071
    %v5449 = vpack.c.b16 %v4089, %v4072
    %v5450 = vpack.c.b16 %v4090, %v4073
    %v5451 = vpack.c.b16 %v4091, %v4074
    %v5452 = vpack.c.b16 %v4092, %v4075
    %v5453 = vpack.c.b16 %v4093, %v4076
    %v5454 = vpack.c.b16 %v4094, %v4077
    %v5455 = vpack.c.b16 %v4095, %v4078
    %v5456 = vpack.c.b16 %v4096, %v4079
    %v5457 = vpack.c.b16 %v4097, %v4080
    %v5458 = vpack.c.b16 %v4098, %v4081
    %v5459 = vpack.c.b16 %v4099, %v4082
    %v5460 = vpack.c.b16 %v4117, %v4100
    %v5461 = vpack.c.b16 %v4118, %v4101
    %v5462 = vpack.c.b16 %v4119, %v4102
    %v5463 = vpack.c.b16 %v4120, %v4103
    %v5464 = vpack.c.b16 %v4121, %v4104
    %v5465 = vpack.c.b16 %v4122, %v4105
    %v5466 = vpack.c.b16 %v4123, %v4106
    %v5467 = vpack.c.b16 %v4124, %v4107
    %v5468 = vpack.c.b16 %v4125, %v4108
    %v5469 = vpack.c.b16 %v4126, %v4109
    %v5470 = vpack.c.b16 %v4127, %v4110
    %v5471 = vpack.c.b16 %v4128, %v4111
    %v5472 = vpack.c.b16 %v4129, %v4112
    %v5473 = vpack.c.b16 %v4130, %v4113
    %v5474 = vpack.c.b16 %v4131, %v4114
    %v5475 = vpack.c.b16 %v4132, %v4115
    %v5476 = vpack.c.b16 %v4133, %v4116
    %v5477 = vpack.c.b16 %v4151, %v4134
    %v5478 = vpack.c.b16 %v4152, %v4135
    %v5479 = vpack.c.b16 %v4153, %v4136
    %v5480 = vpack.c.b16 %v4154, %v4137
    %v5481 = vpack.c.b16 %v4155, %v4138
    %v5482 = vpack.c.b16 %v4156, %v4139
    %v5483 = vpack.c.b16 %v4157, %v4140
    %v5484 = vpack.c.b16 %v4158, %v4141
    %v5485 = vpack.c.b16 %v4159, %v4142
    %v5486 = vpack.c.b16 %v4160, %v4143
    %v5487 = vpack.c.b16 %v4161, %v4144
    %v5488 = vpack.c.b16 %v4162, %v4145
    %v5489 = vpack.c.b16 %v4163, %v4146
    %v5490 = vpack.c.b16 %v4164, %v4147
    %v5491 = vpack.c.b16 %v4165, %v4148
    %v5492 = vpack.c.b16 %v4166, %v4149
    %v5493 = vpack.c.b16 %v4167, %v4150
    %v5494 = vpack.c.b16 %v4185, %v4168
    %v5495 = vpack.c.b16 %v4186, %v4169
    %v5496 = vpack.c.b16 %v4187, %v4170
    %v5497 = vpack.c.b16 %v4188, %v4171
    %v5498 = vpack.c.b16 %v4189, %v4172
    %v5499 = vpack.c.b16 %v4190, %v4173
    %v5500 = vpack.c.b16 %v4191, %v4174
    %v5501 = vpack.c.b16 %v4192, %v4175
    %v5502 = vpack.c.b16 %v4193, %v4176
    %v5503 = vpack.c.b16 %v4194, %v4177
    %v5504 = vpack.c.b16 %v4195, %v4178
    %v5505 = vpack.c.b16 %v4196, %v4179
    %v5506 = vpack.c.b16 %v4197, %v4180
    %v5507 = vpack.c.b16 %v4198, %v4181
    %v5508 = vpack.c.b16 %v4199, %v4182
    %v5509 = vpack.c.b16 %v4200, %v4183
    %v5510 = vpack.c.b16 %v4201, %v4184
    %v5511 = vpack.c.b16 %v4219, %v4202
    %v5512 = vpack.c.b16 %v4220, %v4203
    %v5513 = vpack.c.b16 %v4221, %v4204
    %v5514 = vpack.c.b16 %v4222, %v4205
    %v5515 = vpack.c.b16 %v4223, %v4206
    %v5516 = vpack.c.b16 %v4224, %v4207
    %v5517 = vpack.c.b16 %v4225, %v4208
    %v5518 = vpack.c.b16 %v4226, %v4209
    %v5519 = vpack.c.b16 %v4227, %v4210
    %v5520 = vpack.c.b16 %v4228, %v4211
    %v5521 = vpack.c.b16 %v4229, %v4212
    %v5522 = vpack.c.b16 %v4230, %v4213
    %v5523 = vpack.c.b16 %v4231, %v4214
    %v5524 = vpack.c.b16 %v4232, %v4215
    %v5525 = vpack.c.b16 %v4233, %v4216
    %v5526 = vpack.c.b16 %v4234, %v4217
    %v5527 = vpack.c.b16 %v4235, %v4218
    %v5528 = vpack.c.b16 %v4253, %v4236
    %v5529 = vpack.c.b16 %v4254, %v4237
    %v5530 = vpack.c.b16 %v4255, %v4238
    %v5531 = vpack.c.b16 %v4256, %v4239
    %v5532 = vpack.c.b16 %v4257, %v4240
    %v5533 = vpack.c.b16 %v4258, %v4241
    %v5534 = vpack.c.b16 %v4259, %v4242
    %v5535 = vpack.c.b16 %v4260, %v4243
    %v5536 = vpack.c.b16 %v4261, %v4244
    %v5537 = vpack.c.b16 %v4262, %v4245
    %v5538 = vpack.c.b16 %v4263, %v4246
    %v5539 = vpack.c.b16 %v4264, %v4247
    %v5540 = vpack.c.b16 %v4265, %v4248
    %v5541 = vpack.c.b16 %v4266, %v4249
    %v5542 = vpack.c.b16 %v4267, %v4250
    %v5543 = vpack.c.b16 %v4268, %v4251
    %v5544 = vpack.c.b16 %v4269, %v4252
    %v5545 = vpack.c.b16 %v4287, %v4270
    %v5546 = vpack.c.b16 %v4288, %v4271
    %v5547 = vpack.c.b16 %v4289, %v4272
    %v5548 = vpack.c.b16 %v4290, %v4273
    %v5549 = vpack.c.b16 %v4291, %v4274
    %v5550 = vpack.c.b16 %v4292, %v4275
    %v5551 = vpack.c.b16 %v4293, %v4276
    %v5552 = vpack.c.b16 %v4294, %v4277
    %v5553 = vpack.c.b16 %v4295, %v4278
    %v5554 = vpack.c.b16 %v4296, %v4279
    %v5555 = vpack.c.b16 %v4297, %v4280
    %v5556 = vpack.c.b16 %v4298, %v4281
    %v5557 = vpack.c.b16 %v4299, %v4282
    %v5558 = vpack.c.b16 %v4300, %v4283
    %v5559 = vpack.c.b16 %v4301, %v4284
    %v5560 = vpack.c.b16 %v4302, %v4285
    %v5561 = vpack.c.b16 %v4303, %v4286
    %v5562 = vpack.c.b16 %v4321, %v4304
    %v5563 = vpack.c.b16 %v4322, %v4305
    %v5564 = vpack.c.b16 %v4323, %v4306
    %v5565 = vpack.c.b16 %v4324, %v4307
    %v5566 = vpack.c.b16 %v4325, %v4308
    %v5567 = vpack.c.b16 %v4326, %v4309
    %v5568 = vpack.c.b16 %v4327, %v4310
    %v5569 = vpack.c.b16 %v4328, %v4311
    %v5570 = vpack.c.b16 %v4329, %v4312
    %v5571 = vpack.c.b16 %v4330, %v4313
    %v5572 = vpack.c.b16 %v4331, %v4314
    %v5573 = vpack.c.b16 %v4332, %v4315
    %v5574 = vpack.c.b16 %v4333, %v4316
    %v5575 = vpack.c.b16 %v4334, %v4317
    %v5576 = vpack.c.b16 %v4335, %v4318
    %v5577 = vpack.c.b16 %v4336, %v4319
    %v5578 = vpack.c.b16 %v4337, %v4320
    %v5579 = vpack.c.b16 %v4355, %v4338
    %v5580 = vpack.c.b16 %v4356, %v4339
    %v5581 = vpack.c.b16 %v4357, %v4340
    %v5582 = vpack.c.b16 %v4358, %v4341
    %v5583 = vpack.c.b16 %v4359, %v4342
    %v5584 = vpack.c.b16 %v4360, %v4343
    %v5585 = vpack.c.b16 %v4361, %v4344
    %v5586 = vpack.c.b16 %v4362, %v4345
    %v5587 = vpack.c.b16 %v4363, %v4346
    %v5588 = vpack.c.b16 %v4364, %v4347
    %v5589 = vpack.c.b16 %v4365, %v4348
    %v5590 = vpack.c.b16 %v4366, %v4349
    %v5591 = vpack.c.b16 %v4367, %v4350
    %v5592 = vpack.c.b16 %v4368, %v4351
    %v5593 = vpack.c.b16 %v4369, %v4352
    %v5594 = vpack.c.b16 %v4370, %v4353
    %v5595 = vpack.c.b16 %v4371, %v4354
    %v5596 = vpack.c.b16 %v4389, %v4372
    %v5597 = vpack.c.b16 %v4390, %v4373
    %v5598 = vpack.c.b16 %v4391, %v4374
    %v5599 = vpack.c.b16 %v4392, %v4375
    %v5600 = vpack.c.b16 %v4393, %v4376
    %v5601 = vpack.c.b16 %v4394, %v4377
    %v5602 = vpack.c.b16 %v4395, %v4378
    %v5603 = vpack.c.b16 %v4396, %v4379
    %v5604 = vpack.c.b16 %v4397, %v4380
    %v5605 = vpack.c.b16 %v4398, %v4381
    %v5606 = vpack.c.b16 %v4399, %v4382
    %v5607 = vpack.c.b16 %v4400, %v4383
    %v5608 = vpack.c.b16 %v4401, %v4384
    %v5609 = vpack.c.b16 %v4402, %v4385
    %v5610 = vpack.c.b16 %v4403, %v4386
    %v5611 = vpack.c.b16 %v4404, %v4387
    %v5612 = vpack.c.b16 %v4405, %v4388
    %v5613 = vpack.c.b16 %v4423, %v4406
    %v5614 = vpack.c.b16 %v4424, %v4407
    %v5615 = vpack.c.b16 %v4425, %v4408
    %v5616 = vpack.c.b16 %v4426, %v4409
    %v5617 = vpack.c.b16 %v4427, %v4410
    %v5618 = vpack.c.b16 %v4428, %v4411
    %v5619 = vpack.c.b16 %v4429, %v4412
    %v5620 = vpack.c.b16 %v4430, %v4413
    %v5621 = vpack.c.b16 %v4431, %v4414
    %v5622 = vpack.c.b16 %v4432, %v4415
    %v5623 = vpack.c.b16 %v4433, %v4416
    %v5624 = vpack.c.b16 %v4434, %v4417
    %v5625 = vpack.c.b16 %v4435, %v4418
    %v5626 = vpack.c.b16 %v4436, %v4419
    %v5627 = vpack.c.b16 %v4437, %v4420
    %v5628 = vpack.c.b16 %v4438, %v4421
    %v5629 = vpack.c.b16 %v4439, %v4422
    %v5630 = vpack.c.b16 %v4457, %v4440
    %v5631 = vpack.c.b16 %v4458, %v4441
    %v5632 = vpack.c.b16 %v4459, %v4442
    %v5633 = vpack.c.b16 %v4460, %v4443
    %v5634 = vpack.c.b16 %v4461, %v4444
    %v5635 = vpack.c.b16 %v4462, %v4445
    %v5636 = vpack.c.b16 %v4463, %v4446
    %v5637 = vpack.c.b16 %v4464, %v4447
    %v5638 = vpack.c.b16 %v4465, %v4448
    %v5639 = vpack.c.b16 %v4466, %v4449
    %v5640 = vpack.c.b16 %v4467, %v4450
    %v5641 = vpack.c.b16 %v4468, %v4451
    %v5642 = vpack.c.b16 %v4469, %v4452
    %v5643 = vpack.c.b16 %v4470, %v4453
    %v5644 = vpack.c.b16 %v4471, %v4454
    %v5645 = vpack.c.b16 %v4472, %v4455
    %v5646 = vpack.c.b16 %v4473, %v4456
    %v5647 = vpack.c.b16 %v4491, %v4474
    %v5648 = vpack.c.b16 %v4492, %v4475
    %v5649 = vpack.c.b16 %v4493, %v4476
    %v5650 = vpack.c.b16 %v4494, %v4477
    %v5651 = vpack.c.b16 %v4495, %v4478
    %v5652 = vpack.c.b16 %v4496, %v4479
    %v5653 = vpack.c.b16 %v4497, %v4480
    %v5654 = vpack.c.b16 %v4498, %v4481
    %v5655 = vpack.c.b16 %v4499, %v4482
    %v5656 = vpack.c.b16 %v4500, %v4483
    %v5657 = vpack.c.b16 %v4501, %v4484
    %v5658 = vpack.c.b16 %v4502, %v4485
    %v5659 = vpack.c.b16 %v4503, %v4486
    %v5660 = vpack.c.b16 %v4504, %v4487
    %v5661 = vpack.c.b16 %v4505, %v4488
    %v5662 = vpack.c.b16 %v4506, %v4489
    %v5663 = vpack.c.b16 %v4507, %v4490
    %v5664 = vpack.c.b16 %v4525, %v4508
    %v5665 = vpack.c.b16 %v4526, %v4509
    %v5666 = vpack.c.b16 %v4527, %v4510
    %v5667 = vpack.c.b16 %v4528, %v4511
    %v5668 = vpack.c.b16 %v4529, %v4512
    %v5669 = vpack.c.b16 %v4530, %v4513
    %v5670 = vpack.c.b16 %v4531, %v4514
    %v5671 = vpack.c.b16 %v4532, %v4515
    %v5672 = vpack.c.b16 %v4533, %v4516
    %v5673 = vpack.c.b16 %v4534, %v4517
    %v5674 = vpack.c.b16 %v4535, %v4518
    %v5675 = vpack.c.b16 %v4536, %v4519
    %v5676 = vpack.c.b16 %v4537, %v4520
    %v5677 = vpack.c.b16 %v4538, %v4521
    %v5678 = vpack.c.b16 %v4539, %v4522
    %v5679 = vpack.c.b16 %v4540, %v4523
    %v5680 = vpack.c.b16 %v4541, %v4524
    %v5681 = vpack.c.b16 %v4559, %v4542
    %v5682 = vpack.c.b16 %v4560, %v4543
    %v5683 = vpack.c.b16 %v4561, %v4544
    %v5684 = vpack.c.b16 %v4562, %v4545
    %v5685 = vpack.c.b16 %v4563, %v4546
    %v5686 = vpack.c.b16 %v4564, %v4547
    %v5687 = vpack.c.b16 %v4565, %v4548
    %v5688 = vpack.c.b16 %v4566, %v4549
    %v5689 = vpack.c.b16 %v4567, %v4550
    %v5690 = vpack.c.b16 %v4568, %v4551
    %v5691 = vpack.c.b16 %v4569, %v4552
    %v5692 = vpack.c.b16 %v4570, %v4553
    %v5693 = vpack.c.b16 %v4571, %v4554
    %v5694 = vpack.c.b16 %v4572, %v4555
    %v5695 = vpack.c.b16 %v4573, %v4556
    %v5696 = vpack.c.b16 %v4574, %v4557
    %v5697 = vpack.c.b16 %v4575, %v4558
    %v5698 = vpack.c.b16 %v4593, %v4576
    %v5699 = vpack.c.b16 %v4594, %v4577
    %v5700 = vpack.c.b16 %v4595, %v4578
    %v5701 = vpack.c.b16 %v4596, %v4579
    %v5702 = vpack.c.b16 %v4597, %v4580
    %v5703 = vpack.c.b16 %v4598, %v4581
    %v5704 = vpack.c.b16 %v4599, %v4582
    %v5705 = vpack.c.b16 %v4600, %v4583
    %v5706 = vpack.c.b16 %v4601, %v4584
    %v5707 = vpack.c.b16 %v4602, %v4585
    %v5708 = vpack.c.b16 %v4603, %v4586
    %v5709 = vpack.c.b16 %v4604, %v4587
    %v5710 = vpack.c.b16 %v4605, %v4588
    %v5711 = vpack.c.b16 %v4606, %v4589
    %v5712 = vpack.c.b16 %v4607, %v4590
    %v5713 = vpack.c.b16 %v4608, %v4591
    %v5714 = vpack.c.b16 %v4609, %v4592
    %v5715 = vpack.c.b16 %v4627, %v4610
    %v5716 = vpack.c.b16 %v4628, %v4611
    %v5717 = vpack.c.b16 %v4629, %v4612
    %v5718 = vpack.c.b16 %v4630, %v4613
    %v5719 = vpack.c.b16 %v4631, %v4614
    %v5720 = vpack.c.b16 %v4632, %v4615
    %v5721 = vpack.c.b16 %v4633, %v4616
    %v5722 = vpack.c.b16 %v4634, %v4617
    %v5723 = vpack.c.b16 %v4635, %v4618
    %v5724 = vpack.c.b16 %v4636, %v4619
    %v5725 = vpack.c.b16 %v4637, %v4620
    %v5726 = vpack.c.b16 %v4638, %v4621
    %v5727 = vpack.c.b16 %v4639, %v4622
    %v5728 = vpack.c.b16 %v4640, %v4623
    %v5729 = vpack.c.b16 %v4641, %v4624
    %v5730 = vpack.c.b16 %v4642, %v4625
    %v5731 = vpack.c.b16 %v4643, %v4626
    %6820 = vmatprep.subr.bf16.mxu0 %v4645
    %6821 = vmatpush1.bf16.msra.mxu0 %v4644
    %6822 = vmatprep.subr.bf16.mxu0 %v4662
    %6823 = vmatpush1.bf16.msra.mxu0 %v4661
    %6824 = vmatprep.subr.bf16.mxu0 %v4679
    %6825 = vmatpush1.bf16.msra.mxu0 %v4678
    %6826 = vmatprep.subr.bf16.mxu0 %v4696
    %6827 = vmatpush1.bf16.msra.mxu0 %v4695
    %6828 = vmatprep.subr.bf16.mxu0 %v4713
    %6829 = vmatpush1.bf16.msra.mxu0 %v4712
    %6830 = vmatprep.subr.bf16.mxu0 %v4730
    %6831 = vmatpush1.bf16.msra.mxu0 %v4729
    %6832 = vmatprep.subr.bf16.mxu0 %v4747
    %6833 = vmatpush1.bf16.msra.mxu0 %v4746
    %6834 = vmatprep.subr.bf16.mxu0 %v4764
    %6835 = vmatpush1.bf16.msra.mxu0 %v4763
    %6836 = vmatprep.subr.bf16.mxu0 %v4781
    %6837 = vmatpush1.bf16.msra.mxu0 %v4780
    %6838 = vmatprep.subr.bf16.mxu0 %v4798
    %6839 = vmatpush1.bf16.msra.mxu0 %v4797
    %6840 = vmatprep.subr.bf16.mxu0 %v4815
    %6841 = vmatpush1.bf16.msra.mxu0 %v4814
    %6842 = vmatprep.subr.bf16.mxu0 %v4832
    %6843 = vmatpush1.bf16.msra.mxu0 %v4831
    %6844 = vmatprep.subr.bf16.mxu0 %v4849
    %6845 = vmatpush1.bf16.msra.mxu0 %v4848
    %6846 = vmatprep.subr.bf16.mxu0 %v4866
    %6847 = vmatpush1.bf16.msra.mxu0 %v4865
    %6848 = vmatprep.subr.bf16.mxu0 %v4883
    %6849 = vmatpush1.bf16.msra.mxu0 %v4882
    %6850 = vmatprep.subr.bf16.mxu0 %v4900
    %6851 = vmatpush1.bf16.msra.mxu0 %v4899
    %6852 = vmatprep.mubr.bf16.mxu0 %v66
    %6853 = vmatmul.mubr.bf16.gmra.mrb[0].mxu0 %v65
    %v6854 = vpop.f32.mrb[0].mxu0
    %v6855 = vadd.f32 %v1234, %v6854
    %v6856 = vpop.f32.mrb[0].mxu0
    %v6857 = vadd.f32 %v1238, %v6856
    %v6858 = vpop.f32.mrb[0].mxu0
    %v6859 = vpop.f32.mrb[0].mxu0
    %6860 = vdwg.mxu0
    %6861 = vmatprep.subr.bf16.mxu0 %v4917
    %6862 = vmatpush1.bf16.msra.mxu0 %v4916
    %6863 = vmatprep.subr.bf16.mxu0 %v4934
    %6864 = vmatpush1.bf16.msra.mxu0 %v4933
    %6865 = vmatprep.subr.bf16.mxu0 %v4951
    %6866 = vmatpush1.bf16.msra.mxu0 %v4950
    %6867 = vmatprep.subr.bf16.mxu0 %v4968
    %6868 = vmatpush1.bf16.msra.mxu0 %v4967
    %6869 = vmatprep.subr.bf16.mxu0 %v4985
    %6870 = vmatpush1.bf16.msra.mxu0 %v4984
    %6871 = vmatprep.subr.bf16.mxu0 %v5002
    %6872 = vmatpush1.bf16.msra.mxu0 %v5001
    %6873 = vmatprep.subr.bf16.mxu0 %v5019
    %6874 = vmatpush1.bf16.msra.mxu0 %v5018
    %6875 = vmatprep.subr.bf16.mxu0 %v5036
    %6876 = vmatpush1.bf16.msra.mxu0 %v5035
    %6877 = vmatprep.subr.bf16.mxu0 %v5053
    %6878 = vmatpush1.bf16.msra.mxu0 %v5052
    %6879 = vmatprep.subr.bf16.mxu0 %v5070
    %6880 = vmatpush1.bf16.msra.mxu0 %v5069
    %6881 = vmatprep.subr.bf16.mxu0 %v5087
    %6882 = vmatpush1.bf16.msra.mxu0 %v5086
    %6883 = vmatprep.subr.bf16.mxu0 %v5104
    %6884 = vmatpush1.bf16.msra.mxu0 %v5103
    %6885 = vmatprep.subr.bf16.mxu0 %v5121
    %6886 = vmatpush1.bf16.msra.mxu0 %v5120
    %6887 = vmatprep.subr.bf16.mxu0 %v5138
    %6888 = vmatpush1.bf16.msra.mxu0 %v5137
    %6889 = vmatprep.subr.bf16.mxu0 %v5155
    %6890 = vmatpush1.bf16.msra.mxu0 %v5154
    %6891 = vmatprep.subr.bf16.mxu0 %v5172
    %6892 = vmatpush1.bf16.msra.mxu0 %v5171
    %6893 = vmatprep.mubr.bf16.mxu0 %v68
    %6894 = vmatmul.mubr.bf16.gmra.mrb[0].mxu0 %v67
    %v6895 = vpop.f32.mrb[0].mxu0
    %v6896 = vadd.f32 %v6855, %v6895
    %v6897 = vpop.f32.mrb[0].mxu0
    %v6898 = vadd.f32 %v6857, %v6897
    %v6899 = vpop.f32.mrb[0].mxu0
    %v6900 = vpop.f32.mrb[0].mxu0
    %6901 = vdwg.mxu0
    %6902 = vmatprep.subr.bf16.mxu0 %v5189
    %6903 = vmatpush1.bf16.msra.mxu0 %v5188
    %6904 = vmatprep.subr.bf16.mxu0 %v5206
    %6905 = vmatpush1.bf16.msra.mxu0 %v5205
    %6906 = vmatprep.subr.bf16.mxu0 %v5223
    %6907 = vmatpush1.bf16.msra.mxu0 %v5222
    %6908 = vmatprep.subr.bf16.mxu0 %v5240
    %6909 = vmatpush1.bf16.msra.mxu0 %v5239
    %6910 = vmatprep.subr.bf16.mxu0 %v5257
    %6911 = vmatpush1.bf16.msra.mxu0 %v5256
    %6912 = vmatprep.subr.bf16.mxu0 %v5274
    %6913 = vmatpush1.bf16.msra.mxu0 %v5273
    %6914 = vmatprep.subr.bf16.mxu0 %v5291
    %6915 = vmatpush1.bf16.msra.mxu0 %v5290
    %6916 = vmatprep.subr.bf16.mxu0 %v5308
    %6917 = vmatpush1.bf16.msra.mxu0 %v5307
    %6918 = vmatprep.subr.bf16.mxu0 %v5325
    %6919 = vmatpush1.bf16.msra.mxu0 %v5324
    %6920 = vmatprep.subr.bf16.mxu0 %v5342
    %6921 = vmatpush1.bf16.msra.mxu0 %v5341
    %6922 = vmatprep.subr.bf16.mxu0 %v5359
    %6923 = vmatpush1.bf16.msra.mxu0 %v5358
    %6924 = vmatprep.subr.bf16.mxu0 %v5376
    %6925 = vmatpush1.bf16.msra.mxu0 %v5375
    %6926 = vmatprep.subr.bf16.mxu0 %v5393
    %6927 = vmatpush1.bf16.msra.mxu0 %v5392
    %6928 = vmatprep.subr.bf16.mxu0 %v5410
    %6929 = vmatpush1.bf16.msra.mxu0 %v5409
    %6930 = vmatprep.subr.bf16.mxu0 %v5427
    %6931 = vmatpush1.bf16.msra.mxu0 %v5426
    %6932 = vmatprep.subr.bf16.mxu0 %v5444
    %6933 = vmatpush1.bf16.msra.mxu0 %v5443
    %6934 = vmatprep.mubr.bf16.mxu0 %v70
    %6935 = vmatmul.mubr.bf16.gmra.mrb[0].mxu0 %v69
    %v6936 = vpop.f32.mrb[0].mxu0
    %v6937 = vadd.f32 %v6896, %v6936
    %v6938 = vpop.f32.mrb[0].mxu0
    %v6939 = vadd.f32 %v6898, %v6938
    %v6940 = vpop.f32.mrb[0].mxu0
    %v6941 = vpop.f32.mrb[0].mxu0
    %6942 = vdwg.mxu0
    %6943 = vmatprep.subr.bf16.mxu0 %v5461
    %6944 = vmatpush1.bf16.msra.mxu0 %v5460
    %6945 = vmatprep.subr.bf16.mxu0 %v5478
    %6946 = vmatpush1.bf16.msra.mxu0 %v5477
    %6947 = vmatprep.subr.bf16.mxu0 %v5495
    %6948 = vmatpush1.bf16.msra.mxu0 %v5494
    %6949 = vmatprep.subr.bf16.mxu0 %v5512
    %6950 = vmatpush1.bf16.msra.mxu0 %v5511
    %6951 = vmatprep.subr.bf16.mxu0 %v5529
    %6952 = vmatpush1.bf16.msra.mxu0 %v5528
    %6953 = vmatprep.subr.bf16.mxu0 %v5546
    %6954 = vmatpush1.bf16.msra.mxu0 %v5545
    %6955 = vmatprep.subr.bf16.mxu0 %v5563
    %6956 = vmatpush1.bf16.msra.mxu0 %v5562
    %6957 = vmatprep.subr.bf16.mxu0 %v5580
    %6958 = vmatpush1.bf16.msra.mxu0 %v5579
    %6959 = vmatprep.subr.bf16.mxu0 %v5597
    %6960 = vmatpush1.bf16.msra.mxu0 %v5596
    %6961 = vmatprep.subr.bf16.mxu0 %v5614
    %6962 = vmatpush1.bf16.msra.mxu0 %v5613
    %6963 = vmatprep.subr.bf16.mxu0 %v5631
    %6964 = vmatpush1.bf16.msra.mxu0 %v5630
    %6965 = vmatprep.subr.bf16.mxu0 %v5648
    %6966 = vmatpush1.bf16.msra.mxu0 %v5647
    %6967 = vmatprep.subr.bf16.mxu0 %v5665
    %6968 = vmatpush1.bf16.msra.mxu0 %v5664
    %6969 = vmatprep.subr.bf16.mxu0 %v5682
    %6970 = vmatpush1.bf16.msra.mxu0 %v5681
    %6971 = vmatprep.subr.bf16.mxu0 %v5699
    %6972 = vmatpush1.bf16.msra.mxu0 %v5698
    %6973 = vmatprep.subr.bf16.mxu0 %v5716
    %6974 = vmatpush1.bf16.msra.mxu0 %v5715
    %6975 = vmatprep.mubr.bf16.mxu0 %v72
    %6976 = vmatmul.mubr.bf16.gmra.mrb[0].mxu0 %v71
    %v6977 = vpop.f32.mrb[0].mxu0
    %v6978 = vadd.f32 %v6937, %v6977
    %v6979 = vpop.f32.mrb[0].mxu0
    %v6980 = vadd.f32 %v6939, %v6979
    %v6981 = vpop.f32.mrb[0].mxu0
    %v6982 = vpop.f32.mrb[0].mxu0
    %6983 = vdwg.mxu0
    %6984 = vmatprep.subr.bf16.mxu0 %v4647
    %6985 = vmatpush1.bf16.msra.mxu0 %v4646
    %6986 = vmatprep.subr.bf16.mxu0 %v4664
    %6987 = vmatpush1.bf16.msra.mxu0 %v4663
    %6988 = vmatprep.subr.bf16.mxu0 %v4681
    %6989 = vmatpush1.bf16.msra.mxu0 %v4680
    %6990 = vmatprep.subr.bf16.mxu0 %v4698
    %6991 = vmatpush1.bf16.msra.mxu0 %v4697
    %6992 = vmatprep.subr.bf16.mxu0 %v4715
    %6993 = vmatpush1.bf16.msra.mxu0 %v4714
    %6994 = vmatprep.subr.bf16.mxu0 %v4732
    %6995 = vmatpush1.bf16.msra.mxu0 %v4731
    %6996 = vmatprep.subr.bf16.mxu0 %v4749
    %6997 = vmatpush1.bf16.msra.mxu0 %v4748
    %6998 = vmatprep.subr.bf16.mxu0 %v4766
    %6999 = vmatpush1.bf16.msra.mxu0 %v4765
    %7000 = vmatprep.subr.bf16.mxu0 %v4783
    %7001 = vmatpush1.bf16.msra.mxu0 %v4782
    %7002 = vmatprep.subr.bf16.mxu0 %v4800
    %7003 = vmatpush1.bf16.msra.mxu0 %v4799
    %7004 = vmatprep.subr.bf16.mxu0 %v4817
    %7005 = vmatpush1.bf16.msra.mxu0 %v4816
    %7006 = vmatprep.subr.bf16.mxu0 %v4834
    %7007 = vmatpush1.bf16.msra.mxu0 %v4833
    %7008 = vmatprep.subr.bf16.mxu0 %v4851
    %7009 = vmatpush1.bf16.msra.mxu0 %v4850
    %7010 = vmatprep.subr.bf16.mxu0 %v4868
    %7011 = vmatpush1.bf16.msra.mxu0 %v4867
    %7012 = vmatprep.subr.bf16.mxu0 %v4885
    %7013 = vmatpush1.bf16.msra.mxu0 %v4884
    %7014 = vmatprep.subr.bf16.mxu0 %v4902
    %7015 = vmatpush1.bf16.msra.mxu0 %v4901
    %7016 = vmatprep.mubr.bf16.mxu0 %v66
    %7017 = vmatmul.mubr.bf16.gmra.mrb[0].mxu0 %v65
    %v7018 = vpop.f32.mrb[0].mxu0
    %v7019 = vadd.f32 %v1242, %v7018
    %v7020 = vpop.f32.mrb[0].mxu0
    %v7021 = vadd.f32 %v1246, %v7020
    %v7022 = vpop.f32.mrb[0].mxu0
    %v7023 = vpop.f32.mrb[0].mxu0
    %7024 = vdwg.mxu0
    %7025 = vmatprep.subr.bf16.mxu0 %v4919
    %7026 = vmatpush1.bf16.msra.mxu0 %v4918
    %7027 = vmatprep.subr.bf16.mxu0 %v4936
    %7028 = vmatpush1.bf16.msra.mxu0 %v4935
    %7029 = vmatprep.subr.bf16.mxu0 %v4953
    %7030 = vmatpush1.bf16.msra.mxu0 %v4952
    %7031 = vmatprep.subr.bf16.mxu0 %v4970
    %7032 = vmatpush1.bf16.msra.mxu0 %v4969
    %7033 = vmatprep.subr.bf16.mxu0 %v4987
    %7034 = vmatpush1.bf16.msra.mxu0 %v4986
    %7035 = vmatprep.subr.bf16.mxu0 %v5004
    %7036 = vmatpush1.bf16.msra.mxu0 %v5003
    %7037 = vmatprep.subr.bf16.mxu0 %v5021
    %7038 = vmatpush1.bf16.msra.mxu0 %v5020
    %7039 = vmatprep.subr.bf16.mxu0 %v5038
    %7040 = vmatpush1.bf16.msra.mxu0 %v5037
    %7041 = vmatprep.subr.bf16.mxu0 %v5055
    %7042 = vmatpush1.bf16.msra.mxu0 %v5054
    %7043 = vmatprep.subr.bf16.mxu0 %v5072
    %7044 = vmatpush1.bf16.msra.mxu0 %v5071
    %7045 = vmatprep.subr.bf16.mxu0 %v5089
    %7046 = vmatpush1.bf16.msra.mxu0 %v5088
    %7047 = vmatprep.subr.bf16.mxu0 %v5106
    %7048 = vmatpush1.bf16.msra.mxu0 %v5105
    %7049 = vmatprep.subr.bf16.mxu0 %v5123
    %7050 = vmatpush1.bf16.msra.mxu0 %v5122
    %7051 = vmatprep.subr.bf16.mxu0 %v5140
    %7052 = vmatpush1.bf16.msra.mxu0 %v5139
    %7053 = vmatprep.subr.bf16.mxu0 %v5157
    %7054 = vmatpush1.bf16.msra.mxu0 %v5156
    %7055 = vmatprep.subr.bf16.mxu0 %v5174
    %7056 = vmatpush1.bf16.msra.mxu0 %v5173
    %7057 = vmatprep.mubr.bf16.mxu0 %v68
    %7058 = vmatmul.mubr.bf16.gmra.mrb[0].mxu0 %v67
    %v7059 = vpop.f32.mrb[0].mxu0
    %v7060 = vadd.f32 %v7019, %v7059
    %v7061 = vpop.f32.mrb[0].mxu0
    %v7062 = vadd.f32 %v7021, %v7061
    %v7063 = vpop.f32.mrb[0].mxu0
    %v7064 = vpop.f32.mrb[0].mxu0
    %7065 = vdwg.mxu0
    %7066 = vmatprep.subr.bf16.mxu0 %v5191
    %7067 = vmatpush1.bf16.msra.mxu0 %v5190
    %7068 = vmatprep.subr.bf16.mxu0 %v5208
    %7069 = vmatpush1.bf16.msra.mxu0 %v5207
    %7070 = vmatprep.subr.bf16.mxu0 %v5225
    %7071 = vmatpush1.bf16.msra.mxu0 %v5224
    %7072 = vmatprep.subr.bf16.mxu0 %v5242
    %7073 = vmatpush1.bf16.msra.mxu0 %v5241
    %7074 = vmatprep.subr.bf16.mxu0 %v5259
    %7075 = vmatpush1.bf16.msra.mxu0 %v5258
    %7076 = vmatprep.subr.bf16.mxu0 %v5276
    %7077 = vmatpush1.bf16.msra.mxu0 %v5275
    %7078 = vmatprep.subr.bf16.mxu0 %v5293
    %7079 = vmatpush1.bf16.msra.mxu0 %v5292
    %7080 = vmatprep.subr.bf16.mxu0 %v5310
    %7081 = vmatpush1.bf16.msra.mxu0 %v5309
    %7082 = vmatprep.subr.bf16.mxu0 %v5327
    %7083 = vmatpush1.bf16.msra.mxu0 %v5326
    %7084 = vmatprep.subr.bf16.mxu0 %v5344
    %7085 = vmatpush1.bf16.msra.mxu0 %v5343
    %7086 = vmatprep.subr.bf16.mxu0 %v5361
    %7087 = vmatpush1.bf16.msra.mxu0 %v5360
    %7088 = vmatprep.subr.bf16.mxu0 %v5378
    %7089 = vmatpush1.bf16.msra.mxu0 %v5377
    %7090 = vmatprep.subr.bf16.mxu0 %v5395
    %7091 = vmatpush1.bf16.msra.mxu0 %v5394
    %7092 = vmatprep.subr.bf16.mxu0 %v5412
    %7093 = vmatpush1.bf16.msra.mxu0 %v5411
    %7094 = vmatprep.subr.bf16.mxu0 %v5429
    %7095 = vmatpush1.bf16.msra.mxu0 %v5428
    %7096 = vmatprep.subr.bf16.mxu0 %v5446
    %7097 = vmatpush1.bf16.msra.mxu0 %v5445
    %7098 = vmatprep.mubr.bf16.mxu0 %v70
    %7099 = vmatmul.mubr.bf16.gmra.mrb[0].mxu0 %v69
    %v7100 = vpop.f32.mrb[0].mxu0
    %v7101 = vadd.f32 %v7060, %v7100
    %v7102 = vpop.f32.mrb[0].mxu0
    %v7103 = vadd.f32 %v7062, %v7102
    %v7104 = vpop.f32.mrb[0].mxu0
    %v7105 = vpop.f32.mrb[0].mxu0
    %7106 = vdwg.mxu0
    %7107 = vmatprep.subr.bf16.mxu0 %v5463
    %7108 = vmatpush1.bf16.msra.mxu0 %v5462
    %7109 = vmatprep.subr.bf16.mxu0 %v5480
    %7110 = vmatpush1.bf16.msra.mxu0 %v5479
    %7111 = vmatprep.subr.bf16.mxu0 %v5497
    %7112 = vmatpush1.bf16.msra.mxu0 %v5496
    %7113 = vmatprep.subr.bf16.mxu0 %v5514
    %7114 = vmatpush1.bf16.msra.mxu0 %v5513
    %7115 = vmatprep.subr.bf16.mxu0 %v5531
    %7116 = vmatpush1.bf16.msra.mxu0 %v5530
    %7117 = vmatprep.subr.bf16.mxu0 %v5548
    %7118 = vmatpush1.bf16.msra.mxu0 %v5547
    %7119 = vmatprep.subr.bf16.mxu0 %v5565
    %7120 = vmatpush1.bf16.msra.mxu0 %v5564
    %7121 = vmatprep.subr.bf16.mxu0 %v5582
    %7122 = vmatpush1.bf16.msra.mxu0 %v5581
    %7123 = vmatprep.subr.bf16.mxu0 %v5599
    %7124 = vmatpush1.bf16.msra.mxu0 %v5598
    %7125 = vmatprep.subr.bf16.mxu0 %v5616
    %7126 = vmatpush1.bf16.msra.mxu0 %v5615
    %7127 = vmatprep.subr.bf16.mxu0 %v5633
    %7128 = vmatpush1.bf16.msra.mxu0 %v5632
    %7129 = vmatprep.subr.bf16.mxu0 %v5650
    %7130 = vmatpush1.bf16.msra.mxu0 %v5649
    %7131 = vmatprep.subr.bf16.mxu0 %v5667
    %7132 = vmatpush1.bf16.msra.mxu0 %v5666
    %7133 = vmatprep.subr.bf16.mxu0 %v5684
    %7134 = vmatpush1.bf16.msra.mxu0 %v5683
    %7135 = vmatprep.subr.bf16.mxu0 %v5701
    %7136 = vmatpush1.bf16.msra.mxu0 %v5700
    %7137 = vmatprep.subr.bf16.mxu0 %v5718
    %7138 = vmatpush1.bf16.msra.mxu0 %v5717
    %7139 = vmatprep.mubr.bf16.mxu0 %v72
    %7140 = vmatmul.mubr.bf16.gmra.mrb[0].mxu0 %v71
    %v7141 = vpop.f32.mrb[0].mxu0
    %v7142 = vadd.f32 %v7101, %v7141
    %v7143 = vpop.f32.mrb[0].mxu0
    %v7144 = vadd.f32 %v7103, %v7143
    %v7145 = vpop.f32.mrb[0].mxu0
    %v7146 = vpop.f32.mrb[0].mxu0
    %7147 = vdwg.mxu0
    %7148 = vmatprep.subr.bf16.mxu0 %v4649
    %7149 = vmatpush1.bf16.msra.mxu0 %v4648
    %7150 = vmatprep.subr.bf16.mxu0 %v4666
    %7151 = vmatpush1.bf16.msra.mxu0 %v4665
    %7152 = vmatprep.subr.bf16.mxu0 %v4683
    %7153 = vmatpush1.bf16.msra.mxu0 %v4682
    %7154 = vmatprep.subr.bf16.mxu0 %v4700
    %7155 = vmatpush1.bf16.msra.mxu0 %v4699
    %7156 = vmatprep.subr.bf16.mxu0 %v4717
    %7157 = vmatpush1.bf16.msra.mxu0 %v4716
    %7158 = vmatprep.subr.bf16.mxu0 %v4734
    %7159 = vmatpush1.bf16.msra.mxu0 %v4733
    %7160 = vmatprep.subr.bf16.mxu0 %v4751
    %7161 = vmatpush1.bf16.msra.mxu0 %v4750
    %7162 = vmatprep.subr.bf16.mxu0 %v4768
    %7163 = vmatpush1.bf16.msra.mxu0 %v4767
    %7164 = vmatprep.subr.bf16.mxu0 %v4785
    %7165 = vmatpush1.bf16.msra.mxu0 %v4784
    %7166 = vmatprep.subr.bf16.mxu0 %v4802
    %7167 = vmatpush1.bf16.msra.mxu0 %v4801
    %7168 = vmatprep.subr.bf16.mxu0 %v4819
    %7169 = vmatpush1.bf16.msra.mxu0 %v4818
    %7170 = vmatprep.subr.bf16.mxu0 %v4836
    %7171 = vmatpush1.bf16.msra.mxu0 %v4835
    %7172 = vmatprep.subr.bf16.mxu0 %v4853
    %7173 = vmatpush1.bf16.msra.mxu0 %v4852
    %7174 = vmatprep.subr.bf16.mxu0 %v4870
    %7175 = vmatpush1.bf16.msra.mxu0 %v4869
    %7176 = vmatprep.subr.bf16.mxu0 %v4887
    %7177 = vmatpush1.bf16.msra.mxu0 %v4886
    %7178 = vmatprep.subr.bf16.mxu0 %v4904
    %7179 = vmatpush1.bf16.msra.mxu0 %v4903
    %7180 = vmatprep.mubr.bf16.mxu0 %v66
    %7181 = vmatmul.mubr.bf16.gmra.mrb[0].mxu0 %v65
    %v7182 = vpop.f32.mrb[0].mxu0
    %v7183 = vadd.f32 %v1250, %v7182
    %v7184 = vpop.f32.mrb[0].mxu0
    %v7185 = vadd.f32 %v1254, %v7184
    %v7186 = vpop.f32.mrb[0].mxu0
    %v7187 = vpop.f32.mrb[0].mxu0
    %7188 = vdwg.mxu0
    %7189 = vmatprep.subr.bf16.mxu0 %v4921
    %7190 = vmatpush1.bf16.msra.mxu0 %v4920
    %7191 = vmatprep.subr.bf16.mxu0 %v4938
    %7192 = vmatpush1.bf16.msra.mxu0 %v4937
    %7193 = vmatprep.subr.bf16.mxu0 %v4955
    %7194 = vmatpush1.bf16.msra.mxu0 %v4954
    %7195 = vmatprep.subr.bf16.mxu0 %v4972
    %7196 = vmatpush1.bf16.msra.mxu0 %v4971
    %7197 = vmatprep.subr.bf16.mxu0 %v4989
    %7198 = vmatpush1.bf16.msra.mxu0 %v4988
    %7199 = vmatprep.subr.bf16.mxu0 %v5006
    %7200 = vmatpush1.bf16.msra.mxu0 %v5005
    %7201 = vmatprep.subr.bf16.mxu0 %v5023
    %7202 = vmatpush1.bf16.msra.mxu0 %v5022
    %7203 = vmatprep.subr.bf16.mxu0 %v5040
    %7204 = vmatpush1.bf16.msra.mxu0 %v5039
    %7205 = vmatprep.subr.bf16.mxu0 %v5057
    %7206 = vmatpush1.bf16.msra.mxu0 %v5056
    %7207 = vmatprep.subr.bf16.mxu0 %v5074
    %7208 = vmatpush1.bf16.msra.mxu0 %v5073
    %7209 = vmatprep.subr.bf16.mxu0 %v5091
    %7210 = vmatpush1.bf16.msra.mxu0 %v5090
    %7211 = vmatprep.subr.bf16.mxu0 %v5108
    %7212 = vmatpush1.bf16.msra.mxu0 %v5107
    %7213 = vmatprep.subr.bf16.mxu0 %v5125
    %7214 = vmatpush1.bf16.msra.mxu0 %v5124
    %7215 = vmatprep.subr.bf16.mxu0 %v5142
    %7216 = vmatpush1.bf16.msra.mxu0 %v5141
    %7217 = vmatprep.subr.bf16.mxu0 %v5159
    %7218 = vmatpush1.bf16.msra.mxu0 %v5158
    %7219 = vmatprep.subr.bf16.mxu0 %v5176
    %7220 = vmatpush1.bf16.msra.mxu0 %v5175
    %7221 = vmatprep.mubr.bf16.mxu0 %v68
    %7222 = vmatmul.mubr.bf16.gmra.mrb[0].mxu0 %v67
    %v7223 = vpop.f32.mrb[0].mxu0
    %v7224 = vadd.f32 %v7183, %v7223
    %v7225 = vpop.f32.mrb[0].mxu0
    %v7226 = vadd.f32 %v7185, %v7225
    %v7227 = vpop.f32.mrb[0].mxu0
    %v7228 = vpop.f32.mrb[0].mxu0
    %7229 = vdwg.mxu0
    %7230 = vmatprep.subr.bf16.mxu0 %v5193
    %7231 = vmatpush1.bf16.msra.mxu0 %v5192
    %7232 = vmatprep.subr.bf16.mxu0 %v5210
    %7233 = vmatpush1.bf16.msra.mxu0 %v5209
    %7234 = vmatprep.subr.bf16.mxu0 %v5227
    %7235 = vmatpush1.bf16.msra.mxu0 %v5226
    %7236 = vmatprep.subr.bf16.mxu0 %v5244
    %7237 = vmatpush1.bf16.msra.mxu0 %v5243
    %7238 = vmatprep.subr.bf16.mxu0 %v5261
    %7239 = vmatpush1.bf16.msra.mxu0 %v5260
    %7240 = vmatprep.subr.bf16.mxu0 %v5278
    %7241 = vmatpush1.bf16.msra.mxu0 %v5277
    %7242 = vmatprep.subr.bf16.mxu0 %v5295
    %7243 = vmatpush1.bf16.msra.mxu0 %v5294
    %7244 = vmatprep.subr.bf16.mxu0 %v5312
    %7245 = vmatpush1.bf16.msra.mxu0 %v5311
    %7246 = vmatprep.subr.bf16.mxu0 %v5329
    %7247 = vmatpush1.bf16.msra.mxu0 %v5328
    %7248 = vmatprep.subr.bf16.mxu0 %v5346
    %7249 = vmatpush1.bf16.msra.mxu0 %v5345
    %7250 = vmatprep.subr.bf16.mxu0 %v5363
    %7251 = vmatpush1.bf16.msra.mxu0 %v5362
    %7252 = vmatprep.subr.bf16.mxu0 %v5380
    %7253 = vmatpush1.bf16.msra.mxu0 %v5379
    %7254 = vmatprep.subr.bf16.mxu0 %v5397
    %7255 = vmatpush1.bf16.msra.mxu0 %v5396
    %7256 = vmatprep.subr.bf16.mxu0 %v5414
    %7257 = vmatpush1.bf16.msra.mxu0 %v5413
    %7258 = vmatprep.subr.bf16.mxu0 %v5431
    %7259 = vmatpush1.bf16.msra.mxu0 %v5430
    %7260 = vmatprep.subr.bf16.mxu0 %v5448
    %7261 = vmatpush1.bf16.msra.mxu0 %v5447
    %7262 = vmatprep.mubr.bf16.mxu0 %v70
    %7263 = vmatmul.mubr.bf16.gmra.mrb[0].mxu0 %v69
    %v7264 = vpop.f32.mrb[0].mxu0
    %v7265 = vadd.f32 %v7224, %v7264
    %v7266 = vpop.f32.mrb[0].mxu0
    %v7267 = vadd.f32 %v7226, %v7266
    %v7268 = vpop.f32.mrb[0].mxu0
    %v7269 = vpop.f32.mrb[0].mxu0
    %7270 = vdwg.mxu0
    %7271 = vmatprep.subr.bf16.mxu0 %v5465
    %7272 = vmatpush1.bf16.msra.mxu0 %v5464
    %7273 = vmatprep.subr.bf16.mxu0 %v5482
    %7274 = vmatpush1.bf16.msra.mxu0 %v5481
    %7275 = vmatprep.subr.bf16.mxu0 %v5499
    %7276 = vmatpush1.bf16.msra.mxu0 %v5498
    %7277 = vmatprep.subr.bf16.mxu0 %v5516
    %7278 = vmatpush1.bf16.msra.mxu0 %v5515
    %7279 = vmatprep.subr.bf16.mxu0 %v5533
    %7280 = vmatpush1.bf16.msra.mxu0 %v5532
    %7281 = vmatprep.subr.bf16.mxu0 %v5550
    %7282 = vmatpush1.bf16.msra.mxu0 %v5549
    %7283 = vmatprep.subr.bf16.mxu0 %v5567
    %7284 = vmatpush1.bf16.msra.mxu0 %v5566
    %7285 = vmatprep.subr.bf16.mxu0 %v5584
    %7286 = vmatpush1.bf16.msra.mxu0 %v5583
    %7287 = vmatprep.subr.bf16.mxu0 %v5601
    %7288 = vmatpush1.bf16.msra.mxu0 %v5600
    %7289 = vmatprep.subr.bf16.mxu0 %v5618
    %7290 = vmatpush1.bf16.msra.mxu0 %v5617
    %7291 = vmatprep.subr.bf16.mxu0 %v5635
    %7292 = vmatpush1.bf16.msra.mxu0 %v5634
    %7293 = vmatprep.subr.bf16.mxu0 %v5652
    %7294 = vmatpush1.bf16.msra.mxu0 %v5651
    %7295 = vmatprep.subr.bf16.mxu0 %v5669
    %7296 = vmatpush1.bf16.msra.mxu0 %v5668
    %7297 = vmatprep.subr.bf16.mxu0 %v5686
    %7298 = vmatpush1.bf16.msra.mxu0 %v5685
    %7299 = vmatprep.subr.bf16.mxu0 %v5703
    %7300 = vmatpush1.bf16.msra.mxu0 %v5702
    %7301 = vmatprep.subr.bf16.mxu0 %v5720
    %7302 = vmatpush1.bf16.msra.mxu0 %v5719
    %7303 = vmatprep.mubr.bf16.mxu0 %v72
    %7304 = vmatmul.mubr.bf16.gmra.mrb[0].mxu0 %v71
    %v7305 = vpop.f32.mrb[0].mxu0
    %v7306 = vadd.f32 %v7265, %v7305
    %v7307 = vpop.f32.mrb[0].mxu0
    %v7308 = vadd.f32 %v7267, %v7307
    %v7309 = vpop.f32.mrb[0].mxu0
    %v7310 = vpop.f32.mrb[0].mxu0
    %7311 = vdwg.mxu0
    %7312 = vmatprep.subr.bf16.mxu0 %v4651
    %7313 = vmatpush1.bf16.msra.mxu0 %v4650
    %7314 = vmatprep.subr.bf16.mxu0 %v4668
    %7315 = vmatpush1.bf16.msra.mxu0 %v4667
    %7316 = vmatprep.subr.bf16.mxu0 %v4685
    %7317 = vmatpush1.bf16.msra.mxu0 %v4684
    %7318 = vmatprep.subr.bf16.mxu0 %v4702
    %7319 = vmatpush1.bf16.msra.mxu0 %v4701
    %7320 = vmatprep.subr.bf16.mxu0 %v4719
    %7321 = vmatpush1.bf16.msra.mxu0 %v4718
    %7322 = vmatprep.subr.bf16.mxu0 %v4736
    %7323 = vmatpush1.bf16.msra.mxu0 %v4735
    %7324 = vmatprep.subr.bf16.mxu0 %v4753
    %7325 = vmatpush1.bf16.msra.mxu0 %v4752
    %7326 = vmatprep.subr.bf16.mxu0 %v4770
    %7327 = vmatpush1.bf16.msra.mxu0 %v4769
    %7328 = vmatprep.subr.bf16.mxu0 %v4787
    %7329 = vmatpush1.bf16.msra.mxu0 %v4786
    %7330 = vmatprep.subr.bf16.mxu0 %v4804
    %7331 = vmatpush1.bf16.msra.mxu0 %v4803
    %7332 = vmatprep.subr.bf16.mxu0 %v4821
    %7333 = vmatpush1.bf16.msra.mxu0 %v4820
    %7334 = vmatprep.subr.bf16.mxu0 %v4838
    %7335 = vmatpush1.bf16.msra.mxu0 %v4837
    %7336 = vmatprep.subr.bf16.mxu0 %v4855
    %7337 = vmatpush1.bf16.msra.mxu0 %v4854
    %7338 = vmatprep.subr.bf16.mxu0 %v4872
    %7339 = vmatpush1.bf16.msra.mxu0 %v4871
    %7340 = vmatprep.subr.bf16.mxu0 %v4889
    %7341 = vmatpush1.bf16.msra.mxu0 %v4888
    %7342 = vmatprep.subr.bf16.mxu0 %v4906
    %7343 = vmatpush1.bf16.msra.mxu0 %v4905
    %7344 = vmatprep.mubr.bf16.mxu0 %v66
    %7345 = vmatmul.mubr.bf16.gmra.mrb[0].mxu0 %v65
    %v7346 = vpop.f32.mrb[0].mxu0
    %v7347 = vadd.f32 %v1258, %v7346
    %v7348 = vpop.f32.mrb[0].mxu0
    %v7349 = vadd.f32 %v1262, %v7348
    %v7350 = vpop.f32.mrb[0].mxu0
    %v7351 = vpop.f32.mrb[0].mxu0
    %7352 = vdwg.mxu0
    %7353 = vmatprep.subr.bf16.mxu0 %v4923
    %7354 = vmatpush1.bf16.msra.mxu0 %v4922
    %7355 = vmatprep.subr.bf16.mxu0 %v4940
    %7356 = vmatpush1.bf16.msra.mxu0 %v4939
    %7357 = vmatprep.subr.bf16.mxu0 %v4957
    %7358 = vmatpush1.bf16.msra.mxu0 %v4956
    %7359 = vmatprep.subr.bf16.mxu0 %v4974
    %7360 = vmatpush1.bf16.msra.mxu0 %v4973
    %7361 = vmatprep.subr.bf16.mxu0 %v4991
    %7362 = vmatpush1.bf16.msra.mxu0 %v4990
    %7363 = vmatprep.subr.bf16.mxu0 %v5008
    %7364 = vmatpush1.bf16.msra.mxu0 %v5007
    %7365 = vmatprep.subr.bf16.mxu0 %v5025
    %7366 = vmatpush1.bf16.msra.mxu0 %v5024
    %7367 = vmatprep.subr.bf16.mxu0 %v5042
    %7368 = vmatpush1.bf16.msra.mxu0 %v5041
    %7369 = vmatprep.subr.bf16.mxu0 %v5059
    %7370 = vmatpush1.bf16.msra.mxu0 %v5058
    %7371 = vmatprep.subr.bf16.mxu0 %v5076
    %7372 = vmatpush1.bf16.msra.mxu0 %v5075
    %7373 = vmatprep.subr.bf16.mxu0 %v5093
    %7374 = vmatpush1.bf16.msra.mxu0 %v5092
    %7375 = vmatprep.subr.bf16.mxu0 %v5110
    %7376 = vmatpush1.bf16.msra.mxu0 %v5109
    %7377 = vmatprep.subr.bf16.mxu0 %v5127
    %7378 = vmatpush1.bf16.msra.mxu0 %v5126
    %7379 = vmatprep.subr.bf16.mxu0 %v5144
    %7380 = vmatpush1.bf16.msra.mxu0 %v5143
    %7381 = vmatprep.subr.bf16.mxu0 %v5161
    %7382 = vmatpush1.bf16.msra.mxu0 %v5160
    %7383 = vmatprep.subr.bf16.mxu0 %v5178
    %7384 = vmatpush1.bf16.msra.mxu0 %v5177
    %7385 = vmatprep.mubr.bf16.mxu0 %v68
    %7386 = vmatmul.mubr.bf16.gmra.mrb[0].mxu0 %v67
    %v7387 = vpop.f32.mrb[0].mxu0
    %v7388 = vadd.f32 %v7347, %v7387
    %v7389 = vpop.f32.mrb[0].mxu0
    %v7390 = vadd.f32 %v7349, %v7389
    %v7391 = vpop.f32.mrb[0].mxu0
    %v7392 = vpop.f32.mrb[0].mxu0
    %7393 = vdwg.mxu0
    %7394 = vmatprep.subr.bf16.mxu0 %v5195
    %7395 = vmatpush1.bf16.msra.mxu0 %v5194
    %7396 = vmatprep.subr.bf16.mxu0 %v5212
    %7397 = vmatpush1.bf16.msra.mxu0 %v5211
    %7398 = vmatprep.subr.bf16.mxu0 %v5229
    %7399 = vmatpush1.bf16.msra.mxu0 %v5228
    %7400 = vmatprep.subr.bf16.mxu0 %v5246
    %7401 = vmatpush1.bf16.msra.mxu0 %v5245
    %7402 = vmatprep.subr.bf16.mxu0 %v5263
    %7403 = vmatpush1.bf16.msra.mxu0 %v5262
    %7404 = vmatprep.subr.bf16.mxu0 %v5280
    %7405 = vmatpush1.bf16.msra.mxu0 %v5279
    %7406 = vmatprep.subr.bf16.mxu0 %v5297
    %7407 = vmatpush1.bf16.msra.mxu0 %v5296
    %7408 = vmatprep.subr.bf16.mxu0 %v5314
    %7409 = vmatpush1.bf16.msra.mxu0 %v5313
    %7410 = vmatprep.subr.bf16.mxu0 %v5331
    %7411 = vmatpush1.bf16.msra.mxu0 %v5330
    %7412 = vmatprep.subr.bf16.mxu0 %v5348
    %7413 = vmatpush1.bf16.msra.mxu0 %v5347
    %7414 = vmatprep.subr.bf16.mxu0 %v5365
    %7415 = vmatpush1.bf16.msra.mxu0 %v5364
    %7416 = vmatprep.subr.bf16.mxu0 %v5382
    %7417 = vmatpush1.bf16.msra.mxu0 %v5381
    %7418 = vmatprep.subr.bf16.mxu0 %v5399
    %7419 = vmatpush1.bf16.msra.mxu0 %v5398
    %7420 = vmatprep.subr.bf16.mxu0 %v5416
    %7421 = vmatpush1.bf16.msra.mxu0 %v5415
    %7422 = vmatprep.subr.bf16.mxu0 %v5433
    %7423 = vmatpush1.bf16.msra.mxu0 %v5432
    %7424 = vmatprep.subr.bf16.mxu0 %v5450
    %7425 = vmatpush1.bf16.msra.mxu0 %v5449
    %7426 = vmatprep.mubr.bf16.mxu0 %v70
    %7427 = vmatmul.mubr.bf16.gmra.mrb[0].mxu0 %v69
    %v7428 = vpop.f32.mrb[0].mxu0
    %v7429 = vadd.f32 %v7388, %v7428
    %v7430 = vpop.f32.mrb[0].mxu0
    %v7431 = vadd.f32 %v7390, %v7430
    %v7432 = vpop.f32.mrb[0].mxu0
    %v7433 = vpop.f32.mrb[0].mxu0
    %7434 = vdwg.mxu0
    %7435 = vmatprep.subr.bf16.mxu0 %v5467
    %7436 = vmatpush1.bf16.msra.mxu0 %v5466
    %7437 = vmatprep.subr.bf16.mxu0 %v5484
    %7438 = vmatpush1.bf16.msra.mxu0 %v5483
    %7439 = vmatprep.subr.bf16.mxu0 %v5501
    %7440 = vmatpush1.bf16.msra.mxu0 %v5500
    %7441 = vmatprep.subr.bf16.mxu0 %v5518
    %7442 = vmatpush1.bf16.msra.mxu0 %v5517
    %7443 = vmatprep.subr.bf16.mxu0 %v5535
    %7444 = vmatpush1.bf16.msra.mxu0 %v5534
    %7445 = vmatprep.subr.bf16.mxu0 %v5552
    %7446 = vmatpush1.bf16.msra.mxu0 %v5551
    %7447 = vmatprep.subr.bf16.mxu0 %v5569
    %7448 = vmatpush1.bf16.msra.mxu0 %v5568
    %7449 = vmatprep.subr.bf16.mxu0 %v5586
    %7450 = vmatpush1.bf16.msra.mxu0 %v5585
    %7451 = vmatprep.subr.bf16.mxu0 %v5603
    %7452 = vmatpush1.bf16.msra.mxu0 %v5602
    %7453 = vmatprep.subr.bf16.mxu0 %v5620
    %7454 = vmatpush1.bf16.msra.mxu0 %v5619
    %7455 = vmatprep.subr.bf16.mxu0 %v5637
    %7456 = vmatpush1.bf16.msra.mxu0 %v5636
    %7457 = vmatprep.subr.bf16.mxu0 %v5654
    %7458 = vmatpush1.bf16.msra.mxu0 %v5653
    %7459 = vmatprep.subr.bf16.mxu0 %v5671
    %7460 = vmatpush1.bf16.msra.mxu0 %v5670
    %7461 = vmatprep.subr.bf16.mxu0 %v5688
    %7462 = vmatpush1.bf16.msra.mxu0 %v5687
    %7463 = vmatprep.subr.bf16.mxu0 %v5705
    %7464 = vmatpush1.bf16.msra.mxu0 %v5704
    %7465 = vmatprep.subr.bf16.mxu0 %v5722
    %7466 = vmatpush1.bf16.msra.mxu0 %v5721
    %7467 = vmatprep.mubr.bf16.mxu0 %v72
    %7468 = vmatmul.mubr.bf16.gmra.mrb[0].mxu0 %v71
    %v7469 = vpop.f32.mrb[0].mxu0
    %v7470 = vadd.f32 %v7429, %v7469
    %v7471 = vpop.f32.mrb[0].mxu0
    %v7472 = vadd.f32 %v7431, %v7471
    %v7473 = vpop.f32.mrb[0].mxu0
    %v7474 = vpop.f32.mrb[0].mxu0
    %7475 = vdwg.mxu0
    %7476 = vmatprep.subr.bf16.mxu0 %v4653
    %7477 = vmatpush1.bf16.msra.mxu0 %v4652
    %7478 = vmatprep.subr.bf16.mxu0 %v4670
    %7479 = vmatpush1.bf16.msra.mxu0 %v4669
    %7480 = vmatprep.subr.bf16.mxu0 %v4687
    %7481 = vmatpush1.bf16.msra.mxu0 %v4686
    %7482 = vmatprep.subr.bf16.mxu0 %v4704
    %7483 = vmatpush1.bf16.msra.mxu0 %v4703
    %7484 = vmatprep.subr.bf16.mxu0 %v4721
    %7485 = vmatpush1.bf16.msra.mxu0 %v4720
    %7486 = vmatprep.subr.bf16.mxu0 %v4738
    %7487 = vmatpush1.bf16.msra.mxu0 %v4737
    %7488 = vmatprep.subr.bf16.mxu0 %v4755
    %7489 = vmatpush1.bf16.msra.mxu0 %v4754
    %7490 = vmatprep.subr.bf16.mxu0 %v4772
    %7491 = vmatpush1.bf16.msra.mxu0 %v4771
    %7492 = vmatprep.subr.bf16.mxu0 %v4789
    %7493 = vmatpush1.bf16.msra.mxu0 %v4788
    %7494 = vmatprep.subr.bf16.mxu0 %v4806
    %7495 = vmatpush1.bf16.msra.mxu0 %v4805
    %7496 = vmatprep.subr.bf16.mxu0 %v4823
    %7497 = vmatpush1.bf16.msra.mxu0 %v4822
    %7498 = vmatprep.subr.bf16.mxu0 %v4840
    %7499 = vmatpush1.bf16.msra.mxu0 %v4839
    %7500 = vmatprep.subr.bf16.mxu0 %v4857
    %7501 = vmatpush1.bf16.msra.mxu0 %v4856
    %7502 = vmatprep.subr.bf16.mxu0 %v4874
    %7503 = vmatpush1.bf16.msra.mxu0 %v4873
    %7504 = vmatprep.subr.bf16.mxu0 %v4891
    %7505 = vmatpush1.bf16.msra.mxu0 %v4890
    %7506 = vmatprep.subr.bf16.mxu0 %v4908
    %7507 = vmatpush1.bf16.msra.mxu0 %v4907
    %7508 = vmatprep.mubr.bf16.mxu0 %v66
    %7509 = vmatmul.mubr.bf16.gmra.mrb[0].mxu0 %v65
    %v7510 = vpop.f32.mrb[0].mxu0
    %v7511 = vadd.f32 %v1266, %v7510
    %v7512 = vpop.f32.mrb[0].mxu0
    %v7513 = vadd.f32 %v1270, %v7512
    %v7514 = vpop.f32.mrb[0].mxu0
    %v7515 = vpop.f32.mrb[0].mxu0
    %7516 = vdwg.mxu0
    %7517 = vmatprep.subr.bf16.mxu0 %v4925
    %7518 = vmatpush1.bf16.msra.mxu0 %v4924
    %7519 = vmatprep.subr.bf16.mxu0 %v4942
    %7520 = vmatpush1.bf16.msra.mxu0 %v4941
    %7521 = vmatprep.subr.bf16.mxu0 %v4959
    %7522 = vmatpush1.bf16.msra.mxu0 %v4958
    %7523 = vmatprep.subr.bf16.mxu0 %v4976
    %7524 = vmatpush1.bf16.msra.mxu0 %v4975
    %7525 = vmatprep.subr.bf16.mxu0 %v4993
    %7526 = vmatpush1.bf16.msra.mxu0 %v4992
    %7527 = vmatprep.subr.bf16.mxu0 %v5010
    %7528 = vmatpush1.bf16.msra.mxu0 %v5009
    %7529 = vmatprep.subr.bf16.mxu0 %v5027
    %7530 = vmatpush1.bf16.msra.mxu0 %v5026
    %7531 = vmatprep.subr.bf16.mxu0 %v5044
    %7532 = vmatpush1.bf16.msra.mxu0 %v5043
    %7533 = vmatprep.subr.bf16.mxu0 %v5061
    %7534 = vmatpush1.bf16.msra.mxu0 %v5060
    %7535 = vmatprep.subr.bf16.mxu0 %v5078
    %7536 = vmatpush1.bf16.msra.mxu0 %v5077
    %7537 = vmatprep.subr.bf16.mxu0 %v5095
    %7538 = vmatpush1.bf16.msra.mxu0 %v5094
    %7539 = vmatprep.subr.bf16.mxu0 %v5112
    %7540 = vmatpush1.bf16.msra.mxu0 %v5111
    %7541 = vmatprep.subr.bf16.mxu0 %v5129
    %7542 = vmatpush1.bf16.msra.mxu0 %v5128
    %7543 = vmatprep.subr.bf16.mxu0 %v5146
    %7544 = vmatpush1.bf16.msra.mxu0 %v5145
    %7545 = vmatprep.subr.bf16.mxu0 %v5163
    %7546 = vmatpush1.bf16.msra.mxu0 %v5162
    %7547 = vmatprep.subr.bf16.mxu0 %v5180
    %7548 = vmatpush1.bf16.msra.mxu0 %v5179
    %7549 = vmatprep.mubr.bf16.mxu0 %v68
    %7550 = vmatmul.mubr.bf16.gmra.mrb[0].mxu0 %v67
    %v7551 = vpop.f32.mrb[0].mxu0
    %v7552 = vadd.f32 %v7511, %v7551
    %v7553 = vpop.f32.mrb[0].mxu0
    %v7554 = vadd.f32 %v7513, %v7553
    %v7555 = vpop.f32.mrb[0].mxu0
    %v7556 = vpop.f32.mrb[0].mxu0
    %7557 = vdwg.mxu0
    %7558 = vmatprep.subr.bf16.mxu0 %v5197
    %7559 = vmatpush1.bf16.msra.mxu0 %v5196
    %7560 = vmatprep.subr.bf16.mxu0 %v5214
    %7561 = vmatpush1.bf16.msra.mxu0 %v5213
    %7562 = vmatprep.subr.bf16.mxu0 %v5231
    %7563 = vmatpush1.bf16.msra.mxu0 %v5230
    %7564 = vmatprep.subr.bf16.mxu0 %v5248
    %7565 = vmatpush1.bf16.msra.mxu0 %v5247
    %7566 = vmatprep.subr.bf16.mxu0 %v5265
    %7567 = vmatpush1.bf16.msra.mxu0 %v5264
    %7568 = vmatprep.subr.bf16.mxu0 %v5282
    %7569 = vmatpush1.bf16.msra.mxu0 %v5281
    %7570 = vmatprep.subr.bf16.mxu0 %v5299
    %7571 = vmatpush1.bf16.msra.mxu0 %v5298
    %7572 = vmatprep.subr.bf16.mxu0 %v5316
    %7573 = vmatpush1.bf16.msra.mxu0 %v5315
    %7574 = vmatprep.subr.bf16.mxu0 %v5333
    %7575 = vmatpush1.bf16.msra.mxu0 %v5332
    %7576 = vmatprep.subr.bf16.mxu0 %v5350
    %7577 = vmatpush1.bf16.msra.mxu0 %v5349
    %7578 = vmatprep.subr.bf16.mxu0 %v5367
    %7579 = vmatpush1.bf16.msra.mxu0 %v5366
    %7580 = vmatprep.subr.bf16.mxu0 %v5384
    %7581 = vmatpush1.bf16.msra.mxu0 %v5383
    %7582 = vmatprep.subr.bf16.mxu0 %v5401
    %7583 = vmatpush1.bf16.msra.mxu0 %v5400
    %7584 = vmatprep.subr.bf16.mxu0 %v5418
    %7585 = vmatpush1.bf16.msra.mxu0 %v5417
    %7586 = vmatprep.subr.bf16.mxu0 %v5435
    %7587 = vmatpush1.bf16.msra.mxu0 %v5434
    %7588 = vmatprep.subr.bf16.mxu0 %v5452
    %7589 = vmatpush1.bf16.msra.mxu0 %v5451
    %7590 = vmatprep.mubr.bf16.mxu0 %v70
    %7591 = vmatmul.mubr.bf16.gmra.mrb[0].mxu0 %v69
    %v7592 = vpop.f32.mrb[0].mxu0
    %v7593 = vadd.f32 %v7552, %v7592
    %v7594 = vpop.f32.mrb[0].mxu0
    %v7595 = vadd.f32 %v7554, %v7594
    %v7596 = vpop.f32.mrb[0].mxu0
    %v7597 = vpop.f32.mrb[0].mxu0
    %7598 = vdwg.mxu0
    %7599 = vmatprep.subr.bf16.mxu0 %v5469
    %7600 = vmatpush1.bf16.msra.mxu0 %v5468
    %7601 = vmatprep.subr.bf16.mxu0 %v5486
    %7602 = vmatpush1.bf16.msra.mxu0 %v5485
    %7603 = vmatprep.subr.bf16.mxu0 %v5503
    %7604 = vmatpush1.bf16.msra.mxu0 %v5502
    %7605 = vmatprep.subr.bf16.mxu0 %v5520
    %7606 = vmatpush1.bf16.msra.mxu0 %v5519
    %7607 = vmatprep.subr.bf16.mxu0 %v5537
    %7608 = vmatpush1.bf16.msra.mxu0 %v5536
    %7609 = vmatprep.subr.bf16.mxu0 %v5554
    %7610 = vmatpush1.bf16.msra.mxu0 %v5553
    %7611 = vmatprep.subr.bf16.mxu0 %v5571
    %7612 = vmatpush1.bf16.msra.mxu0 %v5570
    %7613 = vmatprep.subr.bf16.mxu0 %v5588
    %7614 = vmatpush1.bf16.msra.mxu0 %v5587
    %7615 = vmatprep.subr.bf16.mxu0 %v5605
    %7616 = vmatpush1.bf16.msra.mxu0 %v5604
    %7617 = vmatprep.subr.bf16.mxu0 %v5622
    %7618 = vmatpush1.bf16.msra.mxu0 %v5621
    %7619 = vmatprep.subr.bf16.mxu0 %v5639
    %7620 = vmatpush1.bf16.msra.mxu0 %v5638
    %7621 = vmatprep.subr.bf16.mxu0 %v5656
    %7622 = vmatpush1.bf16.msra.mxu0 %v5655
    %7623 = vmatprep.subr.bf16.mxu0 %v5673
    %7624 = vmatpush1.bf16.msra.mxu0 %v5672
    %7625 = vmatprep.subr.bf16.mxu0 %v5690
    %7626 = vmatpush1.bf16.msra.mxu0 %v5689
    %7627 = vmatprep.subr.bf16.mxu0 %v5707
    %7628 = vmatpush1.bf16.msra.mxu0 %v5706
    %7629 = vmatprep.subr.bf16.mxu0 %v5724
    %7630 = vmatpush1.bf16.msra.mxu0 %v5723
    %7631 = vmatprep.mubr.bf16.mxu0 %v72
    %7632 = vmatmul.mubr.bf16.gmra.mrb[0].mxu0 %v71
    %v7633 = vpop.f32.mrb[0].mxu0
    %v7634 = vadd.f32 %v7593, %v7633
    %v7635 = vpop.f32.mrb[0].mxu0
    %v7636 = vadd.f32 %v7595, %v7635
    %v7637 = vpop.f32.mrb[0].mxu0
    %v7638 = vpop.f32.mrb[0].mxu0
    %7639 = vdwg.mxu0
    %7640 = vmatprep.subr.bf16.mxu0 %v4655
    %7641 = vmatpush1.bf16.msra.mxu0 %v4654
    %7642 = vmatprep.subr.bf16.mxu0 %v4672
    %7643 = vmatpush1.bf16.msra.mxu0 %v4671
    %7644 = vmatprep.subr.bf16.mxu0 %v4689
    %7645 = vmatpush1.bf16.msra.mxu0 %v4688
    %7646 = vmatprep.subr.bf16.mxu0 %v4706
    %7647 = vmatpush1.bf16.msra.mxu0 %v4705
    %7648 = vmatprep.subr.bf16.mxu0 %v4723
    %7649 = vmatpush1.bf16.msra.mxu0 %v4722
    %7650 = vmatprep.subr.bf16.mxu0 %v4740
    %7651 = vmatpush1.bf16.msra.mxu0 %v4739
    %7652 = vmatprep.subr.bf16.mxu0 %v4757
    %7653 = vmatpush1.bf16.msra.mxu0 %v4756
    %7654 = vmatprep.subr.bf16.mxu0 %v4774
    %7655 = vmatpush1.bf16.msra.mxu0 %v4773
    %7656 = vmatprep.subr.bf16.mxu0 %v4791
    %7657 = vmatpush1.bf16.msra.mxu0 %v4790
    %7658 = vmatprep.subr.bf16.mxu0 %v4808
    %7659 = vmatpush1.bf16.msra.mxu0 %v4807
    %7660 = vmatprep.subr.bf16.mxu0 %v4825
    %7661 = vmatpush1.bf16.msra.mxu0 %v4824
    %7662 = vmatprep.subr.bf16.mxu0 %v4842
    %7663 = vmatpush1.bf16.msra.mxu0 %v4841
    %7664 = vmatprep.subr.bf16.mxu0 %v4859
    %7665 = vmatpush1.bf16.msra.mxu0 %v4858
    %7666 = vmatprep.subr.bf16.mxu0 %v4876
    %7667 = vmatpush1.bf16.msra.mxu0 %v4875
    %7668 = vmatprep.subr.bf16.mxu0 %v4893
    %7669 = vmatpush1.bf16.msra.mxu0 %v4892
    %7670 = vmatprep.subr.bf16.mxu0 %v4910
    %7671 = vmatpush1.bf16.msra.mxu0 %v4909
    %7672 = vmatprep.mubr.bf16.mxu0 %v66
    %7673 = vmatmul.mubr.bf16.gmra.mrb[0].mxu0 %v65
    %v7674 = vpop.f32.mrb[0].mxu0
    %v7675 = vadd.f32 %v1274, %v7674
    %v7676 = vpop.f32.mrb[0].mxu0
    %v7677 = vadd.f32 %v1278, %v7676
    %v7678 = vpop.f32.mrb[0].mxu0
    %v7679 = vpop.f32.mrb[0].mxu0
    %7680 = vdwg.mxu0
    %7681 = vmatprep.subr.bf16.mxu0 %v4927
    %7682 = vmatpush1.bf16.msra.mxu0 %v4926
    %7683 = vmatprep.subr.bf16.mxu0 %v4944
    %7684 = vmatpush1.bf16.msra.mxu0 %v4943
    %7685 = vmatprep.subr.bf16.mxu0 %v4961
    %7686 = vmatpush1.bf16.msra.mxu0 %v4960
    %7687 = vmatprep.subr.bf16.mxu0 %v4978
    %7688 = vmatpush1.bf16.msra.mxu0 %v4977
    %7689 = vmatprep.subr.bf16.mxu0 %v4995
    %7690 = vmatpush1.bf16.msra.mxu0 %v4994
    %7691 = vmatprep.subr.bf16.mxu0 %v5012
    %7692 = vmatpush1.bf16.msra.mxu0 %v5011
    %7693 = vmatprep.subr.bf16.mxu0 %v5029
    %7694 = vmatpush1.bf16.msra.mxu0 %v5028
    %7695 = vmatprep.subr.bf16.mxu0 %v5046
    %7696 = vmatpush1.bf16.msra.mxu0 %v5045
    %7697 = vmatprep.subr.bf16.mxu0 %v5063
    %7698 = vmatpush1.bf16.msra.mxu0 %v5062
    %7699 = vmatprep.subr.bf16.mxu0 %v5080
    %7700 = vmatpush1.bf16.msra.mxu0 %v5079
    %7701 = vmatprep.subr.bf16.mxu0 %v5097
    %7702 = vmatpush1.bf16.msra.mxu0 %v5096
    %7703 = vmatprep.subr.bf16.mxu0 %v5114
    %7704 = vmatpush1.bf16.msra.mxu0 %v5113
    %7705 = vmatprep.subr.bf16.mxu0 %v5131
    %7706 = vmatpush1.bf16.msra.mxu0 %v5130
    %7707 = vmatprep.subr.bf16.mxu0 %v5148
    %7708 = vmatpush1.bf16.msra.mxu0 %v5147
    %7709 = vmatprep.subr.bf16.mxu0 %v5165
    %7710 = vmatpush1.bf16.msra.mxu0 %v5164
    %7711 = vmatprep.subr.bf16.mxu0 %v5182
    %7712 = vmatpush1.bf16.msra.mxu0 %v5181
    %7713 = vmatprep.mubr.bf16.mxu0 %v68
    %7714 = vmatmul.mubr.bf16.gmra.mrb[0].mxu0 %v67
    %v7715 = vpop.f32.mrb[0].mxu0
    %v7716 = vadd.f32 %v7675, %v7715
    %v7717 = vpop.f32.mrb[0].mxu0
    %v7718 = vadd.f32 %v7677, %v7717
    %v7719 = vpop.f32.mrb[0].mxu0
    %v7720 = vpop.f32.mrb[0].mxu0
    %7721 = vdwg.mxu0
    %7722 = vmatprep.subr.bf16.mxu0 %v5199
    %7723 = vmatpush1.bf16.msra.mxu0 %v5198
    %7724 = vmatprep.subr.bf16.mxu0 %v5216
    %7725 = vmatpush1.bf16.msra.mxu0 %v5215
    %7726 = vmatprep.subr.bf16.mxu0 %v5233
    %7727 = vmatpush1.bf16.msra.mxu0 %v5232
    %7728 = vmatprep.subr.bf16.mxu0 %v5250
    %7729 = vmatpush1.bf16.msra.mxu0 %v5249
    %7730 = vmatprep.subr.bf16.mxu0 %v5267
    %7731 = vmatpush1.bf16.msra.mxu0 %v5266
    %7732 = vmatprep.subr.bf16.mxu0 %v5284
    %7733 = vmatpush1.bf16.msra.mxu0 %v5283
    %7734 = vmatprep.subr.bf16.mxu0 %v5301
    %7735 = vmatpush1.bf16.msra.mxu0 %v5300
    %7736 = vmatprep.subr.bf16.mxu0 %v5318
    %7737 = vmatpush1.bf16.msra.mxu0 %v5317
    %7738 = vmatprep.subr.bf16.mxu0 %v5335
    %7739 = vmatpush1.bf16.msra.mxu0 %v5334
    %7740 = vmatprep.subr.bf16.mxu0 %v5352
    %7741 = vmatpush1.bf16.msra.mxu0 %v5351
    %7742 = vmatprep.subr.bf16.mxu0 %v5369
    %7743 = vmatpush1.bf16.msra.mxu0 %v5368
    %7744 = vmatprep.subr.bf16.mxu0 %v5386
    %7745 = vmatpush1.bf16.msra.mxu0 %v5385
    %7746 = vmatprep.subr.bf16.mxu0 %v5403
    %7747 = vmatpush1.bf16.msra.mxu0 %v5402
    %7748 = vmatprep.subr.bf16.mxu0 %v5420
    %7749 = vmatpush1.bf16.msra.mxu0 %v5419
    %7750 = vmatprep.subr.bf16.mxu0 %v5437
    %7751 = vmatpush1.bf16.msra.mxu0 %v5436
    %7752 = vmatprep.subr.bf16.mxu0 %v5454
    %7753 = vmatpush1.bf16.msra.mxu0 %v5453
    %7754 = vmatprep.mubr.bf16.mxu0 %v70
    %7755 = vmatmul.mubr.bf16.gmra.mrb[0].mxu0 %v69
    %v7756 = vpop.f32.mrb[0].mxu0
    %v7757 = vadd.f32 %v7716, %v7756
    %v7758 = vpop.f32.mrb[0].mxu0
    %v7759 = vadd.f32 %v7718, %v7758
    %v7760 = vpop.f32.mrb[0].mxu0
    %v7761 = vpop.f32.mrb[0].mxu0
    %7762 = vdwg.mxu0
    %7763 = vmatprep.subr.bf16.mxu0 %v5471
    %7764 = vmatpush1.bf16.msra.mxu0 %v5470
    %7765 = vmatprep.subr.bf16.mxu0 %v5488
    %7766 = vmatpush1.bf16.msra.mxu0 %v5487
    %7767 = vmatprep.subr.bf16.mxu0 %v5505
    %7768 = vmatpush1.bf16.msra.mxu0 %v5504
    %7769 = vmatprep.subr.bf16.mxu0 %v5522
    %7770 = vmatpush1.bf16.msra.mxu0 %v5521
    %7771 = vmatprep.subr.bf16.mxu0 %v5539
    %7772 = vmatpush1.bf16.msra.mxu0 %v5538
    %7773 = vmatprep.subr.bf16.mxu0 %v5556
    %7774 = vmatpush1.bf16.msra.mxu0 %v5555
    %7775 = vmatprep.subr.bf16.mxu0 %v5573
    %7776 = vmatpush1.bf16.msra.mxu0 %v5572
    %7777 = vmatprep.subr.bf16.mxu0 %v5590
    %7778 = vmatpush1.bf16.msra.mxu0 %v5589
    %7779 = vmatprep.subr.bf16.mxu0 %v5607
    %7780 = vmatpush1.bf16.msra.mxu0 %v5606
    %7781 = vmatprep.subr.bf16.mxu0 %v5624
    %7782 = vmatpush1.bf16.msra.mxu0 %v5623
    %7783 = vmatprep.subr.bf16.mxu0 %v5641
    %7784 = vmatpush1.bf16.msra.mxu0 %v5640
    %7785 = vmatprep.subr.bf16.mxu0 %v5658
    %7786 = vmatpush1.bf16.msra.mxu0 %v5657
    %7787 = vmatprep.subr.bf16.mxu0 %v5675
    %7788 = vmatpush1.bf16.msra.mxu0 %v5674
    %7789 = vmatprep.subr.bf16.mxu0 %v5692
    %7790 = vmatpush1.bf16.msra.mxu0 %v5691
    %7791 = vmatprep.subr.bf16.mxu0 %v5709
    %7792 = vmatpush1.bf16.msra.mxu0 %v5708
    %7793 = vmatprep.subr.bf16.mxu0 %v5726
    %7794 = vmatpush1.bf16.msra.mxu0 %v5725
    %7795 = vmatprep.mubr.bf16.mxu0 %v72
    %7796 = vmatmul.mubr.bf16.gmra.mrb[0].mxu0 %v71
    %v7797 = vpop.f32.mrb[0].mxu0
    %v7798 = vadd.f32 %v7757, %v7797
    %v7799 = vpop.f32.mrb[0].mxu0
    %v7800 = vadd.f32 %v7759, %v7799
    %v7801 = vpop.f32.mrb[0].mxu0
    %v7802 = vpop.f32.mrb[0].mxu0
    %7803 = vdwg.mxu0
    %7804 = vmatprep.subr.bf16.mxu0 %v4657
    %7805 = vmatpush1.bf16.msra.mxu0 %v4656
    %7806 = vmatprep.subr.bf16.mxu0 %v4674
    %7807 = vmatpush1.bf16.msra.mxu0 %v4673
    %7808 = vmatprep.subr.bf16.mxu0 %v4691
    %7809 = vmatpush1.bf16.msra.mxu0 %v4690
    %7810 = vmatprep.subr.bf16.mxu0 %v4708
    %7811 = vmatpush1.bf16.msra.mxu0 %v4707
    %7812 = vmatprep.subr.bf16.mxu0 %v4725
    %7813 = vmatpush1.bf16.msra.mxu0 %v4724
    %7814 = vmatprep.subr.bf16.mxu0 %v4742
    %7815 = vmatpush1.bf16.msra.mxu0 %v4741
    %7816 = vmatprep.subr.bf16.mxu0 %v4759
    %7817 = vmatpush1.bf16.msra.mxu0 %v4758
    %7818 = vmatprep.subr.bf16.mxu0 %v4776
    %7819 = vmatpush1.bf16.msra.mxu0 %v4775
    %7820 = vmatprep.subr.bf16.mxu0 %v4793
    %7821 = vmatpush1.bf16.msra.mxu0 %v4792
    %7822 = vmatprep.subr.bf16.mxu0 %v4810
    %7823 = vmatpush1.bf16.msra.mxu0 %v4809
    %7824 = vmatprep.subr.bf16.mxu0 %v4827
    %7825 = vmatpush1.bf16.msra.mxu0 %v4826
    %7826 = vmatprep.subr.bf16.mxu0 %v4844
    %7827 = vmatpush1.bf16.msra.mxu0 %v4843
    %7828 = vmatprep.subr.bf16.mxu0 %v4861
    %7829 = vmatpush1.bf16.msra.mxu0 %v4860
    %7830 = vmatprep.subr.bf16.mxu0 %v4878
    %7831 = vmatpush1.bf16.msra.mxu0 %v4877
    %7832 = vmatprep.subr.bf16.mxu0 %v4895
    %7833 = vmatpush1.bf16.msra.mxu0 %v4894
    %7834 = vmatprep.subr.bf16.mxu0 %v4912
    %7835 = vmatpush1.bf16.msra.mxu0 %v4911
    %7836 = vmatprep.mubr.bf16.mxu0 %v66
    %7837 = vmatmul.mubr.bf16.gmra.mrb[0].mxu0 %v65
    %v7838 = vpop.f32.mrb[0].mxu0
    %v7839 = vadd.f32 %v1282, %v7838
    %v7840 = vpop.f32.mrb[0].mxu0
    %v7841 = vadd.f32 %v1286, %v7840
    %v7842 = vpop.f32.mrb[0].mxu0
    %v7843 = vpop.f32.mrb[0].mxu0
    %7844 = vdwg.mxu0
    %7845 = vmatprep.subr.bf16.mxu0 %v4929
    %7846 = vmatpush1.bf16.msra.mxu0 %v4928
    %7847 = vmatprep.subr.bf16.mxu0 %v4946
    %7848 = vmatpush1.bf16.msra.mxu0 %v4945
    %7849 = vmatprep.subr.bf16.mxu0 %v4963
    %7850 = vmatpush1.bf16.msra.mxu0 %v4962
    %7851 = vmatprep.subr.bf16.mxu0 %v4980
    %7852 = vmatpush1.bf16.msra.mxu0 %v4979
    %7853 = vmatprep.subr.bf16.mxu0 %v4997
    %7854 = vmatpush1.bf16.msra.mxu0 %v4996
    %7855 = vmatprep.subr.bf16.mxu0 %v5014
    %7856 = vmatpush1.bf16.msra.mxu0 %v5013
    %7857 = vmatprep.subr.bf16.mxu0 %v5031
    %7858 = vmatpush1.bf16.msra.mxu0 %v5030
    %7859 = vmatprep.subr.bf16.mxu0 %v5048
    %7860 = vmatpush1.bf16.msra.mxu0 %v5047
    %7861 = vmatprep.subr.bf16.mxu0 %v5065
    %7862 = vmatpush1.bf16.msra.mxu0 %v5064
    %7863 = vmatprep.subr.bf16.mxu0 %v5082
    %7864 = vmatpush1.bf16.msra.mxu0 %v5081
    %7865 = vmatprep.subr.bf16.mxu0 %v5099
    %7866 = vmatpush1.bf16.msra.mxu0 %v5098
    %7867 = vmatprep.subr.bf16.mxu0 %v5116
    %7868 = vmatpush1.bf16.msra.mxu0 %v5115
    %7869 = vmatprep.subr.bf16.mxu0 %v5133
    %7870 = vmatpush1.bf16.msra.mxu0 %v5132
    %7871 = vmatprep.subr.bf16.mxu0 %v5150
    %7872 = vmatpush1.bf16.msra.mxu0 %v5149
    %7873 = vmatprep.subr.bf16.mxu0 %v5167
    %7874 = vmatpush1.bf16.msra.mxu0 %v5166
    %7875 = vmatprep.subr.bf16.mxu0 %v5184
    %7876 = vmatpush1.bf16.msra.mxu0 %v5183
    %7877 = vmatprep.mubr.bf16.mxu0 %v68
    %7878 = vmatmul.mubr.bf16.gmra.mrb[0].mxu0 %v67
    %v7879 = vpop.f32.mrb[0].mxu0
    %v7880 = vadd.f32 %v7839, %v7879
    %v7881 = vpop.f32.mrb[0].mxu0
    %v7882 = vadd.f32 %v7841, %v7881
    %v7883 = vpop.f32.mrb[0].mxu0
    %v7884 = vpop.f32.mrb[0].mxu0
    %7885 = vdwg.mxu0
    %7886 = vmatprep.subr.bf16.mxu0 %v5201
    %7887 = vmatpush1.bf16.msra.mxu0 %v5200
    %7888 = vmatprep.subr.bf16.mxu0 %v5218
    %7889 = vmatpush1.bf16.msra.mxu0 %v5217
    %7890 = vmatprep.subr.bf16.mxu0 %v5235
    %7891 = vmatpush1.bf16.msra.mxu0 %v5234
    %7892 = vmatprep.subr.bf16.mxu0 %v5252
    %7893 = vmatpush1.bf16.msra.mxu0 %v5251
    %7894 = vmatprep.subr.bf16.mxu0 %v5269
    %7895 = vmatpush1.bf16.msra.mxu0 %v5268
    %7896 = vmatprep.subr.bf16.mxu0 %v5286
    %7897 = vmatpush1.bf16.msra.mxu0 %v5285
    %7898 = vmatprep.subr.bf16.mxu0 %v5303
    %7899 = vmatpush1.bf16.msra.mxu0 %v5302
    %7900 = vmatprep.subr.bf16.mxu0 %v5320
    %7901 = vmatpush1.bf16.msra.mxu0 %v5319
    %7902 = vmatprep.subr.bf16.mxu0 %v5337
    %7903 = vmatpush1.bf16.msra.mxu0 %v5336
    %7904 = vmatprep.subr.bf16.mxu0 %v5354
    %7905 = vmatpush1.bf16.msra.mxu0 %v5353
    %7906 = vmatprep.subr.bf16.mxu0 %v5371
    %7907 = vmatpush1.bf16.msra.mxu0 %v5370
    %7908 = vmatprep.subr.bf16.mxu0 %v5388
    %7909 = vmatpush1.bf16.msra.mxu0 %v5387
    %7910 = vmatprep.subr.bf16.mxu0 %v5405
    %7911 = vmatpush1.bf16.msra.mxu0 %v5404
    %7912 = vmatprep.subr.bf16.mxu0 %v5422
    %7913 = vmatpush1.bf16.msra.mxu0 %v5421
    %7914 = vmatprep.subr.bf16.mxu0 %v5439
    %7915 = vmatpush1.bf16.msra.mxu0 %v5438
    %7916 = vmatprep.subr.bf16.mxu0 %v5456
    %7917 = vmatpush1.bf16.msra.mxu0 %v5455
    %7918 = vmatprep.mubr.bf16.mxu0 %v70
    %7919 = vmatmul.mubr.bf16.gmra.mrb[0].mxu0 %v69
    %v7920 = vpop.f32.mrb[0].mxu0
    %v7921 = vadd.f32 %v7880, %v7920
    %v7922 = vpop.f32.mrb[0].mxu0
    %v7923 = vadd.f32 %v7882, %v7922
    %v7924 = vpop.f32.mrb[0].mxu0
    %v7925 = vpop.f32.mrb[0].mxu0
    %7926 = vdwg.mxu0
    %7927 = vmatprep.subr.bf16.mxu0 %v5473
    %7928 = vmatpush1.bf16.msra.mxu0 %v5472
    %7929 = vmatprep.subr.bf16.mxu0 %v5490
    %7930 = vmatpush1.bf16.msra.mxu0 %v5489
    %7931 = vmatprep.subr.bf16.mxu0 %v5507
    %7932 = vmatpush1.bf16.msra.mxu0 %v5506
    %7933 = vmatprep.subr.bf16.mxu0 %v5524
    %7934 = vmatpush1.bf16.msra.mxu0 %v5523
    %7935 = vmatprep.subr.bf16.mxu0 %v5541
    %7936 = vmatpush1.bf16.msra.mxu0 %v5540
    %7937 = vmatprep.subr.bf16.mxu0 %v5558
    %7938 = vmatpush1.bf16.msra.mxu0 %v5557
    %7939 = vmatprep.subr.bf16.mxu0 %v5575
    %7940 = vmatpush1.bf16.msra.mxu0 %v5574
    %7941 = vmatprep.subr.bf16.mxu0 %v5592
    %7942 = vmatpush1.bf16.msra.mxu0 %v5591
    %7943 = vmatprep.subr.bf16.mxu0 %v5609
    %7944 = vmatpush1.bf16.msra.mxu0 %v5608
    %7945 = vmatprep.subr.bf16.mxu0 %v5626
    %7946 = vmatpush1.bf16.msra.mxu0 %v5625
    %7947 = vmatprep.subr.bf16.mxu0 %v5643
    %7948 = vmatpush1.bf16.msra.mxu0 %v5642
    %7949 = vmatprep.subr.bf16.mxu0 %v5660
    %7950 = vmatpush1.bf16.msra.mxu0 %v5659
    %7951 = vmatprep.subr.bf16.mxu0 %v5677
    %7952 = vmatpush1.bf16.msra.mxu0 %v5676
    %7953 = vmatprep.subr.bf16.mxu0 %v5694
    %7954 = vmatpush1.bf16.msra.mxu0 %v5693
    %7955 = vmatprep.subr.bf16.mxu0 %v5711
    %7956 = vmatpush1.bf16.msra.mxu0 %v5710
    %7957 = vmatprep.subr.bf16.mxu0 %v5728
    %7958 = vmatpush1.bf16.msra.mxu0 %v5727
    %7959 = vmatprep.mubr.bf16.mxu0 %v72
    %7960 = vmatmul.mubr.bf16.gmra.mrb[0].mxu0 %v71
    %v7961 = vpop.f32.mrb[0].mxu0
    %v7962 = vadd.f32 %v7921, %v7961
    %v7963 = vpop.f32.mrb[0].mxu0
    %v7964 = vadd.f32 %v7923, %v7963
    %v7965 = vpop.f32.mrb[0].mxu0
    %v7966 = vpop.f32.mrb[0].mxu0
    %7967 = vdwg.mxu0
    %7968 = vmatprep.subr.bf16.mxu0 %v4659
    %7969 = vmatpush1.bf16.msra.mxu0 %v4658
    %7970 = vmatprep.subr.bf16.mxu0 %v4676
    %7971 = vmatpush1.bf16.msra.mxu0 %v4675
    %7972 = vmatprep.subr.bf16.mxu0 %v4693
    %7973 = vmatpush1.bf16.msra.mxu0 %v4692
    %7974 = vmatprep.subr.bf16.mxu0 %v4710
    %7975 = vmatpush1.bf16.msra.mxu0 %v4709
    %7976 = vmatprep.subr.bf16.mxu0 %v4727
    %7977 = vmatpush1.bf16.msra.mxu0 %v4726
    %7978 = vmatprep.subr.bf16.mxu0 %v4744
    %7979 = vmatpush1.bf16.msra.mxu0 %v4743
    %7980 = vmatprep.subr.bf16.mxu0 %v4761
    %7981 = vmatpush1.bf16.msra.mxu0 %v4760
    %7982 = vmatprep.subr.bf16.mxu0 %v4778
    %7983 = vmatpush1.bf16.msra.mxu0 %v4777
    %7984 = vmatprep.subr.bf16.mxu0 %v4795
    %7985 = vmatpush1.bf16.msra.mxu0 %v4794
    %7986 = vmatprep.subr.bf16.mxu0 %v4812
    %7987 = vmatpush1.bf16.msra.mxu0 %v4811
    %7988 = vmatprep.subr.bf16.mxu0 %v4829
    %7989 = vmatpush1.bf16.msra.mxu0 %v4828
    %7990 = vmatprep.subr.bf16.mxu0 %v4846
    %7991 = vmatpush1.bf16.msra.mxu0 %v4845
    %7992 = vmatprep.subr.bf16.mxu0 %v4863
    %7993 = vmatpush1.bf16.msra.mxu0 %v4862
    %7994 = vmatprep.subr.bf16.mxu0 %v4880
    %7995 = vmatpush1.bf16.msra.mxu0 %v4879
    %7996 = vmatprep.subr.bf16.mxu0 %v4897
    %7997 = vmatpush1.bf16.msra.mxu0 %v4896
    %7998 = vmatprep.subr.bf16.mxu0 %v4914
    %7999 = vmatpush1.bf16.msra.mxu0 %v4913
    %8000 = vmatprep.mubr.bf16.mxu0 %v66
    %8001 = vmatmul.mubr.bf16.gmra.mrb[0].mxu0 %v65
    %v8002 = vpop.f32.mrb[0].mxu0
    %v8003 = vadd.f32 %v1290, %v8002
    %v8004 = vpop.f32.mrb[0].mxu0
    %v8005 = vadd.f32 %v1294, %v8004
    %v8006 = vpop.f32.mrb[0].mxu0
    %v8007 = vpop.f32.mrb[0].mxu0
    %8008 = vdwg.mxu0
    %8009 = vmatprep.subr.bf16.mxu0 %v4931
    %8010 = vmatpush1.bf16.msra.mxu0 %v4930
    %8011 = vmatprep.subr.bf16.mxu0 %v4948
    %8012 = vmatpush1.bf16.msra.mxu0 %v4947
    %8013 = vmatprep.subr.bf16.mxu0 %v4965
    %8014 = vmatpush1.bf16.msra.mxu0 %v4964
    %8015 = vmatprep.subr.bf16.mxu0 %v4982
    %8016 = vmatpush1.bf16.msra.mxu0 %v4981
    %8017 = vmatprep.subr.bf16.mxu0 %v4999
    %8018 = vmatpush1.bf16.msra.mxu0 %v4998
    %8019 = vmatprep.subr.bf16.mxu0 %v5016
    %8020 = vmatpush1.bf16.msra.mxu0 %v5015
    %8021 = vmatprep.subr.bf16.mxu0 %v5033
    %8022 = vmatpush1.bf16.msra.mxu0 %v5032
    %8023 = vmatprep.subr.bf16.mxu0 %v5050
    %8024 = vmatpush1.bf16.msra.mxu0 %v5049
    %8025 = vmatprep.subr.bf16.mxu0 %v5067
    %8026 = vmatpush1.bf16.msra.mxu0 %v5066
    %8027 = vmatprep.subr.bf16.mxu0 %v5084
    %8028 = vmatpush1.bf16.msra.mxu0 %v5083
    %8029 = vmatprep.subr.bf16.mxu0 %v5101
    %8030 = vmatpush1.bf16.msra.mxu0 %v5100
    %8031 = vmatprep.subr.bf16.mxu0 %v5118
    %8032 = vmatpush1.bf16.msra.mxu0 %v5117
    %8033 = vmatprep.subr.bf16.mxu0 %v5135
    %8034 = vmatpush1.bf16.msra.mxu0 %v5134
    %8035 = vmatprep.subr.bf16.mxu0 %v5152
    %8036 = vmatpush1.bf16.msra.mxu0 %v5151
    %8037 = vmatprep.subr.bf16.mxu0 %v5169
    %8038 = vmatpush1.bf16.msra.mxu0 %v5168
    %8039 = vmatprep.subr.bf16.mxu0 %v5186
    %8040 = vmatpush1.bf16.msra.mxu0 %v5185
    %8041 = vmatprep.mubr.bf16.mxu0 %v68
    %8042 = vmatmul.mubr.bf16.gmra.mrb[0].mxu0 %v67
    %v8043 = vpop.f32.mrb[0].mxu0
    %v8044 = vadd.f32 %v8003, %v8043
    %v8045 = vpop.f32.mrb[0].mxu0
    %v8046 = vadd.f32 %v8005, %v8045
    %v8047 = vpop.f32.mrb[0].mxu0
    %v8048 = vpop.f32.mrb[0].mxu0
    %8049 = vdwg.mxu0
    %8050 = vmatprep.subr.bf16.mxu0 %v5203
    %8051 = vmatpush1.bf16.msra.mxu0 %v5202
    %8052 = vmatprep.subr.bf16.mxu0 %v5220
    %8053 = vmatpush1.bf16.msra.mxu0 %v5219
    %8054 = vmatprep.subr.bf16.mxu0 %v5237
    %8055 = vmatpush1.bf16.msra.mxu0 %v5236
    %8056 = vmatprep.subr.bf16.mxu0 %v5254
    %8057 = vmatpush1.bf16.msra.mxu0 %v5253
    %8058 = vmatprep.subr.bf16.mxu0 %v5271
    %8059 = vmatpush1.bf16.msra.mxu0 %v5270
    %8060 = vmatprep.subr.bf16.mxu0 %v5288
    %8061 = vmatpush1.bf16.msra.mxu0 %v5287
    %8062 = vmatprep.subr.bf16.mxu0 %v5305
    %8063 = vmatpush1.bf16.msra.mxu0 %v5304
    %8064 = vmatprep.subr.bf16.mxu0 %v5322
    %8065 = vmatpush1.bf16.msra.mxu0 %v5321
    %8066 = vmatprep.subr.bf16.mxu0 %v5339
    %8067 = vmatpush1.bf16.msra.mxu0 %v5338
    %8068 = vmatprep.subr.bf16.mxu0 %v5356
    %8069 = vmatpush1.bf16.msra.mxu0 %v5355
    %8070 = vmatprep.subr.bf16.mxu0 %v5373
    %8071 = vmatpush1.bf16.msra.mxu0 %v5372
    %8072 = vmatprep.subr.bf16.mxu0 %v5390
    %8073 = vmatpush1.bf16.msra.mxu0 %v5389
    %8074 = vmatprep.subr.bf16.mxu0 %v5407
    %8075 = vmatpush1.bf16.msra.mxu0 %v5406
    %8076 = vmatprep.subr.bf16.mxu0 %v5424
    %8077 = vmatpush1.bf16.msra.mxu0 %v5423
    %8078 = vmatprep.subr.bf16.mxu0 %v5441
    %8079 = vmatpush1.bf16.msra.mxu0 %v5440
    %8080 = vmatprep.subr.bf16.mxu0 %v5458
    %8081 = vmatpush1.bf16.msra.mxu0 %v5457
    %8082 = vmatprep.mubr.bf16.mxu0 %v70
    %8083 = vmatmul.mubr.bf16.gmra.mrb[0].mxu0 %v69
    %v8084 = vpop.f32.mrb[0].mxu0
    %v8085 = vadd.f32 %v8044, %v8084
    %v8086 = vpop.f32.mrb[0].mxu0
    %v8087 = vadd.f32 %v8046, %v8086
    %v8088 = vpop.f32.mrb[0].mxu0
    %v8089 = vpop.f32.mrb[0].mxu0
    %8090 = vdwg.mxu0
    %8091 = vmatprep.subr.bf16.mxu0 %v5475
    %8092 = vmatpush1.bf16.msra.mxu0 %v5474
    %8093 = vmatprep.subr.bf16.mxu0 %v5492
    %8094 = vmatpush1.bf16.msra.mxu0 %v5491
    %8095 = vmatprep.subr.bf16.mxu0 %v5509
    %8096 = vmatpush1.bf16.msra.mxu0 %v5508
    %8097 = vmatprep.subr.bf16.mxu0 %v5526
    %8098 = vmatpush1.bf16.msra.mxu0 %v5525
    %8099 = vmatprep.subr.bf16.mxu0 %v5543
    %8100 = vmatpush1.bf16.msra.mxu0 %v5542
    %8101 = vmatprep.subr.bf16.mxu0 %v5560
    %8102 = vmatpush1.bf16.msra.mxu0 %v5559
    %8103 = vmatprep.subr.bf16.mxu0 %v5577
    %8104 = vmatpush1.bf16.msra.mxu0 %v5576
    %8105 = vmatprep.subr.bf16.mxu0 %v5594
    %8106 = vmatpush1.bf16.msra.mxu0 %v5593
    %8107 = vmatprep.subr.bf16.mxu0 %v5611
    %8108 = vmatpush1.bf16.msra.mxu0 %v5610
    %8109 = vmatprep.subr.bf16.mxu0 %v5628
    %8110 = vmatpush1.bf16.msra.mxu0 %v5627
    %8111 = vmatprep.subr.bf16.mxu0 %v5645
    %8112 = vmatpush1.bf16.msra.mxu0 %v5644
    %8113 = vmatprep.subr.bf16.mxu0 %v5662
    %8114 = vmatpush1.bf16.msra.mxu0 %v5661
    %8115 = vmatprep.subr.bf16.mxu0 %v5679
    %8116 = vmatpush1.bf16.msra.mxu0 %v5678
    %8117 = vmatprep.subr.bf16.mxu0 %v5696
    %8118 = vmatpush1.bf16.msra.mxu0 %v5695
    %8119 = vmatprep.subr.bf16.mxu0 %v5713
    %8120 = vmatpush1.bf16.msra.mxu0 %v5712
    %8121 = vmatprep.subr.bf16.mxu0 %v5730
    %8122 = vmatpush1.bf16.msra.mxu0 %v5729
    %8123 = vmatprep.mubr.bf16.mxu0 %v72
    %8124 = vmatmul.mubr.bf16.gmra.mrb[0].mxu0 %v71
    %v8125 = vpop.f32.mrb[0].mxu0
    %v8126 = vadd.f32 %v8085, %v8125
    %v8127 = vpop.f32.mrb[0].mxu0
    %v8128 = vadd.f32 %v8087, %v8127
    %v8129 = vpop.f32.mrb[0].mxu0
    %v8130 = vpop.f32.mrb[0].mxu0
    %8131 = vdwg.mxu0
    %8132 = vmatprep.subr.bf16.mxu0 0
    %8133 = vmatpush1.bf16.msra.mxu0 %v4660
    %8134 = vmatprep.subr.bf16.mxu0 0
    %8135 = vmatpush1.bf16.msra.mxu0 %v4677
    %8136 = vmatprep.subr.bf16.mxu0 0
    %8137 = vmatpush1.bf16.msra.mxu0 %v4694
    %8138 = vmatprep.subr.bf16.mxu0 0
    %8139 = vmatpush1.bf16.msra.mxu0 %v4711
    %8140 = vmatprep.subr.bf16.mxu0 0
    %8141 = vmatpush1.bf16.msra.mxu0 %v4728
    %8142 = vmatprep.subr.bf16.mxu0 0
    %8143 = vmatpush1.bf16.msra.mxu0 %v4745
    %8144 = vmatprep.subr.bf16.mxu0 0
    %8145 = vmatpush1.bf16.msra.mxu0 %v4762
    %8146 = vmatprep.subr.bf16.mxu0 0
    %8147 = vmatpush1.bf16.msra.mxu0 %v4779
    %8148 = vmatprep.subr.bf16.mxu0 0
    %8149 = vmatpush1.bf16.msra.mxu0 %v4796
    %8150 = vmatprep.subr.bf16.mxu0 0
    %8151 = vmatpush1.bf16.msra.mxu0 %v4813
    %8152 = vmatprep.subr.bf16.mxu0 0
    %8153 = vmatpush1.bf16.msra.mxu0 %v4830
    %8154 = vmatprep.subr.bf16.mxu0 0
    %8155 = vmatpush1.bf16.msra.mxu0 %v4847
    %8156 = vmatprep.subr.bf16.mxu0 0
    %8157 = vmatpush1.bf16.msra.mxu0 %v4864
    %8158 = vmatprep.subr.bf16.mxu0 0
    %8159 = vmatpush1.bf16.msra.mxu0 %v4881
    %8160 = vmatprep.subr.bf16.mxu0 0
    %8161 = vmatpush1.bf16.msra.mxu0 %v4898
    %8162 = vmatprep.subr.bf16.mxu0 0
    %8163 = vmatpush1.bf16.msra.mxu0 %v4915
    %8164 = vmatprep.mubr.bf16.mxu0 %v66
    %8165 = vmatmul.mubr.bf16.gmra.mrb[0].mxu0 %v65
    %v8166 = vpop.f32.mrb[0].mxu0
    %v8167 = vadd.f32 %v1298, %v8166
    %v8168 = vpop.f32.mrb[0].mxu0
    %v8169 = vpop.f32.mrb[0].mxu0
    %v8170 = vpop.f32.mrb[0].mxu0
    %8171 = vdwg.mxu0
    %8172 = vmatprep.subr.bf16.mxu0 0
    %8173 = vmatpush1.bf16.msra.mxu0 %v4932
    %8174 = vmatprep.subr.bf16.mxu0 0
    %8175 = vmatpush1.bf16.msra.mxu0 %v4949
    %8176 = vmatprep.subr.bf16.mxu0 0
    %8177 = vmatpush1.bf16.msra.mxu0 %v4966
    %8178 = vmatprep.subr.bf16.mxu0 0
    %8179 = vmatpush1.bf16.msra.mxu0 %v4983
    %8180 = vmatprep.subr.bf16.mxu0 0
    %8181 = vmatpush1.bf16.msra.mxu0 %v5000
    %8182 = vmatprep.subr.bf16.mxu0 0
    %8183 = vmatpush1.bf16.msra.mxu0 %v5017
    %8184 = vmatprep.subr.bf16.mxu0 0
    %8185 = vmatpush1.bf16.msra.mxu0 %v5034
    %8186 = vmatprep.subr.bf16.mxu0 0
    %8187 = vmatpush1.bf16.msra.mxu0 %v5051
    %8188 = vmatprep.subr.bf16.mxu0 0
    %8189 = vmatpush1.bf16.msra.mxu0 %v5068
    %8190 = vmatprep.subr.bf16.mxu0 0
    %8191 = vmatpush1.bf16.msra.mxu0 %v5085
    %8192 = vmatprep.subr.bf16.mxu0 0
    %8193 = vmatpush1.bf16.msra.mxu0 %v5102
    %8194 = vmatprep.subr.bf16.mxu0 0
    %8195 = vmatpush1.bf16.msra.mxu0 %v5119
    %8196 = vmatprep.subr.bf16.mxu0 0
    %8197 = vmatpush1.bf16.msra.mxu0 %v5136
    %8198 = vmatprep.subr.bf16.mxu0 0
    %8199 = vmatpush1.bf16.msra.mxu0 %v5153
    %8200 = vmatprep.subr.bf16.mxu0 0
    %8201 = vmatpush1.bf16.msra.mxu0 %v5170
    %8202 = vmatprep.subr.bf16.mxu0 0
    %8203 = vmatpush1.bf16.msra.mxu0 %v5187
    %8204 = vmatprep.mubr.bf16.mxu0 %v68
    %8205 = vmatmul.mubr.bf16.gmra.mrb[0].mxu0 %v67
    %v8206 = vpop.f32.mrb[0].mxu0
    %v8207 = vadd.f32 %v8167, %v8206
    %v8208 = vpop.f32.mrb[0].mxu0
    %v8209 = vpop.f32.mrb[0].mxu0
    %v8210 = vpop.f32.mrb[0].mxu0
    %8211 = vdwg.mxu0
    %8212 = vmatprep.subr.bf16.mxu0 0
    %8213 = vmatpush1.bf16.msra.mxu0 %v5204
    %8214 = vmatprep.subr.bf16.mxu0 0
    %8215 = vmatpush1.bf16.msra.mxu0 %v5221
    %8216 = vmatprep.subr.bf16.mxu0 0
    %8217 = vmatpush1.bf16.msra.mxu0 %v5238
    %8218 = vmatprep.subr.bf16.mxu0 0
    %8219 = vmatpush1.bf16.msra.mxu0 %v5255
    %8220 = vmatprep.subr.bf16.mxu0 0
    %8221 = vmatpush1.bf16.msra.mxu0 %v5272
    %8222 = vmatprep.subr.bf16.mxu0 0
    %8223 = vmatpush1.bf16.msra.mxu0 %v5289
    %8224 = vmatprep.subr.bf16.mxu0 0
    %8225 = vmatpush1.bf16.msra.mxu0 %v5306
    %8226 = vmatprep.subr.bf16.mxu0 0
    %8227 = vmatpush1.bf16.msra.mxu0 %v5323
    %8228 = vmatprep.subr.bf16.mxu0 0
    %8229 = vmatpush1.bf16.msra.mxu0 %v5340
    %8230 = vmatprep.subr.bf16.mxu0 0
    %8231 = vmatpush1.bf16.msra.mxu0 %v5357
    %8232 = vmatprep.subr.bf16.mxu0 0
    %8233 = vmatpush1.bf16.msra.mxu0 %v5374
    %8234 = vmatprep.subr.bf16.mxu0 0
    %8235 = vmatpush1.bf16.msra.mxu0 %v5391
    %8236 = vmatprep.subr.bf16.mxu0 0
    %8237 = vmatpush1.bf16.msra.mxu0 %v5408
    %8238 = vmatprep.subr.bf16.mxu0 0
    %8239 = vmatpush1.bf16.msra.mxu0 %v5425
    %8240 = vmatprep.subr.bf16.mxu0 0
    %8241 = vmatpush1.bf16.msra.mxu0 %v5442
    %8242 = vmatprep.subr.bf16.mxu0 0
    %8243 = vmatpush1.bf16.msra.mxu0 %v5459
    %8244 = vmatprep.mubr.bf16.mxu0 %v70
    %8245 = vmatmul.mubr.bf16.gmra.mrb[0].mxu0 %v69
    %v8246 = vpop.f32.mrb[0].mxu0
    %v8247 = vadd.f32 %v8207, %v8246
    %v8248 = vpop.f32.mrb[0].mxu0
    %v8249 = vpop.f32.mrb[0].mxu0
    %v8250 = vpop.f32.mrb[0].mxu0
    %8251 = vdwg.mxu0
    %8252 = vmatprep.subr.bf16.mxu0 0
    %8253 = vmatpush1.bf16.msra.mxu0 %v5476
    %8254 = vmatprep.subr.bf16.mxu0 0
    %8255 = vmatpush1.bf16.msra.mxu0 %v5493
    %8256 = vmatprep.subr.bf16.mxu0 0
    %8257 = vmatpush1.bf16.msra.mxu0 %v5510
    %8258 = vmatprep.subr.bf16.mxu0 0
    %8259 = vmatpush1.bf16.msra.mxu0 %v5527
    %8260 = vmatprep.subr.bf16.mxu0 0
    %8261 = vmatpush1.bf16.msra.mxu0 %v5544
    %8262 = vmatprep.subr.bf16.mxu0 0
    %8263 = vmatpush1.bf16.msra.mxu0 %v5561
    %8264 = vmatprep.subr.bf16.mxu0 0
    %8265 = vmatpush1.bf16.msra.mxu0 %v5578
    %8266 = vmatprep.subr.bf16.mxu0 0
    %8267 = vmatpush1.bf16.msra.mxu0 %v5595
    %8268 = vmatprep.subr.bf16.mxu0 0
    %8269 = vmatpush1.bf16.msra.mxu0 %v5612
    %8270 = vmatprep.subr.bf16.mxu0 0
    %8271 = vmatpush1.bf16.msra.mxu0 %v5629
    %8272 = vmatprep.subr.bf16.mxu0 0
    %8273 = vmatpush1.bf16.msra.mxu0 %v5646
    %8274 = vmatprep.subr.bf16.mxu0 0
    %8275 = vmatpush1.bf16.msra.mxu0 %v5663
    %8276 = vmatprep.subr.bf16.mxu0 0
    %8277 = vmatpush1.bf16.msra.mxu0 %v5680
    %8278 = vmatprep.subr.bf16.mxu0 0
    %8279 = vmatpush1.bf16.msra.mxu0 %v5697
    %8280 = vmatprep.subr.bf16.mxu0 0
    %8281 = vmatpush1.bf16.msra.mxu0 %v5714
    %8282 = vmatprep.subr.bf16.mxu0 0
    %8283 = vmatpush1.bf16.msra.mxu0 %v5731
    %8284 = vmatprep.mubr.bf16.mxu0 %v72
    %8285 = vmatmul.mubr.bf16.gmra.mrb[0].mxu0 %v71
    %v8286 = vpop.f32.mrb[0].mxu0
    %v8287 = vadd.f32 %v8247, %v8286
    %v8288 = vpop.f32.mrb[0].mxu0
    %v8289 = vpop.f32.mrb[0].mxu0
    %v8290 = vpop.f32.mrb[0].mxu0
    %8291 = vdwg.mxu0
    %8292 = vst [vmem:[#allocation8] sm:$0xff] %v6978
    %8293 = vst [vmem:[#allocation8 + $0x8] sm:$0xff] %v6980
    %8294 = vst [vmem:[#allocation8 + $0x10] sm:$0xff] %v7142
    %8295 = vst [vmem:[#allocation8 + $0x18] sm:$0xff] %v7144
    %8296 = vst [vmem:[#allocation8 + $0x20] sm:$0xff] %v7306
    %8297 = vst [vmem:[#allocation8 + $0x28] sm:$0xff] %v7308
    %8298 = vst [vmem:[#allocation8 + $0x30] sm:$0xff] %v7470
    %8299 = vst [vmem:[#allocation8 + $0x38] sm:$0xff] %v7472
    %8300 = vst [vmem:[#allocation9] sm:$0xff] %v7634
    %8301 = vst [vmem:[#allocation9 + $0x8] sm:$0xff] %v7636
    %8302 = vst [vmem:[#allocation9 + $0x10] sm:$0xff] %v7798
    %8303 = vst [vmem:[#allocation9 + $0x18] sm:$0xff] %v7800
    %8304 = vst [vmem:[#allocation9 + $0x20] sm:$0xff] %v7962
    %8305 = vst [vmem:[#allocation9 + $0x28] sm:$0xff] %v7964
    %8306 = vst [vmem:[#allocation9 + $0x30] sm:$0xff] %v8126
    %8307 = vst [vmem:[#allocation9 + $0x38] sm:$0xff] %v8128
    %8308 = vst [vmem:[#allocation11] sm:$0xff] %v8287
    // Predicated region
    $region26: #{mlp_forward.1} parent=1 // pred_check
      _
    $region27: #{mlp_forward.1} parent=1 // pred_check_branch
      %8310 = sbr.rel (0) target = $region29
    $region28: #{mlp_forward.1} parent=1 // pred_region
      %s8312 = ssub.s32 1024, 1024
      %8313 = vsyncadd [#allocation4], %s8312
      %s8315 = sshll.u32 [#allocation8], 4
      %s8316 = int_to_ptr.vmem [resolvable:$true] %s8315
      %8318 = dma.vmem_to_hbm [thread:$0]  %s8316, 1024, %s3, [#allocation4]
    $region29: #{mlp_forward.1} parent=1 // pred_fallthru
      _
    // Predicated region
    $region30: #{mlp_forward.1} parent=1 // pred_check
      _
    $region31: #{mlp_forward.1} parent=1 // pred_check_branch
      %8320 = sbr.rel (0) target = $region33
    $region32: #{mlp_forward.1} parent=1 // pred_region
      %s8322 = ssub.s32 1024, 1024
      %8323 = vsyncadd [#allocation10], %s8322
      %s8325 = sshll.u32 [#allocation9], 4
      %s8326 = int_to_ptr.vmem [resolvable:$true] %s8325
      %8328 = dma.vmem_to_hbm [thread:$0]  %s8326, 1024, %s4, [#allocation10]
    $region33: #{mlp_forward.1} parent=1 // pred_fallthru
      _
    // Predicated region
    $region34: #{mlp_forward.1} parent=1 // pred_check
      _
    $region35: #{mlp_forward.1} parent=1 // pred_check_branch
      %8330 = sbr.rel (0) target = $region37
    $region36: #{mlp_forward.1} parent=1 // pred_region
      %s8332 = ssub.s32 128, 128
      %8333 = vsyncadd [#allocation10], %s8332
      %s8335 = sshll.u32 [#allocation11], 4
      %s8336 = int_to_ptr.vmem [resolvable:$true] %s8335
      %8338 = dma.vmem_to_hbm [thread:$0]  %s8336, 128, %s5, [#allocation10]
    $region37: #{mlp_forward.1} parent=1 // pred_fallthru
      _
    // Predicated region
    $region38: #{mlp_forward.1} parent=1 // pred_check
      _
    $region39: #{mlp_forward.1} parent=1 // pred_check_branch
      %8340 = sbr.rel (0) target = $region41
    $region40: #{mlp_forward.1} parent=1 // pred_region
      %8341 = dma.done [#allocation4], 1024
    $region41: #{mlp_forward.1} parent=1 // pred_fallthru
      _
    // Predicated region
    $region42: #{mlp_forward.1} parent=1 // pred_check
      _
    $region43: #{mlp_forward.1} parent=1 // pred_check_branch
      %8343 = sbr.rel (0) target = $region45
    $region44: #{mlp_forward.1} parent=1 // pred_region
      %8344 = dma.done [#allocation10], 1024
    $region45: #{mlp_forward.1} parent=1 // pred_fallthru
      _
    // Predicated region
    $region46: #{mlp_forward.1} parent=1 // pred_check
      _
    $region47: #{mlp_forward.1} parent=1 // pred_check_branch
      %8346 = sbr.rel (0) target = $region49
    $region48: #{mlp_forward.1} parent=1 // pred_region
      %8347 = dma.done [#allocation10], 128
    $region49: #{mlp_forward.1} parent=1 // pred_fallthru
      _
    %8348 = vsyncpa [#allocation3], 1
    %8349 = vsyncpa [#allocation6], 1
    %8350 = vsyncpa [#allocation4], 1
    %8351 = vsyncpa [#allocation10], 1

</llo_original>
